<compile_context>
chip_gen: v7x
topology: tpu7x:2x2x1
jax: 0.10.0
libtpu: 0.0.40
codegen_flags: <defaults>
</compile_context>

<pallas_src>
import functools

import jax
import jax.numpy as jnp
from jax.experimental import pallas as pl
from jax.experimental.pallas import tpu as pltpu


# ---------------------------------------------------------------------------
# Tile-size helpers
# ---------------------------------------------------------------------------

def _pick_row_tile(n, target=512):
    """Largest multiple-of-8 divisor of n that is <= target (falls back to n)."""
    cap = min(target, n)
    for t in range(cap - cap % 8, 0, -8):
        if n % t == 0:
            return t
    return n


def _pick_h_tile(h, target=8):
    """Largest divisor of h that is <= target."""
    for t in range(min(target, h), 0, -1):
        if h % t == 0:
            return t
    return h


# ---------------------------------------------------------------------------
# Kernels
# ---------------------------------------------------------------------------

def _conv1x1_bn_relu_kernel(x_ref, w_ref, s_ref, b_ref, o_ref):
    # x: [TM, Cin] f32, w: [Cin, Cout] bf16, s/b: [1, Cout] f32, o: [TM, Cout] f32
    y = jnp.dot(x_ref[...].astype(jnp.bfloat16), w_ref[...],
                preferred_element_type=jnp.float32)
    y = y * s_ref[0, :] + b_ref[0, :]
    o_ref[...] = jnp.maximum(y, 0.0).astype(o_ref.dtype)


def _sk_dual_conv3x3_kernel(x_ref, w1_ref, w2_ref, s1_ref, b1_ref, s2_ref, b2_ref,
                            f1_ref, f2_ref, gap_ref, acc1_ref, acc2_ref):
    # x:    [1, tH+4, W+4, C]  halo-2 padded input tile (f32), shared by both branches
    # w*:   [3, 3, C, C]       branch weights (bf16); dilation 1 / dilation 2
    # s*/b*:[1, C]             folded-BN affine (f32)
    # f*:   [1, tH, W, C]      branch outputs (bf16)
    # gap:  [1, 1, C]          running sum_{h,w}(f1+f2), accumulated over H-tile axis (f32)
    # acc*: [tH, W, C]         f32 VMEM scratch accumulators (avoid SSA/register spills)
    th = f1_ref.shape[1]
    w_out = f1_ref.shape[2]

    acc1_ref[...] = jnp.zeros_like(acc1_ref)
    acc2_ref[...] = jnp.zeros_like(acc2_ref)

    for kh in range(3):
        for kw in range(3):
            # Branch 1: dilation 1 (halo base offset 2 - 1 = 1).
            p1 = x_ref[0, kh + 1:kh + 1 + th, kw + 1:kw + 1 + w_out, :]
            acc1_ref[...] += jnp.dot(p1.astype(jnp.bfloat16), w1_ref[kh, kw],
                                     preferred_element_type=jnp.float32)
            # Branch 2: dilation 2 (halo base offset 2 - 2 = 0).
            p2 = x_ref[0, 2 * kh:2 * kh + th, 2 * kw:2 * kw + w_out, :]
            acc2_ref[...] += jnp.dot(p2.astype(jnp.bfloat16), w2_ref[kh, kw],
                                     preferred_element_type=jnp.float32)

    y1 = jnp.maximum(acc1_ref[...] * s1_ref[0, :] + b1_ref[0, :], 0.0)
    y2 = jnp.maximum(acc2_ref[...] * s2_ref[0, :] + b2_ref[0, :], 0.0)
    f1_ref[0] = y1.astype(f1_ref.dtype)
    f2_ref[0] = y2.astype(f2_ref.dtype)

    # Fused GAP: accumulate sum over this tile into the per-batch [1,1,C] output block
    # (block index constant along the "arbitrary" H-tile axis -> resident accumulator).
    @pl.when(pl.program_id(1) == 0)
    def _():
        gap_ref[...] = jnp.zeros_like(gap_ref)

    gap_ref[...] += jnp.sum(y1 + y2, axis=(0, 1), keepdims=True)


def _sk_attention_kernel(s_ref, wred_ref, rs_ref, rb_ref, wfc1_ref, wfc2_ref,
                         a1_ref, a2_ref, *, inv_hw):
    # s: [B, C] sum over H*W of (f1+f2); a1/a2: [B, C] per-branch attention weights.
    s = s_ref[...] * inv_hw                                              # GAP mean
    z = jnp.dot(s, wred_ref[...], preferred_element_type=jnp.float32)    # [B, d]
    z = jnp.maximum(z * rs_ref[0, :] + rb_ref[0, :], 0.0)                # FC + BN + ReLU
    l1 = jnp.dot(z, wfc1_ref[...], preferred_element_type=jnp.float32)   # [B, C]
    l2 = jnp.dot(z, wfc2_ref[...], preferred_element_type=jnp.float32)
    m = jnp.maximum(l1, l2)                                              # 2-way softmax
    e1 = jnp.exp(l1 - m)
    e2 = jnp.exp(l2 - m)
    inv = pl.reciprocal(e1 + e2, approx=True)                            # EUP slot
    a1_ref[...] = e1 * inv
    a2_ref[...] = e2 * inv


def _sk_apply_conv1x1_add_relu_kernel(f1_ref, f2_ref, a1_ref, a2_ref, w_ref,
                                      s_ref, b_ref, res_ref, o_ref):
    # f*: [1, tS, C] bf16; a*: [1, 1, C] f32; w: [C, E] bf16; s/b: [1, E] f32
    # res: [1, tS, E] f32 (identity); o: [1, tS, E] f32
    v = (a1_ref[0] * f1_ref[0].astype(jnp.float32)
         + a2_ref[0] * f2_ref[0].astype(jnp.float32))        # SK attention-weighted sum
    y = jnp.dot(v.astype(jnp.bfloat16), w_ref[...],
                preferred_element_type=jnp.float32)          # conv3 (1x1)
    y = y * s_ref[0, :] + b_ref[0, :] + res_ref[0]           # BN + residual
    o_ref[0] = jnp.maximum(y, 0.0).astype(o_ref.dtype)       # ReLU


# ---------------------------------------------------------------------------
# Pallas-call wrappers
# ---------------------------------------------------------------------------

def conv1x1_bn_relu(x, w, scale, bias, *, row_tile=512):
    B, H, W, cin = x.shape
    cout = w.shape[-1]
    n = B * H * W
    tm = _pick_row_tile(n, row_tile)
    x2 = x.reshape(n, cin)
    out = pl.pallas_call(
        _conv1x1_bn_relu_kernel,
        out_shape=jax.ShapeDtypeStruct((n, cout), jnp.float32),
        grid=(n // tm,),
        in_specs=[
            pl.BlockSpec((tm, cin), lambda i: (i, 0)),
            pl.BlockSpec((cin, cout), lambda i: (0, 0)),
            pl.BlockSpec((1, cout), lambda i: (0, 0)),
            pl.BlockSpec((1, cout), lambda i: (0, 0)),
        ],
        out_specs=pl.BlockSpec((tm, cout), lambda i: (i, 0)),
        compiler_params=pltpu.CompilerParams(dimension_semantics=("parallel",)),
    )(x2, w, scale, bias)
    return out.reshape(B, H, W, cout)


def sk_dual_conv3x3(y, w1, w2, s1, b1, s2, b2, *, h_tile=8):
    """Both SK 3x3 branches (dilation 1 & 2) + folded BN + ReLU + fused GAP partial sums."""
    B, H, W, C = y.shape
    th = _pick_h_tile(H, h_tile)
    n_ht = H // th
    halo = 2                                   # max dilation; shared by both branches
    wp = W + 2 * halo

    # Pad ONCE for both branches and materialize overlapping (haloed) H-tiles so every
    # grid step DMAs a bounded [th+4, W+4, C] block instead of a whole padded image.
    # TODO(synk): an in-kernel halo DMA (manual make_async_copy) would remove this
    # extra XLA gather pass over the activation.
    yp = jnp.pad(y, ((0, 0), (halo, halo), (halo, halo), (0, 0)))
    rows = jnp.arange(n_ht)[:, None] * th + jnp.arange(th + 2 * halo)[None, :]
    yt = yp[:, rows, :, :].reshape(B * n_ht, th + 2 * halo, wp, C)

    f1, f2, gap = pl.pallas_call(
        _sk_dual_conv3x3_kernel,
        out_shape=(
            jax.ShapeDtypeStruct((B, H, W, C), jnp.bfloat16),
            jax.ShapeDtypeStruct((B, H, W, C), jnp.bfloat16),
            jax.ShapeDtypeStruct((B, 1, C), jnp.float32),
        ),
        grid=(B, n_ht),
        in_specs=[
            pl.BlockSpec((1, th + 2 * halo, wp, C),
                         lambda b, h: (b * n_ht + h, 0, 0, 0)),
            pl.BlockSpec((3, 3, C, C), lambda b, h: (0, 0, 0, 0)),
            pl.BlockSpec((3, 3, C, C), lambda b, h: (0, 0, 0, 0)),
            pl.BlockSpec((1, C), lambda b, h: (0, 0)),
            pl.BlockSpec((1, C), lambda b, h: (0, 0)),
            pl.BlockSpec((1, C), lambda b, h: (0, 0)),
            pl.BlockSpec((1, C), lambda b, h: (0, 0)),
        ],
        out_specs=(
            pl.BlockSpec((1, th, W, C), lambda b, h: (b, h, 0, 0)),
            pl.BlockSpec((1, th, W, C), lambda b, h: (b, h, 0, 0)),
            pl.BlockSpec((1, 1, C), lambda b, h: (b, 0, 0)),
        ),
        scratch_shapes=[
            pltpu.VMEM((th, W, C), jnp.float32),
            pltpu.VMEM((th, W, C), jnp.float32),
        ],
        compiler_params=pltpu.CompilerParams(
            dimension_semantics=("parallel", "arbitrary")),
    )(yt, w1, w2, s1, b1, s2, b2)
    return f1, f2, gap


def sk_attention(gap, w_red, red_scale, red_bias, w_fc1, w_fc2, *, inv_hw):
    B = gap.shape[0]
    C = gap.shape[-1]
    d = w_red.shape[-1]
    s2 = gap.reshape(B, C)
    att1, att2 = pl.pallas_call(
        functools.partial(_sk_attention_kernel, inv_hw=inv_hw),
        out_shape=(jax.ShapeDtypeStruct((B, C), jnp.float32),
                   jax.ShapeDtypeStruct((B, C), jnp.float32)),
        grid=(1,),
        in_specs=[
            pl.BlockSpec((B, C), lambda i: (0, 0)),
            pl.BlockSpec((C, d), lambda i: (0, 0)),
            pl.BlockSpec((1, d), lambda i: (0, 0)),
            pl.BlockSpec((1, d), lambda i: (0, 0)),
            pl.BlockSpec((d, C), lambda i: (0, 0)),
            pl.BlockSpec((d, C), lambda i: (0, 0)),
        ],
        out_specs=(pl.BlockSpec((B, C), lambda i: (0, 0)),
                   pl.BlockSpec((B, C), lambda i: (0, 0))),
    )(s2, w_red, red_scale, red_bias, w_fc1, w_fc2)
    return att1.reshape(B, 1, C), att2.reshape(B, 1, C)


def sk_apply_conv1x1_add_relu(f1, f2, att1, att2, w3, scale, bias, identity,
                              *, row_tile=512):
    B, H, W, C = f1.shape
    E = w3.shape[-1]
    hw = H * W
    ts = _pick_row_tile(hw, row_tile)
    f1r = f1.reshape(B, hw, C)
    f2r = f2.reshape(B, hw, C)
    idr = identity.reshape(B, hw, E)
    out = pl.pallas_call(
        _sk_apply_conv1x1_add_relu_kernel,
        out_shape=jax.ShapeDtypeStruct((B, hw, E), jnp.float32),
        grid=(B, hw // ts),
        in_specs=[
            pl.BlockSpec((1, ts, C), lambda b, j: (b, j, 0)),
            pl.BlockSpec((1, ts, C), lambda b, j: (b, j, 0)),
            pl.BlockSpec((1, 1, C), lambda b, j: (b, 0, 0)),
            pl.BlockSpec((1, 1, C), lambda b, j: (b, 0, 0)),
            pl.BlockSpec((C, E), lambda b, j: (0, 0)),
            pl.BlockSpec((1, E), lambda b, j: (0, 0)),
            pl.BlockSpec((1, E), lambda b, j: (0, 0)),
            pl.BlockSpec((1, ts, E), lambda b, j: (b, j, 0)),
        ],
        out_specs=pl.BlockSpec((1, ts, E), lambda b, j: (b, j, 0)),
        compiler_params=pltpu.CompilerParams(
            dimension_semantics=("parallel", "parallel")),
    )(f1r, f2r, att1, att2, w3, scale, bias, idr)
    return out.reshape(B, H, W, E)


# ---------------------------------------------------------------------------
# Full SKBottleNeck forward
# ---------------------------------------------------------------------------

def sk_bottleneck_forward(x_nchw, p):
    B, cin, H, W = x_nchw.shape
    exp_out = p["w3"].shape[-1]
    # down_sample=None => residual add requires in_chans == out_chans * expansion.
    assert cin == exp_out, "in_chans must equal out_chans*expansion when down_sample is None"

    # NCHW (PyTorch) -> NHWC (channels on TPU lanes); internal pipeline stays NHWC.
    x = jnp.transpose(x_nchw, (0, 2, 3, 1))
    identity = x

    # conv1: 1x1 conv + BN + ReLU  (in_chans -> width), row-tiled.
    y = conv1x1_bn_relu(x, p["w1"], p["bn1_scale"], p["bn1_bias"])

    # SK block: fused dual-branch 3x3 convs (dilation 1 / 2) + GAP partial sums.
    f1, f2, gap = sk_dual_conv3x3(y, p["wb1"], p["wb2"],
                                  p["bnb1_scale"], p["bnb1_bias"],
                                  p["bnb2_scale"], p["bnb2_bias"])

    # SK select: reduce FC + BN + ReLU, per-branch FCs, softmax over branches.
    att1, att2 = sk_attention(gap, p["w_red"], p["bn_red_scale"], p["bn_red_bias"],
                              p["w_fc1"], p["w_fc2"], inv_hw=1.0 / (H * W))

    # Attention-apply fused with conv3 (1x1) + BN + residual add + ReLU.
    out = sk_apply_conv1x1_add_relu(f1, f2, att1, att2,
                                    p["w3"], p["bn3_scale"], p["bn3_bias"], identity)

    # Back to NCHW.
    return jnp.transpose(out, (0, 3, 1, 2))


# ---------------------------------------------------------------------------
# Deterministic parameter initialization
# ---------------------------------------------------------------------------

def _fold_bn(gamma, beta, mean, var, eps=1e-5):
    scale = gamma / jnp.sqrt(var + eps)
    bias = beta - mean * scale
    return scale.reshape(1, -1), bias.reshape(1, -1)


def init_params(key, in_chans, out_chans, groups=1, width_per_group=64,
                base_width=128, reduction=16, expansion=2):
    width = int(out_chans * (width_per_group / base_width)) * groups
    d = max(width // reduction, 32)
    exp_out = out_chans * expansion
    keys = jax.random.split(key, 12)

    def w(k, shape, dtype=jnp.float32):
        return (jax.random.normal(k, shape, jnp.float32) * 0.1).astype(dtype)

    def bn(k, c):
        k1, k2, k3, k4 = jax.random.split(k, 4)
        gamma = jax.random.uniform(k1, (c,), jnp.float32, 0.8, 1.2)
        beta = jax.random.normal(k2, (c,), jnp.float32) * 0.05
        mean = jax.random.normal(k3, (c,), jnp.float32) * 0.05
        var = jax.random.uniform(k4, (c,), jnp.float32, 0.5, 1.5)
        return _fold_bn(gamma, beta, mean, var)

    p = {}
    p["w1"] = w(keys[0], (in_chans, width), jnp.bfloat16)       # conv1 (1x1)
    p["bn1_scale"], p["bn1_bias"] = bn(keys[1], width)
    p["wb1"] = w(keys[2], (3, 3, width, width), jnp.bfloat16)   # SK branch 1 (dilation 1)
    p["bnb1_scale"], p["bnb1_bias"] = bn(keys[3], width)
    p["wb2"] = w(keys[4], (3, 3, width, width), jnp.bfloat16)   # SK branch 2 (dilation 2)
    p["bnb2_scale"], p["bnb2_bias"] = bn(keys[5], width)
    p["w_red"] = w(keys[6], (width, d))                         # SK reduce FC
    p["bn_red_scale"], p["bn_red_bias"] = bn(keys[7], d)
    p["w_fc1"] = w(keys[8], (d, width))                         # SK per-branch FCs
    p["w_fc2"] = w(keys[9], (d, width))
    p["w3"] = w(keys[10], (width, exp_out), jnp.bfloat16)       # conv3 (1x1)
    p["bn3_scale"], p["bn3_bias"] = bn(keys[11], exp_out)
    return p


# ---------------------------------------------------------------------------

if __name__ == "__main__":
    key = jax.random.PRNGKey(0)
    kx, kp = jax.random.split(key)

    # in_chans must equal out_chans * expansion for the residual add (down_sample=None).
    in_chans, out_chans = 16, 8
    B, H, W = 2, 16, 16

    x = jax.random.normal(kx, (B, in_chans, H, W), jnp.float32)   # NCHW, like PyTorch
    params = init_params(kp, in_chans, out_chans)

    y = jax.jit(sk_bottleneck_forward)(x, params)
    jax.block_until_ready(y)

    assert y.shape == (B, out_chans * 2, H, W), y.shape
    assert bool(jnp.all(jnp.isfinite(y)))
    print("KERNEL_OK")
</pallas_src>

<mosaic_0001>
module attributes {stable_mosaic.version = 11 : i64} {
  func.func @_conv1x1_bn_relu_kernel(%arg0: i32, %arg1: memref<512x16xf32, #tpu.memory_space<vmem>>, %arg2: memref<16x4xbf16, #tpu.memory_space<vmem>>, %arg3: memref<1x4xf32, #tpu.memory_space<vmem>>, %arg4: memref<1x4xf32, #tpu.memory_space<vmem>>, %arg5: memref<512x4xf32, #tpu.memory_space<vmem>>) attributes {dimension_semantics = [#tpu.dimension_semantics<parallel>], iteration_bounds = array<i64: 1>, scalar_prefetch = 0 : i64, scratch_operands = 0 : i64, tpu.core_type = #tpu.core_type<tc>, window_params = [{transform_indices = @transform_0, window_bounds = array<i64: 512, 16>}, {pipeline_mode = #tpu.pipeline_mode<synchronous>, transform_indices = @transform_1, window_bounds = array<i64: 16, 4>}, {pipeline_mode = #tpu.pipeline_mode<synchronous>, transform_indices = @transform_2, window_bounds = array<i64: 1, 4>}, {pipeline_mode = #tpu.pipeline_mode<synchronous>, transform_indices = @transform_3, window_bounds = array<i64: 1, 4>}, {transform_indices = @transform_4, window_bounds = array<i64: 512, 4>}]} {
    %c0 = arith.constant 0 : index
    %c0_0 = arith.constant 0 : index
    %0 = vector.load %arg1[%c0, %c0_0] : memref<512x16xf32, #tpu.memory_space<vmem>>, vector<512x16xf32>
    %1 = arith.truncf %0 : vector<512x16xf32> to vector<512x16xbf16>
    %c0_1 = arith.constant 0 : index
    %c0_2 = arith.constant 0 : index
    %2 = vector.load %arg2[%c0_1, %c0_2] : memref<16x4xbf16, #tpu.memory_space<vmem>>, vector<16x4xbf16>
    %cst = arith.constant dense<0.000000e+00> : vector<512x4xf32>
    %3 = tpu.matmul %1, %2, %cst {dimension_numbers = #tpu.dot_dimension_numbers<[1], [0], [0], [1], [0, 0, 1, 1], [], []>} : vector<512x16xbf16>, vector<16x4xbf16>, vector<512x4xf32> -> vector<512x4xf32>
    %c0_3 = arith.constant 0 : index
    %c0_4 = arith.constant 0 : index
    %4 = vector.load %arg3[%c0_3, %c0_4] : memref<1x4xf32, #tpu.memory_space<vmem>>, vector<1x4xf32>
    %5 = vector.shape_cast %4 : vector<1x4xf32> to vector<4xf32>
    %6 = vector.shape_cast %5 : vector<4xf32> to vector<1x4xf32>
    %7 = vector.broadcast %6 : vector<1x4xf32> to vector<512x4xf32>
    %8 = arith.mulf %3, %7 : vector<512x4xf32>
    %c0_5 = arith.constant 0 : index
    %c0_6 = arith.constant 0 : index
    %9 = vector.load %arg4[%c0_5, %c0_6] : memref<1x4xf32, #tpu.memory_space<vmem>>, vector<1x4xf32>
    %10 = vector.shape_cast %9 : vector<1x4xf32> to vector<4xf32>
    %11 = vector.shape_cast %10 : vector<4xf32> to vector<1x4xf32>
    %12 = vector.broadcast %11 : vector<1x4xf32> to vector<512x4xf32>
    %13 = arith.addf %8, %12 : vector<512x4xf32>
    %cst_7 = arith.constant 0.000000e+00 : f32
    %14 = vector.broadcast %cst_7 : f32 to vector<512x4xf32>
    %15 = arith.maximumf %13, %14 : vector<512x4xf32>
    %c0_8 = arith.constant 0 : index
    %c0_9 = arith.constant 0 : index
    %16 = vector.load %arg5[%c0_8, %c0_9] : memref<512x4xf32, #tpu.memory_space<vmem>>, vector<512x4xf32>
    tpu.vector_store %arg5[%c0_8, %c0_9], %15 {strides = array<i32>} : memref<512x4xf32, #tpu.memory_space<vmem>>, vector<512x4xf32>,
    return
  }
  func.func @transform_0(%arg0: i32) -> (i32, i32) {
    %c0_i32 = arith.constant 0 : i32
    %c0_i32_0 = arith.constant 0 : i32
    return %arg0, %c0_i32 : i32, i32
  }
  func.func @transform_1(%arg0: i32) -> (i32, i32) {
    %c0_i32 = arith.constant 0 : i32
    %c0_i32_0 = arith.constant 0 : i32
    %c0_i32_1 = arith.constant 0 : i32
    return %c0_i32, %c0_i32_0 : i32, i32
  }
  func.func @transform_2(%arg0: i32) -> (i32, i32) {
    %c0_i32 = arith.constant 0 : i32
    %c0_i32_0 = arith.constant 0 : i32
    %c0_i32_1 = arith.constant 0 : i32
    return %c0_i32, %c0_i32_0 : i32, i32
  }
  func.func @transform_3(%arg0: i32) -> (i32, i32) {
    %c0_i32 = arith.constant 0 : i32
    %c0_i32_0 = arith.constant 0 : i32
    %c0_i32_1 = arith.constant 0 : i32
    return %c0_i32, %c0_i32_0 : i32, i32
  }
  func.func @transform_4(%arg0: i32) -> (i32, i32) {
    %c0_i32 = arith.constant 0 : i32
    %c0_i32_0 = arith.constant 0 : i32
    return %arg0, %c0_i32 : i32, i32
  }
}

module attributes {stable_mosaic.version = 11 : i64} {
  func.func @_sk_dual_conv3x3_kernel(%arg0: i32, %arg1: i32, %arg2: memref<1x12x20x4xf32, #tpu.memory_space<vmem>>, %arg3: memref<3x3x4x4xbf16, #tpu.memory_space<vmem>>, %arg4: memref<3x3x4x4xbf16, #tpu.memory_space<vmem>>, %arg5: memref<1x4xf32, #tpu.memory_space<vmem>>, %arg6: memref<1x4xf32, #tpu.memory_space<vmem>>, %arg7: memref<1x4xf32, #tpu.memory_space<vmem>>, %arg8: memref<1x4xf32, #tpu.memory_space<vmem>>, %arg9: memref<1x8x16x4xbf16, #tpu.memory_space<vmem>>, %arg10: memref<1x8x16x4xbf16, #tpu.memory_space<vmem>>, %arg11: memref<1x1x4xf32, #tpu.memory_space<vmem>>, %arg12: memref<8x16x4xf32, #tpu.memory_space<vmem>>, %arg13: memref<8x16x4xf32, #tpu.memory_space<vmem>>) attributes {dimension_semantics = [#tpu.dimension_semantics<parallel>, #tpu.dimension_semantics<arbitrary>], iteration_bounds = array<i64: 2, 2>, scalar_prefetch = 0 : i64, scratch_operands = 2 : i64, tpu.core_type = #tpu.core_type<tc>, window_params = [{transform_indices = @transform_0, window_bounds = array<i64: 1, 12, 20, 4>}, {pipeline_mode = #tpu.pipeline_mode<synchronous>, transform_indices = @transform_1, window_bounds = array<i64: 3, 3, 4, 4>}, {pipeline_mode = #tpu.pipeline_mode<synchronous>, transform_indices = @transform_2, window_bounds = array<i64: 3, 3, 4, 4>}, {pipeline_mode = #tpu.pipeline_mode<synchronous>, transform_indices = @transform_3, window_bounds = array<i64: 1, 4>}, {pipeline_mode = #tpu.pipeline_mode<synchronous>, transform_indices = @transform_4, window_bounds = array<i64: 1, 4>}, {pipeline_mode = #tpu.pipeline_mode<synchronous>, transform_indices = @transform_5, window_bounds = array<i64: 1, 4>}, {pipeline_mode = #tpu.pipeline_mode<synchronous>, transform_indices = @transform_6, window_bounds = array<i64: 1, 4>}, {transform_indices = @transform_7, window_bounds = array<i64: 1, 8, 16, 4>}, {transform_indices = @transform_8, window_bounds = array<i64: 1, 8, 16, 4>}, {transform_indices = @transform_9, window_bounds = array<i64: 1, 1, 4>}]} {
    %cst = arith.constant 0.000000e+00 : f32
    %0 = vector.broadcast %cst : f32 to vector<8x16x4xf32>
    %c0 = arith.constant 0 : index
    %c0_0 = arith.constant 0 : index
    %c0_1 = arith.constant 0 : index
    %1 = vector.load %arg12[%c0, %c0_0, %c0_1] : memref<8x16x4xf32, #tpu.memory_space<vmem>>, vector<8x16x4xf32>
    tpu.vector_store %arg12[%c0, %c0_0, %c0_1], %0 {strides = array<i32>} : memref<8x16x4xf32, #tpu.memory_space<vmem>>, vector<8x16x4xf32>,
    %cst_2 = arith.constant 0.000000e+00 : f32
    %2 = vector.broadcast %cst_2 : f32 to vector<8x16x4xf32>
    %c0_3 = arith.constant 0 : index
    %c0_4 = arith.constant 0 : index
    %c0_5 = arith.constant 0 : index
    %3 = vector.load %arg13[%c0_3, %c0_4, %c0_5] : memref<8x16x4xf32, #tpu.memory_space<vmem>>, vector<8x16x4xf32>
    tpu.vector_store %arg13[%c0_3, %c0_4, %c0_5], %2 {strides = array<i32>} : memref<8x16x4xf32, #tpu.memory_space<vmem>>, vector<8x16x4xf32>,
    %c0_6 = arith.constant 0 : index
    %c1 = arith.constant 1 : index
    %c1_7 = arith.constant 1 : index
    %c0_8 = arith.constant 0 : index
    %4 = vector.load %arg2[%c0_6, %c1, %c1_7, %c0_8] : memref<1x12x20x4xf32, #tpu.memory_space<vmem>>, vector<1x8x16x4xf32>
    %5 = vector.shape_cast %4 : vector<1x8x16x4xf32> to vector<8x16x4xf32>
    %c0_9 = arith.constant 0 : index
    %c0_10 = arith.constant 0 : index
    %c0_11 = arith.constant 0 : index
    %6 = vector.load %arg12[%c0_9, %c0_10, %c0_11] : memref<8x16x4xf32, #tpu.memory_space<vmem>>, vector<8x16x4xf32>
    %7 = arith.truncf %5 : vector<8x16x4xf32> to vector<8x16x4xbf16>
    %c0_12 = arith.constant 0 : index
    %c0_13 = arith.constant 0 : index
    %c0_14 = arith.constant 0 : index
    %c0_15 = arith.constant 0 : index
    %8 = vector.load %arg3[%c0_12, %c0_13, %c0_14, %c0_15] : memref<3x3x4x4xbf16, #tpu.memory_space<vmem>>, vector<1x1x4x4xbf16>
    %9 = vector.shape_cast %8 : vector<1x1x4x4xbf16> to vector<4x4xbf16>
    %cst_16 = arith.constant dense<0.000000e+00> : vector<8x16x4xf32>
    %10 = tpu.matmul %7, %9, %cst_16 {dimension_numbers = #tpu.dot_dimension_numbers<[2], [0], [0, 1], [1], [0, 0, 0, 1, 1, 1], [], []>} : vector<8x16x4xbf16>, vector<4x4xbf16>, vector<8x16x4xf32> -> vector<8x16x4xf32>
    %11 = arith.addf %6, %10 : vector<8x16x4xf32>
    %c0_17 = arith.constant 0 : index
    %c0_18 = arith.constant 0 : index
    %c0_19 = arith.constant 0 : index
    %12 = vector.load %arg12[%c0_17, %c0_18, %c0_19] : memref<8x16x4xf32, #tpu.memory_space<vmem>>, vector<8x16x4xf32>
    tpu.vector_store %arg12[%c0_17, %c0_18, %c0_19], %11 {strides = array<i32>} : memref<8x16x4xf32, #tpu.memory_space<vmem>>, vector<8x16x4xf32>,
    %c0_20 = arith.constant 0 : index
    %c0_21 = arith.constant 0 : index
    %c0_22 = arith.constant 0 : index
    %c0_23 = arith.constant 0 : index
    %13 = vector.load %arg2[%c0_20, %c0_21, %c0_22, %c0_23] : memref<1x12x20x4xf32, #tpu.memory_space<vmem>>, vector<1x8x16x4xf32>
    %14 = vector.shape_cast %13 : vector<1x8x16x4xf32> to vector<8x16x4xf32>
    %c0_24 = arith.constant 0 : index
    %c0_25 = arith.constant 0 : index
    %c0_26 = arith.constant 0 : index
    %15 = vector.load %arg13[%c0_24, %c0_25, %c0_26] : memref<8x16x4xf32, #tpu.memory_space<vmem>>, vector<8x16x4xf32>
    %16 = arith.truncf %14 : vector<8x16x4xf32> to vector<8x16x4xbf16>
    %c0_27 = arith.constant 0 : index
    %c0_28 = arith.constant 0 : index
    %c0_29 = arith.constant 0 : index
    %c0_30 = arith.constant 0 : index
    %17 = vector.load %arg4[%c0_27, %c0_28, %c0_29, %c0_30] : memref<3x3x4x4xbf16, #tpu.memory_space<vmem>>, vector<1x1x4x4xbf16>
    %18 = vector.shape_cast %17 : vector<1x1x4x4xbf16> to vector<4x4xbf16>
    %cst_31 = arith.constant dense<0.000000e+00> : vector<8x16x4xf32>
    %19 = tpu.matmul %16, %18, %cst_31 {dimension_numbers = #tpu.dot_dimension_numbers<[2], [0], [0, 1], [1], [0, 0, 0, 1, 1, 1], [], []>} : vector<8x16x4xbf16>, vector<4x4xbf16>, vector<8x16x4xf32> -> vector<8x16x4xf32>
    %20 = arith.addf %15, %19 : vector<8x16x4xf32>
    %c0_32 = arith.constant 0 : index
    %c0_33 = arith.constant 0 : index
    %c0_34 = arith.constant 0 : index
    %21 = vector.load %arg13[%c0_32, %c0_33, %c0_34] : memref<8x16x4xf32, #tpu.memory_space<vmem>>, vector<8x16x4xf32>
    tpu.vector_store %arg13[%c0_32, %c0_33, %c0_34], %20 {strides = array<i32>} : memref<8x16x4xf32, #tpu.memory_space<vmem>>, vector<8x16x4xf32>,
    %c0_35 = arith.constant 0 : index
    %c1_36 = arith.constant 1 : index
    %c2 = arith.constant 2 : index
    %c0_37 = arith.constant 0 : index
    %22 = vector.load %arg2[%c0_35, %c1_36, %c2, %c0_37] : memref<1x12x20x4xf32, #tpu.memory_space<vmem>>, vector<1x8x16x4xf32>
    %23 = vector.shape_cast %22 : vector<1x8x16x4xf32> to vector<8x16x4xf32>
    %c0_38 = arith.constant 0 : index
    %c0_39 = arith.constant 0 : index
    %c0_40 = arith.constant 0 : index
    %24 = vector.load %arg12[%c0_38, %c0_39, %c0_40] : memref<8x16x4xf32, #tpu.memory_space<vmem>>, vector<8x16x4xf32>
    %25 = arith.truncf %23 : vector<8x16x4xf32> to vector<8x16x4xbf16>
    %c0_41 = arith.constant 0 : index
    %c1_42 = arith.constant 1 : index
    %c0_43 = arith.constant 0 : index
    %c0_44 = arith.constant 0 : index
    %26 = vector.load %arg3[%c0_41, %c1_42, %c0_43, %c0_44] : memref<3x3x4x4xbf16, #tpu.memory_space<vmem>>, vector<1x1x4x4xbf16>
    %27 = vector.shape_cast %26 : vector<1x1x4x4xbf16> to vector<4x4xbf16>
    %cst_45 = arith.constant dense<0.000000e+00> : vector<8x16x4xf32>
    %28 = tpu.matmul %25, %27, %cst_45 {dimension_numbers = #tpu.dot_dimension_numbers<[2], [0], [0, 1], [1], [0, 0, 0, 1, 1, 1], [], []>} : vector<8x16x4xbf16>, vector<4x4xbf16>, vector<8x16x4xf32> -> vector<8x16x4xf32>
    %29 = arith.addf %24, %28 : vector<8x16x4xf32>
    %c0_46 = arith.constant 0 : index
    %c0_47 = arith.constant 0 : index
    %c0_48 = arith.constant 0 : index
    %30 = vector.load %arg12[%c0_46, %c0_47, %c0_48] : memref<8x16x4xf32, #tpu.memory_space<vmem>>, vector<8x16x4xf32>
    tpu.vector_store %arg12[%c0_46, %c0_47, %c0_48], %29 {strides = array<i32>} : memref<8x16x4xf32, #tpu.memory_space<vmem>>, vector<8x16x4xf32>,
    %c0_49 = arith.constant 0 : index
    %c0_50 = arith.constant 0 : index
    %c2_51 = arith.constant 2 : index
    %c0_52 = arith.constant 0 : index
    %31 = vector.load %arg2[%c0_49, %c0_50, %c2_51, %c0_52] : memref<1x12x20x4xf32, #tpu.memory_space<vmem>>, vector<1x8x16x4xf32>
    %32 = vector.shape_cast %31 : vector<1x8x16x4xf32> to vector<8x16x4xf32>
    %c0_53 = arith.constant 0 : index
    %c0_54 = arith.constant 0 : index
    %c0_55 = arith.constant 0 : index
    %33 = vector.load %arg13[%c0_53, %c0_54, %c0_55] : memref<8x16x4xf32, #tpu.memory_space<vmem>>, vector<8x16x4xf32>
    %34 = arith.truncf %32 : vector<8x16x4xf32> to vector<8x16x4xbf16>
    %c0_56 = arith.constant 0 : index
    %c1_57 = arith.constant 1 : index
    %c0_58 = arith.constant 0 : index
    %c0_59 = arith.constant 0 : index
    %35 = vector.load %arg4[%c0_56, %c1_57, %c0_58, %c0_59] : memref<3x3x4x4xbf16, #tpu.memory_space<vmem>>, vector<1x1x4x4xbf16>
    %36 = vector.shape_cast %35 : vector<1x1x4x4xbf16> to vector<4x4xbf16>
    %cst_60 = arith.constant dense<0.000000e+00> : vector<8x16x4xf32>
    %37 = tpu.matmul %34, %36, %cst_60 {dimension_numbers = #tpu.dot_dimension_numbers<[2], [0], [0, 1], [1], [0, 0, 0, 1, 1, 1], [], []>} : vector<8x16x4xbf16>, vector<4x4xbf16>, vector<8x16x4xf32> -> vector<8x16x4xf32>
    %38 = arith.addf %33, %37 : vector<8x16x4xf32>
    %c0_61 = arith.constant 0 : index
    %c0_62 = arith.constant 0 : index
    %c0_63 = arith.constant 0 : index
    %39 = vector.load %arg13[%c0_61, %c0_62, %c0_63] : memref<8x16x4xf32, #tpu.memory_space<vmem>>, vector<8x16x4xf32>
    tpu.vector_store %arg13[%c0_61, %c0_62, %c0_63], %38 {strides = array<i32>} : memref<8x16x4xf32, #tpu.memory_space<vmem>>, vector<8x16x4xf32>,
    %c0_64 = arith.constant 0 : index
    %c1_65 = arith.constant 1 : index
    %c3 = arith.constant 3 : index
    %c0_66 = arith.constant 0 : index
    %40 = vector.load %arg2[%c0_64, %c1_65, %c3, %c0_66] : memref<1x12x20x4xf32, #tpu.memory_space<vmem>>, vector<1x8x16x4xf32>
    %41 = vector.shape_cast %40 : vector<1x8x16x4xf32> to vector<8x16x4xf32>
    %c0_67 = arith.constant 0 : index
    %c0_68 = arith.constant 0 : index
    %c0_69 = arith.constant 0 : index
    %42 = vector.load %arg12[%c0_67, %c0_68, %c0_69] : memref<8x16x4xf32, #tpu.memory_space<vmem>>, vector<8x16x4xf32>
    %43 = arith.truncf %41 : vector<8x16x4xf32> to vector<8x16x4xbf16>
    %c0_70 = arith.constant 0 : index
    %c2_71 = arith.constant 2 : index
    %c0_72 = arith.constant 0 : index
    %c0_73 = arith.constant 0 : index
    %44 = vector.load %arg3[%c0_70, %c2_71, %c0_72, %c0_73] : memref<3x3x4x4xbf16, #tpu.memory_space<vmem>>, vector<1x1x4x4xbf16>
    %45 = vector.shape_cast %44 : vector<1x1x4x4xbf16> to vector<4x4xbf16>
    %cst_74 = arith.constant dense<0.000000e+00> : vector<8x16x4xf32>
    %46 = tpu.matmul %43, %45, %cst_74 {dimension_numbers = #tpu.dot_dimension_numbers<[2], [0], [0, 1], [1], [0, 0, 0, 1, 1, 1], [], []>} : vector<8x16x4xbf16>, vector<4x4xbf16>, vector<8x16x4xf32> -> vector<8x16x4xf32>
    %47 = arith.addf %42, %46 : vector<8x16x4xf32>
    %c0_75 = arith.constant 0 : index
    %c0_76 = arith.constant 0 : index
    %c0_77 = arith.constant 0 : index
    %48 = vector.load %arg12[%c0_75, %c0_76, %c0_77] : memref<8x16x4xf32, #tpu.memory_space<vmem>>, vector<8x16x4xf32>
    tpu.vector_store %arg12[%c0_75, %c0_76, %c0_77], %47 {strides = array<i32>} : memref<8x16x4xf32, #tpu.memory_space<vmem>>, vector<8x16x4xf32>,
    %c0_78 = arith.constant 0 : index
    %c0_79 = arith.constant 0 : index
    %c4 = arith.constant 4 : index
    %c0_80 = arith.constant 0 : index
    %49 = vector.load %arg2[%c0_78, %c0_79, %c4, %c0_80] : memref<1x12x20x4xf32, #tpu.memory_space<vmem>>, vector<1x8x16x4xf32>
    %50 = vector.shape_cast %49 : vector<1x8x16x4xf32> to vector<8x16x4xf32>
    %c0_81 = arith.constant 0 : index
    %c0_82 = arith.constant 0 : index
    %c0_83 = arith.constant 0 : index
    %51 = vector.load %arg13[%c0_81, %c0_82, %c0_83] : memref<8x16x4xf32, #tpu.memory_space<vmem>>, vector<8x16x4xf32>
    %52 = arith.truncf %50 : vector<8x16x4xf32> to vector<8x16x4xbf16>
    %c0_84 = arith.constant 0 : index
    %c2_85 = arith.constant 2 : index
    %c0_86 = arith.constant 0 : index
    %c0_87 = arith.constant 0 : index
    %53 = vector.load %arg4[%c0_84, %c2_85, %c0_86, %c0_87] : memref<3x3x4x4xbf16, #tpu.memory_space<vmem>>, vector<1x1x4x4xbf16>
    %54 = vector.shape_cast %53 : vector<1x1x4x4xbf16> to vector<4x4xbf16>
    %cst_88 = arith.constant dense<0.000000e+00> : vector<8x16x4xf32>
    %55 = tpu.matmul %52, %54, %cst_88 {dimension_numbers = #tpu.dot_dimension_numbers<[2], [0], [0, 1], [1], [0, 0, 0, 1, 1, 1], [], []>} : vector<8x16x4xbf16>, vector<4x4xbf16>, vector<8x16x4xf32> -> vector<8x16x4xf32>
    %56 = arith.addf %51, %55 : vector<8x16x4xf32>
    %c0_89 = arith.constant 0 : index
    %c0_90 = arith.constant 0 : index
    %c0_91 = arith.constant 0 : index
    %57 = vector.load %arg13[%c0_89, %c0_90, %c0_91] : memref<8x16x4xf32, #tpu.memory_space<vmem>>, vector<8x16x4xf32>
    tpu.vector_store %arg13[%c0_89, %c0_90, %c0_91], %56 {strides = array<i32>} : memref<8x16x4xf32, #tpu.memory_space<vmem>>, vector<8x16x4xf32>,
    %c0_92 = arith.constant 0 : index
    %c2_93 = arith.constant 2 : index
    %c1_94 = arith.constant 1 : index
    %c0_95 = arith.constant 0 : index
    %58 = vector.load %arg2[%c0_92, %c2_93, %c1_94, %c0_95] : memref<1x12x20x4xf32, #tpu.memory_space<vmem>>, vector<1x8x16x4xf32>
    %59 = vector.shape_cast %58 : vector<1x8x16x4xf32> to vector<8x16x4xf32>
    %c0_96 = arith.constant 0 : index
    %c0_97 = arith.constant 0 : index
    %c0_98 = arith.constant 0 : index
    %60 = vector.load %arg12[%c0_96, %c0_97, %c0_98] : memref<8x16x4xf32, #tpu.memory_space<vmem>>, vector<8x16x4xf32>
    %61 = arith.truncf %59 : vector<8x16x4xf32> to vector<8x16x4xbf16>
    %c1_99 = arith.constant 1 : index
    %c0_100 = arith.constant 0 : index
    %c0_101 = arith.constant 0 : index
    %c0_102 = arith.constant 0 : index
    %62 = vector.load %arg3[%c1_99, %c0_100, %c0_101, %c0_102] : memref<3x3x4x4xbf16, #tpu.memory_space<vmem>>, vector<1x1x4x4xbf16>
    %63 = vector.shape_cast %62 : vector<1x1x4x4xbf16> to vector<4x4xbf16>
    %cst_103 = arith.constant dense<0.000000e+00> : vector<8x16x4xf32>
    %64 = tpu.matmul %61, %63, %cst_103 {dimension_numbers = #tpu.dot_dimension_numbers<[2], [0], [0, 1], [1], [0, 0, 0, 1, 1, 1], [], []>} : vector<8x16x4xbf16>, vector<4x4xbf16>, vector<8x16x4xf32> -> vector<8x16x4xf32>
    %65 = arith.addf %60, %64 : vector<8x16x4xf32>
    %c0_104 = arith.constant 0 : index
    %c0_105 = arith.constant 0 : index
    %c0_106 = arith.constant 0 : index
    %66 = vector.load %arg12[%c0_104, %c0_105, %c0_106] : memref<8x16x4xf32, #tpu.memory_space<vmem>>, vector<8x16x4xf32>
    tpu.vector_store %arg12[%c0_104, %c0_105, %c0_106], %65 {strides = array<i32>} : memref<8x16x4xf32, #tpu.memory_space<vmem>>, vector<8x16x4xf32>,
    %c0_107 = arith.constant 0 : index
    %c2_108 = arith.constant 2 : index
    %c0_109 = arith.constant 0 : index
    %c0_110 = arith.constant 0 : index
    %67 = vector.load %arg2[%c0_107, %c2_108, %c0_109, %c0_110] : memref<1x12x20x4xf32, #tpu.memory_space<vmem>>, vector<1x8x16x4xf32>
    %68 = vector.shape_cast %67 : vector<1x8x16x4xf32> to vector<8x16x4xf32>
    %c0_111 = arith.constant 0 : index
    %c0_112 = arith.constant 0 : index
    %c0_113 = arith.constant 0 : index
    %69 = vector.load %arg13[%c0_111, %c0_112, %c0_113] : memref<8x16x4xf32, #tpu.memory_space<vmem>>, vector<8x16x4xf32>
    %70 = arith.truncf %68 : vector<8x16x4xf32> to vector<8x16x4xbf16>
    %c1_114 = arith.constant 1 : index
    %c0_115 = arith.constant 0 : index
    %c0_116 = arith.constant 0 : index
    %c0_117 = arith.constant 0 : index
    %71 = vector.load %arg4[%c1_114, %c0_115, %c0_116, %c0_117] : memref<3x3x4x4xbf16, #tpu.memory_space<vmem>>, vector<1x1x4x4xbf16>
    %72 = vector.shape_cast %71 : vector<1x1x4x4xbf16> to vector<4x4xbf16>
    %cst_118 = arith.constant dense<0.000000e+00> : vector<8x16x4xf32>
    %73 = tpu.matmul %70, %72, %cst_118 {dimension_numbers = #tpu.dot_dimension_numbers<[2], [0], [0, 1], [1], [0, 0, 0, 1, 1, 1], [], []>} : vector<8x16x4xbf16>, vector<4x4xbf16>, vector<8x16x4xf32> -> vector<8x16x4xf32>
    %74 = arith.addf %69, %73 : vector<8x16x4xf32>
    %c0_119 = arith.constant 0 : index
    %c0_120 = arith.constant 0 : index
    %c0_121 = arith.constant 0 : index
    %75 = vector.load %arg13[%c0_119, %c0_120, %c0_121] : memref<8x16x4xf32, #tpu.memory_space<vmem>>, vector<8x16x4xf32>
    tpu.vector_store %arg13[%c0_119, %c0_120, %c0_121], %74 {strides = array<i32>} : memref<8x16x4xf32, #tpu.memory_space<vmem>>, vector<8x16x4xf32>,
    %c0_122 = arith.constant 0 : index
    %c2_123 = arith.constant 2 : index
    %c2_124 = arith.constant 2 : index
    %c0_125 = arith.constant 0 : index
    %76 = vector.load %arg2[%c0_122, %c2_123, %c2_124, %c0_125] : memref<1x12x20x4xf32, #tpu.memory_space<vmem>>, vector<1x8x16x4xf32>
    %77 = vector.shape_cast %76 : vector<1x8x16x4xf32> to vector<8x16x4xf32>
    %c0_126 = arith.constant 0 : index
    %c0_127 = arith.constant 0 : index
    %c0_128 = arith.constant 0 : index
    %78 = vector.load %arg12[%c0_126, %c0_127, %c0_128] : memref<8x16x4xf32, #tpu.memory_space<vmem>>, vector<8x16x4xf32>
    %79 = arith.truncf %77 : vector<8x16x4xf32> to vector<8x16x4xbf16>
    %c1_129 = arith.constant 1 : index
    %c1_130 = arith.constant 1 : index
    %c0_131 = arith.constant 0 : index
    %c0_132 = arith.constant 0 : index
    %80 = vector.load %arg3[%c1_129, %c1_130, %c0_131, %c0_132] : memref<3x3x4x4xbf16, #tpu.memory_space<vmem>>, vector<1x1x4x4xbf16>
    %81 = vector.shape_cast %80 : vector<1x1x4x4xbf16> to vector<4x4xbf16>
    %cst_133 = arith.constant dense<0.000000e+00> : vector<8x16x4xf32>
    %82 = tpu.matmul %79, %81, %cst_133 {dimension_numbers = #tpu.dot_dimension_numbers<[2], [0], [0, 1], [1], [0, 0, 0, 1, 1, 1], [], []>} : vector<8x16x4xbf16>, vector<4x4xbf16>, vector<8x16x4xf32> -> vector<8x16x4xf32>
    %83 = arith.addf %78, %82 : vector<8x16x4xf32>
    %c0_134 = arith.constant 0 : index
    %c0_135 = arith.constant 0 : index
    %c0_136 = arith.constant 0 : index
    %84 = vector.load %arg12[%c0_134, %c0_135, %c0_136] : memref<8x16x4xf32, #tpu.memory_space<vmem>>, vector<8x16x4xf32>
    tpu.vector_store %arg12[%c0_134, %c0_135, %c0_136], %83 {strides = array<i32>} : memref<8x16x4xf32, #tpu.memory_space<vmem>>, vector<8x16x4xf32>,
    %c0_137 = arith.constant 0 : index
    %c2_138 = arith.constant 2 : index
    %c2_139 = arith.constant 2 : index
    %c0_140 = arith.constant 0 : index
    %85 = vector.load %arg2[%c0_137, %c2_138, %c2_139, %c0_140] : memref<1x12x20x4xf32, #tpu.memory_space<vmem>>, vector<1x8x16x4xf32>
    %86 = vector.shape_cast %85 : vector<1x8x16x4xf32> to vector<8x16x4xf32>
    %c0_141 = arith.constant 0 : index
    %c0_142 = arith.constant 0 : index
    %c0_143 = arith.constant 0 : index
    %87 = vector.load %arg13[%c0_141, %c0_142, %c0_143] : memref<8x16x4xf32, #tpu.memory_space<vmem>>, vector<8x16x4xf32>
    %88 = arith.truncf %86 : vector<8x16x4xf32> to vector<8x16x4xbf16>
    %c1_144 = arith.constant 1 : index
    %c1_145 = arith.constant 1 : index
    %c0_146 = arith.constant 0 : index
    %c0_147 = arith.constant 0 : index
    %89 = vector.load %arg4[%c1_144, %c1_145, %c0_146, %c0_147] : memref<3x3x4x4xbf16, #tpu.memory_space<vmem>>, vector<1x1x4x4xbf16>
    %90 = vector.shape_cast %89 : vector<1x1x4x4xbf16> to vector<4x4xbf16>
    %cst_148 = arith.constant dense<0.000000e+00> : vector<8x16x4xf32>
    %91 = tpu.matmul %88, %90, %cst_148 {dimension_numbers = #tpu.dot_dimension_numbers<[2], [0], [0, 1], [1], [0, 0, 0, 1, 1, 1], [], []>} : vector<8x16x4xbf16>, vector<4x4xbf16>, vector<8x16x4xf32> -> vector<8x16x4xf32>
    %92 = arith.addf %87, %91 : vector<8x16x4xf32>
    %c0_149 = arith.constant 0 : index
    %c0_150 = arith.constant 0 : index
    %c0_151 = arith.constant 0 : index
    %93 = vector.load %arg13[%c0_149, %c0_150, %c0_151] : memref<8x16x4xf32, #tpu.memory_space<vmem>>, vector<8x16x4xf32>
    tpu.vector_store %arg13[%c0_149, %c0_150, %c0_151], %92 {strides = array<i32>} : memref<8x16x4xf32, #tpu.memory_space<vmem>>, vector<8x16x4xf32>,
    %c0_152 = arith.constant 0 : index
    %c2_153 = arith.constant 2 : index
    %c3_154 = arith.constant 3 : index
    %c0_155 = arith.constant 0 : index
    %94 = vector.load %arg2[%c0_152, %c2_153, %c3_154, %c0_155] : memref<1x12x20x4xf32, #tpu.memory_space<vmem>>, vector<1x8x16x4xf32>
    %95 = vector.shape_cast %94 : vector<1x8x16x4xf32> to vector<8x16x4xf32>
    %c0_156 = arith.constant 0 : index
    %c0_157 = arith.constant 0 : index
    %c0_158 = arith.constant 0 : index
    %96 = vector.load %arg12[%c0_156, %c0_157, %c0_158] : memref<8x16x4xf32, #tpu.memory_space<vmem>>, vector<8x16x4xf32>
    %97 = arith.truncf %95 : vector<8x16x4xf32> to vector<8x16x4xbf16>
    %c1_159 = arith.constant 1 : index
    %c2_160 = arith.constant 2 : index
    %c0_161 = arith.constant 0 : index
    %c0_162 = arith.constant 0 : index
    %98 = vector.load %arg3[%c1_159, %c2_160, %c0_161, %c0_162] : memref<3x3x4x4xbf16, #tpu.memory_space<vmem>>, vector<1x1x4x4xbf16>
    %99 = vector.shape_cast %98 : vector<1x1x4x4xbf16> to vector<4x4xbf16>
    %cst_163 = arith.constant dense<0.000000e+00> : vector<8x16x4xf32>
    %100 = tpu.matmul %97, %99, %cst_163 {dimension_numbers = #tpu.dot_dimension_numbers<[2], [0], [0, 1], [1], [0, 0, 0, 1, 1, 1], [], []>} : vector<8x16x4xbf16>, vector<4x4xbf16>, vector<8x16x4xf32> -> vector<8x16x4xf32>
    %101 = arith.addf %96, %100 : vector<8x16x4xf32>
    %c0_164 = arith.constant 0 : index
    %c0_165 = arith.constant 0 : index
    %c0_166 = arith.constant 0 : index
    %102 = vector.load %arg12[%c0_164, %c0_165, %c0_166] : memref<8x16x4xf32, #tpu.memory_space<vmem>>, vector<8x16x4xf32>
    tpu.vector_store %arg12[%c0_164, %c0_165, %c0_166], %101 {strides = array<i32>} : memref<8x16x4xf32, #tpu.memory_space<vmem>>, vector<8x16x4xf32>,
    %c0_167 = arith.constant 0 : index
    %c2_168 = arith.constant 2 : index
    %c4_169 = arith.constant 4 : index
    %c0_170 = arith.constant 0 : index
    %103 = vector.load %arg2[%c0_167, %c2_168, %c4_169, %c0_170] : memref<1x12x20x4xf32, #tpu.memory_space<vmem>>, vector<1x8x16x4xf32>
    %104 = vector.shape_cast %103 : vector<1x8x16x4xf32> to vector<8x16x4xf32>
    %c0_171 = arith.constant 0 : index
    %c0_172 = arith.constant 0 : index
    %c0_173 = arith.constant 0 : index
    %105 = vector.load %arg13[%c0_171, %c0_172, %c0_173] : memref<8x16x4xf32, #tpu.memory_space<vmem>>, vector<8x16x4xf32>
    %106 = arith.truncf %104 : vector<8x16x4xf32> to vector<8x16x4xbf16>
    %c1_174 = arith.constant 1 : index
    %c2_175 = arith.constant 2 : index
    %c0_176 = arith.constant 0 : index
    %c0_177 = arith.constant 0 : index
    %107 = vector.load %arg4[%c1_174, %c2_175, %c0_176, %c0_177] : memref<3x3x4x4xbf16, #tpu.memory_space<vmem>>, vector<1x1x4x4xbf16>
    %108 = vector.shape_cast %107 : vector<1x1x4x4xbf16> to vector<4x4xbf16>
    %cst_178 = arith.constant dense<0.000000e+00> : vector<8x16x4xf32>
    %109 = tpu.matmul %106, %108, %cst_178 {dimension_numbers = #tpu.dot_dimension_numbers<[2], [0], [0, 1], [1], [0, 0, 0, 1, 1, 1], [], []>} : vector<8x16x4xbf16>, vector<4x4xbf16>, vector<8x16x4xf32> -> vector<8x16x4xf32>
    %110 = arith.addf %105, %109 : vector<8x16x4xf32>
    %c0_179 = arith.constant 0 : index
    %c0_180 = arith.constant 0 : index
    %c0_181 = arith.constant 0 : index
    %111 = vector.load %arg13[%c0_179, %c0_180, %c0_181] : memref<8x16x4xf32, #tpu.memory_space<vmem>>, vector<8x16x4xf32>
    tpu.vector_store %arg13[%c0_179, %c0_180, %c0_181], %110 {strides = array<i32>} : memref<8x16x4xf32, #tpu.memory_space<vmem>>, vector<8x16x4xf32>,
    %c0_182 = arith.constant 0 : index
    %c3_183 = arith.constant 3 : index
    %c1_184 = arith.constant 1 : index
    %c0_185 = arith.constant 0 : index
    %112 = vector.load %arg2[%c0_182, %c3_183, %c1_184, %c0_185] : memref<1x12x20x4xf32, #tpu.memory_space<vmem>>, vector<1x8x16x4xf32>
    %113 = vector.shape_cast %112 : vector<1x8x16x4xf32> to vector<8x16x4xf32>
    %c0_186 = arith.constant 0 : index
    %c0_187 = arith.constant 0 : index
    %c0_188 = arith.constant 0 : index
    %114 = vector.load %arg12[%c0_186, %c0_187, %c0_188] : memref<8x16x4xf32, #tpu.memory_space<vmem>>, vector<8x16x4xf32>
    %115 = arith.truncf %113 : vector<8x16x4xf32> to vector<8x16x4xbf16>
    %c2_189 = arith.constant 2 : index
    %c0_190 = arith.constant 0 : index
    %c0_191 = arith.constant 0 : index
    %c0_192 = arith.constant 0 : index
    %116 = vector.load %arg3[%c2_189, %c0_190, %c0_191, %c0_192] : memref<3x3x4x4xbf16, #tpu.memory_space<vmem>>, vector<1x1x4x4xbf16>
    %117 = vector.shape_cast %116 : vector<1x1x4x4xbf16> to vector<4x4xbf16>
    %cst_193 = arith.constant dense<0.000000e+00> : vector<8x16x4xf32>
    %118 = tpu.matmul %115, %117, %cst_193 {dimension_numbers = #tpu.dot_dimension_numbers<[2], [0], [0, 1], [1], [0, 0, 0, 1, 1, 1], [], []>} : vector<8x16x4xbf16>, vector<4x4xbf16>, vector<8x16x4xf32> -> vector<8x16x4xf32>
    %119 = arith.addf %114, %118 : vector<8x16x4xf32>
    %c0_194 = arith.constant 0 : index
    %c0_195 = arith.constant 0 : index
    %c0_196 = arith.constant 0 : index
    %120 = vector.load %arg12[%c0_194, %c0_195, %c0_196] : memref<8x16x4xf32, #tpu.memory_space<vmem>>, vector<8x16x4xf32>
    tpu.vector_store %arg12[%c0_194, %c0_195, %c0_196], %119 {strides = array<i32>} : memref<8x16x4xf32, #tpu.memory_space<vmem>>, vector<8x16x4xf32>,
    %c0_197 = arith.constant 0 : index
    %c4_198 = arith.constant 4 : index
    %c0_199 = arith.constant 0 : index
    %c0_200 = arith.constant 0 : index
    %121 = vector.load %arg2[%c0_197, %c4_198, %c0_199, %c0_200] : memref<1x12x20x4xf32, #tpu.memory_space<vmem>>, vector<1x8x16x4xf32>
    %122 = vector.shape_cast %121 : vector<1x8x16x4xf32> to vector<8x16x4xf32>
    %c0_201 = arith.constant 0 : index
    %c0_202 = arith.constant 0 : index
    %c0_203 = arith.constant 0 : index
    %123 = vector.load %arg13[%c0_201, %c0_202, %c0_203] : memref<8x16x4xf32, #tpu.memory_space<vmem>>, vector<8x16x4xf32>
    %124 = arith.truncf %122 : vector<8x16x4xf32> to vector<8x16x4xbf16>
    %c2_204 = arith.constant 2 : index
    %c0_205 = arith.constant 0 : index
    %c0_206 = arith.constant 0 : index
    %c0_207 = arith.constant 0 : index
    %125 = vector.load %arg4[%c2_204, %c0_205, %c0_206, %c0_207] : memref<3x3x4x4xbf16, #tpu.memory_space<vmem>>, vector<1x1x4x4xbf16>
    %126 = vector.shape_cast %125 : vector<1x1x4x4xbf16> to vector<4x4xbf16>
    %cst_208 = arith.constant dense<0.000000e+00> : vector<8x16x4xf32>
    %127 = tpu.matmul %124, %126, %cst_208 {dimension_numbers = #tpu.dot_dimension_numbers<[2], [0], [0, 1], [1], [0, 0, 0, 1, 1, 1], [], []>} : vector<8x16x4xbf16>, vector<4x4xbf16>, vector<8x16x4xf32> -> vector<8x16x4xf32>
    %128 = arith.addf %123, %127 : vector<8x16x4xf32>
    %c0_209 = arith.constant 0 : index
    %c0_210 = arith.constant 0 : index
    %c0_211 = arith.constant 0 : index
    %129 = vector.load %arg13[%c0_209, %c0_210, %c0_211] : memref<8x16x4xf32, #tpu.memory_space<vmem>>, vector<8x16x4xf32>
    tpu.vector_store %arg13[%c0_209, %c0_210, %c0_211], %128 {strides = array<i32>} : memref<8x16x4xf32, #tpu.memory_space<vmem>>, vector<8x16x4xf32>,
    %c0_212 = arith.constant 0 : index
    %c3_213 = arith.constant 3 : index
    %c2_214 = arith.constant 2 : index
    %c0_215 = arith.constant 0 : index
    %130 = vector.load %arg2[%c0_212, %c3_213, %c2_214, %c0_215] : memref<1x12x20x4xf32, #tpu.memory_space<vmem>>, vector<1x8x16x4xf32>
    %131 = vector.shape_cast %130 : vector<1x8x16x4xf32> to vector<8x16x4xf32>
    %c0_216 = arith.constant 0 : index
    %c0_217 = arith.constant 0 : index
    %c0_218 = arith.constant 0 : index
    %132 = vector.load %arg12[%c0_216, %c0_217, %c0_218] : memref<8x16x4xf32, #tpu.memory_space<vmem>>, vector<8x16x4xf32>
    %133 = arith.truncf %131 : vector<8x16x4xf32> to vector<8x16x4xbf16>
    %c2_219 = arith.constant 2 : index
    %c1_220 = arith.constant 1 : index
    %c0_221 = arith.constant 0 : index
    %c0_222 = arith.constant 0 : index
    %134 = vector.load %arg3[%c2_219, %c1_220, %c0_221, %c0_222] : memref<3x3x4x4xbf16, #tpu.memory_space<vmem>>, vector<1x1x4x4xbf16>
    %135 = vector.shape_cast %134 : vector<1x1x4x4xbf16> to vector<4x4xbf16>
    %cst_223 = arith.constant dense<0.000000e+00> : vector<8x16x4xf32>
    %136 = tpu.matmul %133, %135, %cst_223 {dimension_numbers = #tpu.dot_dimension_numbers<[2], [0], [0, 1], [1], [0, 0, 0, 1, 1, 1], [], []>} : vector<8x16x4xbf16>, vector<4x4xbf16>, vector<8x16x4xf32> -> vector<8x16x4xf32>
    %137 = arith.addf %132, %136 : vector<8x16x4xf32>
    %c0_224 = arith.constant 0 : index
    %c0_225 = arith.constant 0 : index
    %c0_226 = arith.constant 0 : index
    %138 = vector.load %arg12[%c0_224, %c0_225, %c0_226] : memref<8x16x4xf32, #tpu.memory_space<vmem>>, vector<8x16x4xf32>
    tpu.vector_store %arg12[%c0_224, %c0_225, %c0_226], %137 {strides = array<i32>} : memref<8x16x4xf32, #tpu.memory_space<vmem>>, vector<8x16x4xf32>,
    %c0_227 = arith.constant 0 : index
    %c4_228 = arith.constant 4 : index
    %c2_229 = arith.constant 2 : index
    %c0_230 = arith.constant 0 : index
    %139 = vector.load %arg2[%c0_227, %c4_228, %c2_229, %c0_230] : memref<1x12x20x4xf32, #tpu.memory_space<vmem>>, vector<1x8x16x4xf32>
    %140 = vector.shape_cast %139 : vector<1x8x16x4xf32> to vector<8x16x4xf32>
    %c0_231 = arith.constant 0 : index
    %c0_232 = arith.constant 0 : index
    %c0_233 = arith.constant 0 : index
    %141 = vector.load %arg13[%c0_231, %c0_232, %c0_233] : memref<8x16x4xf32, #tpu.memory_space<vmem>>, vector<8x16x4xf32>
    %142 = arith.truncf %140 : vector<8x16x4xf32> to vector<8x16x4xbf16>
    %c2_234 = arith.constant 2 : index
    %c1_235 = arith.constant 1 : index
    %c0_236 = arith.constant 0 : index
    %c0_237 = arith.constant 0 : index
    %143 = vector.load %arg4[%c2_234, %c1_235, %c0_236, %c0_237] : memref<3x3x4x4xbf16, #tpu.memory_space<vmem>>, vector<1x1x4x4xbf16>
    %144 = vector.shape_cast %143 : vector<1x1x4x4xbf16> to vector<4x4xbf16>
    %cst_238 = arith.constant dense<0.000000e+00> : vector<8x16x4xf32>
    %145 = tpu.matmul %142, %144, %cst_238 {dimension_numbers = #tpu.dot_dimension_numbers<[2], [0], [0, 1], [1], [0, 0, 0, 1, 1, 1], [], []>} : vector<8x16x4xbf16>, vector<4x4xbf16>, vector<8x16x4xf32> -> vector<8x16x4xf32>
    %146 = arith.addf %141, %145 : vector<8x16x4xf32>
    %c0_239 = arith.constant 0 : index
    %c0_240 = arith.constant 0 : index
    %c0_241 = arith.constant 0 : index
    %147 = vector.load %arg13[%c0_239, %c0_240, %c0_241] : memref<8x16x4xf32, #tpu.memory_space<vmem>>, vector<8x16x4xf32>
    tpu.vector_store %arg13[%c0_239, %c0_240, %c0_241], %146 {strides = array<i32>} : memref<8x16x4xf32, #tpu.memory_space<vmem>>, vector<8x16x4xf32>,
    %c0_242 = arith.constant 0 : index
    %c3_243 = arith.constant 3 : index
    %c3_244 = arith.constant 3 : index
    %c0_245 = arith.constant 0 : index
    %148 = vector.load %arg2[%c0_242, %c3_243, %c3_244, %c0_245] : memref<1x12x20x4xf32, #tpu.memory_space<vmem>>, vector<1x8x16x4xf32>
    %149 = vector.shape_cast %148 : vector<1x8x16x4xf32> to vector<8x16x4xf32>
    %c0_246 = arith.constant 0 : index
    %c0_247 = arith.constant 0 : index
    %c0_248 = arith.constant 0 : index
    %150 = vector.load %arg12[%c0_246, %c0_247, %c0_248] : memref<8x16x4xf32, #tpu.memory_space<vmem>>, vector<8x16x4xf32>
    %151 = arith.truncf %149 : vector<8x16x4xf32> to vector<8x16x4xbf16>
    %c2_249 = arith.constant 2 : index
    %c2_250 = arith.constant 2 : index
    %c0_251 = arith.constant 0 : index
    %c0_252 = arith.constant 0 : index
    %152 = vector.load %arg3[%c2_249, %c2_250, %c0_251, %c0_252] : memref<3x3x4x4xbf16, #tpu.memory_space<vmem>>, vector<1x1x4x4xbf16>
    %153 = vector.shape_cast %152 : vector<1x1x4x4xbf16> to vector<4x4xbf16>
    %cst_253 = arith.constant dense<0.000000e+00> : vector<8x16x4xf32>
    %154 = tpu.matmul %151, %153, %cst_253 {dimension_numbers = #tpu.dot_dimension_numbers<[2], [0], [0, 1], [1], [0, 0, 0, 1, 1, 1], [], []>} : vector<8x16x4xbf16>, vector<4x4xbf16>, vector<8x16x4xf32> -> vector<8x16x4xf32>
    %155 = arith.addf %150, %154 : vector<8x16x4xf32>
    %c0_254 = arith.constant 0 : index
    %c0_255 = arith.constant 0 : index
    %c0_256 = arith.constant 0 : index
    %156 = vector.load %arg12[%c0_254, %c0_255, %c0_256] : memref<8x16x4xf32, #tpu.memory_space<vmem>>, vector<8x16x4xf32>
    tpu.vector_store %arg12[%c0_254, %c0_255, %c0_256], %155 {strides = array<i32>} : memref<8x16x4xf32, #tpu.memory_space<vmem>>, vector<8x16x4xf32>,
    %c0_257 = arith.constant 0 : index
    %c4_258 = arith.constant 4 : index
    %c4_259 = arith.constant 4 : index
    %c0_260 = arith.constant 0 : index
    %157 = vector.load %arg2[%c0_257, %c4_258, %c4_259, %c0_260] : memref<1x12x20x4xf32, #tpu.memory_space<vmem>>, vector<1x8x16x4xf32>
    %158 = vector.shape_cast %157 : vector<1x8x16x4xf32> to vector<8x16x4xf32>
    %c0_261 = arith.constant 0 : index
    %c0_262 = arith.constant 0 : index
    %c0_263 = arith.constant 0 : index
    %159 = vector.load %arg13[%c0_261, %c0_262, %c0_263] : memref<8x16x4xf32, #tpu.memory_space<vmem>>, vector<8x16x4xf32>
    %160 = arith.truncf %158 : vector<8x16x4xf32> to vector<8x16x4xbf16>
    %c2_264 = arith.constant 2 : index
    %c2_265 = arith.constant 2 : index
    %c0_266 = arith.constant 0 : index
    %c0_267 = arith.constant 0 : index
    %161 = vector.load %arg4[%c2_264, %c2_265, %c0_266, %c0_267] : memref<3x3x4x4xbf16, #tpu.memory_space<vmem>>, vector<1x1x4x4xbf16>
    %162 = vector.shape_cast %161 : vector<1x1x4x4xbf16> to vector<4x4xbf16>
    %cst_268 = arith.constant dense<0.000000e+00> : vector<8x16x4xf32>
    %163 = tpu.matmul %160, %162, %cst_268 {dimension_numbers = #tpu.dot_dimension_numbers<[2], [0], [0, 1], [1], [0, 0, 0, 1, 1, 1], [], []>} : vector<8x16x4xbf16>, vector<4x4xbf16>, vector<8x16x4xf32> -> vector<8x16x4xf32>
    %164 = arith.addf %159, %163 : vector<8x16x4xf32>
    %c0_269 = arith.constant 0 : index
    %c0_270 = arith.constant 0 : index
    %c0_271 = arith.constant 0 : index
    %165 = vector.load %arg13[%c0_269, %c0_270, %c0_271] : memref<8x16x4xf32, #tpu.memory_space<vmem>>, vector<8x16x4xf32>
    tpu.vector_store %arg13[%c0_269, %c0_270, %c0_271], %164 {strides = array<i32>} : memref<8x16x4xf32, #tpu.memory_space<vmem>>, vector<8x16x4xf32>,
    %c0_272 = arith.constant 0 : index
    %c0_273 = arith.constant 0 : index
    %c0_274 = arith.constant 0 : index
    %166 = vector.load %arg12[%c0_272, %c0_273, %c0_274] : memref<8x16x4xf32, #tpu.memory_space<vmem>>, vector<8x16x4xf32>
    %c0_275 = arith.constant 0 : index
    %c0_276 = arith.constant 0 : index
    %167 = vector.load %arg5[%c0_275, %c0_276] : memref<1x4xf32, #tpu.memory_space<vmem>>, vector<1x4xf32>
    %168 = vector.shape_cast %167 : vector<1x4xf32> to vector<4xf32>
    %169 = vector.shape_cast %168 : vector<4xf32> to vector<1x1x4xf32>
    %170 = vector.broadcast %169 : vector<1x1x4xf32> to vector<8x16x4xf32>
    %171 = arith.mulf %166, %170 : vector<8x16x4xf32>
    %c0_277 = arith.constant 0 : index
    %c0_278 = arith.constant 0 : index
    %172 = vector.load %arg6[%c0_277, %c0_278] : memref<1x4xf32, #tpu.memory_space<vmem>>, vector<1x4xf32>
    %173 = vector.shape_cast %172 : vector<1x4xf32> to vector<4xf32>
    %174 = vector.shape_cast %173 : vector<4xf32> to vector<1x1x4xf32>
    %175 = vector.broadcast %174 : vector<1x1x4xf32> to vector<8x16x4xf32>
    %176 = arith.addf %171, %175 : vector<8x16x4xf32>
    %cst_279 = arith.constant 0.000000e+00 : f32
    %177 = vector.broadcast %cst_279 : f32 to vector<8x16x4xf32>
    %178 = arith.maximumf %176, %177 : vector<8x16x4xf32>
    %c0_280 = arith.constant 0 : index
    %c0_281 = arith.constant 0 : index
    %c0_282 = arith.constant 0 : index
    %179 = vector.load %arg13[%c0_280, %c0_281, %c0_282] : memref<8x16x4xf32, #tpu.memory_space<vmem>>, vector<8x16x4xf32>
    %c0_283 = arith.constant 0 : index
    %c0_284 = arith.constant 0 : index
    %180 = vector.load %arg7[%c0_283, %c0_284] : memref<1x4xf32, #tpu.memory_space<vmem>>, vector<1x4xf32>
    %181 = vector.shape_cast %180 : vector<1x4xf32> to vector<4xf32>
    %182 = vector.shape_cast %181 : vector<4xf32> to vector<1x1x4xf32>
    %183 = vector.broadcast %182 : vector<1x1x4xf32> to vector<8x16x4xf32>
    %184 = arith.mulf %179, %183 : vector<8x16x4xf32>
    %c0_285 = arith.constant 0 : index
    %c0_286 = arith.constant 0 : index
    %185 = vector.load %arg8[%c0_285, %c0_286] : memref<1x4xf32, #tpu.memory_space<vmem>>, vector<1x4xf32>
    %186 = vector.shape_cast %185 : vector<1x4xf32> to vector<4xf32>
    %187 = vector.shape_cast %186 : vector<4xf32> to vector<1x1x4xf32>
    %188 = vector.broadcast %187 : vector<1x1x4xf32> to vector<8x16x4xf32>
    %189 = arith.addf %184, %188 : vector<8x16x4xf32>
    %cst_287 = arith.constant 0.000000e+00 : f32
    %190 = vector.broadcast %cst_287 : f32 to vector<8x16x4xf32>
    %191 = arith.maximumf %189, %190 : vector<8x16x4xf32>
    %192 = arith.truncf %178 : vector<8x16x4xf32> to vector<8x16x4xbf16>
    %c0_288 = arith.constant 0 : index
    %c0_289 = arith.constant 0 : index
    %c0_290 = arith.constant 0 : index
    %c0_291 = arith.constant 0 : index
    %193 = vector.load %arg9[%c0_288, %c0_289, %c0_290, %c0_291] : memref<1x8x16x4xbf16, #tpu.memory_space<vmem>>, vector<1x8x16x4xbf16>
    %194 = vector.shape_cast %193 : vector<1x8x16x4xbf16> to vector<8x16x4xbf16>
    %195 = vector.shape_cast %192 : vector<8x16x4xbf16> to vector<1x8x16x4xbf16>
    tpu.vector_store %arg9[%c0_288, %c0_289, %c0_290, %c0_291], %195 {strides = array<i32>} : memref<1x8x16x4xbf16, #tpu.memory_space<vmem>>, vector<1x8x16x4xbf16>,
    %196 = arith.truncf %191 : vector<8x16x4xf32> to vector<8x16x4xbf16>
    %c0_292 = arith.constant 0 : index
    %c0_293 = arith.constant 0 : index
    %c0_294 = arith.constant 0 : index
    %c0_295 = arith.constant 0 : index
    %197 = vector.load %arg10[%c0_292, %c0_293, %c0_294, %c0_295] : memref<1x8x16x4xbf16, #tpu.memory_space<vmem>>, vector<1x8x16x4xbf16>
    %198 = vector.shape_cast %197 : vector<1x8x16x4xbf16> to vector<8x16x4xbf16>
    %199 = vector.shape_cast %196 : vector<8x16x4xbf16> to vector<1x8x16x4xbf16>
    tpu.vector_store %arg10[%c0_292, %c0_293, %c0_294, %c0_295], %199 {strides = array<i32>} : memref<1x8x16x4xbf16, #tpu.memory_space<vmem>>, vector<1x8x16x4xbf16>,
    %c0_i32 = arith.constant 0 : i32
    %200 = arith.cmpi eq, %arg1, %c0_i32 : i32
    %201 = arith.extui %200 : i1 to i32
    %c0_i32_296 = arith.constant 0 : i32
    %202 = arith.cmpi ne, %201, %c0_i32_296 : i32
    scf.if %202 {
      %cst_304 = arith.constant 0.000000e+00 : f32
      %209 = vector.broadcast %cst_304 : f32 to vector<1x1x4xf32>
      %c0_305 = arith.constant 0 : index
      %c0_306 = arith.constant 0 : index
      %c0_307 = arith.constant 0 : index
      %210 = vector.load %arg11[%c0_305, %c0_306, %c0_307] : memref<1x1x4xf32, #tpu.memory_space<vmem>>, vector<1x1x4xf32>
      tpu.vector_store %arg11[%c0_305, %c0_306, %c0_307], %209 {strides = array<i32>} : memref<1x1x4xf32, #tpu.memory_space<vmem>>, vector<1x1x4xf32>,
    } else {
    }
    %c0_297 = arith.constant 0 : index
    %c0_298 = arith.constant 0 : index
    %c0_299 = arith.constant 0 : index
    %203 = vector.load %arg11[%c0_297, %c0_298, %c0_299] : memref<1x1x4xf32, #tpu.memory_space<vmem>>, vector<1x1x4xf32>
    %204 = arith.addf %178, %191 : vector<8x16x4xf32>
    %cst_300 = arith.constant dense<0.000000e+00> : vector<4xf32>
    %205 = vector.multi_reduction <add>, %204, %cst_300 [0, 1] : vector<8x16x4xf32> to vector<4xf32>
    %206 = vector.shape_cast %205 : vector<4xf32> to vector<1x1x4xf32>
    %207 = arith.addf %203, %206 : vector<1x1x4xf32>
    %c0_301 = arith.constant 0 : index
    %c0_302 = arith.constant 0 : index
    %c0_303 = arith.constant 0 : index
    %208 = vector.load %arg11[%c0_301, %c0_302, %c0_303] : memref<1x1x4xf32, #tpu.memory_space<vmem>>, vector<1x1x4xf32>
    tpu.vector_store %arg11[%c0_301, %c0_302, %c0_303], %207 {strides = array<i32>} : memref<1x1x4xf32, #tpu.memory_space<vmem>>, vector<1x1x4xf32>,
    return
  }
  func.func @transform_0(%arg0: i32, %arg1: i32) -> (i32, i32, i32, i32) {
    %c2_i32 = arith.constant 2 : i32
    %0 = arith.muli %arg0, %c2_i32 : i32
    %1 = arith.addi %0, %arg1 : i32
    %c0_i32 = arith.constant 0 : i32
    %c0_i32_0 = arith.constant 0 : i32
    %c0_i32_1 = arith.constant 0 : i32
    %c0_i32_2 = arith.constant 0 : i32
    return %1, %c0_i32, %c0_i32_0, %c0_i32_1 : i32, i32, i32, i32
  }
  func.func @transform_1(%arg0: i32, %arg1: i32) -> (i32, i32, i32, i32) {
    %c0_i32 = arith.constant 0 : i32
    %c0_i32_0 = arith.constant 0 : i32
    %c0_i32_1 = arith.constant 0 : i32
    %c0_i32_2 = arith.constant 0 : i32
    %c0_i32_3 = arith.constant 0 : i32
    return %c0_i32, %c0_i32_0, %c0_i32_1, %c0_i32_2 : i32, i32, i32, i32
  }
  func.func @transform_2(%arg0: i32, %arg1: i32) -> (i32, i32, i32, i32) {
    %c0_i32 = arith.constant 0 : i32
    %c0_i32_0 = arith.constant 0 : i32
    %c0_i32_1 = arith.constant 0 : i32
    %c0_i32_2 = arith.constant 0 : i32
    %c0_i32_3 = arith.constant 0 : i32
    return %c0_i32, %c0_i32_0, %c0_i32_1, %c0_i32_2 : i32, i32, i32, i32
  }
  func.func @transform_3(%arg0: i32, %arg1: i32) -> (i32, i32) {
    %c0_i32 = arith.constant 0 : i32
    %c0_i32_0 = arith.constant 0 : i32
    %c0_i32_1 = arith.constant 0 : i32
    return %c0_i32, %c0_i32_0 : i32, i32
  }
  func.func @transform_4(%arg0: i32, %arg1: i32) -> (i32, i32) {
    %c0_i32 = arith.constant 0 : i32
    %c0_i32_0 = arith.constant 0 : i32
    %c0_i32_1 = arith.constant 0 : i32
    return %c0_i32, %c0_i32_0 : i32, i32
  }
  func.func @transform_5(%arg0: i32, %arg1: i32) -> (i32, i32) {
    %c0_i32 = arith.constant 0 : i32
    %c0_i32_0 = arith.constant 0 : i32
    %c0_i32_1 = arith.constant 0 : i32
    return %c0_i32, %c0_i32_0 : i32, i32
  }
  func.func @transform_6(%arg0: i32, %arg1: i32) -> (i32, i32) {
    %c0_i32 = arith.constant 0 : i32
    %c0_i32_0 = arith.constant 0 : i32
    %c0_i32_1 = arith.constant 0 : i32
    return %c0_i32, %c0_i32_0 : i32, i32
  }
  func.func @transform_7(%arg0: i32, %arg1: i32) -> (i32, i32, i32, i32) {
    %c0_i32 = arith.constant 0 : i32
    %c0_i32_0 = arith.constant 0 : i32
    %c0_i32_1 = arith.constant 0 : i32
    return %arg0, %arg1, %c0_i32, %c0_i32_0 : i32, i32, i32, i32
  }
  func.func @transform_8(%arg0: i32, %arg1: i32) -> (i32, i32, i32, i32) {
    %c0_i32 = arith.constant 0 : i32
    %c0_i32_0 = arith.constant 0 : i32
    %c0_i32_1 = arith.constant 0 : i32
    return %arg0, %arg1, %c0_i32, %c0_i32_0 : i32, i32, i32, i32
  }
  func.func @transform_9(%arg0: i32, %arg1: i32) -> (i32, i32, i32) {
    %c0_i32 = arith.constant 0 : i32
    %c0_i32_0 = arith.constant 0 : i32
    %c0_i32_1 = arith.constant 0 : i32
    return %arg0, %c0_i32, %c0_i32_0 : i32, i32, i32
  }
}

module attributes {stable_mosaic.version = 11 : i64} {
  func.func @_sk_attention_kernel(%arg0: i32, %arg1: memref<2x4xf32, #tpu.memory_space<vmem>>, %arg2: memref<4x32xf32, #tpu.memory_space<vmem>>, %arg3: memref<1x32xf32, #tpu.memory_space<vmem>>, %arg4: memref<1x32xf32, #tpu.memory_space<vmem>>, %arg5: memref<32x4xf32, #tpu.memory_space<vmem>>, %arg6: memref<32x4xf32, #tpu.memory_space<vmem>>, %arg7: memref<2x4xf32, #tpu.memory_space<vmem>>, %arg8: memref<2x4xf32, #tpu.memory_space<vmem>>) attributes {dimension_semantics = [#tpu.dimension_semantics<arbitrary>], iteration_bounds = array<i64: 1>, scalar_prefetch = 0 : i64, scratch_operands = 0 : i64, tpu.core_type = #tpu.core_type<tc>, window_params = [{pipeline_mode = #tpu.pipeline_mode<synchronous>, transform_indices = @transform_0, window_bounds = array<i64: 2, 4>}, {pipeline_mode = #tpu.pipeline_mode<synchronous>, transform_indices = @transform_1, window_bounds = array<i64: 4, 32>}, {pipeline_mode = #tpu.pipeline_mode<synchronous>, transform_indices = @transform_2, window_bounds = array<i64: 1, 32>}, {pipeline_mode = #tpu.pipeline_mode<synchronous>, transform_indices = @transform_3, window_bounds = array<i64: 1, 32>}, {pipeline_mode = #tpu.pipeline_mode<synchronous>, transform_indices = @transform_4, window_bounds = array<i64: 32, 4>}, {pipeline_mode = #tpu.pipeline_mode<synchronous>, transform_indices = @transform_5, window_bounds = array<i64: 32, 4>}, {pipeline_mode = #tpu.pipeline_mode<synchronous>, transform_indices = @transform_6, window_bounds = array<i64: 2, 4>}, {pipeline_mode = #tpu.pipeline_mode<synchronous>, transform_indices = @transform_7, window_bounds = array<i64: 2, 4>}]} {
    %c0 = arith.constant 0 : index
    %c0_0 = arith.constant 0 : index
    %0 = vector.load %arg1[%c0, %c0_0] : memref<2x4xf32, #tpu.memory_space<vmem>>, vector<2x4xf32>
    %cst = arith.constant 3.906250e-03 : f32
    %1 = vector.broadcast %cst : f32 to vector<2x4xf32>
    %2 = arith.mulf %0, %1 : vector<2x4xf32>
    %c0_1 = arith.constant 0 : index
    %c0_2 = arith.constant 0 : index
    %3 = vector.load %arg2[%c0_1, %c0_2] : memref<4x32xf32, #tpu.memory_space<vmem>>, vector<4x32xf32>
    %cst_3 = arith.constant dense<0.000000e+00> : vector<2x32xf32>
    %4 = tpu.matmul %2, %3, %cst_3 {dimension_numbers = #tpu.dot_dimension_numbers<[1], [0], [0], [1], [0, 0, 1, 1], [], []>} : vector<2x4xf32>, vector<4x32xf32>, vector<2x32xf32> -> vector<2x32xf32>
    %c0_4 = arith.constant 0 : index
    %c0_5 = arith.constant 0 : index
    %5 = vector.load %arg3[%c0_4, %c0_5] : memref<1x32xf32, #tpu.memory_space<vmem>>, vector<1x32xf32>
    %6 = vector.shape_cast %5 : vector<1x32xf32> to vector<32xf32>
    %7 = vector.shape_cast %6 : vector<32xf32> to vector<1x32xf32>
    %8 = vector.broadcast %7 : vector<1x32xf32> to vector<2x32xf32>
    %9 = arith.mulf %4, %8 : vector<2x32xf32>
    %c0_6 = arith.constant 0 : index
    %c0_7 = arith.constant 0 : index
    %10 = vector.load %arg4[%c0_6, %c0_7] : memref<1x32xf32, #tpu.memory_space<vmem>>, vector<1x32xf32>
    %11 = vector.shape_cast %10 : vector<1x32xf32> to vector<32xf32>
    %12 = vector.shape_cast %11 : vector<32xf32> to vector<1x32xf32>
    %13 = vector.broadcast %12 : vector<1x32xf32> to vector<2x32xf32>
    %14 = arith.addf %9, %13 : vector<2x32xf32>
    %cst_8 = arith.constant 0.000000e+00 : f32
    %15 = vector.broadcast %cst_8 : f32 to vector<2x32xf32>
    %16 = arith.maximumf %14, %15 : vector<2x32xf32>
    %c0_9 = arith.constant 0 : index
    %c0_10 = arith.constant 0 : index
    %17 = vector.load %arg5[%c0_9, %c0_10] : memref<32x4xf32, #tpu.memory_space<vmem>>, vector<32x4xf32>
    %cst_11 = arith.constant dense<0.000000e+00> : vector<2x4xf32>
    %18 = tpu.matmul %16, %17, %cst_11 {dimension_numbers = #tpu.dot_dimension_numbers<[1], [0], [0], [1], [0, 0, 1, 1], [], []>} : vector<2x32xf32>, vector<32x4xf32>, vector<2x4xf32> -> vector<2x4xf32>
    %c0_12 = arith.constant 0 : index
    %c0_13 = arith.constant 0 : index
    %19 = vector.load %arg6[%c0_12, %c0_13] : memref<32x4xf32, #tpu.memory_space<vmem>>, vector<32x4xf32>
    %cst_14 = arith.constant dense<0.000000e+00> : vector<2x4xf32>
    %20 = tpu.matmul %16, %19, %cst_14 {dimension_numbers = #tpu.dot_dimension_numbers<[1], [0], [0], [1], [0, 0, 1, 1], [], []>} : vector<2x32xf32>, vector<32x4xf32>, vector<2x4xf32> -> vector<2x4xf32>
    %21 = arith.maximumf %18, %20 : vector<2x4xf32>
    %22 = arith.subf %18, %21 : vector<2x4xf32>
    %23 = math.exp %22 : vector<2x4xf32>
    %24 = arith.subf %20, %21 : vector<2x4xf32>
    %25 = math.exp %24 : vector<2x4xf32>
    %26 = arith.addf %23, %25 : vector<2x4xf32>
    %27 = tpu.reciprocal %26 {approx = true} : vector<2x4xf32> -> vector<2x4xf32>
    %28 = arith.mulf %23, %27 : vector<2x4xf32>
    %c0_15 = arith.constant 0 : index
    %c0_16 = arith.constant 0 : index
    %29 = vector.load %arg7[%c0_15, %c0_16] : memref<2x4xf32, #tpu.memory_space<vmem>>, vector<2x4xf32>
    tpu.vector_store %arg7[%c0_15, %c0_16], %28 {strides = array<i32>} : memref<2x4xf32, #tpu.memory_space<vmem>>, vector<2x4xf32>,
    %30 = arith.mulf %25, %27 : vector<2x4xf32>
    %c0_17 = arith.constant 0 : index
    %c0_18 = arith.constant 0 : index
    %31 = vector.load %arg8[%c0_17, %c0_18] : memref<2x4xf32, #tpu.memory_space<vmem>>, vector<2x4xf32>
    tpu.vector_store %arg8[%c0_17, %c0_18], %30 {strides = array<i32>} : memref<2x4xf32, #tpu.memory_space<vmem>>, vector<2x4xf32>,
    return
  }
  func.func @transform_0(%arg0: i32) -> (i32, i32) {
    %c0_i32 = arith.constant 0 : i32
    %c0_i32_0 = arith.constant 0 : i32
    %c0_i32_1 = arith.constant 0 : i32
    return %c0_i32, %c0_i32_0 : i32, i32
  }
  func.func @transform_1(%arg0: i32) -> (i32, i32) {
    %c0_i32 = arith.constant 0 : i32
    %c0_i32_0 = arith.constant 0 : i32
    %c0_i32_1 = arith.constant 0 : i32
    return %c0_i32, %c0_i32_0 : i32, i32
  }
  func.func @transform_2(%arg0: i32) -> (i32, i32) {
    %c0_i32 = arith.constant 0 : i32
    %c0_i32_0 = arith.constant 0 : i32
    %c0_i32_1 = arith.constant 0 : i32
    return %c0_i32, %c0_i32_0 : i32, i32
  }
  func.func @transform_3(%arg0: i32) -> (i32, i32) {
    %c0_i32 = arith.constant 0 : i32
    %c0_i32_0 = arith.constant 0 : i32
    %c0_i32_1 = arith.constant 0 : i32
    return %c0_i32, %c0_i32_0 : i32, i32
  }
  func.func @transform_4(%arg0: i32) -> (i32, i32) {
    %c0_i32 = arith.constant 0 : i32
    %c0_i32_0 = arith.constant 0 : i32
    %c0_i32_1 = arith.constant 0 : i32
    return %c0_i32, %c0_i32_0 : i32, i32
  }
  func.func @transform_5(%arg0: i32) -> (i32, i32) {
    %c0_i32 = arith.constant 0 : i32
    %c0_i32_0 = arith.constant 0 : i32
    %c0_i32_1 = arith.constant 0 : i32
    return %c0_i32, %c0_i32_0 : i32, i32
  }
  func.func @transform_6(%arg0: i32) -> (i32, i32) {
    %c0_i32 = arith.constant 0 : i32
    %c0_i32_0 = arith.constant 0 : i32
    %c0_i32_1 = arith.constant 0 : i32
    return %c0_i32, %c0_i32_0 : i32, i32
  }
  func.func @transform_7(%arg0: i32) -> (i32, i32) {
    %c0_i32 = arith.constant 0 : i32
    %c0_i32_0 = arith.constant 0 : i32
    %c0_i32_1 = arith.constant 0 : i32
    return %c0_i32, %c0_i32_0 : i32, i32
  }
}

module attributes {stable_mosaic.version = 11 : i64} {
  func.func @_sk_apply_conv1x1_add_relu_kernel(%arg0: i32, %arg1: i32, %arg2: memref<1x256x4xbf16, #tpu.memory_space<vmem>>, %arg3: memref<1x256x4xbf16, #tpu.memory_space<vmem>>, %arg4: memref<1x1x4xf32, #tpu.memory_space<vmem>>, %arg5: memref<1x1x4xf32, #tpu.memory_space<vmem>>, %arg6: memref<4x16xbf16, #tpu.memory_space<vmem>>, %arg7: memref<1x16xf32, #tpu.memory_space<vmem>>, %arg8: memref<1x16xf32, #tpu.memory_space<vmem>>, %arg9: memref<1x256x16xf32, #tpu.memory_space<vmem>>, %arg10: memref<1x256x16xf32, #tpu.memory_space<vmem>>) attributes {dimension_semantics = [#tpu.dimension_semantics<parallel>, #tpu.dimension_semantics<parallel>], iteration_bounds = array<i64: 2, 1>, scalar_prefetch = 0 : i64, scratch_operands = 0 : i64, tpu.core_type = #tpu.core_type<tc>, window_params = [{transform_indices = @transform_0, window_bounds = array<i64: 1, 256, 4>}, {transform_indices = @transform_1, window_bounds = array<i64: 1, 256, 4>}, {transform_indices = @transform_2, window_bounds = array<i64: 1, 1, 4>}, {transform_indices = @transform_3, window_bounds = array<i64: 1, 1, 4>}, {pipeline_mode = #tpu.pipeline_mode<synchronous>, transform_indices = @transform_4, window_bounds = array<i64: 4, 16>}, {pipeline_mode = #tpu.pipeline_mode<synchronous>, transform_indices = @transform_5, window_bounds = array<i64: 1, 16>}, {pipeline_mode = #tpu.pipeline_mode<synchronous>, transform_indices = @transform_6, window_bounds = array<i64: 1, 16>}, {transform_indices = @transform_7, window_bounds = array<i64: 1, 256, 16>}, {transform_indices = @transform_8, window_bounds = array<i64: 1, 256, 16>}]} {
    %c0 = arith.constant 0 : index
    %c0_0 = arith.constant 0 : index
    %c0_1 = arith.constant 0 : index
    %0 = vector.load %arg4[%c0, %c0_0, %c0_1] : memref<1x1x4xf32, #tpu.memory_space<vmem>>, vector<1x1x4xf32>
    %1 = vector.shape_cast %0 : vector<1x1x4xf32> to vector<1x4xf32>
    %c0_2 = arith.constant 0 : index
    %c0_3 = arith.constant 0 : index
    %c0_4 = arith.constant 0 : index
    %2 = vector.load %arg2[%c0_2, %c0_3, %c0_4] : memref<1x256x4xbf16, #tpu.memory_space<vmem>>, vector<1x256x4xbf16>
    %3 = vector.shape_cast %2 : vector<1x256x4xbf16> to vector<256x4xbf16>
    %4 = arith.extf %3 : vector<256x4xbf16> to vector<256x4xf32>
    %5 = vector.broadcast %1 : vector<1x4xf32> to vector<256x4xf32>
    %6 = arith.mulf %5, %4 : vector<256x4xf32>
    %c0_5 = arith.constant 0 : index
    %c0_6 = arith.constant 0 : index
    %c0_7 = arith.constant 0 : index
    %7 = vector.load %arg5[%c0_5, %c0_6, %c0_7] : memref<1x1x4xf32, #tpu.memory_space<vmem>>, vector<1x1x4xf32>
    %8 = vector.shape_cast %7 : vector<1x1x4xf32> to vector<1x4xf32>
    %c0_8 = arith.constant 0 : index
    %c0_9 = arith.constant 0 : index
    %c0_10 = arith.constant 0 : index
    %9 = vector.load %arg3[%c0_8, %c0_9, %c0_10] : memref<1x256x4xbf16, #tpu.memory_space<vmem>>, vector<1x256x4xbf16>
    %10 = vector.shape_cast %9 : vector<1x256x4xbf16> to vector<256x4xbf16>
    %11 = arith.extf %10 : vector<256x4xbf16> to vector<256x4xf32>
    %12 = vector.broadcast %8 : vector<1x4xf32> to vector<256x4xf32>
    %13 = arith.mulf %12, %11 : vector<256x4xf32>
    %14 = arith.addf %6, %13 : vector<256x4xf32>
    %15 = arith.truncf %14 : vector<256x4xf32> to vector<256x4xbf16>
    %c0_11 = arith.constant 0 : index
    %c0_12 = arith.constant 0 : index
    %16 = vector.load %arg6[%c0_11, %c0_12] : memref<4x16xbf16, #tpu.memory_space<vmem>>, vector<4x16xbf16>
    %cst = arith.constant dense<0.000000e+00> : vector<256x16xf32>
    %17 = tpu.matmul %15, %16, %cst {dimension_numbers = #tpu.dot_dimension_numbers<[1], [0], [0], [1], [0, 0, 1, 1], [], []>} : vector<256x4xbf16>, vector<4x16xbf16>, vector<256x16xf32> -> vector<256x16xf32>
    %c0_13 = arith.constant 0 : index
    %c0_14 = arith.constant 0 : index
    %18 = vector.load %arg7[%c0_13, %c0_14] : memref<1x16xf32, #tpu.memory_space<vmem>>, vector<1x16xf32>
    %19 = vector.shape_cast %18 : vector<1x16xf32> to vector<16xf32>
    %20 = vector.shape_cast %19 : vector<16xf32> to vector<1x16xf32>
    %21 = vector.broadcast %20 : vector<1x16xf32> to vector<256x16xf32>
    %22 = arith.mulf %17, %21 : vector<256x16xf32>
    %c0_15 = arith.constant 0 : index
    %c0_16 = arith.constant 0 : index
    %23 = vector.load %arg8[%c0_15, %c0_16] : memref<1x16xf32, #tpu.memory_space<vmem>>, vector<1x16xf32>
    %24 = vector.shape_cast %23 : vector<1x16xf32> to vector<16xf32>
    %25 = vector.shape_cast %24 : vector<16xf32> to vector<1x16xf32>
    %26 = vector.broadcast %25 : vector<1x16xf32> to vector<256x16xf32>
    %27 = arith.addf %22, %26 : vector<256x16xf32>
    %c0_17 = arith.constant 0 : index
    %c0_18 = arith.constant 0 : index
    %c0_19 = arith.constant 0 : index
    %28 = vector.load %arg9[%c0_17, %c0_18, %c0_19] : memref<1x256x16xf32, #tpu.memory_space<vmem>>, vector<1x256x16xf32>
    %29 = vector.shape_cast %28 : vector<1x256x16xf32> to vector<256x16xf32>
    %30 = arith.addf %27, %29 : vector<256x16xf32>
    %cst_20 = arith.constant 0.000000e+00 : f32
    %31 = vector.broadcast %cst_20 : f32 to vector<256x16xf32>
    %32 = arith.maximumf %30, %31 : vector<256x16xf32>
    %c0_21 = arith.constant 0 : index
    %c0_22 = arith.constant 0 : index
    %c0_23 = arith.constant 0 : index
    %33 = vector.load %arg10[%c0_21, %c0_22, %c0_23] : memref<1x256x16xf32, #tpu.memory_space<vmem>>, vector<1x256x16xf32>
    %34 = vector.shape_cast %33 : vector<1x256x16xf32> to vector<256x16xf32>
    %35 = vector.shape_cast %32 : vector<256x16xf32> to vector<1x256x16xf32>
    tpu.vector_store %arg10[%c0_21, %c0_22, %c0_23], %35 {strides = array<i32>} : memref<1x256x16xf32, #tpu.memory_space<vmem>>, vector<1x256x16xf32>,
    return
  }
  func.func @transform_0(%arg0: i32, %arg1: i32) -> (i32, i32, i32) {
    %c0_i32 = arith.constant 0 : i32
    %c0_i32_0 = arith.constant 0 : i32
    return %arg0, %arg1, %c0_i32 : i32, i32, i32
  }
  func.func @transform_1(%arg0: i32, %arg1: i32) -> (i32, i32, i32) {
    %c0_i32 = arith.constant 0 : i32
    %c0_i32_0 = arith.constant 0 : i32
    return %arg0, %arg1, %c0_i32 : i32, i32, i32
  }
  func.func @transform_2(%arg0: i32, %arg1: i32) -> (i32, i32, i32) {
    %c0_i32 = arith.constant 0 : i32
    %c0_i32_0 = arith.constant 0 : i32
    %c0_i32_1 = arith.constant 0 : i32
    return %arg0, %c0_i32, %c0_i32_0 : i32, i32, i32
  }
  func.func @transform_3(%arg0: i32, %arg1: i32) -> (i32, i32, i32) {
    %c0_i32 = arith.constant 0 : i32
    %c0_i32_0 = arith.constant 0 : i32
    %c0_i32_1 = arith.constant 0 : i32
    return %arg0, %c0_i32, %c0_i32_0 : i32, i32, i32
  }
  func.func @transform_4(%arg0: i32, %arg1: i32) -> (i32, i32) {
    %c0_i32 = arith.constant 0 : i32
    %c0_i32_0 = arith.constant 0 : i32
    %c0_i32_1 = arith.constant 0 : i32
    return %c0_i32, %c0_i32_0 : i32, i32
  }
  func.func @transform_5(%arg0: i32, %arg1: i32) -> (i32, i32) {
    %c0_i32 = arith.constant 0 : i32
    %c0_i32_0 = arith.constant 0 : i32
    %c0_i32_1 = arith.constant 0 : i32
    return %c0_i32, %c0_i32_0 : i32, i32
  }
  func.func @transform_6(%arg0: i32, %arg1: i32) -> (i32, i32) {
    %c0_i32 = arith.constant 0 : i32
    %c0_i32_0 = arith.constant 0 : i32
    %c0_i32_1 = arith.constant 0 : i32
    return %c0_i32, %c0_i32_0 : i32, i32
  }
  func.func @transform_7(%arg0: i32, %arg1: i32) -> (i32, i32, i32) {
    %c0_i32 = arith.constant 0 : i32
    %c0_i32_0 = arith.constant 0 : i32
    return %arg0, %arg1, %c0_i32 : i32, i32, i32
  }
  func.func @transform_8(%arg0: i32, %arg1: i32) -> (i32, i32, i32) {
    %c0_i32 = arith.constant 0 : i32
    %c0_i32_0 = arith.constant 0 : i32
    return %arg0, %arg1, %c0_i32 : i32, i32, i32
  }
}

</mosaic_0001>

<llo_original>
// kernel: sk_bottleneck_forward.4
$region0: #{sk_bottleneck_forward.4}
  #allocation0 [shape = 'u32[]', space=smem, size = 0x4, offset = 0x4, fixed_abs, tag = 'smem constant byte address 0x4 - core index']
  #allocation1 [shape = 'u32[144,128]{1,0:T(1,128)}', space=vmem, size = 0x12000, scoped, tag = 'internal scratch']
  %s0 = inlined_call_operand.vmem [shape: f32[512,16], index: 0, kind: input, shape index: {}]
  %s1 = inlined_call_operand.vmem [shape: bf16[16,4], index: 1, kind: input, shape index: {}]
  %s2 = inlined_call_operand.vmem [shape: f32[1,4], index: 2, kind: input, shape index: {}]
  %s3 = inlined_call_operand.vmem [shape: f32[1,4], index: 3, kind: input, shape index: {}]
  %s4 = inlined_call_operand.vmem [shape: f32[512,4], index: 4, kind: output, shape index: {}]
  %s5 = sld [smem:[#allocation0]]
  $region26: #{sk_bottleneck_forward.4} parent=0
    _
  %s7 = ssub.s32 1, %s5
  %s8 = scalar_select 0, %s7, %s5
  // Predicated region
  $region2: #{sk_bottleneck_forward.4} parent=0 // pred_check
    _
  $region3: #{sk_bottleneck_forward.4} parent=0 // pred_check_branch
    %10 = sbr.rel (0) target = $region5
  $region4: #{sk_bottleneck_forward.4} parent=0 // pred_region
    _
  $region5: #{sk_bottleneck_forward.4} parent=0 // pred_fallthru
    _
  // Predicated region
  $region6: #{sk_bottleneck_forward.4} parent=0 // pred_check
    _
  $region7: #{sk_bottleneck_forward.4} parent=0 // pred_check_branch
    %12 = sbr.rel (0) target = $region9
  $region8: #{sk_bottleneck_forward.4} parent=0 // pred_region
    _
  $region9: #{sk_bottleneck_forward.4} parent=0 // pred_fallthru
    _
  // Predicated region
  $region10: #{sk_bottleneck_forward.4} parent=0 // pred_check
    _
  $region11: #{sk_bottleneck_forward.4} parent=0 // pred_check_branch
    %14 = sbr.rel (0) target = $region13
  $region12: #{sk_bottleneck_forward.4} parent=0 // pred_region
    _
  $region13: #{sk_bottleneck_forward.4} parent=0 // pred_fallthru
    _
  // Predicated region
  $region14: #{sk_bottleneck_forward.4} parent=0 // pred_check
    _
  $region15: #{sk_bottleneck_forward.4} parent=0 // pred_check_branch
    %16 = sbr.rel (0) target = $region17
  $region16: #{sk_bottleneck_forward.4} parent=0 // pred_region
    _
  $region17: #{sk_bottleneck_forward.4} parent=0 // pred_fallthru
    _
  %v18 = vld [vmem:[%s0] sm:$0xff]
  %v19 = vld [vmem:[%s0 + $0x8] sm:$0xff]
  %v20 = vld [vmem:[%s0 + $0x10] sm:$0xff]
  %v21 = vld [vmem:[%s0 + $0x18] sm:$0xff]
  %v22 = vld [vmem:[%s0 + $0x20] sm:$0xff]
  %v23 = vld [vmem:[%s0 + $0x28] sm:$0xff]
  %v24 = vld [vmem:[%s0 + $0x30] sm:$0xff]
  %v25 = vld [vmem:[%s0 + $0x38] sm:$0xff]
  %v26 = vld [vmem:[%s0 + $0x40] sm:$0xff]
  %v27 = vld [vmem:[%s0 + $0x48] sm:$0xff]
  %v28 = vld [vmem:[%s0 + $0x50] sm:$0xff]
  %v29 = vld [vmem:[%s0 + $0x58] sm:$0xff]
  %v30 = vld [vmem:[%s0 + $0x60] sm:$0xff]
  %v31 = vld [vmem:[%s0 + $0x68] sm:$0xff]
  %v32 = vld [vmem:[%s0 + $0x70] sm:$0xff]
  %v33 = vld [vmem:[%s0 + $0x78] sm:$0xff]
  %v34 = vld [vmem:[%s0 + $0x80] sm:$0xff]
  %v35 = vld [vmem:[%s0 + $0x88] sm:$0xff]
  %v36 = vld [vmem:[%s0 + $0x90] sm:$0xff]
  %v37 = vld [vmem:[%s0 + $0x98] sm:$0xff]
  %v38 = vld [vmem:[%s0 + $0xa0] sm:$0xff]
  %v39 = vld [vmem:[%s0 + $0xa8] sm:$0xff]
  %v40 = vld [vmem:[%s0 + $0xb0] sm:$0xff]
  %v41 = vld [vmem:[%s0 + $0xb8] sm:$0xff]
  %v42 = vld [vmem:[%s0 + $0xc0] sm:$0xff]
  %v43 = vld [vmem:[%s0 + $0xc8] sm:$0xff]
  %v44 = vld [vmem:[%s0 + $0xd0] sm:$0xff]
  %v45 = vld [vmem:[%s0 + $0xd8] sm:$0xff]
  %v46 = vld [vmem:[%s0 + $0xe0] sm:$0xff]
  %v47 = vld [vmem:[%s0 + $0xe8] sm:$0xff]
  %v48 = vld [vmem:[%s0 + $0xf0] sm:$0xff]
  %v49 = vld [vmem:[%s0 + $0xf8] sm:$0xff]
  %v50 = vld [vmem:[%s0 + $0x100] sm:$0xff]
  %v51 = vld [vmem:[%s0 + $0x108] sm:$0xff]
  %v52 = vld [vmem:[%s0 + $0x110] sm:$0xff]
  %v53 = vld [vmem:[%s0 + $0x118] sm:$0xff]
  %v54 = vld [vmem:[%s0 + $0x120] sm:$0xff]
  %v55 = vld [vmem:[%s0 + $0x128] sm:$0xff]
  %v56 = vld [vmem:[%s0 + $0x130] sm:$0xff]
  %v57 = vld [vmem:[%s0 + $0x138] sm:$0xff]
  %v58 = vld [vmem:[%s0 + $0x140] sm:$0xff]
  %v59 = vld [vmem:[%s0 + $0x148] sm:$0xff]
  %v60 = vld [vmem:[%s0 + $0x150] sm:$0xff]
  %v61 = vld [vmem:[%s0 + $0x158] sm:$0xff]
  %v62 = vld [vmem:[%s0 + $0x160] sm:$0xff]
  %v63 = vld [vmem:[%s0 + $0x168] sm:$0xff]
  %v64 = vld [vmem:[%s0 + $0x170] sm:$0xff]
  %v65 = vld [vmem:[%s0 + $0x178] sm:$0xff]
  %v66 = vld [vmem:[%s0 + $0x180] sm:$0xff]
  %v67 = vld [vmem:[%s0 + $0x188] sm:$0xff]
  %v68 = vld [vmem:[%s0 + $0x190] sm:$0xff]
  %v69 = vld [vmem:[%s0 + $0x198] sm:$0xff]
  %v70 = vld [vmem:[%s0 + $0x1a0] sm:$0xff]
  %v71 = vld [vmem:[%s0 + $0x1a8] sm:$0xff]
  %v72 = vld [vmem:[%s0 + $0x1b0] sm:$0xff]
  %v73 = vld [vmem:[%s0 + $0x1b8] sm:$0xff]
  %v74 = vld [vmem:[%s0 + $0x1c0] sm:$0xff]
  %v75 = vld [vmem:[%s0 + $0x1c8] sm:$0xff]
  %v76 = vld [vmem:[%s0 + $0x1d0] sm:$0xff]
  %v77 = vld [vmem:[%s0 + $0x1d8] sm:$0xff]
  %v78 = vld [vmem:[%s0 + $0x1e0] sm:$0xff]
  %v79 = vld [vmem:[%s0 + $0x1e8] sm:$0xff]
  %v80 = vld [vmem:[%s0 + $0x1f0] sm:$0xff]
  %v81 = vld [vmem:[%s0 + $0x1f8] sm:$0xff]
  %v82 = vpack.c.bf16 %v19, %v18
  %v83 = vpack.c.bf16 %v21, %v20
  %v84 = vpack.c.bf16 %v23, %v22
  %v85 = vpack.c.bf16 %v25, %v24
  %v86 = vpack.c.bf16 %v27, %v26
  %v87 = vpack.c.bf16 %v29, %v28
  %v88 = vpack.c.bf16 %v31, %v30
  %v89 = vpack.c.bf16 %v33, %v32
  %v90 = vpack.c.bf16 %v35, %v34
  %v91 = vpack.c.bf16 %v37, %v36
  %v92 = vpack.c.bf16 %v39, %v38
  %v93 = vpack.c.bf16 %v41, %v40
  %v94 = vpack.c.bf16 %v43, %v42
  %v95 = vpack.c.bf16 %v45, %v44
  %v96 = vpack.c.bf16 %v47, %v46
  %v97 = vpack.c.bf16 %v49, %v48
  %v98 = vpack.c.bf16 %v51, %v50
  %v99 = vpack.c.bf16 %v53, %v52
  %v100 = vpack.c.bf16 %v55, %v54
  %v101 = vpack.c.bf16 %v57, %v56
  %v102 = vpack.c.bf16 %v59, %v58
  %v103 = vpack.c.bf16 %v61, %v60
  %v104 = vpack.c.bf16 %v63, %v62
  %v105 = vpack.c.bf16 %v65, %v64
  %v106 = vpack.c.bf16 %v67, %v66
  %v107 = vpack.c.bf16 %v69, %v68
  %v108 = vpack.c.bf16 %v71, %v70
  %v109 = vpack.c.bf16 %v73, %v72
  %v110 = vpack.c.bf16 %v75, %v74
  %v111 = vpack.c.bf16 %v77, %v76
  %v112 = vpack.c.bf16 %v79, %v78
  %v113 = vpack.c.bf16 %v81, %v80
  %v114 = vld [vmem:[%s1] sm:$0xf]
  %v115 = vld [vmem:[%s1 + $0x4] sm:$0xf]
  %v118 = vunpack.c.l.b16 %v114
  %v119 = vunpack.c.l.b16 %v115
  %v120 = vpack.c.b16 %v119, %v118
  %vm122 = vcmask 130048
  %v124 = vsel %vm122, %v82, 0
  %v127 = vsel %vm122, %v83, 0
  %v130 = vsel %vm122, %v84, 0
  %v133 = vsel %vm122, %v85, 0
  %v136 = vsel %vm122, %v86, 0
  %v139 = vsel %vm122, %v87, 0
  %v142 = vsel %vm122, %v88, 0
  %v145 = vsel %vm122, %v89, 0
  %v148 = vsel %vm122, %v90, 0
  %v151 = vsel %vm122, %v91, 0
  %v154 = vsel %vm122, %v92, 0
  %v157 = vsel %vm122, %v93, 0
  %v160 = vsel %vm122, %v94, 0
  %v163 = vsel %vm122, %v95, 0
  %v166 = vsel %vm122, %v96, 0
  %v169 = vsel %vm122, %v97, 0
  %v172 = vsel %vm122, %v98, 0
  %v175 = vsel %vm122, %v99, 0
  %v178 = vsel %vm122, %v100, 0
  %v181 = vsel %vm122, %v101, 0
  %v184 = vsel %vm122, %v102, 0
  %v187 = vsel %vm122, %v103, 0
  %v190 = vsel %vm122, %v104, 0
  %v193 = vsel %vm122, %v105, 0
  %v196 = vsel %vm122, %v106, 0
  %v199 = vsel %vm122, %v107, 0
  %v202 = vsel %vm122, %v108, 0
  %v205 = vsel %vm122, %v109, 0
  %v208 = vsel %vm122, %v110, 0
  %v211 = vsel %vm122, %v111, 0
  %v214 = vsel %vm122, %v112, 0
  %v217 = vsel %vm122, %v113, 0
  %219 = vmatprep.subr.bf16.mxu0 0
  %220 = vmatpush1.bf16.msra.mxu0 %v120
  %221 = vmatprep.subr.bf16.mxu0 0
  %222 = vmatpush1.bf16.msra.mxu0 0
  %223 = vmatprep.subr.bf16.mxu0 0
  %224 = vmatpush1.bf16.msra.mxu0 0
  %225 = vmatprep.subr.bf16.mxu0 0
  %226 = vmatpush1.bf16.msra.mxu0 0
  %227 = vmatprep.subr.bf16.mxu0 0
  %228 = vmatpush1.bf16.msra.mxu0 0
  %229 = vmatprep.subr.bf16.mxu0 0
  %230 = vmatpush1.bf16.msra.mxu0 0
  %231 = vmatprep.subr.bf16.mxu0 0
  %232 = vmatpush1.bf16.msra.mxu0 0
  %233 = vmatprep.subr.bf16.mxu0 0
  %234 = vmatpush1.bf16.msra.mxu0 0
  %235 = vmatprep.subr.bf16.mxu0 0
  %236 = vmatpush1.bf16.msra.mxu0 0
  %237 = vmatprep.subr.bf16.mxu0 0
  %238 = vmatpush1.bf16.msra.mxu0 0
  %239 = vmatprep.subr.bf16.mxu0 0
  %240 = vmatpush1.bf16.msra.mxu0 0
  %241 = vmatprep.subr.bf16.mxu0 0
  %242 = vmatpush1.bf16.msra.mxu0 0
  %243 = vmatprep.subr.bf16.mxu0 0
  %244 = vmatpush1.bf16.msra.mxu0 0
  %245 = vmatprep.subr.bf16.mxu0 0
  %246 = vmatpush1.bf16.msra.mxu0 0
  %247 = vmatprep.subr.bf16.mxu0 0
  %248 = vmatpush1.bf16.msra.mxu0 0
  %249 = vmatprep.subr.bf16.mxu0 0
  %250 = vmatpush1.bf16.msra.mxu0 0
  %251 = vmatprep.mubr.bf16.mxu0 0
  %252 = vmatmul.mubr.bf16.gmra.mrb[0].mxu0 %v124
  %v253 = vpop.f32.mrb[0].mxu0
  %v254 = vadd.f32 0.0, %v253
  %v255 = vpop.f32.mrb[0].mxu0
  %v256 = vpop.f32.mrb[0].mxu0
  %v257 = vadd.f32 0.0, %v256
  %v258 = vpop.f32.mrb[0].mxu0
  %259 = vmatprep.mubr.bf16.mxu0 0
  %260 = vmatmul.mubr.bf16.gmra.mrb[0].mxu0 %v127
  %v261 = vpop.f32.mrb[0].mxu0
  %v262 = vadd.f32 0.0, %v261
  %v263 = vpop.f32.mrb[0].mxu0
  %v264 = vpop.f32.mrb[0].mxu0
  %v265 = vadd.f32 0.0, %v264
  %v266 = vpop.f32.mrb[0].mxu0
  %267 = vmatprep.mubr.bf16.mxu0 0
  %268 = vmatmul.mubr.bf16.gmra.mrb[0].mxu0 %v130
  %v269 = vpop.f32.mrb[0].mxu0
  %v270 = vadd.f32 0.0, %v269
  %v271 = vpop.f32.mrb[0].mxu0
  %v272 = vpop.f32.mrb[0].mxu0
  %v273 = vadd.f32 0.0, %v272
  %v274 = vpop.f32.mrb[0].mxu0
  %275 = vmatprep.mubr.bf16.mxu0 0
  %276 = vmatmul.mubr.bf16.gmra.mrb[0].mxu0 %v133
  %v277 = vpop.f32.mrb[0].mxu0
  %v278 = vadd.f32 0.0, %v277
  %v279 = vpop.f32.mrb[0].mxu0
  %v280 = vpop.f32.mrb[0].mxu0
  %v281 = vadd.f32 0.0, %v280
  %v282 = vpop.f32.mrb[0].mxu0
  %283 = vmatprep.mubr.bf16.mxu0 0
  %284 = vmatmul.mubr.bf16.gmra.mrb[0].mxu0 %v136
  %v285 = vpop.f32.mrb[0].mxu0
  %v286 = vadd.f32 0.0, %v285
  %v287 = vpop.f32.mrb[0].mxu0
  %v288 = vpop.f32.mrb[0].mxu0
  %v289 = vadd.f32 0.0, %v288
  %v290 = vpop.f32.mrb[0].mxu0
  %291 = vmatprep.mubr.bf16.mxu0 0
  %292 = vmatmul.mubr.bf16.gmra.mrb[0].mxu0 %v139
  %v293 = vpop.f32.mrb[0].mxu0
  %v294 = vadd.f32 0.0, %v293
  %v295 = vpop.f32.mrb[0].mxu0
  %v296 = vpop.f32.mrb[0].mxu0
  %v297 = vadd.f32 0.0, %v296
  %v298 = vpop.f32.mrb[0].mxu0
  %299 = vmatprep.mubr.bf16.mxu0 0
  %300 = vmatmul.mubr.bf16.gmra.mrb[0].mxu0 %v142
  %v301 = vpop.f32.mrb[0].mxu0
  %v302 = vadd.f32 0.0, %v301
  %v303 = vpop.f32.mrb[0].mxu0
  %v304 = vpop.f32.mrb[0].mxu0
  %v305 = vadd.f32 0.0, %v304
  %v306 = vpop.f32.mrb[0].mxu0
  %307 = vmatprep.mubr.bf16.mxu0 0
  %308 = vmatmul.mubr.bf16.gmra.mrb[0].mxu0 %v145
  %v309 = vpop.f32.mrb[0].mxu0
  %v310 = vadd.f32 0.0, %v309
  %v311 = vpop.f32.mrb[0].mxu0
  %v312 = vpop.f32.mrb[0].mxu0
  %v313 = vadd.f32 0.0, %v312
  %v314 = vpop.f32.mrb[0].mxu0
  %315 = vmatprep.mubr.bf16.mxu0 0
  %316 = vmatmul.mubr.bf16.gmra.mrb[0].mxu0 %v148
  %v317 = vpop.f32.mrb[0].mxu0
  %v318 = vadd.f32 0.0, %v317
  %v319 = vpop.f32.mrb[0].mxu0
  %v320 = vpop.f32.mrb[0].mxu0
  %v321 = vadd.f32 0.0, %v320
  %v322 = vpop.f32.mrb[0].mxu0
  %323 = vmatprep.mubr.bf16.mxu0 0
  %324 = vmatmul.mubr.bf16.gmra.mrb[0].mxu0 %v151
  %v325 = vpop.f32.mrb[0].mxu0
  %v326 = vadd.f32 0.0, %v325
  %v327 = vpop.f32.mrb[0].mxu0
  %v328 = vpop.f32.mrb[0].mxu0
  %v329 = vadd.f32 0.0, %v328
  %v330 = vpop.f32.mrb[0].mxu0
  %331 = vmatprep.mubr.bf16.mxu0 0
  %332 = vmatmul.mubr.bf16.gmra.mrb[0].mxu0 %v154
  %v333 = vpop.f32.mrb[0].mxu0
  %v334 = vadd.f32 0.0, %v333
  %v335 = vpop.f32.mrb[0].mxu0
  %v336 = vpop.f32.mrb[0].mxu0
  %v337 = vadd.f32 0.0, %v336
  %v338 = vpop.f32.mrb[0].mxu0
  %339 = vmatprep.mubr.bf16.mxu0 0
  %340 = vmatmul.mubr.bf16.gmra.mrb[0].mxu0 %v157
  %v341 = vpop.f32.mrb[0].mxu0
  %v342 = vadd.f32 0.0, %v341
  %v343 = vpop.f32.mrb[0].mxu0
  %v344 = vpop.f32.mrb[0].mxu0
  %v345 = vadd.f32 0.0, %v344
  %v346 = vpop.f32.mrb[0].mxu0
  %347 = vmatprep.mubr.bf16.mxu0 0
  %348 = vmatmul.mubr.bf16.gmra.mrb[0].mxu0 %v160
  %v349 = vpop.f32.mrb[0].mxu0
  %v350 = vadd.f32 0.0, %v349
  %v351 = vpop.f32.mrb[0].mxu0
  %v352 = vpop.f32.mrb[0].mxu0
  %v353 = vadd.f32 0.0, %v352
  %v354 = vpop.f32.mrb[0].mxu0
  %355 = vmatprep.mubr.bf16.mxu0 0
  %356 = vmatmul.mubr.bf16.gmra.mrb[0].mxu0 %v163
  %v357 = vpop.f32.mrb[0].mxu0
  %v358 = vadd.f32 0.0, %v357
  %v359 = vpop.f32.mrb[0].mxu0
  %v360 = vpop.f32.mrb[0].mxu0
  %v361 = vadd.f32 0.0, %v360
  %v362 = vpop.f32.mrb[0].mxu0
  %363 = vmatprep.mubr.bf16.mxu0 0
  %364 = vmatmul.mubr.bf16.gmra.mrb[0].mxu0 %v166
  %v365 = vpop.f32.mrb[0].mxu0
  %v366 = vadd.f32 0.0, %v365
  %v367 = vpop.f32.mrb[0].mxu0
  %v368 = vpop.f32.mrb[0].mxu0
  %v369 = vadd.f32 0.0, %v368
  %v370 = vpop.f32.mrb[0].mxu0
  %371 = vmatprep.mubr.bf16.mxu0 0
  %372 = vmatmul.mubr.bf16.gmra.mrb[0].mxu0 %v169
  %v373 = vpop.f32.mrb[0].mxu0
  %v374 = vadd.f32 0.0, %v373
  %v375 = vpop.f32.mrb[0].mxu0
  %v376 = vpop.f32.mrb[0].mxu0
  %v377 = vadd.f32 0.0, %v376
  %v378 = vpop.f32.mrb[0].mxu0
  %379 = vmatprep.mubr.bf16.mxu0 0
  %380 = vmatmul.mubr.bf16.gmra.mrb[0].mxu0 %v172
  %v381 = vpop.f32.mrb[0].mxu0
  %v382 = vadd.f32 0.0, %v381
  %v383 = vpop.f32.mrb[0].mxu0
  %v384 = vpop.f32.mrb[0].mxu0
  %v385 = vadd.f32 0.0, %v384
  %v386 = vpop.f32.mrb[0].mxu0
  %387 = vmatprep.mubr.bf16.mxu0 0
  %388 = vmatmul.mubr.bf16.gmra.mrb[0].mxu0 %v175
  %v389 = vpop.f32.mrb[0].mxu0
  %v390 = vadd.f32 0.0, %v389
  %v391 = vpop.f32.mrb[0].mxu0
  %v392 = vpop.f32.mrb[0].mxu0
  %v393 = vadd.f32 0.0, %v392
  %v394 = vpop.f32.mrb[0].mxu0
  %395 = vmatprep.mubr.bf16.mxu0 0
  %396 = vmatmul.mubr.bf16.gmra.mrb[0].mxu0 %v178
  %v397 = vpop.f32.mrb[0].mxu0
  %v398 = vadd.f32 0.0, %v397
  %v399 = vpop.f32.mrb[0].mxu0
  %v400 = vpop.f32.mrb[0].mxu0
  %v401 = vadd.f32 0.0, %v400
  %v402 = vpop.f32.mrb[0].mxu0
  %403 = vmatprep.mubr.bf16.mxu0 0
  %404 = vmatmul.mubr.bf16.gmra.mrb[0].mxu0 %v181
  %v405 = vpop.f32.mrb[0].mxu0
  %v406 = vadd.f32 0.0, %v405
  %v407 = vpop.f32.mrb[0].mxu0
  %v408 = vpop.f32.mrb[0].mxu0
  %v409 = vadd.f32 0.0, %v408
  %v410 = vpop.f32.mrb[0].mxu0
  %411 = vmatprep.mubr.bf16.mxu0 0
  %412 = vmatmul.mubr.bf16.gmra.mrb[0].mxu0 %v184
  %v413 = vpop.f32.mrb[0].mxu0
  %v414 = vadd.f32 0.0, %v413
  %v415 = vpop.f32.mrb[0].mxu0
  %v416 = vpop.f32.mrb[0].mxu0
  %v417 = vadd.f32 0.0, %v416
  %v418 = vpop.f32.mrb[0].mxu0
  %419 = vmatprep.mubr.bf16.mxu0 0
  %420 = vmatmul.mubr.bf16.gmra.mrb[0].mxu0 %v187
  %v421 = vpop.f32.mrb[0].mxu0
  %v422 = vadd.f32 0.0, %v421
  %v423 = vpop.f32.mrb[0].mxu0
  %v424 = vpop.f32.mrb[0].mxu0
  %v425 = vadd.f32 0.0, %v424
  %v426 = vpop.f32.mrb[0].mxu0
  %427 = vmatprep.mubr.bf16.mxu0 0
  %428 = vmatmul.mubr.bf16.gmra.mrb[0].mxu0 %v190
  %v429 = vpop.f32.mrb[0].mxu0
  %v430 = vadd.f32 0.0, %v429
  %v431 = vpop.f32.mrb[0].mxu0
  %v432 = vpop.f32.mrb[0].mxu0
  %v433 = vadd.f32 0.0, %v432
  %v434 = vpop.f32.mrb[0].mxu0
  %435 = vmatprep.mubr.bf16.mxu0 0
  %436 = vmatmul.mubr.bf16.gmra.mrb[0].mxu0 %v193
  %v437 = vpop.f32.mrb[0].mxu0
  %v438 = vadd.f32 0.0, %v437
  %v439 = vpop.f32.mrb[0].mxu0
  %v440 = vpop.f32.mrb[0].mxu0
  %v441 = vadd.f32 0.0, %v440
  %v442 = vpop.f32.mrb[0].mxu0
  %443 = vmatprep.mubr.bf16.mxu0 0
  %444 = vmatmul.mubr.bf16.gmra.mrb[0].mxu0 %v196
  %v445 = vpop.f32.mrb[0].mxu0
  %v446 = vadd.f32 0.0, %v445
  %v447 = vpop.f32.mrb[0].mxu0
  %v448 = vpop.f32.mrb[0].mxu0
  %v449 = vadd.f32 0.0, %v448
  %v450 = vpop.f32.mrb[0].mxu0
  %451 = vmatprep.mubr.bf16.mxu0 0
  %452 = vmatmul.mubr.bf16.gmra.mrb[0].mxu0 %v199
  %v453 = vpop.f32.mrb[0].mxu0
  %v454 = vadd.f32 0.0, %v453
  %v455 = vpop.f32.mrb[0].mxu0
  %v456 = vpop.f32.mrb[0].mxu0
  %v457 = vadd.f32 0.0, %v456
  %v458 = vpop.f32.mrb[0].mxu0
  %459 = vmatprep.mubr.bf16.mxu0 0
  %460 = vmatmul.mubr.bf16.gmra.mrb[0].mxu0 %v202
  %v461 = vpop.f32.mrb[0].mxu0
  %v462 = vadd.f32 0.0, %v461
  %v463 = vpop.f32.mrb[0].mxu0
  %v464 = vpop.f32.mrb[0].mxu0
  %v465 = vadd.f32 0.0, %v464
  %v466 = vpop.f32.mrb[0].mxu0
  %467 = vmatprep.mubr.bf16.mxu0 0
  %468 = vmatmul.mubr.bf16.gmra.mrb[0].mxu0 %v205
  %v469 = vpop.f32.mrb[0].mxu0
  %v470 = vadd.f32 0.0, %v469
  %v471 = vpop.f32.mrb[0].mxu0
  %v472 = vpop.f32.mrb[0].mxu0
  %v473 = vadd.f32 0.0, %v472
  %v474 = vpop.f32.mrb[0].mxu0
  %475 = vmatprep.mubr.bf16.mxu0 0
  %476 = vmatmul.mubr.bf16.gmra.mrb[0].mxu0 %v208
  %v477 = vpop.f32.mrb[0].mxu0
  %v478 = vadd.f32 0.0, %v477
  %v479 = vpop.f32.mrb[0].mxu0
  %v480 = vpop.f32.mrb[0].mxu0
  %v481 = vadd.f32 0.0, %v480
  %v482 = vpop.f32.mrb[0].mxu0
  %483 = vmatprep.mubr.bf16.mxu0 0
  %484 = vmatmul.mubr.bf16.gmra.mrb[0].mxu0 %v211
  %v485 = vpop.f32.mrb[0].mxu0
  %v486 = vadd.f32 0.0, %v485
  %v487 = vpop.f32.mrb[0].mxu0
  %v488 = vpop.f32.mrb[0].mxu0
  %v489 = vadd.f32 0.0, %v488
  %v490 = vpop.f32.mrb[0].mxu0
  %491 = vmatprep.mubr.bf16.mxu0 0
  %492 = vmatmul.mubr.bf16.gmra.mrb[0].mxu0 %v214
  %v493 = vpop.f32.mrb[0].mxu0
  %v494 = vadd.f32 0.0, %v493
  %v495 = vpop.f32.mrb[0].mxu0
  %v496 = vpop.f32.mrb[0].mxu0
  %v497 = vadd.f32 0.0, %v496
  %v498 = vpop.f32.mrb[0].mxu0
  %499 = vmatprep.mubr.bf16.mxu0 0
  %500 = vmatmul.mubr.bf16.gmra.mrb[0].mxu0 %v217
  %v501 = vpop.f32.mrb[0].mxu0
  %v502 = vadd.f32 0.0, %v501
  %v503 = vpop.f32.mrb[0].mxu0
  %v504 = vpop.f32.mrb[0].mxu0
  %v505 = vadd.f32 0.0, %v504
  %v506 = vpop.f32.mrb[0].mxu0
  %507 = vdwg.mxu0
  %v508 = vld [vmem:[%s2] sm:$0x1]
  %v510 = vlaneseq
  %v511 = vshrl.u32 %v510, 7
  %v512 = vsub.s32 0, %v511
  %v513 = vrot.slane %v508, %v512
  %v515 = vmul.f32 %v254, %v513
  %v516 = vmul.f32 %v257, %v513
  %v517 = vmul.f32 %v262, %v513
  %v518 = vmul.f32 %v265, %v513
  %v519 = vmul.f32 %v270, %v513
  %v520 = vmul.f32 %v273, %v513
  %v521 = vmul.f32 %v278, %v513
  %v522 = vmul.f32 %v281, %v513
  %v523 = vmul.f32 %v286, %v513
  %v524 = vmul.f32 %v289, %v513
  %v525 = vmul.f32 %v294, %v513
  %v526 = vmul.f32 %v297, %v513
  %v527 = vmul.f32 %v302, %v513
  %v528 = vmul.f32 %v305, %v513
  %v529 = vmul.f32 %v310, %v513
  %v530 = vmul.f32 %v313, %v513
  %v531 = vmul.f32 %v318, %v513
  %v532 = vmul.f32 %v321, %v513
  %v533 = vmul.f32 %v326, %v513
  %v534 = vmul.f32 %v329, %v513
  %v535 = vmul.f32 %v334, %v513
  %v536 = vmul.f32 %v337, %v513
  %v537 = vmul.f32 %v342, %v513
  %v538 = vmul.f32 %v345, %v513
  %v539 = vmul.f32 %v350, %v513
  %v540 = vmul.f32 %v353, %v513
  %v541 = vmul.f32 %v358, %v513
  %v542 = vmul.f32 %v361, %v513
  %v543 = vmul.f32 %v366, %v513
  %v544 = vmul.f32 %v369, %v513
  %v545 = vmul.f32 %v374, %v513
  %v546 = vmul.f32 %v377, %v513
  %v547 = vmul.f32 %v382, %v513
  %v548 = vmul.f32 %v385, %v513
  %v549 = vmul.f32 %v390, %v513
  %v550 = vmul.f32 %v393, %v513
  %v551 = vmul.f32 %v398, %v513
  %v552 = vmul.f32 %v401, %v513
  %v553 = vmul.f32 %v406, %v513
  %v554 = vmul.f32 %v409, %v513
  %v555 = vmul.f32 %v414, %v513
  %v556 = vmul.f32 %v417, %v513
  %v557 = vmul.f32 %v422, %v513
  %v558 = vmul.f32 %v425, %v513
  %v559 = vmul.f32 %v430, %v513
  %v560 = vmul.f32 %v433, %v513
  %v561 = vmul.f32 %v438, %v513
  %v562 = vmul.f32 %v441, %v513
  %v563 = vmul.f32 %v446, %v513
  %v564 = vmul.f32 %v449, %v513
  %v565 = vmul.f32 %v454, %v513
  %v566 = vmul.f32 %v457, %v513
  %v567 = vmul.f32 %v462, %v513
  %v568 = vmul.f32 %v465, %v513
  %v569 = vmul.f32 %v470, %v513
  %v570 = vmul.f32 %v473, %v513
  %v571 = vmul.f32 %v478, %v513
  %v572 = vmul.f32 %v481, %v513
  %v573 = vmul.f32 %v486, %v513
  %v574 = vmul.f32 %v489, %v513
  %v575 = vmul.f32 %v494, %v513
  %v576 = vmul.f32 %v497, %v513
  %v577 = vmul.f32 %v502, %v513
  %v578 = vmul.f32 %v505, %v513
  %v579 = vld [vmem:[%s3] sm:$0x1]
  %v581 = vlaneseq
  %v582 = vshrl.u32 %v581, 7
  %v583 = vsub.s32 0, %v582
  %v584 = vrot.slane %v579, %v583
  %v586 = vadd.f32 %v515, %v584
  %v587 = vadd.f32 %v516, %v584
  %v588 = vadd.f32 %v517, %v584
  %v589 = vadd.f32 %v518, %v584
  %v590 = vadd.f32 %v519, %v584
  %v591 = vadd.f32 %v520, %v584
  %v592 = vadd.f32 %v521, %v584
  %v593 = vadd.f32 %v522, %v584
  %v594 = vadd.f32 %v523, %v584
  %v595 = vadd.f32 %v524, %v584
  %v596 = vadd.f32 %v525, %v584
  %v597 = vadd.f32 %v526, %v584
  %v598 = vadd.f32 %v527, %v584
  %v599 = vadd.f32 %v528, %v584
  %v600 = vadd.f32 %v529, %v584
  %v601 = vadd.f32 %v530, %v584
  %v602 = vadd.f32 %v531, %v584
  %v603 = vadd.f32 %v532, %v584
  %v604 = vadd.f32 %v533, %v584
  %v605 = vadd.f32 %v534, %v584
  %v606 = vadd.f32 %v535, %v584
  %v607 = vadd.f32 %v536, %v584
  %v608 = vadd.f32 %v537, %v584
  %v609 = vadd.f32 %v538, %v584
  %v610 = vadd.f32 %v539, %v584
  %v611 = vadd.f32 %v540, %v584
  %v612 = vadd.f32 %v541, %v584
  %v613 = vadd.f32 %v542, %v584
  %v614 = vadd.f32 %v543, %v584
  %v615 = vadd.f32 %v544, %v584
  %v616 = vadd.f32 %v545, %v584
  %v617 = vadd.f32 %v546, %v584
  %v618 = vadd.f32 %v547, %v584
  %v619 = vadd.f32 %v548, %v584
  %v620 = vadd.f32 %v549, %v584
  %v621 = vadd.f32 %v550, %v584
  %v622 = vadd.f32 %v551, %v584
  %v623 = vadd.f32 %v552, %v584
  %v624 = vadd.f32 %v553, %v584
  %v625 = vadd.f32 %v554, %v584
  %v626 = vadd.f32 %v555, %v584
  %v627 = vadd.f32 %v556, %v584
  %v628 = vadd.f32 %v557, %v584
  %v629 = vadd.f32 %v558, %v584
  %v630 = vadd.f32 %v559, %v584
  %v631 = vadd.f32 %v560, %v584
  %v632 = vadd.f32 %v561, %v584
  %v633 = vadd.f32 %v562, %v584
  %v634 = vadd.f32 %v563, %v584
  %v635 = vadd.f32 %v564, %v584
  %v636 = vadd.f32 %v565, %v584
  %v637 = vadd.f32 %v566, %v584
  %v638 = vadd.f32 %v567, %v584
  %v639 = vadd.f32 %v568, %v584
  %v640 = vadd.f32 %v569, %v584
  %v641 = vadd.f32 %v570, %v584
  %v642 = vadd.f32 %v571, %v584
  %v643 = vadd.f32 %v572, %v584
  %v644 = vadd.f32 %v573, %v584
  %v645 = vadd.f32 %v574, %v584
  %v646 = vadd.f32 %v575, %v584
  %v647 = vadd.f32 %v576, %v584
  %v648 = vadd.f32 %v577, %v584
  %v649 = vadd.f32 %v578, %v584
  %v650 = vmax.f32 %v586, 0.0
  %v651 = vmax.f32 %v587, 0.0
  %v652 = vmax.f32 %v588, 0.0
  %v653 = vmax.f32 %v589, 0.0
  %v654 = vmax.f32 %v590, 0.0
  %v655 = vmax.f32 %v591, 0.0
  %v656 = vmax.f32 %v592, 0.0
  %v657 = vmax.f32 %v593, 0.0
  %v658 = vmax.f32 %v594, 0.0
  %v659 = vmax.f32 %v595, 0.0
  %v660 = vmax.f32 %v596, 0.0
  %v661 = vmax.f32 %v597, 0.0
  %v662 = vmax.f32 %v598, 0.0
  %v663 = vmax.f32 %v599, 0.0
  %v664 = vmax.f32 %v600, 0.0
  %v665 = vmax.f32 %v601, 0.0
  %v666 = vmax.f32 %v602, 0.0
  %v667 = vmax.f32 %v603, 0.0
  %v668 = vmax.f32 %v604, 0.0
  %v669 = vmax.f32 %v605, 0.0
  %v670 = vmax.f32 %v606, 0.0
  %v671 = vmax.f32 %v607, 0.0
  %v672 = vmax.f32 %v608, 0.0
  %v673 = vmax.f32 %v609, 0.0
  %v674 = vmax.f32 %v610, 0.0
  %v675 = vmax.f32 %v611, 0.0
  %v676 = vmax.f32 %v612, 0.0
  %v677 = vmax.f32 %v613, 0.0
  %v678 = vmax.f32 %v614, 0.0
  %v679 = vmax.f32 %v615, 0.0
  %v680 = vmax.f32 %v616, 0.0
  %v681 = vmax.f32 %v617, 0.0
  %v682 = vmax.f32 %v618, 0.0
  %v683 = vmax.f32 %v619, 0.0
  %v684 = vmax.f32 %v620, 0.0
  %v685 = vmax.f32 %v621, 0.0
  %v686 = vmax.f32 %v622, 0.0
  %v687 = vmax.f32 %v623, 0.0
  %v688 = vmax.f32 %v624, 0.0
  %v689 = vmax.f32 %v625, 0.0
  %v690 = vmax.f32 %v626, 0.0
  %v691 = vmax.f32 %v627, 0.0
  %v692 = vmax.f32 %v628, 0.0
  %v693 = vmax.f32 %v629, 0.0
  %v694 = vmax.f32 %v630, 0.0
  %v695 = vmax.f32 %v631, 0.0
  %v696 = vmax.f32 %v632, 0.0
  %v697 = vmax.f32 %v633, 0.0
  %v698 = vmax.f32 %v634, 0.0
  %v699 = vmax.f32 %v635, 0.0
  %v700 = vmax.f32 %v636, 0.0
  %v701 = vmax.f32 %v637, 0.0
  %v702 = vmax.f32 %v638, 0.0
  %v703 = vmax.f32 %v639, 0.0
  %v704 = vmax.f32 %v640, 0.0
  %v705 = vmax.f32 %v641, 0.0
  %v706 = vmax.f32 %v642, 0.0
  %v707 = vmax.f32 %v643, 0.0
  %v708 = vmax.f32 %v644, 0.0
  %v709 = vmax.f32 %v645, 0.0
  %v710 = vmax.f32 %v646, 0.0
  %v711 = vmax.f32 %v647, 0.0
  %v712 = vmax.f32 %v648, 0.0
  %v713 = vmax.f32 %v649, 0.0
  %vm714 = vcmask 31744
  %715 = vst.msk [vmem:[%s4] sm:$0xff] %vm714, %v650
  %716 = vst.msk [vmem:[%s4 + $0x8] sm:$0xff] %vm714, %v651
  %717 = vst.msk [vmem:[%s4 + $0x10] sm:$0xff] %vm714, %v652
  %718 = vst.msk [vmem:[%s4 + $0x18] sm:$0xff] %vm714, %v653
  %719 = vst.msk [vmem:[%s4 + $0x20] sm:$0xff] %vm714, %v654
  %720 = vst.msk [vmem:[%s4 + $0x28] sm:$0xff] %vm714, %v655
  %721 = vst.msk [vmem:[%s4 + $0x30] sm:$0xff] %vm714, %v656
  %722 = vst.msk [vmem:[%s4 + $0x38] sm:$0xff] %vm714, %v657
  %723 = vst.msk [vmem:[%s4 + $0x40] sm:$0xff] %vm714, %v658
  %724 = vst.msk [vmem:[%s4 + $0x48] sm:$0xff] %vm714, %v659
  %725 = vst.msk [vmem:[%s4 + $0x50] sm:$0xff] %vm714, %v660
  %726 = vst.msk [vmem:[%s4 + $0x58] sm:$0xff] %vm714, %v661
  %727 = vst.msk [vmem:[%s4 + $0x60] sm:$0xff] %vm714, %v662
  %728 = vst.msk [vmem:[%s4 + $0x68] sm:$0xff] %vm714, %v663
  %729 = vst.msk [vmem:[%s4 + $0x70] sm:$0xff] %vm714, %v664
  %730 = vst.msk [vmem:[%s4 + $0x78] sm:$0xff] %vm714, %v665
  %731 = vst.msk [vmem:[%s4 + $0x80] sm:$0xff] %vm714, %v666
  %732 = vst.msk [vmem:[%s4 + $0x88] sm:$0xff] %vm714, %v667
  %733 = vst.msk [vmem:[%s4 + $0x90] sm:$0xff] %vm714, %v668
  %734 = vst.msk [vmem:[%s4 + $0x98] sm:$0xff] %vm714, %v669
  %735 = vst.msk [vmem:[%s4 + $0xa0] sm:$0xff] %vm714, %v670
  %736 = vst.msk [vmem:[%s4 + $0xa8] sm:$0xff] %vm714, %v671
  %737 = vst.msk [vmem:[%s4 + $0xb0] sm:$0xff] %vm714, %v672
  %738 = vst.msk [vmem:[%s4 + $0xb8] sm:$0xff] %vm714, %v673
  %739 = vst.msk [vmem:[%s4 + $0xc0] sm:$0xff] %vm714, %v674
  %740 = vst.msk [vmem:[%s4 + $0xc8] sm:$0xff] %vm714, %v675
  %741 = vst.msk [vmem:[%s4 + $0xd0] sm:$0xff] %vm714, %v676
  %742 = vst.msk [vmem:[%s4 + $0xd8] sm:$0xff] %vm714, %v677
  %743 = vst.msk [vmem:[%s4 + $0xe0] sm:$0xff] %vm714, %v678
  %744 = vst.msk [vmem:[%s4 + $0xe8] sm:$0xff] %vm714, %v679
  %745 = vst.msk [vmem:[%s4 + $0xf0] sm:$0xff] %vm714, %v680
  %746 = vst.msk [vmem:[%s4 + $0xf8] sm:$0xff] %vm714, %v681
  %747 = vst.msk [vmem:[%s4 + $0x100] sm:$0xff] %vm714, %v682
  %748 = vst.msk [vmem:[%s4 + $0x108] sm:$0xff] %vm714, %v683
  %749 = vst.msk [vmem:[%s4 + $0x110] sm:$0xff] %vm714, %v684
  %750 = vst.msk [vmem:[%s4 + $0x118] sm:$0xff] %vm714, %v685
  %751 = vst.msk [vmem:[%s4 + $0x120] sm:$0xff] %vm714, %v686
  %752 = vst.msk [vmem:[%s4 + $0x128] sm:$0xff] %vm714, %v687
  %753 = vst.msk [vmem:[%s4 + $0x130] sm:$0xff] %vm714, %v688
  %754 = vst.msk [vmem:[%s4 + $0x138] sm:$0xff] %vm714, %v689
  %755 = vst.msk [vmem:[%s4 + $0x140] sm:$0xff] %vm714, %v690
  %756 = vst.msk [vmem:[%s4 + $0x148] sm:$0xff] %vm714, %v691
  %757 = vst.msk [vmem:[%s4 + $0x150] sm:$0xff] %vm714, %v692
  %758 = vst.msk [vmem:[%s4 + $0x158] sm:$0xff] %vm714, %v693
  %759 = vst.msk [vmem:[%s4 + $0x160] sm:$0xff] %vm714, %v694
  %760 = vst.msk [vmem:[%s4 + $0x168] sm:$0xff] %vm714, %v695
  %761 = vst.msk [vmem:[%s4 + $0x170] sm:$0xff] %vm714, %v696
  %762 = vst.msk [vmem:[%s4 + $0x178] sm:$0xff] %vm714, %v697
  %763 = vst.msk [vmem:[%s4 + $0x180] sm:$0xff] %vm714, %v698
  %764 = vst.msk [vmem:[%s4 + $0x188] sm:$0xff] %vm714, %v699
  %765 = vst.msk [vmem:[%s4 + $0x190] sm:$0xff] %vm714, %v700
  %766 = vst.msk [vmem:[%s4 + $0x198] sm:$0xff] %vm714, %v701
  %767 = vst.msk [vmem:[%s4 + $0x1a0] sm:$0xff] %vm714, %v702
  %768 = vst.msk [vmem:[%s4 + $0x1a8] sm:$0xff] %vm714, %v703
  %769 = vst.msk [vmem:[%s4 + $0x1b0] sm:$0xff] %vm714, %v704
  %770 = vst.msk [vmem:[%s4 + $0x1b8] sm:$0xff] %vm714, %v705
  %771 = vst.msk [vmem:[%s4 + $0x1c0] sm:$0xff] %vm714, %v706
  %772 = vst.msk [vmem:[%s4 + $0x1c8] sm:$0xff] %vm714, %v707
  %773 = vst.msk [vmem:[%s4 + $0x1d0] sm:$0xff] %vm714, %v708
  %774 = vst.msk [vmem:[%s4 + $0x1d8] sm:$0xff] %vm714, %v709
  %775 = vst.msk [vmem:[%s4 + $0x1e0] sm:$0xff] %vm714, %v710
  %776 = vst.msk [vmem:[%s4 + $0x1e8] sm:$0xff] %vm714, %v711
  %777 = vst.msk [vmem:[%s4 + $0x1f0] sm:$0xff] %vm714, %v712
  %778 = vst.msk [vmem:[%s4 + $0x1f8] sm:$0xff] %vm714, %v713
  // Predicated region
  $region18: #{sk_bottleneck_forward.4} parent=0 // pred_check
    _
  $region19: #{sk_bottleneck_forward.4} parent=0 // pred_check_branch
    %780 = sbr.rel (0) target = $region21
  $region20: #{sk_bottleneck_forward.4} parent=0 // pred_region
    _
  $region21: #{sk_bottleneck_forward.4} parent=0 // pred_fallthru
    _
  // Predicated region
  $region22: #{sk_bottleneck_forward.4} parent=0 // pred_check
    _
  $region23: #{sk_bottleneck_forward.4} parent=0 // pred_check_branch
    %782 = sbr.rel (0) target = $region25
  $region24: #{sk_bottleneck_forward.4} parent=0 // pred_region
    _
  $region25: #{sk_bottleneck_forward.4} parent=0 // pred_fallthru
    _

// kernel: sk_bottleneck_forward.6
$region0: #{sk_bottleneck_forward.6}
  #allocation0 [shape = 'u32[]', space=smem, size = 0x4, offset = 0x4, fixed_abs, tag = 'smem constant byte address 0x4 - core index']
  #allocation1 [shape = 'u32[144,128]{1,0:T(1,128)}', space=vmem, size = 0x12000, scoped, tag = 'internal scratch']
  %s0 = inlined_call_operand.vmem [shape: f32[2,4], index: 0, kind: input, shape index: {}]
  %s1 = inlined_call_operand.vmem [shape: f32[4,32], index: 1, kind: input, shape index: {}]
  %s2 = inlined_call_operand.vmem [shape: f32[1,32], index: 2, kind: input, shape index: {}]
  %s3 = inlined_call_operand.vmem [shape: f32[1,32], index: 3, kind: input, shape index: {}]
  %s4 = inlined_call_operand.vmem [shape: f32[32,4], index: 4, kind: input, shape index: {}]
  %s5 = inlined_call_operand.vmem [shape: f32[32,4], index: 5, kind: input, shape index: {}]
  %s6 = inlined_call_operand.vmem [shape: f32[2,4], index: 6, kind: output, shape index: {0}]
  %s7 = inlined_call_operand.vmem [shape: f32[2,4], index: 7, kind: output, shape index: {1}]
  %8 = xla_tuple %s6, %s7
  %s9 = sld [smem:[#allocation0]]
  $region42: #{sk_bottleneck_forward.6} parent=0
    _
  %s11 = ssub.s32 1, %s9
  %s12 = scalar_select 0, %s11, %s9
  // Predicated region
  $region2: #{sk_bottleneck_forward.6} parent=0 // pred_check
    _
  $region3: #{sk_bottleneck_forward.6} parent=0 // pred_check_branch
    %14 = sbr.rel (0) target = $region5
  $region4: #{sk_bottleneck_forward.6} parent=0 // pred_region
    _
  $region5: #{sk_bottleneck_forward.6} parent=0 // pred_fallthru
    _
  // Predicated region
  $region6: #{sk_bottleneck_forward.6} parent=0 // pred_check
    _
  $region7: #{sk_bottleneck_forward.6} parent=0 // pred_check_branch
    %16 = sbr.rel (0) target = $region9
  $region8: #{sk_bottleneck_forward.6} parent=0 // pred_region
    _
  $region9: #{sk_bottleneck_forward.6} parent=0 // pred_fallthru
    _
  // Predicated region
  $region10: #{sk_bottleneck_forward.6} parent=0 // pred_check
    _
  $region11: #{sk_bottleneck_forward.6} parent=0 // pred_check_branch
    %18 = sbr.rel (0) target = $region13
  $region12: #{sk_bottleneck_forward.6} parent=0 // pred_region
    _
  $region13: #{sk_bottleneck_forward.6} parent=0 // pred_fallthru
    _
  // Predicated region
  $region14: #{sk_bottleneck_forward.6} parent=0 // pred_check
    _
  $region15: #{sk_bottleneck_forward.6} parent=0 // pred_check_branch
    %20 = sbr.rel (0) target = $region17
  $region16: #{sk_bottleneck_forward.6} parent=0 // pred_region
    _
  $region17: #{sk_bottleneck_forward.6} parent=0 // pred_fallthru
    _
  // Predicated region
  $region18: #{sk_bottleneck_forward.6} parent=0 // pred_check
    _
  $region19: #{sk_bottleneck_forward.6} parent=0 // pred_check_branch
    %22 = sbr.rel (0) target = $region21
  $region20: #{sk_bottleneck_forward.6} parent=0 // pred_region
    _
  $region21: #{sk_bottleneck_forward.6} parent=0 // pred_fallthru
    _
  // Predicated region
  $region22: #{sk_bottleneck_forward.6} parent=0 // pred_check
    _
  $region23: #{sk_bottleneck_forward.6} parent=0 // pred_check_branch
    %24 = sbr.rel (0) target = $region25
  $region24: #{sk_bottleneck_forward.6} parent=0 // pred_region
    _
  $region25: #{sk_bottleneck_forward.6} parent=0 // pred_fallthru
    _
  %v25 = vld [vmem:[%s0] sm:$0x3]
  %v26 = vmul.f32 %v25, 0.00390625
  %v27 = vld [vmem:[%s1] sm:$0xf]
  %vm28 = vcmask 31744
  %v30 = vsel %vm28, %v26, 0
  %vm32 = vcmask 1043456
  %v34 = vsel %vm32, %v27, 0
  %36 = vmatprep.subr.mxu0 0.0
  %37 = vmatpush1.msra.mxu0 %v34
  %38 = vmatprep.subr.mxu0 0.0
  %39 = vmatpush1.msra.mxu0 0.0
  %40 = vmatprep.subr.mxu0 0.0
  %41 = vmatpush1.msra.mxu0 0.0
  %42 = vmatprep.subr.mxu0 0.0
  %43 = vmatpush1.msra.mxu0 0.0
  %44 = vmatprep.subr.mxu0 0.0
  %45 = vmatpush1.msra.mxu0 0.0
  %46 = vmatprep.subr.mxu0 0.0
  %47 = vmatpush1.msra.mxu0 0.0
  %48 = vmatprep.subr.mxu0 0.0
  %49 = vmatpush1.msra.mxu0 0.0
  %50 = vmatprep.subr.mxu0 0.0
  %51 = vmatpush1.msra.mxu0 0.0
  %52 = vmatprep.subr.mxu0 0.0
  %53 = vmatpush1.msra.mxu0 0.0
  %54 = vmatprep.subr.mxu0 0.0
  %55 = vmatpush1.msra.mxu0 0.0
  %56 = vmatprep.subr.mxu0 0.0
  %57 = vmatpush1.msra.mxu0 0.0
  %58 = vmatprep.subr.mxu0 0.0
  %59 = vmatpush1.msra.mxu0 0.0
  %60 = vmatprep.subr.mxu0 0.0
  %61 = vmatpush1.msra.mxu0 0.0
  %62 = vmatprep.subr.mxu0 0.0
  %63 = vmatpush1.msra.mxu0 0.0
  %64 = vmatprep.subr.mxu0 0.0
  %65 = vmatpush1.msra.mxu0 0.0
  %66 = vmatprep.subr.mxu0 0.0
  %67 = vmatpush1.msra.mxu0 0.0
  %68 = vmatprep.subr.mxu0 0.0
  %69 = vmatpush1.msra.mxu0 0.0
  %70 = vmatprep.subr.mxu0 0.0
  %71 = vmatpush1.msra.mxu0 0.0
  %72 = vmatprep.subr.mxu0 0.0
  %73 = vmatpush1.msra.mxu0 0.0
  %74 = vmatprep.subr.mxu0 0.0
  %75 = vmatpush1.msra.mxu0 0.0
  %76 = vmatprep.subr.mxu0 0.0
  %77 = vmatpush1.msra.mxu0 0.0
  %78 = vmatprep.subr.mxu0 0.0
  %79 = vmatpush1.msra.mxu0 0.0
  %80 = vmatprep.subr.mxu0 0.0
  %81 = vmatpush1.msra.mxu0 0.0
  %82 = vmatprep.subr.mxu0 0.0
  %83 = vmatpush1.msra.mxu0 0.0
  %84 = vmatprep.subr.mxu0 0.0
  %85 = vmatpush1.msra.mxu0 0.0
  %86 = vmatprep.subr.mxu0 0.0
  %87 = vmatpush1.msra.mxu0 0.0
  %88 = vmatprep.subr.mxu0 0.0
  %89 = vmatpush1.msra.mxu0 0.0
  %90 = vmatprep.subr.mxu0 0.0
  %91 = vmatpush1.msra.mxu0 0.0
  %92 = vmatprep.subr.mxu0 0.0
  %93 = vmatpush1.msra.mxu0 0.0
  %94 = vmatprep.subr.mxu0 0.0
  %95 = vmatpush1.msra.mxu0 0.0
  %96 = vmatprep.subr.mxu0 0.0
  %97 = vmatpush1.msra.mxu0 0.0
  %98 = vmatprep.subr.mxu0 0.0
  %99 = vmatpush1.msra.mxu0 0.0
  %100 = vmatprep.mubr.f32.mxu0 0.0
  %101 = vmatmul.mubr.f32.gmra.mrb[0].mxu0 %v30
  %v102 = vpop.f32.mrb[0].mxu0
  %v103 = vadd.f32 0.0, %v102
  %v104 = vpop.f32.mrb[0].mxu0
  %105 = vdwg.mxu0
  %v106 = vld [vmem:[%s2] sm:$0x1]
  %v108 = vlaneseq
  %v109 = vshrl.u32 %v108, 7
  %v110 = vsub.s32 0, %v109
  %v111 = vrot.slane %v106, %v110
  %v113 = vmul.f32 %v103, %v111
  %v114 = vld [vmem:[%s3] sm:$0x1]
  %v116 = vlaneseq
  %v117 = vshrl.u32 %v116, 7
  %v118 = vsub.s32 0, %v117
  %v119 = vrot.slane %v114, %v118
  %v121 = vadd.f32 %v113, %v119
  %v122 = vmax.f32 %v121, 0.0
  %v123 = vld [vmem:[%s4] sm:$0xff]
  %v124 = vld [vmem:[%s4 + $0x8] sm:$0xff]
  %v125 = vld [vmem:[%s4 + $0x10] sm:$0xff]
  %v126 = vld [vmem:[%s4 + $0x18] sm:$0xff]
  %vm127 = vcmask 261120
  %v129 = vsel %vm127, %v122, 0
  %131 = vmatprep.subr.mxu0 0.0
  %132 = vmatpush1.msra.mxu0 %v123
  %133 = vmatprep.subr.mxu0 0.0
  %134 = vmatpush1.msra.mxu0 %v124
  %135 = vmatprep.subr.mxu0 0.0
  %136 = vmatpush1.msra.mxu0 %v125
  %137 = vmatprep.subr.mxu0 0.0
  %138 = vmatpush1.msra.mxu0 %v126
  %139 = vmatprep.subr.mxu0 0.0
  %140 = vmatpush1.msra.mxu0 0.0
  %141 = vmatprep.subr.mxu0 0.0
  %142 = vmatpush1.msra.mxu0 0.0
  %143 = vmatprep.subr.mxu0 0.0
  %144 = vmatpush1.msra.mxu0 0.0
  %145 = vmatprep.subr.mxu0 0.0
  %146 = vmatpush1.msra.mxu0 0.0
  %147 = vmatprep.subr.mxu0 0.0
  %148 = vmatpush1.msra.mxu0 0.0
  %149 = vmatprep.subr.mxu0 0.0
  %150 = vmatpush1.msra.mxu0 0.0
  %151 = vmatprep.subr.mxu0 0.0
  %152 = vmatpush1.msra.mxu0 0.0
  %153 = vmatprep.subr.mxu0 0.0
  %154 = vmatpush1.msra.mxu0 0.0
  %155 = vmatprep.subr.mxu0 0.0
  %156 = vmatpush1.msra.mxu0 0.0
  %157 = vmatprep.subr.mxu0 0.0
  %158 = vmatpush1.msra.mxu0 0.0
  %159 = vmatprep.subr.mxu0 0.0
  %160 = vmatpush1.msra.mxu0 0.0
  %161 = vmatprep.subr.mxu0 0.0
  %162 = vmatpush1.msra.mxu0 0.0
  %163 = vmatprep.subr.mxu0 0.0
  %164 = vmatpush1.msra.mxu0 0.0
  %165 = vmatprep.subr.mxu0 0.0
  %166 = vmatpush1.msra.mxu0 0.0
  %167 = vmatprep.subr.mxu0 0.0
  %168 = vmatpush1.msra.mxu0 0.0
  %169 = vmatprep.subr.mxu0 0.0
  %170 = vmatpush1.msra.mxu0 0.0
  %171 = vmatprep.subr.mxu0 0.0
  %172 = vmatpush1.msra.mxu0 0.0
  %173 = vmatprep.subr.mxu0 0.0
  %174 = vmatpush1.msra.mxu0 0.0
  %175 = vmatprep.subr.mxu0 0.0
  %176 = vmatpush1.msra.mxu0 0.0
  %177 = vmatprep.subr.mxu0 0.0
  %178 = vmatpush1.msra.mxu0 0.0
  %179 = vmatprep.subr.mxu0 0.0
  %180 = vmatpush1.msra.mxu0 0.0
  %181 = vmatprep.subr.mxu0 0.0
  %182 = vmatpush1.msra.mxu0 0.0
  %183 = vmatprep.subr.mxu0 0.0
  %184 = vmatpush1.msra.mxu0 0.0
  %185 = vmatprep.subr.mxu0 0.0
  %186 = vmatpush1.msra.mxu0 0.0
  %187 = vmatprep.subr.mxu0 0.0
  %188 = vmatpush1.msra.mxu0 0.0
  %189 = vmatprep.subr.mxu0 0.0
  %190 = vmatpush1.msra.mxu0 0.0
  %191 = vmatprep.subr.mxu0 0.0
  %192 = vmatpush1.msra.mxu0 0.0
  %193 = vmatprep.subr.mxu0 0.0
  %194 = vmatpush1.msra.mxu0 0.0
  %195 = vmatprep.mubr.f32.mxu0 0.0
  %196 = vmatmul.mubr.f32.gmra.mrb[0].mxu0 %v129
  %v197 = vpop.f32.mrb[0].mxu0
  %v198 = vadd.f32 0.0, %v197
  %v199 = vpop.f32.mrb[0].mxu0
  %200 = vdwg.mxu0
  %v201 = vld [vmem:[%s5] sm:$0xff]
  %v202 = vld [vmem:[%s5 + $0x8] sm:$0xff]
  %v203 = vld [vmem:[%s5 + $0x10] sm:$0xff]
  %v204 = vld [vmem:[%s5 + $0x18] sm:$0xff]
  %205 = vmatprep.subr.mxu0 0.0
  %206 = vmatpush1.msra.mxu0 %v201
  %207 = vmatprep.subr.mxu0 0.0
  %208 = vmatpush1.msra.mxu0 %v202
  %209 = vmatprep.subr.mxu0 0.0
  %210 = vmatpush1.msra.mxu0 %v203
  %211 = vmatprep.subr.mxu0 0.0
  %212 = vmatpush1.msra.mxu0 %v204
  %213 = vmatprep.subr.mxu0 0.0
  %214 = vmatpush1.msra.mxu0 0.0
  %215 = vmatprep.subr.mxu0 0.0
  %216 = vmatpush1.msra.mxu0 0.0
  %217 = vmatprep.subr.mxu0 0.0
  %218 = vmatpush1.msra.mxu0 0.0
  %219 = vmatprep.subr.mxu0 0.0
  %220 = vmatpush1.msra.mxu0 0.0
  %221 = vmatprep.subr.mxu0 0.0
  %222 = vmatpush1.msra.mxu0 0.0
  %223 = vmatprep.subr.mxu0 0.0
  %224 = vmatpush1.msra.mxu0 0.0
  %225 = vmatprep.subr.mxu0 0.0
  %226 = vmatpush1.msra.mxu0 0.0
  %227 = vmatprep.subr.mxu0 0.0
  %228 = vmatpush1.msra.mxu0 0.0
  %229 = vmatprep.subr.mxu0 0.0
  %230 = vmatpush1.msra.mxu0 0.0
  %231 = vmatprep.subr.mxu0 0.0
  %232 = vmatpush1.msra.mxu0 0.0
  %233 = vmatprep.subr.mxu0 0.0
  %234 = vmatpush1.msra.mxu0 0.0
  %235 = vmatprep.subr.mxu0 0.0
  %236 = vmatpush1.msra.mxu0 0.0
  %237 = vmatprep.subr.mxu0 0.0
  %238 = vmatpush1.msra.mxu0 0.0
  %239 = vmatprep.subr.mxu0 0.0
  %240 = vmatpush1.msra.mxu0 0.0
  %241 = vmatprep.subr.mxu0 0.0
  %242 = vmatpush1.msra.mxu0 0.0
  %243 = vmatprep.subr.mxu0 0.0
  %244 = vmatpush1.msra.mxu0 0.0
  %245 = vmatprep.subr.mxu0 0.0
  %246 = vmatpush1.msra.mxu0 0.0
  %247 = vmatprep.subr.mxu0 0.0
  %248 = vmatpush1.msra.mxu0 0.0
  %249 = vmatprep.subr.mxu0 0.0
  %250 = vmatpush1.msra.mxu0 0.0
  %251 = vmatprep.subr.mxu0 0.0
  %252 = vmatpush1.msra.mxu0 0.0
  %253 = vmatprep.subr.mxu0 0.0
  %254 = vmatpush1.msra.mxu0 0.0
  %255 = vmatprep.subr.mxu0 0.0
  %256 = vmatpush1.msra.mxu0 0.0
  %257 = vmatprep.subr.mxu0 0.0
  %258 = vmatpush1.msra.mxu0 0.0
  %259 = vmatprep.subr.mxu0 0.0
  %260 = vmatpush1.msra.mxu0 0.0
  %261 = vmatprep.subr.mxu0 0.0
  %262 = vmatpush1.msra.mxu0 0.0
  %263 = vmatprep.subr.mxu0 0.0
  %264 = vmatpush1.msra.mxu0 0.0
  %265 = vmatprep.subr.mxu0 0.0
  %266 = vmatpush1.msra.mxu0 0.0
  %267 = vmatprep.subr.mxu0 0.0
  %268 = vmatpush1.msra.mxu0 0.0
  %269 = vmatprep.mubr.f32.mxu0 0.0
  %270 = vmatmul.mubr.f32.gmra.mrb[0].mxu0 %v129
  %v271 = vpop.f32.mrb[0].mxu0
  %v272 = vadd.f32 0.0, %v271
  %v273 = vpop.f32.mrb[0].mxu0
  %274 = vdwg.mxu0
  %v275 = vmax.f32 %v198, %v272
  %v276 = vsub.f32 %v198, %v275
  %v277 = vmul.f32 %v276, 1.442695
  %v278 = vpow.pop %v277
  %v279 = vsub.f32 %v272, %v275
  %v280 = vmul.f32 %v279, 1.442695
  %v281 = vpow.pop %v280
  %v282 = vadd.f32 %v278, %v281
  %v283 = vrcp.pop %v282
  %v284 = vmul.f32 %v278, %v283
  %vm285 = vcmask 25600
  %286 = vst.msk [vmem:[%s6] sm:$0x3] %vm285, %v284
  %v287 = vmul.f32 %v281, %v283
  %288 = vst.msk [vmem:[%s7] sm:$0x3] %vm285, %v287
  // Predicated region
  $region26: #{sk_bottleneck_forward.6} parent=0 // pred_check
    _
  $region27: #{sk_bottleneck_forward.6} parent=0 // pred_check_branch
    %290 = sbr.rel (0) target = $region29
  $region28: #{sk_bottleneck_forward.6} parent=0 // pred_region
    _
  $region29: #{sk_bottleneck_forward.6} parent=0 // pred_fallthru
    _
  // Predicated region
  $region30: #{sk_bottleneck_forward.6} parent=0 // pred_check
    _
  $region31: #{sk_bottleneck_forward.6} parent=0 // pred_check_branch
    %292 = sbr.rel (0) target = $region33
  $region32: #{sk_bottleneck_forward.6} parent=0 // pred_region
    _
  $region33: #{sk_bottleneck_forward.6} parent=0 // pred_fallthru
    _
  // Predicated region
  $region34: #{sk_bottleneck_forward.6} parent=0 // pred_check
    _
  $region35: #{sk_bottleneck_forward.6} parent=0 // pred_check_branch
    %294 = sbr.rel (0) target = $region37
  $region36: #{sk_bottleneck_forward.6} parent=0 // pred_region
    _
  $region37: #{sk_bottleneck_forward.6} parent=0 // pred_fallthru
    _
  // Predicated region
  $region38: #{sk_bottleneck_forward.6} parent=0 // pred_check
    _
  $region39: #{sk_bottleneck_forward.6} parent=0 // pred_check_branch
    %296 = sbr.rel (0) target = $region41
  $region40: #{sk_bottleneck_forward.6} parent=0 // pred_region
    _
  $region41: #{sk_bottleneck_forward.6} parent=0 // pred_fallthru
    _

// kernel: sk_bottleneck_forward.7
$region0: #{sk_bottleneck_forward.7}
  #allocation0 [shape = 'u32[]', space=smem, size = 0x4, offset = 0x4, fixed_abs, tag = 'smem constant byte address 0x4 - core index']
  #allocation1 [shape = 'u32[144,128]{1,0:T(1,128)}', space=vmem, size = 0x12000, scoped, tag = 'internal scratch']
  %s0 = inlined_call_operand.vmem [shape: bf16[2,256,4], index: 0, kind: input, shape index: {}]
  %s1 = inlined_call_operand.vmem [shape: bf16[2,256,4], index: 1, kind: input, shape index: {}]
  %s2 = inlined_call_operand.vmem [shape: f32[2,1,4], index: 2, kind: input, shape index: {}]
  %s3 = inlined_call_operand.vmem [shape: f32[2,1,4], index: 3, kind: input, shape index: {}]
  %s4 = inlined_call_operand.vmem [shape: bf16[4,16], index: 4, kind: input, shape index: {}]
  %s5 = inlined_call_operand.vmem [shape: f32[1,16], index: 5, kind: input, shape index: {}]
  %s6 = inlined_call_operand.vmem [shape: f32[1,16], index: 6, kind: input, shape index: {}]
  %s7 = inlined_call_operand.vmem [shape: f32[2,256,16], index: 7, kind: input, shape index: {}]
  %s8 = inlined_call_operand.vmem [shape: f32[2,256,16], index: 8, kind: output, shape index: {}]
  %s9 = sld [smem:[#allocation0]]
  $region65: #{sk_bottleneck_forward.7} parent=0
    _
  %s11 = ssub.s32 1, %s9
  %s12 = scalar_select 0, %s11, %s9
  loop: start=0, step=1, limit=4
  $region2: #{sk_bottleneck_forward.7} parent=0 // loop_pre_header
    _
  $region3: #{sk_bottleneck_forward.7} parent=0 // loop_header
    %s14 = sphi 0, %s18
    %p15 = scmp.ge.s32.totalorder %s14, 4
    %s21 = sphi 0, %s33
    %s22 = sphi 0, %s29
    %s23 = sphi 0, %s21
    %s24 = sphi 0, %s22
    %s25 = sphi 0, %s23
    %s26 = sphi 0, %s24
    %s38 = sphi 0, %s40
    %s41 = sphi 0, %s38
    %s42 = sphi 0, %s41
    %s58 = sphi 0, %s42
    %s66 = sphi 0, %s68
    %s69 = sphi 0, %s66
    %s70 = sphi 0, %s69
    %s86 = sphi 0, %s70
    %s92 = sphi 0, %s94
    %s95 = sphi 0, %s92
    %s96 = sphi 0, %s95
    %s112 = sphi 0, %s96
    %s118 = sphi 0, %s120
    %s121 = sphi 0, %s118
    %s122 = sphi 0, %s121
    %s138 = sphi 0, %s122
    %s142 = sphi 0, %s142
    %s144 = sphi 0, %s142
    %s145 = sphi 0, %s144
    %s159 = sphi 0, %s145
    %s163 = sphi 0, %s163
    %s165 = sphi 0, %s163
    %s166 = sphi 0, %s165
    %s180 = sphi 0, %s166
    %s184 = sphi 0, %s184
    %s186 = sphi 0, %s184
    %s187 = sphi 0, %s186
    %s201 = sphi 0, %s187
    %s209 = sphi 0, %s211
    %s212 = sphi 0, %s209
    %s213 = sphi 0, %s212
    %s229 = sphi 0, %s213
    %s237 = sphi 0, %s239
    %s240 = sphi 0, %s237
    %s241 = sphi 0, %s240
    %s257 = sphi 0, %s241
  $region4: #{sk_bottleneck_forward.7} parent=0 // loop_header_branch
    %17 = sbr.rel (%p15) target = $region8
  $region5: #{sk_bottleneck_forward.7} parent=0 // loop_body
    %s19 = ssub.s32 %s14, 1
    %s20 = ssub.s32 %s14, 2
    %s27 = sadd.s32 1, %s22
    %p28 = scmp.ge.s32.totalorder %s27, 1
    %s29 = scalar_select %p28, 0, %s27
    %s30 = sadd.s32 1, %s21
    %s31 = scalar_select %p28, %s30, %s21
    %p32 = scmp.ge.s32.totalorder %s31, 2
    %s33 = scalar_select %p32, 0, %s31
    %s34 = ssub.s32 %s21, %s33
    %s35 = ssub.s32 %s22, %s29
    %s36 = sor.u32 %s34, %s35
    %p37 = scmp.eq.s32.totalorder %s36, 0
    %s39 = sadd.s32 %s38, 1
    %s40 = scalar_select %p37, %s38, %s39
    %p43 = pneg %p37
    %p44 = scmp.eq.s32.totalorder %s14, 1
    %p45 = por %p43, %p44
    %p46 = scmp.ne.s32.totalorder %s38, %s41
    %p47 = scmp.eq.s32.totalorder %s14, 0
    %p48 = por %p46, %p47
    %p49 = scmp.ne.s32.totalorder %s38, %s41
    %p50 = scmp.eq.s32.totalorder %s19, 1
    %p51 = por %p49, %p50
    %p52 = scmp.ne.s32.totalorder %s41, %s42
    %p53 = scmp.eq.s32.totalorder %s19, 0
    %p54 = por %p52, %p53
    %p55 = scmp.ne.s32.totalorder %s41, %s42
    %p56 = scmp.eq.s32.totalorder %s20, 1
    %p57 = por %p55, %p56
    %p59 = scmp.ne.s32.totalorder %s42, %s58
    %p60 = scmp.eq.s32.totalorder %s20, 0
    %p61 = por %p59, %p60
    %s62 = ssub.s32 %s21, %s33
    %s63 = ssub.s32 %s22, %s29
    %s64 = sor.u32 %s62, %s63
    %p65 = scmp.eq.s32.totalorder %s64, 0
    %s67 = sadd.s32 %s66, 1
    %s68 = scalar_select %p65, %s66, %s67
    %p71 = pneg %p65
    %p72 = scmp.eq.s32.totalorder %s14, 1
    %p73 = por %p71, %p72
    %p74 = scmp.ne.s32.totalorder %s66, %s69
    %p75 = scmp.eq.s32.totalorder %s14, 0
    %p76 = por %p74, %p75
    %p77 = scmp.ne.s32.totalorder %s66, %s69
    %p78 = scmp.eq.s32.totalorder %s19, 1
    %p79 = por %p77, %p78
    %p80 = scmp.ne.s32.totalorder %s69, %s70
    %p81 = scmp.eq.s32.totalorder %s19, 0
    %p82 = por %p80, %p81
    %p83 = scmp.ne.s32.totalorder %s69, %s70
    %p84 = scmp.eq.s32.totalorder %s20, 1
    %p85 = por %p83, %p84
    %p87 = scmp.ne.s32.totalorder %s70, %s86
    %p88 = scmp.eq.s32.totalorder %s20, 0
    %p89 = por %p87, %p88
    %s90 = ssub.s32 %s21, %s33
    %p91 = scmp.eq.s32.totalorder %s90, 0
    %s93 = sadd.s32 %s92, 1
    %s94 = scalar_select %p91, %s92, %s93
    %p97 = pneg %p91
    %p98 = scmp.eq.s32.totalorder %s14, 1
    %p99 = por %p97, %p98
    %p100 = scmp.ne.s32.totalorder %s92, %s95
    %p101 = scmp.eq.s32.totalorder %s14, 0
    %p102 = por %p100, %p101
    %p103 = scmp.ne.s32.totalorder %s92, %s95
    %p104 = scmp.eq.s32.totalorder %s19, 1
    %p105 = por %p103, %p104
    %p106 = scmp.ne.s32.totalorder %s95, %s96
    %p107 = scmp.eq.s32.totalorder %s19, 0
    %p108 = por %p106, %p107
    %p109 = scmp.ne.s32.totalorder %s95, %s96
    %p110 = scmp.eq.s32.totalorder %s20, 1
    %p111 = por %p109, %p110
    %p113 = scmp.ne.s32.totalorder %s96, %s112
    %p114 = scmp.eq.s32.totalorder %s20, 0
    %p115 = por %p113, %p114
    %s116 = ssub.s32 %s21, %s33
    %p117 = scmp.eq.s32.totalorder %s116, 0
    %s119 = sadd.s32 %s118, 1
    %s120 = scalar_select %p117, %s118, %s119
    %p123 = pneg %p117
    %p124 = scmp.eq.s32.totalorder %s14, 1
    %p125 = por %p123, %p124
    %p126 = scmp.ne.s32.totalorder %s118, %s121
    %p127 = scmp.eq.s32.totalorder %s14, 0
    %p128 = por %p126, %p127
    %p129 = scmp.ne.s32.totalorder %s118, %s121
    %p130 = scmp.eq.s32.totalorder %s19, 1
    %p131 = por %p129, %p130
    %p132 = scmp.ne.s32.totalorder %s121, %s122
    %p133 = scmp.eq.s32.totalorder %s19, 0
    %p134 = por %p132, %p133
    %p135 = scmp.ne.s32.totalorder %s121, %s122
    %p136 = scmp.eq.s32.totalorder %s20, 1
    %p137 = por %p135, %p136
    %p139 = scmp.ne.s32.totalorder %s122, %s138
    %p140 = scmp.eq.s32.totalorder %s20, 0
    %p141 = por %p139, %p140
    %s143 = sadd.s32 %s142, 1
    %p146 = scmp.eq.s32.totalorder %s14, 1
    %p147 = scmp.ne.s32.totalorder %s142, %s144
    %p148 = scmp.eq.s32.totalorder %s14, 0
    %p149 = por %p147, %p148
    %p150 = scmp.ne.s32.totalorder %s142, %s144
    %p151 = scmp.eq.s32.totalorder %s19, 1
    %p152 = por %p150, %p151
    %p153 = scmp.ne.s32.totalorder %s144, %s145
    %p154 = scmp.eq.s32.totalorder %s19, 0
    %p155 = por %p153, %p154
    %p156 = scmp.ne.s32.totalorder %s144, %s145
    %p157 = scmp.eq.s32.totalorder %s20, 1
    %p158 = por %p156, %p157
    %p160 = scmp.ne.s32.totalorder %s145, %s159
    %p161 = scmp.eq.s32.totalorder %s20, 0
    %p162 = por %p160, %p161
    %s164 = sadd.s32 %s163, 1
    %p167 = scmp.eq.s32.totalorder %s14, 1
    %p168 = scmp.ne.s32.totalorder %s163, %s165
    %p169 = scmp.eq.s32.totalorder %s14, 0
    %p170 = por %p168, %p169
    %p171 = scmp.ne.s32.totalorder %s163, %s165
    %p172 = scmp.eq.s32.totalorder %s19, 1
    %p173 = por %p171, %p172
    %p174 = scmp.ne.s32.totalorder %s165, %s166
    %p175 = scmp.eq.s32.totalorder %s19, 0
    %p176 = por %p174, %p175
    %p177 = scmp.ne.s32.totalorder %s165, %s166
    %p178 = scmp.eq.s32.totalorder %s20, 1
    %p179 = por %p177, %p178
    %p181 = scmp.ne.s32.totalorder %s166, %s180
    %p182 = scmp.eq.s32.totalorder %s20, 0
    %p183 = por %p181, %p182
    %s185 = sadd.s32 %s184, 1
    %p188 = scmp.eq.s32.totalorder %s14, 1
    %p189 = scmp.ne.s32.totalorder %s184, %s186
    %p190 = scmp.eq.s32.totalorder %s14, 0
    %p191 = por %p189, %p190
    %p192 = scmp.ne.s32.totalorder %s184, %s186
    %p193 = scmp.eq.s32.totalorder %s19, 1
    %p194 = por %p192, %p193
    %p195 = scmp.ne.s32.totalorder %s186, %s187
    %p196 = scmp.eq.s32.totalorder %s19, 0
    %p197 = por %p195, %p196
    %p198 = scmp.ne.s32.totalorder %s186, %s187
    %p199 = scmp.eq.s32.totalorder %s20, 1
    %p200 = por %p198, %p199
    %p202 = scmp.ne.s32.totalorder %s187, %s201
    %p203 = scmp.eq.s32.totalorder %s20, 0
    %p204 = por %p202, %p203
    %s205 = ssub.s32 %s21, %s33
    %s206 = ssub.s32 %s22, %s29
    %s207 = sor.u32 %s205, %s206
    %p208 = scmp.eq.s32.totalorder %s207, 0
    %s210 = sadd.s32 %s209, 1
    %s211 = scalar_select %p208, %s209, %s210
    %p214 = pneg %p208
    %p215 = scmp.eq.s32.totalorder %s14, 1
    %p216 = por %p214, %p215
    %p217 = scmp.ne.s32.totalorder %s209, %s212
    %p218 = scmp.eq.s32.totalorder %s14, 0
    %p219 = por %p217, %p218
    %p220 = scmp.ne.s32.totalorder %s209, %s212
    %p221 = scmp.eq.s32.totalorder %s19, 1
    %p222 = por %p220, %p221
    %p223 = scmp.ne.s32.totalorder %s212, %s213
    %p224 = scmp.eq.s32.totalorder %s19, 0
    %p225 = por %p223, %p224
    %p226 = scmp.ne.s32.totalorder %s212, %s213
    %p227 = scmp.eq.s32.totalorder %s20, 1
    %p228 = por %p226, %p227
    %p230 = scmp.ne.s32.totalorder %s213, %s229
    %p231 = scmp.eq.s32.totalorder %s20, 0
    %p232 = por %p230, %p231
    %s233 = ssub.s32 %s21, %s33
    %s234 = ssub.s32 %s22, %s29
    %s235 = sor.u32 %s233, %s234
    %p236 = scmp.eq.s32.totalorder %s235, 0
    %s238 = sadd.s32 %s237, 1
    %s239 = scalar_select %p236, %s237, %s238
    %p242 = pneg %p236
    %p243 = scmp.eq.s32.totalorder %s14, 1
    %p244 = por %p242, %p243
    %p245 = scmp.ne.s32.totalorder %s237, %s240
    %p246 = scmp.eq.s32.totalorder %s14, 0
    %p247 = por %p245, %p246
    %p248 = scmp.ne.s32.totalorder %s237, %s240
    %p249 = scmp.eq.s32.totalorder %s19, 1
    %p250 = por %p248, %p249
    %p251 = scmp.ne.s32.totalorder %s240, %s241
    %p252 = scmp.eq.s32.totalorder %s19, 0
    %p253 = por %p251, %p252
    %p254 = scmp.ne.s32.totalorder %s240, %s241
    %p255 = scmp.eq.s32.totalorder %s20, 1
    %p256 = por %p254, %p255
    %p258 = scmp.ne.s32.totalorder %s241, %s257
    %p259 = scmp.eq.s32.totalorder %s20, 0
    %p260 = por %p258, %p259
    %p261 = scmp.le.s32.totalorder 1, %s14
    %p262 = scmp.lt.s32.totalorder %s14, 3
    %p263 = pnand %p261, %p262
    %p264 = pneg %p263
    // Predicated region
    $region9: #{sk_bottleneck_forward.7} parent=5 // pred_check
      _
    $region10: #{sk_bottleneck_forward.7} parent=5 // pred_check_branch
      %266 = sbr.rel (%p263) target = $region12
    $region11: #{sk_bottleneck_forward.7} parent=5 // pred_region
      %s267 = ssub.s32 %s14, 1
      // Predicated region
      $region13: #{sk_bottleneck_forward.7} parent=11 // pred_check
        %p268 = pneg %p155
      $region14: #{sk_bottleneck_forward.7} parent=11 // pred_check_branch
        %270 = sbr.rel (%p268) target = $region16
      $region15: #{sk_bottleneck_forward.7} parent=11 // pred_region
        _
      $region16: #{sk_bottleneck_forward.7} parent=11 // pred_fallthru
        _
      // Predicated region
      $region17: #{sk_bottleneck_forward.7} parent=11 // pred_check
        %p271 = pneg %p176
      $region18: #{sk_bottleneck_forward.7} parent=11 // pred_check_branch
        %273 = sbr.rel (%p271) target = $region20
      $region19: #{sk_bottleneck_forward.7} parent=11 // pred_region
        _
      $region20: #{sk_bottleneck_forward.7} parent=11 // pred_fallthru
        _
      // Predicated region
      $region21: #{sk_bottleneck_forward.7} parent=11 // pred_check
        %p274 = pneg %p197
      $region22: #{sk_bottleneck_forward.7} parent=11 // pred_check_branch
        %276 = sbr.rel (%p274) target = $region24
      $region23: #{sk_bottleneck_forward.7} parent=11 // pred_region
        _
      $region24: #{sk_bottleneck_forward.7} parent=11 // pred_fallthru
        _
    $region12: #{sk_bottleneck_forward.7} parent=5 // pred_fallthru
      _
    %p277 = scmp.lt.s32.totalorder %s14, 2
    // Predicated region
    $region25: #{sk_bottleneck_forward.7} parent=5 // pred_check
      %p278 = pneg %p277
    $region26: #{sk_bottleneck_forward.7} parent=5 // pred_check_branch
      %280 = sbr.rel (%p278) target = $region28
    $region27: #{sk_bottleneck_forward.7} parent=5 // pred_region
      // Predicated region
      $region29: #{sk_bottleneck_forward.7} parent=27 // pred_check
        %p281 = pneg %p48
      $region30: #{sk_bottleneck_forward.7} parent=27 // pred_check_branch
        %283 = sbr.rel (%p281) target = $region32
      $region31: #{sk_bottleneck_forward.7} parent=27 // pred_region
        %s284 = smul.u32 32, %s22
        %p285 = scmp.lt.s32.totalorder %s21, 1
        %s286 = scalar_select %p285, %s21, 1
        %p287 = scmp.lt.s32.totalorder %s284, 31
        %s288 = scalar_select %p287, %s284, 31
        %s289 = smul.addr %s286, 32
        %s290 = sadd.s32 %s288, %s289
        %s291 = smul.addr %s290, 4
        %s292 = scalar_lea.vmem %s0, %s291
        %s293 = smul.u32 32, %s22
      $region32: #{sk_bottleneck_forward.7} parent=27 // pred_fallthru
        _
      // Predicated region
      $region33: #{sk_bottleneck_forward.7} parent=27 // pred_check
        %p294 = pneg %p76
      $region34: #{sk_bottleneck_forward.7} parent=27 // pred_check_branch
        %296 = sbr.rel (%p294) target = $region36
      $region35: #{sk_bottleneck_forward.7} parent=27 // pred_region
        %s297 = smul.u32 32, %s22
        %p298 = scmp.lt.s32.totalorder %s21, 1
        %s299 = scalar_select %p298, %s21, 1
        %p300 = scmp.lt.s32.totalorder %s297, 31
        %s301 = scalar_select %p300, %s297, 31
        %s302 = smul.addr %s299, 32
        %s303 = sadd.s32 %s301, %s302
        %s304 = smul.addr %s303, 4
        %s305 = scalar_lea.vmem %s1, %s304
        %s306 = smul.u32 32, %s22
      $region36: #{sk_bottleneck_forward.7} parent=27 // pred_fallthru
        _
      // Predicated region
      $region37: #{sk_bottleneck_forward.7} parent=27 // pred_check
        %p307 = pneg %p102
      $region38: #{sk_bottleneck_forward.7} parent=27 // pred_check_branch
        %309 = sbr.rel (%p307) target = $region40
      $region39: #{sk_bottleneck_forward.7} parent=27 // pred_region
        %p310 = scmp.lt.s32.totalorder %s21, 1
        %s311 = scalar_select %p310, %s21, 1
        %s312 = scalar_lea.vmem %s2, %s311
      $region40: #{sk_bottleneck_forward.7} parent=27 // pred_fallthru
        _
      // Predicated region
      $region41: #{sk_bottleneck_forward.7} parent=27 // pred_check
        %p313 = pneg %p128
      $region42: #{sk_bottleneck_forward.7} parent=27 // pred_check_branch
        %315 = sbr.rel (%p313) target = $region44
      $region43: #{sk_bottleneck_forward.7} parent=27 // pred_region
        %p316 = scmp.lt.s32.totalorder %s21, 1
        %s317 = scalar_select %p316, %s21, 1
        %s318 = scalar_lea.vmem %s3, %s317
      $region44: #{sk_bottleneck_forward.7} parent=27 // pred_fallthru
        _
      // Predicated region
      $region45: #{sk_bottleneck_forward.7} parent=27 // pred_check
        %p319 = pneg %p219
      $region46: #{sk_bottleneck_forward.7} parent=27 // pred_check_branch
        %321 = sbr.rel (%p319) target = $region48
      $region47: #{sk_bottleneck_forward.7} parent=27 // pred_region
        %s322 = smul.u32 32, %s22
        %p323 = scmp.lt.s32.totalorder %s21, 1
        %s324 = scalar_select %p323, %s21, 1
        %p325 = scmp.lt.s32.totalorder %s322, 31
        %s326 = scalar_select %p325, %s322, 31
        %s327 = smul.addr %s324, 32
        %s328 = sadd.s32 %s326, %s327
        %s329 = smul.addr %s328, 8
        %s330 = scalar_lea.vmem %s7, %s329
        %s331 = smul.u32 32, %s22
      $region48: #{sk_bottleneck_forward.7} parent=27 // pred_fallthru
        _
    $region28: #{sk_bottleneck_forward.7} parent=5 // pred_fallthru
      _
    %p332 = scmp.le.s32.totalorder 1, %s14
    %p333 = scmp.lt.s32.totalorder %s14, 3
    %p334 = pnand %p332, %p333
    %p335 = pneg %p334
    // Predicated region
    $region49: #{sk_bottleneck_forward.7} parent=5 // pred_check
      _
    $region50: #{sk_bottleneck_forward.7} parent=5 // pred_check_branch
      %337 = sbr.rel (%p334) target = $region52
    $region51: #{sk_bottleneck_forward.7} parent=5 // pred_region
      %s338 = ssub.s32 %s14, 1
      %s339 = smul.u32 32, %s24
      %p340 = scmp.lt.s32.totalorder %s23, 1
      %s341 = scalar_select %p340, %s23, 1
      %p342 = scmp.lt.s32.totalorder %s339, 31
      %s343 = scalar_select %p342, %s339, 31
      %s344 = smul.addr %s341, 32
      %s345 = sadd.s32 %s343, %s344
      %s346 = smul.addr %s345, 4
      %s347 = scalar_lea.vmem %s0, %s346
      %p348 = pneg %p54
      %p349 = pneg %p51
      %s350 = smul.u32 32, %s24
      %p351 = scmp.lt.s32.totalorder %s23, 1
      %s352 = scalar_select %p351, %s23, 1
      %p353 = scmp.lt.s32.totalorder %s350, 31
      %s354 = scalar_select %p353, %s350, 31
      %s355 = smul.addr %s352, 32
      %s356 = sadd.s32 %s354, %s355
      %s357 = smul.addr %s356, 4
      %s358 = scalar_lea.vmem %s1, %s357
      %p359 = pneg %p82
      %p360 = pneg %p79
      %p361 = scmp.lt.s32.totalorder %s23, 1
      %s362 = scalar_select %p361, %s23, 1
      %s363 = scalar_lea.vmem %s2, %s362
      %p364 = pneg %p108
      %p365 = pneg %p105
      %p366 = scmp.lt.s32.totalorder %s23, 1
      %s367 = scalar_select %p366, %s23, 1
      %s368 = scalar_lea.vmem %s3, %s367
      %p369 = pneg %p134
      %p370 = pneg %p131
      %p371 = pneg %p155
      %p372 = pneg %p152
      %p373 = pneg %p176
      %p374 = pneg %p173
      %p375 = pneg %p197
      %p376 = pneg %p194
      %s377 = smul.u32 32, %s24
      %p378 = scmp.lt.s32.totalorder %s23, 1
      %s379 = scalar_select %p378, %s23, 1
      %p380 = scmp.lt.s32.totalorder %s377, 31
      %s381 = scalar_select %p380, %s377, 31
      %s382 = smul.addr %s379, 32
      %s383 = sadd.s32 %s381, %s382
      %s384 = smul.addr %s383, 8
      %s385 = scalar_lea.vmem %s7, %s384
      %p386 = pneg %p225
      %p387 = pneg %p222
      %p388 = pneg %p253
      %p389 = pneg %p250
      %s390 = smul.u32 32, %s24
      %p391 = scmp.lt.s32.totalorder %s23, 1
      %s392 = scalar_select %p391, %s23, 1
      %p393 = scmp.lt.s32.totalorder %s390, 31
      %s394 = scalar_select %p393, %s390, 31
      %s395 = smul.addr %s392, 32
      %s396 = sadd.s32 %s394, %s395
      %s397 = smul.addr %s396, 8
      %s398 = scalar_lea.vmem %s8, %s397
      %s399 = smul.u32 32, %s24
      %p400 = scmp.lt.s32.totalorder %s23, 1
      %s401 = scalar_select %p400, %s23, 1
      %p402 = scmp.lt.s32.totalorder %s399, 31
      %s403 = scalar_select %p402, %s399, 31
      %s404 = smul.addr %s401, 32
      %s405 = sadd.s32 %s403, %s404
      %s406 = smul.addr %s405, 4
      %s407 = scalar_lea.vmem %s0, %s406
      %s408 = smul.u32 32, %s24
      %s409 = smul.u32 32, %s24
      %p410 = scmp.lt.s32.totalorder %s23, 1
      %s411 = scalar_select %p410, %s23, 1
      %p412 = scmp.lt.s32.totalorder %s409, 31
      %s413 = scalar_select %p412, %s409, 31
      %s414 = smul.addr %s411, 32
      %s415 = sadd.s32 %s413, %s414
      %s416 = smul.addr %s415, 4
      %s417 = scalar_lea.vmem %s1, %s416
      %s418 = smul.u32 32, %s24
      %p419 = scmp.lt.s32.totalorder %s23, 1
      %s420 = scalar_select %p419, %s23, 1
      %s421 = scalar_lea.vmem %s2, %s420
      %p422 = scmp.lt.s32.totalorder %s23, 1
      %s423 = scalar_select %p422, %s23, 1
      %s424 = scalar_lea.vmem %s3, %s423
      %s425 = smul.u32 32, %s24
      %p426 = scmp.lt.s32.totalorder %s23, 1
      %s427 = scalar_select %p426, %s23, 1
      %p428 = scmp.lt.s32.totalorder %s425, 31
      %s429 = scalar_select %p428, %s425, 31
      %s430 = smul.addr %s427, 32
      %s431 = sadd.s32 %s429, %s430
      %s432 = smul.addr %s431, 8
      %s433 = scalar_lea.vmem %s7, %s432
      %s434 = smul.u32 32, %s24
      %s435 = smul.u32 32, %s24
      %p436 = scmp.lt.s32.totalorder %s23, 1
      %s437 = scalar_select %p436, %s23, 1
      %p438 = scmp.lt.s32.totalorder %s435, 31
      %s439 = scalar_select %p438, %s435, 31
      %s440 = smul.addr %s437, 32
      %s441 = sadd.s32 %s439, %s440
      %s442 = smul.addr %s441, 8
      %s443 = scalar_lea.vmem %s8, %s442
      %s444 = smul.u32 32, %s24
      %v446 = vld [vmem:[%s421] sm:$0x1]
      %v447 = vld [vmem:[%s407] sm:$0xf]
      %v448 = vld [vmem:[%s407 + $0x4] sm:$0xf]
      %v449 = vld [vmem:[%s407 + $0x8] sm:$0xf]
      %v450 = vld [vmem:[%s407 + $0xc] sm:$0xf]
      %v451 = vld [vmem:[%s407 + $0x10] sm:$0xf]
      %v452 = vld [vmem:[%s407 + $0x14] sm:$0xf]
      %v453 = vld [vmem:[%s407 + $0x18] sm:$0xf]
      %v454 = vld [vmem:[%s407 + $0x1c] sm:$0xf]
      %v455 = vld [vmem:[%s407 + $0x20] sm:$0xf]
      %v456 = vld [vmem:[%s407 + $0x24] sm:$0xf]
      %v457 = vld [vmem:[%s407 + $0x28] sm:$0xf]
      %v458 = vld [vmem:[%s407 + $0x2c] sm:$0xf]
      %v459 = vld [vmem:[%s407 + $0x30] sm:$0xf]
      %v460 = vld [vmem:[%s407 + $0x34] sm:$0xf]
      %v461 = vld [vmem:[%s407 + $0x38] sm:$0xf]
      %v462 = vld [vmem:[%s407 + $0x3c] sm:$0xf]
      %v463 = vld [vmem:[%s407 + $0x40] sm:$0xf]
      %v464 = vld [vmem:[%s407 + $0x44] sm:$0xf]
      %v465 = vld [vmem:[%s407 + $0x48] sm:$0xf]
      %v466 = vld [vmem:[%s407 + $0x4c] sm:$0xf]
      %v467 = vld [vmem:[%s407 + $0x50] sm:$0xf]
      %v468 = vld [vmem:[%s407 + $0x54] sm:$0xf]
      %v469 = vld [vmem:[%s407 + $0x58] sm:$0xf]
      %v470 = vld [vmem:[%s407 + $0x5c] sm:$0xf]
      %v471 = vld [vmem:[%s407 + $0x60] sm:$0xf]
      %v472 = vld [vmem:[%s407 + $0x64] sm:$0xf]
      %v473 = vld [vmem:[%s407 + $0x68] sm:$0xf]
      %v474 = vld [vmem:[%s407 + $0x6c] sm:$0xf]
      %v475 = vld [vmem:[%s407 + $0x70] sm:$0xf]
      %v476 = vld [vmem:[%s407 + $0x74] sm:$0xf]
      %v477 = vld [vmem:[%s407 + $0x78] sm:$0xf]
      %v478 = vld [vmem:[%s407 + $0x7c] sm:$0xf]
      %v479 = vunpack.c.l.bf16 %v447
      %v480 = vunpack.c.l.bf16 %v448
      %v481 = vunpack.c.l.bf16 %v449
      %v482 = vunpack.c.l.bf16 %v450
      %v483 = vunpack.c.l.bf16 %v451
      %v484 = vunpack.c.l.bf16 %v452
      %v485 = vunpack.c.l.bf16 %v453
      %v486 = vunpack.c.l.bf16 %v454
      %v487 = vunpack.c.l.bf16 %v455
      %v488 = vunpack.c.l.bf16 %v456
      %v489 = vunpack.c.l.bf16 %v457
      %v490 = vunpack.c.l.bf16 %v458
      %v491 = vunpack.c.l.bf16 %v459
      %v492 = vunpack.c.l.bf16 %v460
      %v493 = vunpack.c.l.bf16 %v461
      %v494 = vunpack.c.l.bf16 %v462
      %v495 = vunpack.c.l.bf16 %v463
      %v496 = vunpack.c.l.bf16 %v464
      %v497 = vunpack.c.l.bf16 %v465
      %v498 = vunpack.c.l.bf16 %v466
      %v499 = vunpack.c.l.bf16 %v467
      %v500 = vunpack.c.l.bf16 %v468
      %v501 = vunpack.c.l.bf16 %v469
      %v502 = vunpack.c.l.bf16 %v470
      %v503 = vunpack.c.l.bf16 %v471
      %v504 = vunpack.c.l.bf16 %v472
      %v505 = vunpack.c.l.bf16 %v473
      %v506 = vunpack.c.l.bf16 %v474
      %v507 = vunpack.c.l.bf16 %v475
      %v508 = vunpack.c.l.bf16 %v476
      %v509 = vunpack.c.l.bf16 %v477
      %v510 = vunpack.c.l.bf16 %v478
      %v512 = vlaneseq
      %v513 = vshrl.u32 %v512, 7
      %v514 = vsub.s32 0, %v513
      %v515 = vrot.slane %v446, %v514
      %v517 = vmul.f32 %v515, %v479
      %v518 = vmul.f32 %v515, %v480
      %v519 = vmul.f32 %v515, %v481
      %v520 = vmul.f32 %v515, %v482
      %v521 = vmul.f32 %v515, %v483
      %v522 = vmul.f32 %v515, %v484
      %v523 = vmul.f32 %v515, %v485
      %v524 = vmul.f32 %v515, %v486
      %v525 = vmul.f32 %v515, %v487
      %v526 = vmul.f32 %v515, %v488
      %v527 = vmul.f32 %v515, %v489
      %v528 = vmul.f32 %v515, %v490
      %v529 = vmul.f32 %v515, %v491
      %v530 = vmul.f32 %v515, %v492
      %v531 = vmul.f32 %v515, %v493
      %v532 = vmul.f32 %v515, %v494
      %v533 = vmul.f32 %v515, %v495
      %v534 = vmul.f32 %v515, %v496
      %v535 = vmul.f32 %v515, %v497
      %v536 = vmul.f32 %v515, %v498
      %v537 = vmul.f32 %v515, %v499
      %v538 = vmul.f32 %v515, %v500
      %v539 = vmul.f32 %v515, %v501
      %v540 = vmul.f32 %v515, %v502
      %v541 = vmul.f32 %v515, %v503
      %v542 = vmul.f32 %v515, %v504
      %v543 = vmul.f32 %v515, %v505
      %v544 = vmul.f32 %v515, %v506
      %v545 = vmul.f32 %v515, %v507
      %v546 = vmul.f32 %v515, %v508
      %v547 = vmul.f32 %v515, %v509
      %v548 = vmul.f32 %v515, %v510
      %v549 = vld [vmem:[%s424] sm:$0x1]
      %v550 = vld [vmem:[%s417] sm:$0xf]
      %v551 = vld [vmem:[%s417 + $0x4] sm:$0xf]
      %v552 = vld [vmem:[%s417 + $0x8] sm:$0xf]
      %v553 = vld [vmem:[%s417 + $0xc] sm:$0xf]
      %v554 = vld [vmem:[%s417 + $0x10] sm:$0xf]
      %v555 = vld [vmem:[%s417 + $0x14] sm:$0xf]
      %v556 = vld [vmem:[%s417 + $0x18] sm:$0xf]
      %v557 = vld [vmem:[%s417 + $0x1c] sm:$0xf]
      %v558 = vld [vmem:[%s417 + $0x20] sm:$0xf]
      %v559 = vld [vmem:[%s417 + $0x24] sm:$0xf]
      %v560 = vld [vmem:[%s417 + $0x28] sm:$0xf]
      %v561 = vld [vmem:[%s417 + $0x2c] sm:$0xf]
      %v562 = vld [vmem:[%s417 + $0x30] sm:$0xf]
      %v563 = vld [vmem:[%s417 + $0x34] sm:$0xf]
      %v564 = vld [vmem:[%s417 + $0x38] sm:$0xf]
      %v565 = vld [vmem:[%s417 + $0x3c] sm:$0xf]
      %v566 = vld [vmem:[%s417 + $0x40] sm:$0xf]
      %v567 = vld [vmem:[%s417 + $0x44] sm:$0xf]
      %v568 = vld [vmem:[%s417 + $0x48] sm:$0xf]
      %v569 = vld [vmem:[%s417 + $0x4c] sm:$0xf]
      %v570 = vld [vmem:[%s417 + $0x50] sm:$0xf]
      %v571 = vld [vmem:[%s417 + $0x54] sm:$0xf]
      %v572 = vld [vmem:[%s417 + $0x58] sm:$0xf]
      %v573 = vld [vmem:[%s417 + $0x5c] sm:$0xf]
      %v574 = vld [vmem:[%s417 + $0x60] sm:$0xf]
      %v575 = vld [vmem:[%s417 + $0x64] sm:$0xf]
      %v576 = vld [vmem:[%s417 + $0x68] sm:$0xf]
      %v577 = vld [vmem:[%s417 + $0x6c] sm:$0xf]
      %v578 = vld [vmem:[%s417 + $0x70] sm:$0xf]
      %v579 = vld [vmem:[%s417 + $0x74] sm:$0xf]
      %v580 = vld [vmem:[%s417 + $0x78] sm:$0xf]
      %v581 = vld [vmem:[%s417 + $0x7c] sm:$0xf]
      %v582 = vunpack.c.l.bf16 %v550
      %v583 = vunpack.c.l.bf16 %v551
      %v584 = vunpack.c.l.bf16 %v552
      %v585 = vunpack.c.l.bf16 %v553
      %v586 = vunpack.c.l.bf16 %v554
      %v587 = vunpack.c.l.bf16 %v555
      %v588 = vunpack.c.l.bf16 %v556
      %v589 = vunpack.c.l.bf16 %v557
      %v590 = vunpack.c.l.bf16 %v558
      %v591 = vunpack.c.l.bf16 %v559
      %v592 = vunpack.c.l.bf16 %v560
      %v593 = vunpack.c.l.bf16 %v561
      %v594 = vunpack.c.l.bf16 %v562
      %v595 = vunpack.c.l.bf16 %v563
      %v596 = vunpack.c.l.bf16 %v564
      %v597 = vunpack.c.l.bf16 %v565
      %v598 = vunpack.c.l.bf16 %v566
      %v599 = vunpack.c.l.bf16 %v567
      %v600 = vunpack.c.l.bf16 %v568
      %v601 = vunpack.c.l.bf16 %v569
      %v602 = vunpack.c.l.bf16 %v570
      %v603 = vunpack.c.l.bf16 %v571
      %v604 = vunpack.c.l.bf16 %v572
      %v605 = vunpack.c.l.bf16 %v573
      %v606 = vunpack.c.l.bf16 %v574
      %v607 = vunpack.c.l.bf16 %v575
      %v608 = vunpack.c.l.bf16 %v576
      %v609 = vunpack.c.l.bf16 %v577
      %v610 = vunpack.c.l.bf16 %v578
      %v611 = vunpack.c.l.bf16 %v579
      %v612 = vunpack.c.l.bf16 %v580
      %v613 = vunpack.c.l.bf16 %v581
      %v615 = vlaneseq
      %v616 = vshrl.u32 %v615, 7
      %v617 = vsub.s32 0, %v616
      %v618 = vrot.slane %v549, %v617
      %v620 = vmul.f32 %v618, %v582
      %v621 = vmul.f32 %v618, %v583
      %v622 = vmul.f32 %v618, %v584
      %v623 = vmul.f32 %v618, %v585
      %v624 = vmul.f32 %v618, %v586
      %v625 = vmul.f32 %v618, %v587
      %v626 = vmul.f32 %v618, %v588
      %v627 = vmul.f32 %v618, %v589
      %v628 = vmul.f32 %v618, %v590
      %v629 = vmul.f32 %v618, %v591
      %v630 = vmul.f32 %v618, %v592
      %v631 = vmul.f32 %v618, %v593
      %v632 = vmul.f32 %v618, %v594
      %v633 = vmul.f32 %v618, %v595
      %v634 = vmul.f32 %v618, %v596
      %v635 = vmul.f32 %v618, %v597
      %v636 = vmul.f32 %v618, %v598
      %v637 = vmul.f32 %v618, %v599
      %v638 = vmul.f32 %v618, %v600
      %v639 = vmul.f32 %v618, %v601
      %v640 = vmul.f32 %v618, %v602
      %v641 = vmul.f32 %v618, %v603
      %v642 = vmul.f32 %v618, %v604
      %v643 = vmul.f32 %v618, %v605
      %v644 = vmul.f32 %v618, %v606
      %v645 = vmul.f32 %v618, %v607
      %v646 = vmul.f32 %v618, %v608
      %v647 = vmul.f32 %v618, %v609
      %v648 = vmul.f32 %v618, %v610
      %v649 = vmul.f32 %v618, %v611
      %v650 = vmul.f32 %v618, %v612
      %v651 = vmul.f32 %v618, %v613
      %v652 = vadd.f32 %v517, %v620
      %v653 = vadd.f32 %v518, %v621
      %v654 = vadd.f32 %v519, %v622
      %v655 = vadd.f32 %v520, %v623
      %v656 = vadd.f32 %v521, %v624
      %v657 = vadd.f32 %v522, %v625
      %v658 = vadd.f32 %v523, %v626
      %v659 = vadd.f32 %v524, %v627
      %v660 = vadd.f32 %v525, %v628
      %v661 = vadd.f32 %v526, %v629
      %v662 = vadd.f32 %v527, %v630
      %v663 = vadd.f32 %v528, %v631
      %v664 = vadd.f32 %v529, %v632
      %v665 = vadd.f32 %v530, %v633
      %v666 = vadd.f32 %v531, %v634
      %v667 = vadd.f32 %v532, %v635
      %v668 = vadd.f32 %v533, %v636
      %v669 = vadd.f32 %v534, %v637
      %v670 = vadd.f32 %v535, %v638
      %v671 = vadd.f32 %v536, %v639
      %v672 = vadd.f32 %v537, %v640
      %v673 = vadd.f32 %v538, %v641
      %v674 = vadd.f32 %v539, %v642
      %v675 = vadd.f32 %v540, %v643
      %v676 = vadd.f32 %v541, %v644
      %v677 = vadd.f32 %v542, %v645
      %v678 = vadd.f32 %v543, %v646
      %v679 = vadd.f32 %v544, %v647
      %v680 = vadd.f32 %v545, %v648
      %v681 = vadd.f32 %v546, %v649
      %v682 = vadd.f32 %v547, %v650
      %v683 = vadd.f32 %v548, %v651
      %v684 = vpack.c.bf16 %v653, %v652
      %v685 = vpack.c.bf16 %v655, %v654
      %v686 = vpack.c.bf16 %v657, %v656
      %v687 = vpack.c.bf16 %v659, %v658
      %v688 = vpack.c.bf16 %v661, %v660
      %v689 = vpack.c.bf16 %v663, %v662
      %v690 = vpack.c.bf16 %v665, %v664
      %v691 = vpack.c.bf16 %v667, %v666
      %v692 = vpack.c.bf16 %v669, %v668
      %v693 = vpack.c.bf16 %v671, %v670
      %v694 = vpack.c.bf16 %v673, %v672
      %v695 = vpack.c.bf16 %v675, %v674
      %v696 = vpack.c.bf16 %v677, %v676
      %v697 = vpack.c.bf16 %v679, %v678
      %v698 = vpack.c.bf16 %v681, %v680
      %v699 = vpack.c.bf16 %v683, %v682
      %v700 = vld [vmem:[%s4] sm:$0x3]
      %vm701 = vcmask 31744
      %v703 = vsel %vm701, %v684, 0
      %v706 = vsel %vm701, %v685, 0
      %v709 = vsel %vm701, %v686, 0
      %v712 = vsel %vm701, %v687, 0
      %v715 = vsel %vm701, %v688, 0
      %v718 = vsel %vm701, %v689, 0
      %v721 = vsel %vm701, %v690, 0
      %v724 = vsel %vm701, %v691, 0
      %v727 = vsel %vm701, %v692, 0
      %v730 = vsel %vm701, %v693, 0
      %v733 = vsel %vm701, %v694, 0
      %v736 = vsel %vm701, %v695, 0
      %v739 = vsel %vm701, %v696, 0
      %v742 = vsel %vm701, %v697, 0
      %v745 = vsel %vm701, %v698, 0
      %v748 = vsel %vm701, %v699, 0
      %vm750 = vcmask 1041408
      %v752 = vsel %vm750, %v700, 0
      %754 = vmatprep.subr.bf16.mxu0 0
      %755 = vmatpush1.bf16.msra.mxu0 %v752
      %756 = vmatprep.subr.bf16.mxu0 0
      %757 = vmatpush1.bf16.msra.mxu0 0
      %758 = vmatprep.subr.bf16.mxu0 0
      %759 = vmatpush1.bf16.msra.mxu0 0
      %760 = vmatprep.subr.bf16.mxu0 0
      %761 = vmatpush1.bf16.msra.mxu0 0
      %762 = vmatprep.subr.bf16.mxu0 0
      %763 = vmatpush1.bf16.msra.mxu0 0
      %764 = vmatprep.subr.bf16.mxu0 0
      %765 = vmatpush1.bf16.msra.mxu0 0
      %766 = vmatprep.subr.bf16.mxu0 0
      %767 = vmatpush1.bf16.msra.mxu0 0
      %768 = vmatprep.subr.bf16.mxu0 0
      %769 = vmatpush1.bf16.msra.mxu0 0
      %770 = vmatprep.subr.bf16.mxu0 0
      %771 = vmatpush1.bf16.msra.mxu0 0
      %772 = vmatprep.subr.bf16.mxu0 0
      %773 = vmatpush1.bf16.msra.mxu0 0
      %774 = vmatprep.subr.bf16.mxu0 0
      %775 = vmatpush1.bf16.msra.mxu0 0
      %776 = vmatprep.subr.bf16.mxu0 0
      %777 = vmatpush1.bf16.msra.mxu0 0
      %778 = vmatprep.subr.bf16.mxu0 0
      %779 = vmatpush1.bf16.msra.mxu0 0
      %780 = vmatprep.subr.bf16.mxu0 0
      %781 = vmatpush1.bf16.msra.mxu0 0
      %782 = vmatprep.subr.bf16.mxu0 0
      %783 = vmatpush1.bf16.msra.mxu0 0
      %784 = vmatprep.subr.bf16.mxu0 0
      %785 = vmatpush1.bf16.msra.mxu0 0
      %786 = vmatprep.mubr.bf16.mxu0 0
      %787 = vmatmul.mubr.bf16.gmra.mrb[0].mxu0 %v703
      %v788 = vpop.f32.mrb[0].mxu0
      %v789 = vadd.f32 0.0, %v788
      %v790 = vpop.f32.mrb[0].mxu0
      %v791 = vpop.f32.mrb[0].mxu0
      %v792 = vadd.f32 0.0, %v791
      %v793 = vpop.f32.mrb[0].mxu0
      %794 = vmatprep.mubr.bf16.mxu0 0
      %795 = vmatmul.mubr.bf16.gmra.mrb[0].mxu0 %v706
      %v796 = vpop.f32.mrb[0].mxu0
      %v797 = vadd.f32 0.0, %v796
      %v798 = vpop.f32.mrb[0].mxu0
      %v799 = vpop.f32.mrb[0].mxu0
      %v800 = vadd.f32 0.0, %v799
      %v801 = vpop.f32.mrb[0].mxu0
      %802 = vmatprep.mubr.bf16.mxu0 0
      %803 = vmatmul.mubr.bf16.gmra.mrb[0].mxu0 %v709
      %v804 = vpop.f32.mrb[0].mxu0
      %v805 = vadd.f32 0.0, %v804
      %v806 = vpop.f32.mrb[0].mxu0
      %v807 = vpop.f32.mrb[0].mxu0
      %v808 = vadd.f32 0.0, %v807
      %v809 = vpop.f32.mrb[0].mxu0
      %810 = vmatprep.mubr.bf16.mxu0 0
      %811 = vmatmul.mubr.bf16.gmra.mrb[0].mxu0 %v712
      %v812 = vpop.f32.mrb[0].mxu0
      %v813 = vadd.f32 0.0, %v812
      %v814 = vpop.f32.mrb[0].mxu0
      %v815 = vpop.f32.mrb[0].mxu0
      %v816 = vadd.f32 0.0, %v815
      %v817 = vpop.f32.mrb[0].mxu0
      %818 = vmatprep.mubr.bf16.mxu0 0
      %819 = vmatmul.mubr.bf16.gmra.mrb[0].mxu0 %v715
      %v820 = vpop.f32.mrb[0].mxu0
      %v821 = vadd.f32 0.0, %v820
      %v822 = vpop.f32.mrb[0].mxu0
      %v823 = vpop.f32.mrb[0].mxu0
      %v824 = vadd.f32 0.0, %v823
      %v825 = vpop.f32.mrb[0].mxu0
      %826 = vmatprep.mubr.bf16.mxu0 0
      %827 = vmatmul.mubr.bf16.gmra.mrb[0].mxu0 %v718
      %v828 = vpop.f32.mrb[0].mxu0
      %v829 = vadd.f32 0.0, %v828
      %v830 = vpop.f32.mrb[0].mxu0
      %v831 = vpop.f32.mrb[0].mxu0
      %v832 = vadd.f32 0.0, %v831
      %v833 = vpop.f32.mrb[0].mxu0
      %834 = vmatprep.mubr.bf16.mxu0 0
      %835 = vmatmul.mubr.bf16.gmra.mrb[0].mxu0 %v721
      %v836 = vpop.f32.mrb[0].mxu0
      %v837 = vadd.f32 0.0, %v836
      %v838 = vpop.f32.mrb[0].mxu0
      %v839 = vpop.f32.mrb[0].mxu0
      %v840 = vadd.f32 0.0, %v839
      %v841 = vpop.f32.mrb[0].mxu0
      %842 = vmatprep.mubr.bf16.mxu0 0
      %843 = vmatmul.mubr.bf16.gmra.mrb[0].mxu0 %v724
      %v844 = vpop.f32.mrb[0].mxu0
      %v845 = vadd.f32 0.0, %v844
      %v846 = vpop.f32.mrb[0].mxu0
      %v847 = vpop.f32.mrb[0].mxu0
      %v848 = vadd.f32 0.0, %v847
      %v849 = vpop.f32.mrb[0].mxu0
      %850 = vmatprep.mubr.bf16.mxu0 0
      %851 = vmatmul.mubr.bf16.gmra.mrb[0].mxu0 %v727
      %v852 = vpop.f32.mrb[0].mxu0
      %v853 = vadd.f32 0.0, %v852
      %v854 = vpop.f32.mrb[0].mxu0
      %v855 = vpop.f32.mrb[0].mxu0
      %v856 = vadd.f32 0.0, %v855
      %v857 = vpop.f32.mrb[0].mxu0
      %858 = vmatprep.mubr.bf16.mxu0 0
      %859 = vmatmul.mubr.bf16.gmra.mrb[0].mxu0 %v730
      %v860 = vpop.f32.mrb[0].mxu0
      %v861 = vadd.f32 0.0, %v860
      %v862 = vpop.f32.mrb[0].mxu0
      %v863 = vpop.f32.mrb[0].mxu0
      %v864 = vadd.f32 0.0, %v863
      %v865 = vpop.f32.mrb[0].mxu0
      %866 = vmatprep.mubr.bf16.mxu0 0
      %867 = vmatmul.mubr.bf16.gmra.mrb[0].mxu0 %v733
      %v868 = vpop.f32.mrb[0].mxu0
      %v869 = vadd.f32 0.0, %v868
      %v870 = vpop.f32.mrb[0].mxu0
      %v871 = vpop.f32.mrb[0].mxu0
      %v872 = vadd.f32 0.0, %v871
      %v873 = vpop.f32.mrb[0].mxu0
      %874 = vmatprep.mubr.bf16.mxu0 0
      %875 = vmatmul.mubr.bf16.gmra.mrb[0].mxu0 %v736
      %v876 = vpop.f32.mrb[0].mxu0
      %v877 = vadd.f32 0.0, %v876
      %v878 = vpop.f32.mrb[0].mxu0
      %v879 = vpop.f32.mrb[0].mxu0
      %v880 = vadd.f32 0.0, %v879
      %v881 = vpop.f32.mrb[0].mxu0
      %882 = vmatprep.mubr.bf16.mxu0 0
      %883 = vmatmul.mubr.bf16.gmra.mrb[0].mxu0 %v739
      %v884 = vpop.f32.mrb[0].mxu0
      %v885 = vadd.f32 0.0, %v884
      %v886 = vpop.f32.mrb[0].mxu0
      %v887 = vpop.f32.mrb[0].mxu0
      %v888 = vadd.f32 0.0, %v887
      %v889 = vpop.f32.mrb[0].mxu0
      %890 = vmatprep.mubr.bf16.mxu0 0
      %891 = vmatmul.mubr.bf16.gmra.mrb[0].mxu0 %v742
      %v892 = vpop.f32.mrb[0].mxu0
      %v893 = vadd.f32 0.0, %v892
      %v894 = vpop.f32.mrb[0].mxu0
      %v895 = vpop.f32.mrb[0].mxu0
      %v896 = vadd.f32 0.0, %v895
      %v897 = vpop.f32.mrb[0].mxu0
      %898 = vmatprep.mubr.bf16.mxu0 0
      %899 = vmatmul.mubr.bf16.gmra.mrb[0].mxu0 %v745
      %v900 = vpop.f32.mrb[0].mxu0
      %v901 = vadd.f32 0.0, %v900
      %v902 = vpop.f32.mrb[0].mxu0
      %v903 = vpop.f32.mrb[0].mxu0
      %v904 = vadd.f32 0.0, %v903
      %v905 = vpop.f32.mrb[0].mxu0
      %906 = vmatprep.mubr.bf16.mxu0 0
      %907 = vmatmul.mubr.bf16.gmra.mrb[0].mxu0 %v748
      %v908 = vpop.f32.mrb[0].mxu0
      %v909 = vadd.f32 0.0, %v908
      %v910 = vpop.f32.mrb[0].mxu0
      %v911 = vpop.f32.mrb[0].mxu0
      %v912 = vadd.f32 0.0, %v911
      %v913 = vpop.f32.mrb[0].mxu0
      %914 = vdwg.mxu0
      %v915 = vld [vmem:[%s5] sm:$0x1]
      %v917 = vlaneseq
      %v918 = vshrl.u32 %v917, 7
      %v919 = vsub.s32 0, %v918
      %v920 = vrot.slane %v915, %v919
      %v922 = vmul.f32 %v789, %v920
      %v923 = vmul.f32 %v792, %v920
      %v924 = vmul.f32 %v797, %v920
      %v925 = vmul.f32 %v800, %v920
      %v926 = vmul.f32 %v805, %v920
      %v927 = vmul.f32 %v808, %v920
      %v928 = vmul.f32 %v813, %v920
      %v929 = vmul.f32 %v816, %v920
      %v930 = vmul.f32 %v821, %v920
      %v931 = vmul.f32 %v824, %v920
      %v932 = vmul.f32 %v829, %v920
      %v933 = vmul.f32 %v832, %v920
      %v934 = vmul.f32 %v837, %v920
      %v935 = vmul.f32 %v840, %v920
      %v936 = vmul.f32 %v845, %v920
      %v937 = vmul.f32 %v848, %v920
      %v938 = vmul.f32 %v853, %v920
      %v939 = vmul.f32 %v856, %v920
      %v940 = vmul.f32 %v861, %v920
      %v941 = vmul.f32 %v864, %v920
      %v942 = vmul.f32 %v869, %v920
      %v943 = vmul.f32 %v872, %v920
      %v944 = vmul.f32 %v877, %v920
      %v945 = vmul.f32 %v880, %v920
      %v946 = vmul.f32 %v885, %v920
      %v947 = vmul.f32 %v888, %v920
      %v948 = vmul.f32 %v893, %v920
      %v949 = vmul.f32 %v896, %v920
      %v950 = vmul.f32 %v901, %v920
      %v951 = vmul.f32 %v904, %v920
      %v952 = vmul.f32 %v909, %v920
      %v953 = vmul.f32 %v912, %v920
      %v954 = vld [vmem:[%s6] sm:$0x1]
      %v956 = vlaneseq
      %v957 = vshrl.u32 %v956, 7
      %v958 = vsub.s32 0, %v957
      %v959 = vrot.slane %v954, %v958
      %v961 = vadd.f32 %v922, %v959
      %v962 = vadd.f32 %v923, %v959
      %v963 = vadd.f32 %v924, %v959
      %v964 = vadd.f32 %v925, %v959
      %v965 = vadd.f32 %v926, %v959
      %v966 = vadd.f32 %v927, %v959
      %v967 = vadd.f32 %v928, %v959
      %v968 = vadd.f32 %v929, %v959
      %v969 = vadd.f32 %v930, %v959
      %v970 = vadd.f32 %v931, %v959
      %v971 = vadd.f32 %v932, %v959
      %v972 = vadd.f32 %v933, %v959
      %v973 = vadd.f32 %v934, %v959
      %v974 = vadd.f32 %v935, %v959
      %v975 = vadd.f32 %v936, %v959
      %v976 = vadd.f32 %v937, %v959
      %v977 = vadd.f32 %v938, %v959
      %v978 = vadd.f32 %v939, %v959
      %v979 = vadd.f32 %v940, %v959
      %v980 = vadd.f32 %v941, %v959
      %v981 = vadd.f32 %v942, %v959
      %v982 = vadd.f32 %v943, %v959
      %v983 = vadd.f32 %v944, %v959
      %v984 = vadd.f32 %v945, %v959
      %v985 = vadd.f32 %v946, %v959
      %v986 = vadd.f32 %v947, %v959
      %v987 = vadd.f32 %v948, %v959
      %v988 = vadd.f32 %v949, %v959
      %v989 = vadd.f32 %v950, %v959
      %v990 = vadd.f32 %v951, %v959
      %v991 = vadd.f32 %v952, %v959
      %v992 = vadd.f32 %v953, %v959
      %v993 = vld [vmem:[%s433] sm:$0xff]
      %v994 = vld [vmem:[%s433 + $0x8] sm:$0xff]
      %v995 = vld [vmem:[%s433 + $0x10] sm:$0xff]
      %v996 = vld [vmem:[%s433 + $0x18] sm:$0xff]
      %v997 = vld [vmem:[%s433 + $0x20] sm:$0xff]
      %v998 = vld [vmem:[%s433 + $0x28] sm:$0xff]
      %v999 = vld [vmem:[%s433 + $0x30] sm:$0xff]
      %v1000 = vld [vmem:[%s433 + $0x38] sm:$0xff]
      %v1001 = vld [vmem:[%s433 + $0x40] sm:$0xff]
      %v1002 = vld [vmem:[%s433 + $0x48] sm:$0xff]
      %v1003 = vld [vmem:[%s433 + $0x50] sm:$0xff]
      %v1004 = vld [vmem:[%s433 + $0x58] sm:$0xff]
      %v1005 = vld [vmem:[%s433 + $0x60] sm:$0xff]
      %v1006 = vld [vmem:[%s433 + $0x68] sm:$0xff]
      %v1007 = vld [vmem:[%s433 + $0x70] sm:$0xff]
      %v1008 = vld [vmem:[%s433 + $0x78] sm:$0xff]
      %v1009 = vld [vmem:[%s433 + $0x80] sm:$0xff]
      %v1010 = vld [vmem:[%s433 + $0x88] sm:$0xff]
      %v1011 = vld [vmem:[%s433 + $0x90] sm:$0xff]
      %v1012 = vld [vmem:[%s433 + $0x98] sm:$0xff]
      %v1013 = vld [vmem:[%s433 + $0xa0] sm:$0xff]
      %v1014 = vld [vmem:[%s433 + $0xa8] sm:$0xff]
      %v1015 = vld [vmem:[%s433 + $0xb0] sm:$0xff]
      %v1016 = vld [vmem:[%s433 + $0xb8] sm:$0xff]
      %v1017 = vld [vmem:[%s433 + $0xc0] sm:$0xff]
      %v1018 = vld [vmem:[%s433 + $0xc8] sm:$0xff]
      %v1019 = vld [vmem:[%s433 + $0xd0] sm:$0xff]
      %v1020 = vld [vmem:[%s433 + $0xd8] sm:$0xff]
      %v1021 = vld [vmem:[%s433 + $0xe0] sm:$0xff]
      %v1022 = vld [vmem:[%s433 + $0xe8] sm:$0xff]
      %v1023 = vld [vmem:[%s433 + $0xf0] sm:$0xff]
      %v1024 = vld [vmem:[%s433 + $0xf8] sm:$0xff]
      %v1025 = vadd.f32 %v961, %v993
      %v1026 = vadd.f32 %v962, %v994
      %v1027 = vadd.f32 %v963, %v995
      %v1028 = vadd.f32 %v964, %v996
      %v1029 = vadd.f32 %v965, %v997
      %v1030 = vadd.f32 %v966, %v998
      %v1031 = vadd.f32 %v967, %v999
      %v1032 = vadd.f32 %v968, %v1000
      %v1033 = vadd.f32 %v969, %v1001
      %v1034 = vadd.f32 %v970, %v1002
      %v1035 = vadd.f32 %v971, %v1003
      %v1036 = vadd.f32 %v972, %v1004
      %v1037 = vadd.f32 %v973, %v1005
      %v1038 = vadd.f32 %v974, %v1006
      %v1039 = vadd.f32 %v975, %v1007
      %v1040 = vadd.f32 %v976, %v1008
      %v1041 = vadd.f32 %v977, %v1009
      %v1042 = vadd.f32 %v978, %v1010
      %v1043 = vadd.f32 %v979, %v1011
      %v1044 = vadd.f32 %v980, %v1012
      %v1045 = vadd.f32 %v981, %v1013
      %v1046 = vadd.f32 %v982, %v1014
      %v1047 = vadd.f32 %v983, %v1015
      %v1048 = vadd.f32 %v984, %v1016
      %v1049 = vadd.f32 %v985, %v1017
      %v1050 = vadd.f32 %v986, %v1018
      %v1051 = vadd.f32 %v987, %v1019
      %v1052 = vadd.f32 %v988, %v1020
      %v1053 = vadd.f32 %v989, %v1021
      %v1054 = vadd.f32 %v990, %v1022
      %v1055 = vadd.f32 %v991, %v1023
      %v1056 = vadd.f32 %v992, %v1024
      %v1057 = vmax.f32 %v1025, 0.0
      %v1058 = vmax.f32 %v1026, 0.0
      %v1059 = vmax.f32 %v1027, 0.0
      %v1060 = vmax.f32 %v1028, 0.0
      %v1061 = vmax.f32 %v1029, 0.0
      %v1062 = vmax.f32 %v1030, 0.0
      %v1063 = vmax.f32 %v1031, 0.0
      %v1064 = vmax.f32 %v1032, 0.0
      %v1065 = vmax.f32 %v1033, 0.0
      %v1066 = vmax.f32 %v1034, 0.0
      %v1067 = vmax.f32 %v1035, 0.0
      %v1068 = vmax.f32 %v1036, 0.0
      %v1069 = vmax.f32 %v1037, 0.0
      %v1070 = vmax.f32 %v1038, 0.0
      %v1071 = vmax.f32 %v1039, 0.0
      %v1072 = vmax.f32 %v1040, 0.0
      %v1073 = vmax.f32 %v1041, 0.0
      %v1074 = vmax.f32 %v1042, 0.0
      %v1075 = vmax.f32 %v1043, 0.0
      %v1076 = vmax.f32 %v1044, 0.0
      %v1077 = vmax.f32 %v1045, 0.0
      %v1078 = vmax.f32 %v1046, 0.0
      %v1079 = vmax.f32 %v1047, 0.0
      %v1080 = vmax.f32 %v1048, 0.0
      %v1081 = vmax.f32 %v1049, 0.0
      %v1082 = vmax.f32 %v1050, 0.0
      %v1083 = vmax.f32 %v1051, 0.0
      %v1084 = vmax.f32 %v1052, 0.0
      %v1085 = vmax.f32 %v1053, 0.0
      %v1086 = vmax.f32 %v1054, 0.0
      %v1087 = vmax.f32 %v1055, 0.0
      %v1088 = vmax.f32 %v1056, 0.0
      %vm1089 = vcmask 130048
      %1090 = vst.msk [vmem:[%s443] sm:$0xff] %vm1089, %v1057
      %1091 = vst.msk [vmem:[%s443 + $0x8] sm:$0xff] %vm1089, %v1058
      %1092 = vst.msk [vmem:[%s443 + $0x10] sm:$0xff] %vm1089, %v1059
      %1093 = vst.msk [vmem:[%s443 + $0x18] sm:$0xff] %vm1089, %v1060
      %1094 = vst.msk [vmem:[%s443 + $0x20] sm:$0xff] %vm1089, %v1061
      %1095 = vst.msk [vmem:[%s443 + $0x28] sm:$0xff] %vm1089, %v1062
      %1096 = vst.msk [vmem:[%s443 + $0x30] sm:$0xff] %vm1089, %v1063
      %1097 = vst.msk [vmem:[%s443 + $0x38] sm:$0xff] %vm1089, %v1064
      %1098 = vst.msk [vmem:[%s443 + $0x40] sm:$0xff] %vm1089, %v1065
      %1099 = vst.msk [vmem:[%s443 + $0x48] sm:$0xff] %vm1089, %v1066
      %1100 = vst.msk [vmem:[%s443 + $0x50] sm:$0xff] %vm1089, %v1067
      %1101 = vst.msk [vmem:[%s443 + $0x58] sm:$0xff] %vm1089, %v1068
      %1102 = vst.msk [vmem:[%s443 + $0x60] sm:$0xff] %vm1089, %v1069
      %1103 = vst.msk [vmem:[%s443 + $0x68] sm:$0xff] %vm1089, %v1070
      %1104 = vst.msk [vmem:[%s443 + $0x70] sm:$0xff] %vm1089, %v1071
      %1105 = vst.msk [vmem:[%s443 + $0x78] sm:$0xff] %vm1089, %v1072
      %1106 = vst.msk [vmem:[%s443 + $0x80] sm:$0xff] %vm1089, %v1073
      %1107 = vst.msk [vmem:[%s443 + $0x88] sm:$0xff] %vm1089, %v1074
      %1108 = vst.msk [vmem:[%s443 + $0x90] sm:$0xff] %vm1089, %v1075
      %1109 = vst.msk [vmem:[%s443 + $0x98] sm:$0xff] %vm1089, %v1076
      %1110 = vst.msk [vmem:[%s443 + $0xa0] sm:$0xff] %vm1089, %v1077
      %1111 = vst.msk [vmem:[%s443 + $0xa8] sm:$0xff] %vm1089, %v1078
      %1112 = vst.msk [vmem:[%s443 + $0xb0] sm:$0xff] %vm1089, %v1079
      %1113 = vst.msk [vmem:[%s443 + $0xb8] sm:$0xff] %vm1089, %v1080
      %1114 = vst.msk [vmem:[%s443 + $0xc0] sm:$0xff] %vm1089, %v1081
      %1115 = vst.msk [vmem:[%s443 + $0xc8] sm:$0xff] %vm1089, %v1082
      %1116 = vst.msk [vmem:[%s443 + $0xd0] sm:$0xff] %vm1089, %v1083
      %1117 = vst.msk [vmem:[%s443 + $0xd8] sm:$0xff] %vm1089, %v1084
      %1118 = vst.msk [vmem:[%s443 + $0xe0] sm:$0xff] %vm1089, %v1085
      %1119 = vst.msk [vmem:[%s443 + $0xe8] sm:$0xff] %vm1089, %v1086
      %1120 = vst.msk [vmem:[%s443 + $0xf0] sm:$0xff] %vm1089, %v1087
      %1121 = vst.msk [vmem:[%s443 + $0xf8] sm:$0xff] %vm1089, %v1088
      %s1122 = smul.u32 32, %s24
      %p1123 = scmp.lt.s32.totalorder %s23, 1
      %s1124 = scalar_select %p1123, %s23, 1
      %p1125 = scmp.lt.s32.totalorder %s1122, 31
      %s1126 = scalar_select %p1125, %s1122, 31
      %s1127 = smul.addr %s1124, 32
      %s1128 = sadd.s32 %s1126, %s1127
      %s1129 = smul.addr %s1128, 8
      %s1130 = scalar_lea.vmem %s8, %s1129
      // Predicated region
      $region53: #{sk_bottleneck_forward.7} parent=51 // pred_check
        %p1131 = pneg %p250
      $region54: #{sk_bottleneck_forward.7} parent=51 // pred_check_branch
        %1133 = sbr.rel (%p1131) target = $region56
      $region55: #{sk_bottleneck_forward.7} parent=51 // pred_region
        %s1134 = smul.u32 32, %s24
      $region56: #{sk_bottleneck_forward.7} parent=51 // pred_fallthru
        _
    $region52: #{sk_bottleneck_forward.7} parent=5 // pred_fallthru
      _
    %p1135 = scmp.le.s32.totalorder 2, %s14
    // Predicated region
    $region57: #{sk_bottleneck_forward.7} parent=5 // pred_check
      %p1136 = pneg %p1135
    $region58: #{sk_bottleneck_forward.7} parent=5 // pred_check_branch
      %1138 = sbr.rel (%p1136) target = $region60
    $region59: #{sk_bottleneck_forward.7} parent=5 // pred_region
      %s1139 = ssub.s32 %s14, 2
      // Predicated region
      $region61: #{sk_bottleneck_forward.7} parent=59 // pred_check
        %p1140 = pneg %p256
      $region62: #{sk_bottleneck_forward.7} parent=59 // pred_check_branch
        %1142 = sbr.rel (%p1140) target = $region64
      $region63: #{sk_bottleneck_forward.7} parent=59 // pred_region
        %s1143 = smul.u32 32, %s26
        %p1144 = scmp.lt.s32.totalorder %s25, 1
        %s1145 = scalar_select %p1144, %s25, 1
        %p1146 = scmp.lt.s32.totalorder %s1143, 31
        %s1147 = scalar_select %p1146, %s1143, 31
        %s1148 = smul.addr %s1145, 32
        %s1149 = sadd.s32 %s1147, %s1148
        %s1150 = smul.addr %s1149, 8
        %s1151 = scalar_lea.vmem %s8, %s1150
      $region64: #{sk_bottleneck_forward.7} parent=59 // pred_fallthru
        _
    $region60: #{sk_bottleneck_forward.7} parent=5 // pred_fallthru
      _
  $region6: #{sk_bottleneck_forward.7} parent=0 // loop_footer
    %s18 = sadd.s32 1, %s14
  $region7: #{sk_bottleneck_forward.7} parent=0 // loop_footer_branch
    %13 = sbr.rel target = $region3
  $region8: #{sk_bottleneck_forward.7} parent=0 // loop_exit
    _

// kernel: sk_bottleneck_forward.5
$region0: #{sk_bottleneck_forward.5}
  #allocation0 [shape = 'u32[]', space=smem, size = 0x4, offset = 0x4, fixed_abs, tag = 'smem constant byte address 0x4 - core index']
  #allocation1 [shape = 'u32[144,128]{1,0:T(1,128)}', space=vmem, size = 0x12000, scoped, tag = 'internal scratch']
  #allocation2 [shape = 'f32[8,16,4]{2,1,0:T(8,128)}', space=vmem, size = 0x10000, scoped, tag = 'scratch operand']
  #allocation3 [shape = 'f32[8,16,4]{2,1,0:T(8,128)}', space=vmem, size = 0x10000, scoped, tag = 'scratch operand']
  %s0 = inlined_call_operand.vmem [shape: f32[4,12,20,4], index: 0, kind: input, shape index: {}]
  %s1 = inlined_call_operand.vmem [shape: bf16[3,3,4,4], index: 1, kind: input, shape index: {}]
  %s2 = inlined_call_operand.vmem [shape: bf16[3,3,4,4], index: 2, kind: input, shape index: {}]
  %s3 = inlined_call_operand.vmem [shape: f32[1,4], index: 3, kind: input, shape index: {}]
  %s4 = inlined_call_operand.vmem [shape: f32[1,4], index: 4, kind: input, shape index: {}]
  %s5 = inlined_call_operand.vmem [shape: f32[1,4], index: 5, kind: input, shape index: {}]
  %s6 = inlined_call_operand.vmem [shape: f32[1,4], index: 6, kind: input, shape index: {}]
  %s7 = inlined_call_operand.vmem [shape: bf16[2,16,16,4], index: 7, kind: output, shape index: {0}]
  %s8 = inlined_call_operand.vmem [shape: bf16[2,16,16,4], index: 8, kind: output, shape index: {1}]
  %s9 = inlined_call_operand.vmem [shape: f32[2,1,4], index: 9, kind: output, shape index: {2}]
  %10 = xla_tuple %s7, %s8, %s9
  %s11 = sld [smem:[#allocation0]]
  $region81: #{sk_bottleneck_forward.5} parent=0
    _
  %s13 = ssub.s32 1, %s11
  %s14 = scalar_select 0, %s13, %s11
  loop: start=0, step=1, limit=6
  $region2: #{sk_bottleneck_forward.5} parent=0 // loop_pre_header
    _
  $region3: #{sk_bottleneck_forward.5} parent=0 // loop_header
    %s16 = sphi 0, %s20
    %p17 = scmp.ge.s32.totalorder %s16, 6
    %s23 = sphi 0, %s35
    %s24 = sphi 0, %s31
    %s25 = sphi 0, %s23
    %s26 = sphi 0, %s24
    %s27 = sphi 0, %s25
    %s28 = sphi 0, %s26
    %s42 = sphi 0, %s44
    %s45 = sphi 0, %s42
    %s46 = sphi 0, %s45
    %s62 = sphi 0, %s46
    %s66 = sphi 0, %s66
    %s68 = sphi 0, %s66
    %s69 = sphi 0, %s68
    %s83 = sphi 0, %s69
    %s87 = sphi 0, %s87
    %s89 = sphi 0, %s87
    %s90 = sphi 0, %s89
    %s104 = sphi 0, %s90
    %s108 = sphi 0, %s108
    %s110 = sphi 0, %s108
    %s111 = sphi 0, %s110
    %s125 = sphi 0, %s111
    %s129 = sphi 0, %s129
    %s131 = sphi 0, %s129
    %s132 = sphi 0, %s131
    %s146 = sphi 0, %s132
    %s150 = sphi 0, %s150
    %s152 = sphi 0, %s150
    %s153 = sphi 0, %s152
    %s167 = sphi 0, %s153
    %s171 = sphi 0, %s171
    %s173 = sphi 0, %s171
    %s174 = sphi 0, %s173
    %s188 = sphi 0, %s174
    %s196 = sphi 0, %s198
    %s199 = sphi 0, %s196
    %s200 = sphi 0, %s199
    %s216 = sphi 0, %s200
    %s224 = sphi 0, %s226
    %s227 = sphi 0, %s224
    %s228 = sphi 0, %s227
    %s244 = sphi 0, %s228
    %s250 = sphi 0, %s252
    %s253 = sphi 0, %s250
    %s254 = sphi 0, %s253
    %s270 = sphi 0, %s254
  $region4: #{sk_bottleneck_forward.5} parent=0 // loop_header_branch
    %19 = sbr.rel (%p17) target = $region8
  $region5: #{sk_bottleneck_forward.5} parent=0 // loop_body
    %s21 = ssub.s32 %s16, 1
    %s22 = ssub.s32 %s16, 2
    %s29 = sadd.s32 1, %s24
    %p30 = scmp.ge.s32.totalorder %s29, 2
    %s31 = scalar_select %p30, 0, %s29
    %s32 = sadd.s32 1, %s23
    %s33 = scalar_select %p30, %s32, %s23
    %p34 = scmp.ge.s32.totalorder %s33, 2
    %s35 = scalar_select %p34, 0, %s33
    %s36 = smul.u32 %s23, 2
    %s37 = sadd.s32 %s36, %s24
    %s38 = smul.u32 %s35, 2
    %s39 = sadd.s32 %s38, %s31
    %s40 = ssub.s32 %s37, %s39
    %p41 = scmp.eq.s32.totalorder %s40, 0
    %s43 = sadd.s32 %s42, 1
    %s44 = scalar_select %p41, %s42, %s43
    %p47 = pneg %p41
    %p48 = scmp.eq.s32.totalorder %s16, 3
    %p49 = por %p47, %p48
    %p50 = scmp.ne.s32.totalorder %s42, %s45
    %p51 = scmp.eq.s32.totalorder %s16, 0
    %p52 = por %p50, %p51
    %p53 = scmp.ne.s32.totalorder %s42, %s45
    %p54 = scmp.eq.s32.totalorder %s21, 3
    %p55 = por %p53, %p54
    %p56 = scmp.ne.s32.totalorder %s45, %s46
    %p57 = scmp.eq.s32.totalorder %s21, 0
    %p58 = por %p56, %p57
    %p59 = scmp.ne.s32.totalorder %s45, %s46
    %p60 = scmp.eq.s32.totalorder %s22, 3
    %p61 = por %p59, %p60
    %p63 = scmp.ne.s32.totalorder %s46, %s62
    %p64 = scmp.eq.s32.totalorder %s22, 0
    %p65 = por %p63, %p64
    %s67 = sadd.s32 %s66, 1
    %p70 = scmp.eq.s32.totalorder %s16, 3
    %p71 = scmp.ne.s32.totalorder %s66, %s68
    %p72 = scmp.eq.s32.totalorder %s16, 0
    %p73 = por %p71, %p72
    %p74 = scmp.ne.s32.totalorder %s66, %s68
    %p75 = scmp.eq.s32.totalorder %s21, 3
    %p76 = por %p74, %p75
    %p77 = scmp.ne.s32.totalorder %s68, %s69
    %p78 = scmp.eq.s32.totalorder %s21, 0
    %p79 = por %p77, %p78
    %p80 = scmp.ne.s32.totalorder %s68, %s69
    %p81 = scmp.eq.s32.totalorder %s22, 3
    %p82 = por %p80, %p81
    %p84 = scmp.ne.s32.totalorder %s69, %s83
    %p85 = scmp.eq.s32.totalorder %s22, 0
    %p86 = por %p84, %p85
    %s88 = sadd.s32 %s87, 1
    %p91 = scmp.eq.s32.totalorder %s16, 3
    %p92 = scmp.ne.s32.totalorder %s87, %s89
    %p93 = scmp.eq.s32.totalorder %s16, 0
    %p94 = por %p92, %p93
    %p95 = scmp.ne.s32.totalorder %s87, %s89
    %p96 = scmp.eq.s32.totalorder %s21, 3
    %p97 = por %p95, %p96
    %p98 = scmp.ne.s32.totalorder %s89, %s90
    %p99 = scmp.eq.s32.totalorder %s21, 0
    %p100 = por %p98, %p99
    %p101 = scmp.ne.s32.totalorder %s89, %s90
    %p102 = scmp.eq.s32.totalorder %s22, 3
    %p103 = por %p101, %p102
    %p105 = scmp.ne.s32.totalorder %s90, %s104
    %p106 = scmp.eq.s32.totalorder %s22, 0
    %p107 = por %p105, %p106
    %s109 = sadd.s32 %s108, 1
    %p112 = scmp.eq.s32.totalorder %s16, 3
    %p113 = scmp.ne.s32.totalorder %s108, %s110
    %p114 = scmp.eq.s32.totalorder %s16, 0
    %p115 = por %p113, %p114
    %p116 = scmp.ne.s32.totalorder %s108, %s110
    %p117 = scmp.eq.s32.totalorder %s21, 3
    %p118 = por %p116, %p117
    %p119 = scmp.ne.s32.totalorder %s110, %s111
    %p120 = scmp.eq.s32.totalorder %s21, 0
    %p121 = por %p119, %p120
    %p122 = scmp.ne.s32.totalorder %s110, %s111
    %p123 = scmp.eq.s32.totalorder %s22, 3
    %p124 = por %p122, %p123
    %p126 = scmp.ne.s32.totalorder %s111, %s125
    %p127 = scmp.eq.s32.totalorder %s22, 0
    %p128 = por %p126, %p127
    %s130 = sadd.s32 %s129, 1
    %p133 = scmp.eq.s32.totalorder %s16, 3
    %p134 = scmp.ne.s32.totalorder %s129, %s131
    %p135 = scmp.eq.s32.totalorder %s16, 0
    %p136 = por %p134, %p135
    %p137 = scmp.ne.s32.totalorder %s129, %s131
    %p138 = scmp.eq.s32.totalorder %s21, 3
    %p139 = por %p137, %p138
    %p140 = scmp.ne.s32.totalorder %s131, %s132
    %p141 = scmp.eq.s32.totalorder %s21, 0
    %p142 = por %p140, %p141
    %p143 = scmp.ne.s32.totalorder %s131, %s132
    %p144 = scmp.eq.s32.totalorder %s22, 3
    %p145 = por %p143, %p144
    %p147 = scmp.ne.s32.totalorder %s132, %s146
    %p148 = scmp.eq.s32.totalorder %s22, 0
    %p149 = por %p147, %p148
    %s151 = sadd.s32 %s150, 1
    %p154 = scmp.eq.s32.totalorder %s16, 3
    %p155 = scmp.ne.s32.totalorder %s150, %s152
    %p156 = scmp.eq.s32.totalorder %s16, 0
    %p157 = por %p155, %p156
    %p158 = scmp.ne.s32.totalorder %s150, %s152
    %p159 = scmp.eq.s32.totalorder %s21, 3
    %p160 = por %p158, %p159
    %p161 = scmp.ne.s32.totalorder %s152, %s153
    %p162 = scmp.eq.s32.totalorder %s21, 0
    %p163 = por %p161, %p162
    %p164 = scmp.ne.s32.totalorder %s152, %s153
    %p165 = scmp.eq.s32.totalorder %s22, 3
    %p166 = por %p164, %p165
    %p168 = scmp.ne.s32.totalorder %s153, %s167
    %p169 = scmp.eq.s32.totalorder %s22, 0
    %p170 = por %p168, %p169
    %s172 = sadd.s32 %s171, 1
    %p175 = scmp.eq.s32.totalorder %s16, 3
    %p176 = scmp.ne.s32.totalorder %s171, %s173
    %p177 = scmp.eq.s32.totalorder %s16, 0
    %p178 = por %p176, %p177
    %p179 = scmp.ne.s32.totalorder %s171, %s173
    %p180 = scmp.eq.s32.totalorder %s21, 3
    %p181 = por %p179, %p180
    %p182 = scmp.ne.s32.totalorder %s173, %s174
    %p183 = scmp.eq.s32.totalorder %s21, 0
    %p184 = por %p182, %p183
    %p185 = scmp.ne.s32.totalorder %s173, %s174
    %p186 = scmp.eq.s32.totalorder %s22, 3
    %p187 = por %p185, %p186
    %p189 = scmp.ne.s32.totalorder %s174, %s188
    %p190 = scmp.eq.s32.totalorder %s22, 0
    %p191 = por %p189, %p190
    %s192 = ssub.s32 %s23, %s35
    %s193 = ssub.s32 %s24, %s31
    %s194 = sor.u32 %s192, %s193
    %p195 = scmp.eq.s32.totalorder %s194, 0
    %s197 = sadd.s32 %s196, 1
    %s198 = scalar_select %p195, %s196, %s197
    %p201 = pneg %p195
    %p202 = scmp.eq.s32.totalorder %s16, 3
    %p203 = por %p201, %p202
    %p204 = scmp.ne.s32.totalorder %s196, %s199
    %p205 = scmp.eq.s32.totalorder %s16, 0
    %p206 = por %p204, %p205
    %p207 = scmp.ne.s32.totalorder %s196, %s199
    %p208 = scmp.eq.s32.totalorder %s21, 3
    %p209 = por %p207, %p208
    %p210 = scmp.ne.s32.totalorder %s199, %s200
    %p211 = scmp.eq.s32.totalorder %s21, 0
    %p212 = por %p210, %p211
    %p213 = scmp.ne.s32.totalorder %s199, %s200
    %p214 = scmp.eq.s32.totalorder %s22, 3
    %p215 = por %p213, %p214
    %p217 = scmp.ne.s32.totalorder %s200, %s216
    %p218 = scmp.eq.s32.totalorder %s22, 0
    %p219 = por %p217, %p218
    %s220 = ssub.s32 %s23, %s35
    %s221 = ssub.s32 %s24, %s31
    %s222 = sor.u32 %s220, %s221
    %p223 = scmp.eq.s32.totalorder %s222, 0
    %s225 = sadd.s32 %s224, 1
    %s226 = scalar_select %p223, %s224, %s225
    %p229 = pneg %p223
    %p230 = scmp.eq.s32.totalorder %s16, 3
    %p231 = por %p229, %p230
    %p232 = scmp.ne.s32.totalorder %s224, %s227
    %p233 = scmp.eq.s32.totalorder %s16, 0
    %p234 = por %p232, %p233
    %p235 = scmp.ne.s32.totalorder %s224, %s227
    %p236 = scmp.eq.s32.totalorder %s21, 3
    %p237 = por %p235, %p236
    %p238 = scmp.ne.s32.totalorder %s227, %s228
    %p239 = scmp.eq.s32.totalorder %s21, 0
    %p240 = por %p238, %p239
    %p241 = scmp.ne.s32.totalorder %s227, %s228
    %p242 = scmp.eq.s32.totalorder %s22, 3
    %p243 = por %p241, %p242
    %p245 = scmp.ne.s32.totalorder %s228, %s244
    %p246 = scmp.eq.s32.totalorder %s22, 0
    %p247 = por %p245, %p246
    %s248 = ssub.s32 %s23, %s35
    %p249 = scmp.eq.s32.totalorder %s248, 0
    %s251 = sadd.s32 %s250, 1
    %s252 = scalar_select %p249, %s250, %s251
    %p255 = pneg %p249
    %p256 = scmp.eq.s32.totalorder %s16, 3
    %p257 = por %p255, %p256
    %p258 = scmp.ne.s32.totalorder %s250, %s253
    %p259 = scmp.eq.s32.totalorder %s16, 0
    %p260 = por %p258, %p259
    %p261 = scmp.ne.s32.totalorder %s250, %s253
    %p262 = scmp.eq.s32.totalorder %s21, 3
    %p263 = por %p261, %p262
    %p264 = scmp.ne.s32.totalorder %s253, %s254
    %p265 = scmp.eq.s32.totalorder %s21, 0
    %p266 = por %p264, %p265
    %p267 = scmp.ne.s32.totalorder %s253, %s254
    %p268 = scmp.eq.s32.totalorder %s22, 3
    %p269 = por %p267, %p268
    %p271 = scmp.ne.s32.totalorder %s254, %s270
    %p272 = scmp.eq.s32.totalorder %s22, 0
    %p273 = por %p271, %p272
    %p274 = scmp.le.s32.totalorder 1, %s16
    %p275 = scmp.lt.s32.totalorder %s16, 5
    %p276 = pnand %p274, %p275
    %p277 = pneg %p276
    // Predicated region
    $region9: #{sk_bottleneck_forward.5} parent=5 // pred_check
      _
    $region10: #{sk_bottleneck_forward.5} parent=5 // pred_check_branch
      %279 = sbr.rel (%p276) target = $region12
    $region11: #{sk_bottleneck_forward.5} parent=5 // pred_region
      %s280 = ssub.s32 %s16, 1
      // Predicated region
      $region13: #{sk_bottleneck_forward.5} parent=11 // pred_check
        %p281 = pneg %p79
      $region14: #{sk_bottleneck_forward.5} parent=11 // pred_check_branch
        %283 = sbr.rel (%p281) target = $region16
      $region15: #{sk_bottleneck_forward.5} parent=11 // pred_region
        _
      $region16: #{sk_bottleneck_forward.5} parent=11 // pred_fallthru
        _
      // Predicated region
      $region17: #{sk_bottleneck_forward.5} parent=11 // pred_check
        %p284 = pneg %p100
      $region18: #{sk_bottleneck_forward.5} parent=11 // pred_check_branch
        %286 = sbr.rel (%p284) target = $region20
      $region19: #{sk_bottleneck_forward.5} parent=11 // pred_region
        _
      $region20: #{sk_bottleneck_forward.5} parent=11 // pred_fallthru
        _
      // Predicated region
      $region21: #{sk_bottleneck_forward.5} parent=11 // pred_check
        %p287 = pneg %p121
      $region22: #{sk_bottleneck_forward.5} parent=11 // pred_check_branch
        %289 = sbr.rel (%p287) target = $region24
      $region23: #{sk_bottleneck_forward.5} parent=11 // pred_region
        _
      $region24: #{sk_bottleneck_forward.5} parent=11 // pred_fallthru
        _
      // Predicated region
      $region25: #{sk_bottleneck_forward.5} parent=11 // pred_check
        %p290 = pneg %p142
      $region26: #{sk_bottleneck_forward.5} parent=11 // pred_check_branch
        %292 = sbr.rel (%p290) target = $region28
      $region27: #{sk_bottleneck_forward.5} parent=11 // pred_region
        _
      $region28: #{sk_bottleneck_forward.5} parent=11 // pred_fallthru
        _
      // Predicated region
      $region29: #{sk_bottleneck_forward.5} parent=11 // pred_check
        %p293 = pneg %p163
      $region30: #{sk_bottleneck_forward.5} parent=11 // pred_check_branch
        %295 = sbr.rel (%p293) target = $region32
      $region31: #{sk_bottleneck_forward.5} parent=11 // pred_region
        _
      $region32: #{sk_bottleneck_forward.5} parent=11 // pred_fallthru
        _
      // Predicated region
      $region33: #{sk_bottleneck_forward.5} parent=11 // pred_check
        %p296 = pneg %p184
      $region34: #{sk_bottleneck_forward.5} parent=11 // pred_check_branch
        %298 = sbr.rel (%p296) target = $region36
      $region35: #{sk_bottleneck_forward.5} parent=11 // pred_region
        _
      $region36: #{sk_bottleneck_forward.5} parent=11 // pred_fallthru
        _
    $region12: #{sk_bottleneck_forward.5} parent=5 // pred_fallthru
      _
    %p299 = scmp.lt.s32.totalorder %s16, 4
    // Predicated region
    $region37: #{sk_bottleneck_forward.5} parent=5 // pred_check
      %p300 = pneg %p299
    $region38: #{sk_bottleneck_forward.5} parent=5 // pred_check_branch
      %302 = sbr.rel (%p300) target = $region40
    $region39: #{sk_bottleneck_forward.5} parent=5 // pred_region
      // Predicated region
      $region41: #{sk_bottleneck_forward.5} parent=39 // pred_check
        %p303 = pneg %p52
      $region42: #{sk_bottleneck_forward.5} parent=39 // pred_check_branch
        %305 = sbr.rel (%p303) target = $region44
      $region43: #{sk_bottleneck_forward.5} parent=39 // pred_region
        %s306 = smul.u32 %s23, 2
        %s307 = sadd.s32 %s306, %s24
        %p308 = scmp.lt.s32.totalorder %s307, 3
        %s309 = scalar_select %p308, %s307, 3
        %s310 = smul.addr %s309, 36
        %s311 = smul.addr %s310, 8
        %s312 = scalar_lea.vmem %s0, %s311
        %s313 = smul.u32 %s23, 2
        %s314 = sadd.s32 %s313, %s24
      $region44: #{sk_bottleneck_forward.5} parent=39 // pred_fallthru
        _
    $region40: #{sk_bottleneck_forward.5} parent=5 // pred_fallthru
      _
    %p315 = scmp.le.s32.totalorder 1, %s16
    %p316 = scmp.lt.s32.totalorder %s16, 5
    %p317 = pnand %p315, %p316
    %p318 = pneg %p317
    // Predicated region
    $region45: #{sk_bottleneck_forward.5} parent=5 // pred_check
      _
    $region46: #{sk_bottleneck_forward.5} parent=5 // pred_check_branch
      %320 = sbr.rel (%p317) target = $region48
    $region47: #{sk_bottleneck_forward.5} parent=5 // pred_region
      %s321 = ssub.s32 %s16, 1
      %s322 = smul.u32 %s25, 2
      %s323 = sadd.s32 %s322, %s26
      %p324 = scmp.lt.s32.totalorder %s323, 3
      %s325 = scalar_select %p324, %s323, 3
      %s326 = smul.addr %s325, 36
      %s327 = smul.addr %s326, 8
      %s328 = scalar_lea.vmem %s0, %s327
      %p329 = pneg %p58
      %p330 = pneg %p55
      %p331 = pneg %p79
      %p332 = pneg %p76
      %p333 = pneg %p100
      %p334 = pneg %p97
      %p335 = pneg %p121
      %p336 = pneg %p118
      %p337 = pneg %p142
      %p338 = pneg %p139
      %p339 = pneg %p163
      %p340 = pneg %p160
      %p341 = pneg %p184
      %p342 = pneg %p181
      %p343 = pneg %p212
      %p344 = pneg %p209
      %s345 = smul.u32 8, %s26
      %p346 = scmp.lt.s32.totalorder %s25, 1
      %s347 = scalar_select %p346, %s25, 1
      %p348 = scmp.lt.s32.totalorder %s345, 15
      %s349 = scalar_select %p348, %s345, 15
      %s350 = smul.addr %s349, 2
      %s351 = smul.addr %s347, 32
      %s352 = sadd.s32 %s350, %s351
      %s353 = smul.addr %s352, 4
      %s354 = scalar_lea.vmem %s7, %s353
      %p355 = pneg %p240
      %p356 = pneg %p237
      %s357 = smul.u32 8, %s26
      %p358 = scmp.lt.s32.totalorder %s25, 1
      %s359 = scalar_select %p358, %s25, 1
      %p360 = scmp.lt.s32.totalorder %s357, 15
      %s361 = scalar_select %p360, %s357, 15
      %s362 = smul.addr %s361, 2
      %s363 = smul.addr %s359, 32
      %s364 = sadd.s32 %s362, %s363
      %s365 = smul.addr %s364, 4
      %s366 = scalar_lea.vmem %s8, %s365
      %p367 = pneg %p266
      %p368 = pneg %p263
      %p369 = scmp.lt.s32.totalorder %s25, 1
      %s370 = scalar_select %p369, %s25, 1
      %s371 = scalar_lea.vmem %s9, %s370
      %s372 = smul.u32 %s25, 2
      %s373 = sadd.s32 %s372, %s26
      %p374 = scmp.lt.s32.totalorder %s373, 3
      %s375 = scalar_select %p374, %s373, 3
      %s376 = smul.addr %s375, 36
      %s377 = smul.addr %s376, 8
      %s378 = scalar_lea.vmem %s0, %s377
      %s379 = smul.u32 %s25, 2
      %s380 = sadd.s32 %s379, %s26
      %s381 = smul.u32 8, %s26
      %p382 = scmp.lt.s32.totalorder %s25, 1
      %s383 = scalar_select %p382, %s25, 1
      %p384 = scmp.lt.s32.totalorder %s381, 15
      %s385 = scalar_select %p384, %s381, 15
      %s386 = smul.addr %s385, 2
      %s387 = smul.addr %s383, 32
      %s388 = sadd.s32 %s386, %s387
      %s389 = smul.addr %s388, 4
      %s390 = scalar_lea.vmem %s7, %s389
      %s391 = smul.u32 8, %s26
      %s392 = smul.u32 8, %s26
      %p393 = scmp.lt.s32.totalorder %s25, 1
      %s394 = scalar_select %p393, %s25, 1
      %p395 = scmp.lt.s32.totalorder %s392, 15
      %s396 = scalar_select %p395, %s392, 15
      %s397 = smul.addr %s396, 2
      %s398 = smul.addr %s394, 32
      %s399 = sadd.s32 %s397, %s398
      %s400 = smul.addr %s399, 4
      %s401 = scalar_lea.vmem %s8, %s400
      %s402 = smul.u32 8, %s26
      %p403 = scmp.lt.s32.totalorder %s25, 1
      %s404 = scalar_select %p403, %s25, 1
      %s405 = scalar_lea.vmem %s9, %s404
      %vm407 = vcmask 31744
      %408 = vst.msk [vmem:[#allocation2] sm:$0xff] %vm407, 0.0
      %409 = vst.msk [vmem:[#allocation2 + $0x8] sm:$0xff] %vm407, 0.0
      %410 = vst.msk [vmem:[#allocation2 + $0x10] sm:$0xff] %vm407, 0.0
      %411 = vst.msk [vmem:[#allocation2 + $0x18] sm:$0xff] %vm407, 0.0
      %412 = vst.msk [vmem:[#allocation2 + $0x20] sm:$0xff] %vm407, 0.0
      %413 = vst.msk [vmem:[#allocation2 + $0x28] sm:$0xff] %vm407, 0.0
      %414 = vst.msk [vmem:[#allocation2 + $0x30] sm:$0xff] %vm407, 0.0
      %415 = vst.msk [vmem:[#allocation2 + $0x38] sm:$0xff] %vm407, 0.0
      %416 = vst.msk [vmem:[#allocation2 + $0x40] sm:$0xff] %vm407, 0.0
      %417 = vst.msk [vmem:[#allocation2 + $0x48] sm:$0xff] %vm407, 0.0
      %418 = vst.msk [vmem:[#allocation2 + $0x50] sm:$0xff] %vm407, 0.0
      %419 = vst.msk [vmem:[#allocation2 + $0x58] sm:$0xff] %vm407, 0.0
      %420 = vst.msk [vmem:[#allocation2 + $0x60] sm:$0xff] %vm407, 0.0
      %421 = vst.msk [vmem:[#allocation2 + $0x68] sm:$0xff] %vm407, 0.0
      %422 = vst.msk [vmem:[#allocation2 + $0x70] sm:$0xff] %vm407, 0.0
      %423 = vst.msk [vmem:[#allocation2 + $0x78] sm:$0xff] %vm407, 0.0
      %424 = vst.msk [vmem:[#allocation3] sm:$0xff] %vm407, 0.0
      %425 = vst.msk [vmem:[#allocation3 + $0x8] sm:$0xff] %vm407, 0.0
      %426 = vst.msk [vmem:[#allocation3 + $0x10] sm:$0xff] %vm407, 0.0
      %427 = vst.msk [vmem:[#allocation3 + $0x18] sm:$0xff] %vm407, 0.0
      %428 = vst.msk [vmem:[#allocation3 + $0x20] sm:$0xff] %vm407, 0.0
      %429 = vst.msk [vmem:[#allocation3 + $0x28] sm:$0xff] %vm407, 0.0
      %430 = vst.msk [vmem:[#allocation3 + $0x30] sm:$0xff] %vm407, 0.0
      %431 = vst.msk [vmem:[#allocation3 + $0x38] sm:$0xff] %vm407, 0.0
      %432 = vst.msk [vmem:[#allocation3 + $0x40] sm:$0xff] %vm407, 0.0
      %433 = vst.msk [vmem:[#allocation3 + $0x48] sm:$0xff] %vm407, 0.0
      %434 = vst.msk [vmem:[#allocation3 + $0x50] sm:$0xff] %vm407, 0.0
      %435 = vst.msk [vmem:[#allocation3 + $0x58] sm:$0xff] %vm407, 0.0
      %436 = vst.msk [vmem:[#allocation3 + $0x60] sm:$0xff] %vm407, 0.0
      %437 = vst.msk [vmem:[#allocation3 + $0x68] sm:$0xff] %vm407, 0.0
      %438 = vst.msk [vmem:[#allocation3 + $0x70] sm:$0xff] %vm407, 0.0
      %439 = vst.msk [vmem:[#allocation3 + $0x78] sm:$0xff] %vm407, 0.0
      %s440 = scalar_lea.vmem %s378, 24
      %v441 = vld [vmem:[%s440 + $0x1] sm:$0xff]
      %v442 = vld [vmem:[%s440 + $0x9] sm:$0xff]
      %v443 = vld [vmem:[%s440 + $0x19] sm:$0xff]
      %v444 = vld [vmem:[%s440 + $0x21] sm:$0xff]
      %v445 = vld [vmem:[%s440 + $0x31] sm:$0xff]
      %v446 = vld [vmem:[%s440 + $0x39] sm:$0xff]
      %v447 = vld [vmem:[%s440 + $0x49] sm:$0xff]
      %v448 = vld [vmem:[%s440 + $0x51] sm:$0xff]
      %v449 = vld [vmem:[%s440 + $0x61] sm:$0xff]
      %v450 = vld [vmem:[%s440 + $0x69] sm:$0xff]
      %v451 = vld [vmem:[%s440 + $0x79] sm:$0xff]
      %v452 = vld [vmem:[%s440 + $0x81] sm:$0xff]
      %v453 = vld [vmem:[%s440 + $0x91] sm:$0xff]
      %v454 = vld [vmem:[%s440 + $0x99] sm:$0xff]
      %v455 = vld [vmem:[%s440 + $0xa9] sm:$0xff]
      %v456 = vld [vmem:[%s440 + $0xb1] sm:$0xff]
      %v457 = vld [vmem:[#allocation2] sm:$0xff]
      %v458 = vld [vmem:[#allocation2 + $0x8] sm:$0xff]
      %v459 = vld [vmem:[#allocation2 + $0x10] sm:$0xff]
      %v460 = vld [vmem:[#allocation2 + $0x18] sm:$0xff]
      %v461 = vld [vmem:[#allocation2 + $0x20] sm:$0xff]
      %v462 = vld [vmem:[#allocation2 + $0x28] sm:$0xff]
      %v463 = vld [vmem:[#allocation2 + $0x30] sm:$0xff]
      %v464 = vld [vmem:[#allocation2 + $0x38] sm:$0xff]
      %v465 = vld [vmem:[#allocation2 + $0x40] sm:$0xff]
      %v466 = vld [vmem:[#allocation2 + $0x48] sm:$0xff]
      %v467 = vld [vmem:[#allocation2 + $0x50] sm:$0xff]
      %v468 = vld [vmem:[#allocation2 + $0x58] sm:$0xff]
      %v469 = vld [vmem:[#allocation2 + $0x60] sm:$0xff]
      %v470 = vld [vmem:[#allocation2 + $0x68] sm:$0xff]
      %v471 = vld [vmem:[#allocation2 + $0x70] sm:$0xff]
      %v472 = vld [vmem:[#allocation2 + $0x78] sm:$0xff]
      %v473 = vpack.c.bf16 %v442, %v441
      %v474 = vpack.c.bf16 %v444, %v443
      %v475 = vpack.c.bf16 %v446, %v445
      %v476 = vpack.c.bf16 %v448, %v447
      %v477 = vpack.c.bf16 %v450, %v449
      %v478 = vpack.c.bf16 %v452, %v451
      %v479 = vpack.c.bf16 %v454, %v453
      %v480 = vpack.c.bf16 %v456, %v455
      %v481 = vld [vmem:[%s1] sm:$0x3]
      %v483 = vsel %vm407, %v473, 0
      %v486 = vsel %vm407, %v474, 0
      %v489 = vsel %vm407, %v475, 0
      %v492 = vsel %vm407, %v476, 0
      %v495 = vsel %vm407, %v477, 0
      %v498 = vsel %vm407, %v478, 0
      %v501 = vsel %vm407, %v479, 0
      %v504 = vsel %vm407, %v480, 0
      %vm506 = vcmask 1041408
      %v508 = vsel %vm506, %v481, 0
      %510 = vmatprep.subr.bf16.mxu0 0
      %511 = vmatpush1.bf16.msra.mxu0 %v508
      %512 = vmatprep.subr.bf16.mxu0 0
      %513 = vmatpush1.bf16.msra.mxu0 0
      %514 = vmatprep.subr.bf16.mxu0 0
      %515 = vmatpush1.bf16.msra.mxu0 0
      %516 = vmatprep.subr.bf16.mxu0 0
      %517 = vmatpush1.bf16.msra.mxu0 0
      %518 = vmatprep.subr.bf16.mxu0 0
      %519 = vmatpush1.bf16.msra.mxu0 0
      %520 = vmatprep.subr.bf16.mxu0 0
      %521 = vmatpush1.bf16.msra.mxu0 0
      %522 = vmatprep.subr.bf16.mxu0 0
      %523 = vmatpush1.bf16.msra.mxu0 0
      %524 = vmatprep.subr.bf16.mxu0 0
      %525 = vmatpush1.bf16.msra.mxu0 0
      %526 = vmatprep.subr.bf16.mxu0 0
      %527 = vmatpush1.bf16.msra.mxu0 0
      %528 = vmatprep.subr.bf16.mxu0 0
      %529 = vmatpush1.bf16.msra.mxu0 0
      %530 = vmatprep.subr.bf16.mxu0 0
      %531 = vmatpush1.bf16.msra.mxu0 0
      %532 = vmatprep.subr.bf16.mxu0 0
      %533 = vmatpush1.bf16.msra.mxu0 0
      %534 = vmatprep.subr.bf16.mxu0 0
      %535 = vmatpush1.bf16.msra.mxu0 0
      %536 = vmatprep.subr.bf16.mxu0 0
      %537 = vmatpush1.bf16.msra.mxu0 0
      %538 = vmatprep.subr.bf16.mxu0 0
      %539 = vmatpush1.bf16.msra.mxu0 0
      %540 = vmatprep.subr.bf16.mxu0 0
      %541 = vmatpush1.bf16.msra.mxu0 0
      %542 = vmatprep.mubr.bf16.mxu0 0
      %543 = vmatmul.mubr.bf16.gmra.mrb[0].mxu0 %v483
      %v544 = vpop.f32.mrb[0].mxu0
      %v545 = vadd.f32 0.0, %v544
      %v546 = vpop.f32.mrb[0].mxu0
      %v547 = vpop.f32.mrb[0].mxu0
      %v548 = vadd.f32 0.0, %v547
      %v549 = vpop.f32.mrb[0].mxu0
      %550 = vmatprep.mubr.bf16.mxu0 0
      %551 = vmatmul.mubr.bf16.gmra.mrb[0].mxu0 %v486
      %v552 = vpop.f32.mrb[0].mxu0
      %v553 = vadd.f32 0.0, %v552
      %v554 = vpop.f32.mrb[0].mxu0
      %v555 = vpop.f32.mrb[0].mxu0
      %v556 = vadd.f32 0.0, %v555
      %v557 = vpop.f32.mrb[0].mxu0
      %558 = vmatprep.mubr.bf16.mxu0 0
      %559 = vmatmul.mubr.bf16.gmra.mrb[0].mxu0 %v489
      %v560 = vpop.f32.mrb[0].mxu0
      %v561 = vadd.f32 0.0, %v560
      %v562 = vpop.f32.mrb[0].mxu0
      %v563 = vpop.f32.mrb[0].mxu0
      %v564 = vadd.f32 0.0, %v563
      %v565 = vpop.f32.mrb[0].mxu0
      %566 = vmatprep.mubr.bf16.mxu0 0
      %567 = vmatmul.mubr.bf16.gmra.mrb[0].mxu0 %v492
      %v568 = vpop.f32.mrb[0].mxu0
      %v569 = vadd.f32 0.0, %v568
      %v570 = vpop.f32.mrb[0].mxu0
      %v571 = vpop.f32.mrb[0].mxu0
      %v572 = vadd.f32 0.0, %v571
      %v573 = vpop.f32.mrb[0].mxu0
      %574 = vmatprep.mubr.bf16.mxu0 0
      %575 = vmatmul.mubr.bf16.gmra.mrb[0].mxu0 %v495
      %v576 = vpop.f32.mrb[0].mxu0
      %v577 = vadd.f32 0.0, %v576
      %v578 = vpop.f32.mrb[0].mxu0
      %v579 = vpop.f32.mrb[0].mxu0
      %v580 = vadd.f32 0.0, %v579
      %v581 = vpop.f32.mrb[0].mxu0
      %582 = vmatprep.mubr.bf16.mxu0 0
      %583 = vmatmul.mubr.bf16.gmra.mrb[0].mxu0 %v498
      %v584 = vpop.f32.mrb[0].mxu0
      %v585 = vadd.f32 0.0, %v584
      %v586 = vpop.f32.mrb[0].mxu0
      %v587 = vpop.f32.mrb[0].mxu0
      %v588 = vadd.f32 0.0, %v587
      %v589 = vpop.f32.mrb[0].mxu0
      %590 = vmatprep.mubr.bf16.mxu0 0
      %591 = vmatmul.mubr.bf16.gmra.mrb[0].mxu0 %v501
      %v592 = vpop.f32.mrb[0].mxu0
      %v593 = vadd.f32 0.0, %v592
      %v594 = vpop.f32.mrb[0].mxu0
      %v595 = vpop.f32.mrb[0].mxu0
      %v596 = vadd.f32 0.0, %v595
      %v597 = vpop.f32.mrb[0].mxu0
      %598 = vmatprep.mubr.bf16.mxu0 0
      %599 = vmatmul.mubr.bf16.gmra.mrb[0].mxu0 %v504
      %v600 = vpop.f32.mrb[0].mxu0
      %v601 = vadd.f32 0.0, %v600
      %v602 = vpop.f32.mrb[0].mxu0
      %v603 = vpop.f32.mrb[0].mxu0
      %v604 = vadd.f32 0.0, %v603
      %v605 = vpop.f32.mrb[0].mxu0
      %606 = vdwg.mxu0
      %v607 = vadd.f32 %v457, %v545
      %v608 = vadd.f32 %v458, %v548
      %v609 = vadd.f32 %v459, %v553
      %v610 = vadd.f32 %v460, %v556
      %v611 = vadd.f32 %v461, %v561
      %v612 = vadd.f32 %v462, %v564
      %v613 = vadd.f32 %v463, %v569
      %v614 = vadd.f32 %v464, %v572
      %v615 = vadd.f32 %v465, %v577
      %v616 = vadd.f32 %v466, %v580
      %v617 = vadd.f32 %v467, %v585
      %v618 = vadd.f32 %v468, %v588
      %v619 = vadd.f32 %v469, %v593
      %v620 = vadd.f32 %v470, %v596
      %v621 = vadd.f32 %v471, %v601
      %v622 = vadd.f32 %v472, %v604
      %623 = vst.msk [vmem:[#allocation2] sm:$0xff] %vm407, %v607
      %624 = vst.msk [vmem:[#allocation2 + $0x8] sm:$0xff] %vm407, %v608
      %625 = vst.msk [vmem:[#allocation2 + $0x10] sm:$0xff] %vm407, %v609
      %626 = vst.msk [vmem:[#allocation2 + $0x18] sm:$0xff] %vm407, %v610
      %627 = vst.msk [vmem:[#allocation2 + $0x20] sm:$0xff] %vm407, %v611
      %628 = vst.msk [vmem:[#allocation2 + $0x28] sm:$0xff] %vm407, %v612
      %629 = vst.msk [vmem:[#allocation2 + $0x30] sm:$0xff] %vm407, %v613
      %630 = vst.msk [vmem:[#allocation2 + $0x38] sm:$0xff] %vm407, %v614
      %631 = vst.msk [vmem:[#allocation2 + $0x40] sm:$0xff] %vm407, %v615
      %632 = vst.msk [vmem:[#allocation2 + $0x48] sm:$0xff] %vm407, %v616
      %633 = vst.msk [vmem:[#allocation2 + $0x50] sm:$0xff] %vm407, %v617
      %634 = vst.msk [vmem:[#allocation2 + $0x58] sm:$0xff] %vm407, %v618
      %635 = vst.msk [vmem:[#allocation2 + $0x60] sm:$0xff] %vm407, %v619
      %636 = vst.msk [vmem:[#allocation2 + $0x68] sm:$0xff] %vm407, %v620
      %637 = vst.msk [vmem:[#allocation2 + $0x70] sm:$0xff] %vm407, %v621
      %638 = vst.msk [vmem:[#allocation2 + $0x78] sm:$0xff] %vm407, %v622
      %v639 = vld [vmem:[%s378] sm:$0xff]
      %v640 = vld [vmem:[%s378 + $0x8] sm:$0xff]
      %v641 = vld [vmem:[%s378 + $0x18] sm:$0xff]
      %v642 = vld [vmem:[%s378 + $0x20] sm:$0xff]
      %v643 = vld [vmem:[%s378 + $0x30] sm:$0xff]
      %v644 = vld [vmem:[%s378 + $0x38] sm:$0xff]
      %v645 = vld [vmem:[%s378 + $0x48] sm:$0xff]
      %v646 = vld [vmem:[%s378 + $0x50] sm:$0xff]
      %v647 = vld [vmem:[%s378 + $0x60] sm:$0xff]
      %v648 = vld [vmem:[%s378 + $0x68] sm:$0xff]
      %v649 = vld [vmem:[%s378 + $0x78] sm:$0xff]
      %v650 = vld [vmem:[%s378 + $0x80] sm:$0xff]
      %v651 = vld [vmem:[%s378 + $0x90] sm:$0xff]
      %v652 = vld [vmem:[%s378 + $0x98] sm:$0xff]
      %v653 = vld [vmem:[%s378 + $0xa8] sm:$0xff]
      %v654 = vld [vmem:[%s378 + $0xb0] sm:$0xff]
      %v655 = vld [vmem:[#allocation3] sm:$0xff]
      %v656 = vld [vmem:[#allocation3 + $0x8] sm:$0xff]
      %v657 = vld [vmem:[#allocation3 + $0x10] sm:$0xff]
      %v658 = vld [vmem:[#allocation3 + $0x18] sm:$0xff]
      %v659 = vld [vmem:[#allocation3 + $0x20] sm:$0xff]
      %v660 = vld [vmem:[#allocation3 + $0x28] sm:$0xff]
      %v661 = vld [vmem:[#allocation3 + $0x30] sm:$0xff]
      %v662 = vld [vmem:[#allocation3 + $0x38] sm:$0xff]
      %v663 = vld [vmem:[#allocation3 + $0x40] sm:$0xff]
      %v664 = vld [vmem:[#allocation3 + $0x48] sm:$0xff]
      %v665 = vld [vmem:[#allocation3 + $0x50] sm:$0xff]
      %v666 = vld [vmem:[#allocation3 + $0x58] sm:$0xff]
      %v667 = vld [vmem:[#allocation3 + $0x60] sm:$0xff]
      %v668 = vld [vmem:[#allocation3 + $0x68] sm:$0xff]
      %v669 = vld [vmem:[#allocation3 + $0x70] sm:$0xff]
      %v670 = vld [vmem:[#allocation3 + $0x78] sm:$0xff]
      %v671 = vpack.c.bf16 %v640, %v639
      %v672 = vpack.c.bf16 %v642, %v641
      %v673 = vpack.c.bf16 %v644, %v643
      %v674 = vpack.c.bf16 %v646, %v645
      %v675 = vpack.c.bf16 %v648, %v647
      %v676 = vpack.c.bf16 %v650, %v649
      %v677 = vpack.c.bf16 %v652, %v651
      %v678 = vpack.c.bf16 %v654, %v653
      %v679 = vld [vmem:[%s2] sm:$0x3]
      %v681 = vsel %vm407, %v671, 0
      %v684 = vsel %vm407, %v672, 0
      %v687 = vsel %vm407, %v673, 0
      %v690 = vsel %vm407, %v674, 0
      %v693 = vsel %vm407, %v675, 0
      %v696 = vsel %vm407, %v676, 0
      %v699 = vsel %vm407, %v677, 0
      %v702 = vsel %vm407, %v678, 0
      %v705 = vsel %vm506, %v679, 0
      %707 = vmatprep.subr.bf16.mxu0 0
      %708 = vmatpush1.bf16.msra.mxu0 %v705
      %709 = vmatprep.subr.bf16.mxu0 0
      %710 = vmatpush1.bf16.msra.mxu0 0
      %711 = vmatprep.subr.bf16.mxu0 0
      %712 = vmatpush1.bf16.msra.mxu0 0
      %713 = vmatprep.subr.bf16.mxu0 0
      %714 = vmatpush1.bf16.msra.mxu0 0
      %715 = vmatprep.subr.bf16.mxu0 0
      %716 = vmatpush1.bf16.msra.mxu0 0
      %717 = vmatprep.subr.bf16.mxu0 0
      %718 = vmatpush1.bf16.msra.mxu0 0
      %719 = vmatprep.subr.bf16.mxu0 0
      %720 = vmatpush1.bf16.msra.mxu0 0
      %721 = vmatprep.subr.bf16.mxu0 0
      %722 = vmatpush1.bf16.msra.mxu0 0
      %723 = vmatprep.subr.bf16.mxu0 0
      %724 = vmatpush1.bf16.msra.mxu0 0
      %725 = vmatprep.subr.bf16.mxu0 0
      %726 = vmatpush1.bf16.msra.mxu0 0
      %727 = vmatprep.subr.bf16.mxu0 0
      %728 = vmatpush1.bf16.msra.mxu0 0
      %729 = vmatprep.subr.bf16.mxu0 0
      %730 = vmatpush1.bf16.msra.mxu0 0
      %731 = vmatprep.subr.bf16.mxu0 0
      %732 = vmatpush1.bf16.msra.mxu0 0
      %733 = vmatprep.subr.bf16.mxu0 0
      %734 = vmatpush1.bf16.msra.mxu0 0
      %735 = vmatprep.subr.bf16.mxu0 0
      %736 = vmatpush1.bf16.msra.mxu0 0
      %737 = vmatprep.subr.bf16.mxu0 0
      %738 = vmatpush1.bf16.msra.mxu0 0
      %739 = vmatprep.mubr.bf16.mxu0 0
      %740 = vmatmul.mubr.bf16.gmra.mrb[0].mxu0 %v681
      %v741 = vpop.f32.mrb[0].mxu0
      %v742 = vadd.f32 0.0, %v741
      %v743 = vpop.f32.mrb[0].mxu0
      %v744 = vpop.f32.mrb[0].mxu0
      %v745 = vadd.f32 0.0, %v744
      %v746 = vpop.f32.mrb[0].mxu0
      %747 = vmatprep.mubr.bf16.mxu0 0
      %748 = vmatmul.mubr.bf16.gmra.mrb[0].mxu0 %v684
      %v749 = vpop.f32.mrb[0].mxu0
      %v750 = vadd.f32 0.0, %v749
      %v751 = vpop.f32.mrb[0].mxu0
      %v752 = vpop.f32.mrb[0].mxu0
      %v753 = vadd.f32 0.0, %v752
      %v754 = vpop.f32.mrb[0].mxu0
      %755 = vmatprep.mubr.bf16.mxu0 0
      %756 = vmatmul.mubr.bf16.gmra.mrb[0].mxu0 %v687
      %v757 = vpop.f32.mrb[0].mxu0
      %v758 = vadd.f32 0.0, %v757
      %v759 = vpop.f32.mrb[0].mxu0
      %v760 = vpop.f32.mrb[0].mxu0
      %v761 = vadd.f32 0.0, %v760
      %v762 = vpop.f32.mrb[0].mxu0
      %763 = vmatprep.mubr.bf16.mxu0 0
      %764 = vmatmul.mubr.bf16.gmra.mrb[0].mxu0 %v690
      %v765 = vpop.f32.mrb[0].mxu0
      %v766 = vadd.f32 0.0, %v765
      %v767 = vpop.f32.mrb[0].mxu0
      %v768 = vpop.f32.mrb[0].mxu0
      %v769 = vadd.f32 0.0, %v768
      %v770 = vpop.f32.mrb[0].mxu0
      %771 = vmatprep.mubr.bf16.mxu0 0
      %772 = vmatmul.mubr.bf16.gmra.mrb[0].mxu0 %v693
      %v773 = vpop.f32.mrb[0].mxu0
      %v774 = vadd.f32 0.0, %v773
      %v775 = vpop.f32.mrb[0].mxu0
      %v776 = vpop.f32.mrb[0].mxu0
      %v777 = vadd.f32 0.0, %v776
      %v778 = vpop.f32.mrb[0].mxu0
      %779 = vmatprep.mubr.bf16.mxu0 0
      %780 = vmatmul.mubr.bf16.gmra.mrb[0].mxu0 %v696
      %v781 = vpop.f32.mrb[0].mxu0
      %v782 = vadd.f32 0.0, %v781
      %v783 = vpop.f32.mrb[0].mxu0
      %v784 = vpop.f32.mrb[0].mxu0
      %v785 = vadd.f32 0.0, %v784
      %v786 = vpop.f32.mrb[0].mxu0
      %787 = vmatprep.mubr.bf16.mxu0 0
      %788 = vmatmul.mubr.bf16.gmra.mrb[0].mxu0 %v699
      %v789 = vpop.f32.mrb[0].mxu0
      %v790 = vadd.f32 0.0, %v789
      %v791 = vpop.f32.mrb[0].mxu0
      %v792 = vpop.f32.mrb[0].mxu0
      %v793 = vadd.f32 0.0, %v792
      %v794 = vpop.f32.mrb[0].mxu0
      %795 = vmatprep.mubr.bf16.mxu0 0
      %796 = vmatmul.mubr.bf16.gmra.mrb[0].mxu0 %v702
      %v797 = vpop.f32.mrb[0].mxu0
      %v798 = vadd.f32 0.0, %v797
      %v799 = vpop.f32.mrb[0].mxu0
      %v800 = vpop.f32.mrb[0].mxu0
      %v801 = vadd.f32 0.0, %v800
      %v802 = vpop.f32.mrb[0].mxu0
      %803 = vdwg.mxu0
      %v804 = vadd.f32 %v655, %v742
      %v805 = vadd.f32 %v656, %v745
      %v806 = vadd.f32 %v657, %v750
      %v807 = vadd.f32 %v658, %v753
      %v808 = vadd.f32 %v659, %v758
      %v809 = vadd.f32 %v660, %v761
      %v810 = vadd.f32 %v661, %v766
      %v811 = vadd.f32 %v662, %v769
      %v812 = vadd.f32 %v663, %v774
      %v813 = vadd.f32 %v664, %v777
      %v814 = vadd.f32 %v665, %v782
      %v815 = vadd.f32 %v666, %v785
      %v816 = vadd.f32 %v667, %v790
      %v817 = vadd.f32 %v668, %v793
      %v818 = vadd.f32 %v669, %v798
      %v819 = vadd.f32 %v670, %v801
      %820 = vst.msk [vmem:[#allocation3] sm:$0xff] %vm407, %v804
      %821 = vst.msk [vmem:[#allocation3 + $0x8] sm:$0xff] %vm407, %v805
      %822 = vst.msk [vmem:[#allocation3 + $0x10] sm:$0xff] %vm407, %v806
      %823 = vst.msk [vmem:[#allocation3 + $0x18] sm:$0xff] %vm407, %v807
      %824 = vst.msk [vmem:[#allocation3 + $0x20] sm:$0xff] %vm407, %v808
      %825 = vst.msk [vmem:[#allocation3 + $0x28] sm:$0xff] %vm407, %v809
      %826 = vst.msk [vmem:[#allocation3 + $0x30] sm:$0xff] %vm407, %v810
      %827 = vst.msk [vmem:[#allocation3 + $0x38] sm:$0xff] %vm407, %v811
      %828 = vst.msk [vmem:[#allocation3 + $0x40] sm:$0xff] %vm407, %v812
      %829 = vst.msk [vmem:[#allocation3 + $0x48] sm:$0xff] %vm407, %v813
      %830 = vst.msk [vmem:[#allocation3 + $0x50] sm:$0xff] %vm407, %v814
      %831 = vst.msk [vmem:[#allocation3 + $0x58] sm:$0xff] %vm407, %v815
      %832 = vst.msk [vmem:[#allocation3 + $0x60] sm:$0xff] %vm407, %v816
      %833 = vst.msk [vmem:[#allocation3 + $0x68] sm:$0xff] %vm407, %v817
      %834 = vst.msk [vmem:[#allocation3 + $0x70] sm:$0xff] %vm407, %v818
      %835 = vst.msk [vmem:[#allocation3 + $0x78] sm:$0xff] %vm407, %v819
      %v836 = vld [vmem:[%s440 + $0x2] sm:$0xff]
      %v837 = vld [vmem:[%s440 + $0xa] sm:$0xff]
      %v838 = vld [vmem:[%s440 + $0x1a] sm:$0xff]
      %v839 = vld [vmem:[%s440 + $0x22] sm:$0xff]
      %v840 = vld [vmem:[%s440 + $0x32] sm:$0xff]
      %v841 = vld [vmem:[%s440 + $0x3a] sm:$0xff]
      %v842 = vld [vmem:[%s440 + $0x4a] sm:$0xff]
      %v843 = vld [vmem:[%s440 + $0x52] sm:$0xff]
      %v844 = vld [vmem:[%s440 + $0x62] sm:$0xff]
      %v845 = vld [vmem:[%s440 + $0x6a] sm:$0xff]
      %v846 = vld [vmem:[%s440 + $0x7a] sm:$0xff]
      %v847 = vld [vmem:[%s440 + $0x82] sm:$0xff]
      %v848 = vld [vmem:[%s440 + $0x92] sm:$0xff]
      %v849 = vld [vmem:[%s440 + $0x9a] sm:$0xff]
      %v850 = vld [vmem:[%s440 + $0xaa] sm:$0xff]
      %v851 = vld [vmem:[%s440 + $0xb2] sm:$0xff]
      %v852 = vld [vmem:[#allocation2] sm:$0xff]
      %v853 = vld [vmem:[#allocation2 + $0x8] sm:$0xff]
      %v854 = vld [vmem:[#allocation2 + $0x10] sm:$0xff]
      %v855 = vld [vmem:[#allocation2 + $0x18] sm:$0xff]
      %v856 = vld [vmem:[#allocation2 + $0x20] sm:$0xff]
      %v857 = vld [vmem:[#allocation2 + $0x28] sm:$0xff]
      %v858 = vld [vmem:[#allocation2 + $0x30] sm:$0xff]
      %v859 = vld [vmem:[#allocation2 + $0x38] sm:$0xff]
      %v860 = vld [vmem:[#allocation2 + $0x40] sm:$0xff]
      %v861 = vld [vmem:[#allocation2 + $0x48] sm:$0xff]
      %v862 = vld [vmem:[#allocation2 + $0x50] sm:$0xff]
      %v863 = vld [vmem:[#allocation2 + $0x58] sm:$0xff]
      %v864 = vld [vmem:[#allocation2 + $0x60] sm:$0xff]
      %v865 = vld [vmem:[#allocation2 + $0x68] sm:$0xff]
      %v866 = vld [vmem:[#allocation2 + $0x70] sm:$0xff]
      %v867 = vld [vmem:[#allocation2 + $0x78] sm:$0xff]
      %v868 = vpack.c.bf16 %v837, %v836
      %v869 = vpack.c.bf16 %v839, %v838
      %v870 = vpack.c.bf16 %v841, %v840
      %v871 = vpack.c.bf16 %v843, %v842
      %v872 = vpack.c.bf16 %v845, %v844
      %v873 = vpack.c.bf16 %v847, %v846
      %v874 = vpack.c.bf16 %v849, %v848
      %v875 = vpack.c.bf16 %v851, %v850
      %s876 = scalar_lea.vmem %s1, 2
      %v877 = vld [vmem:[%s876] sm:$0x3]
      %v879 = vsel %vm407, %v868, 0
      %v882 = vsel %vm407, %v869, 0
      %v885 = vsel %vm407, %v870, 0
      %v888 = vsel %vm407, %v871, 0
      %v891 = vsel %vm407, %v872, 0
      %v894 = vsel %vm407, %v873, 0
      %v897 = vsel %vm407, %v874, 0
      %v900 = vsel %vm407, %v875, 0
      %v903 = vsel %vm506, %v877, 0
      %905 = vmatprep.subr.bf16.mxu0 0
      %906 = vmatpush1.bf16.msra.mxu0 %v903
      %907 = vmatprep.subr.bf16.mxu0 0
      %908 = vmatpush1.bf16.msra.mxu0 0
      %909 = vmatprep.subr.bf16.mxu0 0
      %910 = vmatpush1.bf16.msra.mxu0 0
      %911 = vmatprep.subr.bf16.mxu0 0
      %912 = vmatpush1.bf16.msra.mxu0 0
      %913 = vmatprep.subr.bf16.mxu0 0
      %914 = vmatpush1.bf16.msra.mxu0 0
      %915 = vmatprep.subr.bf16.mxu0 0
      %916 = vmatpush1.bf16.msra.mxu0 0
      %917 = vmatprep.subr.bf16.mxu0 0
      %918 = vmatpush1.bf16.msra.mxu0 0
      %919 = vmatprep.subr.bf16.mxu0 0
      %920 = vmatpush1.bf16.msra.mxu0 0
      %921 = vmatprep.subr.bf16.mxu0 0
      %922 = vmatpush1.bf16.msra.mxu0 0
      %923 = vmatprep.subr.bf16.mxu0 0
      %924 = vmatpush1.bf16.msra.mxu0 0
      %925 = vmatprep.subr.bf16.mxu0 0
      %926 = vmatpush1.bf16.msra.mxu0 0
      %927 = vmatprep.subr.bf16.mxu0 0
      %928 = vmatpush1.bf16.msra.mxu0 0
      %929 = vmatprep.subr.bf16.mxu0 0
      %930 = vmatpush1.bf16.msra.mxu0 0
      %931 = vmatprep.subr.bf16.mxu0 0
      %932 = vmatpush1.bf16.msra.mxu0 0
      %933 = vmatprep.subr.bf16.mxu0 0
      %934 = vmatpush1.bf16.msra.mxu0 0
      %935 = vmatprep.subr.bf16.mxu0 0
      %936 = vmatpush1.bf16.msra.mxu0 0
      %937 = vmatprep.mubr.bf16.mxu0 0
      %938 = vmatmul.mubr.bf16.gmra.mrb[0].mxu0 %v879
      %v939 = vpop.f32.mrb[0].mxu0
      %v940 = vadd.f32 0.0, %v939
      %v941 = vpop.f32.mrb[0].mxu0
      %v942 = vpop.f32.mrb[0].mxu0
      %v943 = vadd.f32 0.0, %v942
      %v944 = vpop.f32.mrb[0].mxu0
      %945 = vmatprep.mubr.bf16.mxu0 0
      %946 = vmatmul.mubr.bf16.gmra.mrb[0].mxu0 %v882
      %v947 = vpop.f32.mrb[0].mxu0
      %v948 = vadd.f32 0.0, %v947
      %v949 = vpop.f32.mrb[0].mxu0
      %v950 = vpop.f32.mrb[0].mxu0
      %v951 = vadd.f32 0.0, %v950
      %v952 = vpop.f32.mrb[0].mxu0
      %953 = vmatprep.mubr.bf16.mxu0 0
      %954 = vmatmul.mubr.bf16.gmra.mrb[0].mxu0 %v885
      %v955 = vpop.f32.mrb[0].mxu0
      %v956 = vadd.f32 0.0, %v955
      %v957 = vpop.f32.mrb[0].mxu0
      %v958 = vpop.f32.mrb[0].mxu0
      %v959 = vadd.f32 0.0, %v958
      %v960 = vpop.f32.mrb[0].mxu0
      %961 = vmatprep.mubr.bf16.mxu0 0
      %962 = vmatmul.mubr.bf16.gmra.mrb[0].mxu0 %v888
      %v963 = vpop.f32.mrb[0].mxu0
      %v964 = vadd.f32 0.0, %v963
      %v965 = vpop.f32.mrb[0].mxu0
      %v966 = vpop.f32.mrb[0].mxu0
      %v967 = vadd.f32 0.0, %v966
      %v968 = vpop.f32.mrb[0].mxu0
      %969 = vmatprep.mubr.bf16.mxu0 0
      %970 = vmatmul.mubr.bf16.gmra.mrb[0].mxu0 %v891
      %v971 = vpop.f32.mrb[0].mxu0
      %v972 = vadd.f32 0.0, %v971
      %v973 = vpop.f32.mrb[0].mxu0
      %v974 = vpop.f32.mrb[0].mxu0
      %v975 = vadd.f32 0.0, %v974
      %v976 = vpop.f32.mrb[0].mxu0
      %977 = vmatprep.mubr.bf16.mxu0 0
      %978 = vmatmul.mubr.bf16.gmra.mrb[0].mxu0 %v894
      %v979 = vpop.f32.mrb[0].mxu0
      %v980 = vadd.f32 0.0, %v979
      %v981 = vpop.f32.mrb[0].mxu0
      %v982 = vpop.f32.mrb[0].mxu0
      %v983 = vadd.f32 0.0, %v982
      %v984 = vpop.f32.mrb[0].mxu0
      %985 = vmatprep.mubr.bf16.mxu0 0
      %986 = vmatmul.mubr.bf16.gmra.mrb[0].mxu0 %v897
      %v987 = vpop.f32.mrb[0].mxu0
      %v988 = vadd.f32 0.0, %v987
      %v989 = vpop.f32.mrb[0].mxu0
      %v990 = vpop.f32.mrb[0].mxu0
      %v991 = vadd.f32 0.0, %v990
      %v992 = vpop.f32.mrb[0].mxu0
      %993 = vmatprep.mubr.bf16.mxu0 0
      %994 = vmatmul.mubr.bf16.gmra.mrb[0].mxu0 %v900
      %v995 = vpop.f32.mrb[0].mxu0
      %v996 = vadd.f32 0.0, %v995
      %v997 = vpop.f32.mrb[0].mxu0
      %v998 = vpop.f32.mrb[0].mxu0
      %v999 = vadd.f32 0.0, %v998
      %v1000 = vpop.f32.mrb[0].mxu0
      %1001 = vdwg.mxu0
      %v1002 = vadd.f32 %v852, %v940
      %v1003 = vadd.f32 %v853, %v943
      %v1004 = vadd.f32 %v854, %v948
      %v1005 = vadd.f32 %v855, %v951
      %v1006 = vadd.f32 %v856, %v956
      %v1007 = vadd.f32 %v857, %v959
      %v1008 = vadd.f32 %v858, %v964
      %v1009 = vadd.f32 %v859, %v967
      %v1010 = vadd.f32 %v860, %v972
      %v1011 = vadd.f32 %v861, %v975
      %v1012 = vadd.f32 %v862, %v980
      %v1013 = vadd.f32 %v863, %v983
      %v1014 = vadd.f32 %v864, %v988
      %v1015 = vadd.f32 %v865, %v991
      %v1016 = vadd.f32 %v866, %v996
      %v1017 = vadd.f32 %v867, %v999
      %1018 = vst.msk [vmem:[#allocation2] sm:$0xff] %vm407, %v1002
      %1019 = vst.msk [vmem:[#allocation2 + $0x8] sm:$0xff] %vm407, %v1003
      %1020 = vst.msk [vmem:[#allocation2 + $0x10] sm:$0xff] %vm407, %v1004
      %1021 = vst.msk [vmem:[#allocation2 + $0x18] sm:$0xff] %vm407, %v1005
      %1022 = vst.msk [vmem:[#allocation2 + $0x20] sm:$0xff] %vm407, %v1006
      %1023 = vst.msk [vmem:[#allocation2 + $0x28] sm:$0xff] %vm407, %v1007
      %1024 = vst.msk [vmem:[#allocation2 + $0x30] sm:$0xff] %vm407, %v1008
      %1025 = vst.msk [vmem:[#allocation2 + $0x38] sm:$0xff] %vm407, %v1009
      %1026 = vst.msk [vmem:[#allocation2 + $0x40] sm:$0xff] %vm407, %v1010
      %1027 = vst.msk [vmem:[#allocation2 + $0x48] sm:$0xff] %vm407, %v1011
      %1028 = vst.msk [vmem:[#allocation2 + $0x50] sm:$0xff] %vm407, %v1012
      %1029 = vst.msk [vmem:[#allocation2 + $0x58] sm:$0xff] %vm407, %v1013
      %1030 = vst.msk [vmem:[#allocation2 + $0x60] sm:$0xff] %vm407, %v1014
      %1031 = vst.msk [vmem:[#allocation2 + $0x68] sm:$0xff] %vm407, %v1015
      %1032 = vst.msk [vmem:[#allocation2 + $0x70] sm:$0xff] %vm407, %v1016
      %1033 = vst.msk [vmem:[#allocation2 + $0x78] sm:$0xff] %vm407, %v1017
      %v1034 = vld [vmem:[%s378 + $0x2] sm:$0xff]
      %v1035 = vld [vmem:[%s378 + $0xa] sm:$0xff]
      %v1036 = vld [vmem:[%s378 + $0x1a] sm:$0xff]
      %v1037 = vld [vmem:[%s378 + $0x22] sm:$0xff]
      %v1038 = vld [vmem:[%s378 + $0x32] sm:$0xff]
      %v1039 = vld [vmem:[%s378 + $0x3a] sm:$0xff]
      %v1040 = vld [vmem:[%s378 + $0x4a] sm:$0xff]
      %v1041 = vld [vmem:[%s378 + $0x52] sm:$0xff]
      %v1042 = vld [vmem:[%s378 + $0x62] sm:$0xff]
      %v1043 = vld [vmem:[%s378 + $0x6a] sm:$0xff]
      %v1044 = vld [vmem:[%s378 + $0x7a] sm:$0xff]
      %v1045 = vld [vmem:[%s378 + $0x82] sm:$0xff]
      %v1046 = vld [vmem:[%s378 + $0x92] sm:$0xff]
      %v1047 = vld [vmem:[%s378 + $0x9a] sm:$0xff]
      %v1048 = vld [vmem:[%s378 + $0xaa] sm:$0xff]
      %v1049 = vld [vmem:[%s378 + $0xb2] sm:$0xff]
      %v1050 = vld [vmem:[#allocation3] sm:$0xff]
      %v1051 = vld [vmem:[#allocation3 + $0x8] sm:$0xff]
      %v1052 = vld [vmem:[#allocation3 + $0x10] sm:$0xff]
      %v1053 = vld [vmem:[#allocation3 + $0x18] sm:$0xff]
      %v1054 = vld [vmem:[#allocation3 + $0x20] sm:$0xff]
      %v1055 = vld [vmem:[#allocation3 + $0x28] sm:$0xff]
      %v1056 = vld [vmem:[#allocation3 + $0x30] sm:$0xff]
      %v1057 = vld [vmem:[#allocation3 + $0x38] sm:$0xff]
      %v1058 = vld [vmem:[#allocation3 + $0x40] sm:$0xff]
      %v1059 = vld [vmem:[#allocation3 + $0x48] sm:$0xff]
      %v1060 = vld [vmem:[#allocation3 + $0x50] sm:$0xff]
      %v1061 = vld [vmem:[#allocation3 + $0x58] sm:$0xff]
      %v1062 = vld [vmem:[#allocation3 + $0x60] sm:$0xff]
      %v1063 = vld [vmem:[#allocation3 + $0x68] sm:$0xff]
      %v1064 = vld [vmem:[#allocation3 + $0x70] sm:$0xff]
      %v1065 = vld [vmem:[#allocation3 + $0x78] sm:$0xff]
      %v1066 = vpack.c.bf16 %v1035, %v1034
      %v1067 = vpack.c.bf16 %v1037, %v1036
      %v1068 = vpack.c.bf16 %v1039, %v1038
      %v1069 = vpack.c.bf16 %v1041, %v1040
      %v1070 = vpack.c.bf16 %v1043, %v1042
      %v1071 = vpack.c.bf16 %v1045, %v1044
      %v1072 = vpack.c.bf16 %v1047, %v1046
      %v1073 = vpack.c.bf16 %v1049, %v1048
      %s1074 = scalar_lea.vmem %s2, 2
      %v1075 = vld [vmem:[%s1074] sm:$0x3]
      %v1077 = vsel %vm407, %v1066, 0
      %v1080 = vsel %vm407, %v1067, 0
      %v1083 = vsel %vm407, %v1068, 0
      %v1086 = vsel %vm407, %v1069, 0
      %v1089 = vsel %vm407, %v1070, 0
      %v1092 = vsel %vm407, %v1071, 0
      %v1095 = vsel %vm407, %v1072, 0
      %v1098 = vsel %vm407, %v1073, 0
      %v1101 = vsel %vm506, %v1075, 0
      %1103 = vmatprep.subr.bf16.mxu0 0
      %1104 = vmatpush1.bf16.msra.mxu0 %v1101
      %1105 = vmatprep.subr.bf16.mxu0 0
      %1106 = vmatpush1.bf16.msra.mxu0 0
      %1107 = vmatprep.subr.bf16.mxu0 0
      %1108 = vmatpush1.bf16.msra.mxu0 0
      %1109 = vmatprep.subr.bf16.mxu0 0
      %1110 = vmatpush1.bf16.msra.mxu0 0
      %1111 = vmatprep.subr.bf16.mxu0 0
      %1112 = vmatpush1.bf16.msra.mxu0 0
      %1113 = vmatprep.subr.bf16.mxu0 0
      %1114 = vmatpush1.bf16.msra.mxu0 0
      %1115 = vmatprep.subr.bf16.mxu0 0
      %1116 = vmatpush1.bf16.msra.mxu0 0
      %1117 = vmatprep.subr.bf16.mxu0 0
      %1118 = vmatpush1.bf16.msra.mxu0 0
      %1119 = vmatprep.subr.bf16.mxu0 0
      %1120 = vmatpush1.bf16.msra.mxu0 0
      %1121 = vmatprep.subr.bf16.mxu0 0
      %1122 = vmatpush1.bf16.msra.mxu0 0
      %1123 = vmatprep.subr.bf16.mxu0 0
      %1124 = vmatpush1.bf16.msra.mxu0 0
      %1125 = vmatprep.subr.bf16.mxu0 0
      %1126 = vmatpush1.bf16.msra.mxu0 0
      %1127 = vmatprep.subr.bf16.mxu0 0
      %1128 = vmatpush1.bf16.msra.mxu0 0
      %1129 = vmatprep.subr.bf16.mxu0 0
      %1130 = vmatpush1.bf16.msra.mxu0 0
      %1131 = vmatprep.subr.bf16.mxu0 0
      %1132 = vmatpush1.bf16.msra.mxu0 0
      %1133 = vmatprep.subr.bf16.mxu0 0
      %1134 = vmatpush1.bf16.msra.mxu0 0
      %1135 = vmatprep.mubr.bf16.mxu0 0
      %1136 = vmatmul.mubr.bf16.gmra.mrb[0].mxu0 %v1077
      %v1137 = vpop.f32.mrb[0].mxu0
      %v1138 = vadd.f32 0.0, %v1137
      %v1139 = vpop.f32.mrb[0].mxu0
      %v1140 = vpop.f32.mrb[0].mxu0
      %v1141 = vadd.f32 0.0, %v1140
      %v1142 = vpop.f32.mrb[0].mxu0
      %1143 = vmatprep.mubr.bf16.mxu0 0
      %1144 = vmatmul.mubr.bf16.gmra.mrb[0].mxu0 %v1080
      %v1145 = vpop.f32.mrb[0].mxu0
      %v1146 = vadd.f32 0.0, %v1145
      %v1147 = vpop.f32.mrb[0].mxu0
      %v1148 = vpop.f32.mrb[0].mxu0
      %v1149 = vadd.f32 0.0, %v1148
      %v1150 = vpop.f32.mrb[0].mxu0
      %1151 = vmatprep.mubr.bf16.mxu0 0
      %1152 = vmatmul.mubr.bf16.gmra.mrb[0].mxu0 %v1083
      %v1153 = vpop.f32.mrb[0].mxu0
      %v1154 = vadd.f32 0.0, %v1153
      %v1155 = vpop.f32.mrb[0].mxu0
      %v1156 = vpop.f32.mrb[0].mxu0
      %v1157 = vadd.f32 0.0, %v1156
      %v1158 = vpop.f32.mrb[0].mxu0
      %1159 = vmatprep.mubr.bf16.mxu0 0
      %1160 = vmatmul.mubr.bf16.gmra.mrb[0].mxu0 %v1086
      %v1161 = vpop.f32.mrb[0].mxu0
      %v1162 = vadd.f32 0.0, %v1161
      %v1163 = vpop.f32.mrb[0].mxu0
      %v1164 = vpop.f32.mrb[0].mxu0
      %v1165 = vadd.f32 0.0, %v1164
      %v1166 = vpop.f32.mrb[0].mxu0
      %1167 = vmatprep.mubr.bf16.mxu0 0
      %1168 = vmatmul.mubr.bf16.gmra.mrb[0].mxu0 %v1089
      %v1169 = vpop.f32.mrb[0].mxu0
      %v1170 = vadd.f32 0.0, %v1169
      %v1171 = vpop.f32.mrb[0].mxu0
      %v1172 = vpop.f32.mrb[0].mxu0
      %v1173 = vadd.f32 0.0, %v1172
      %v1174 = vpop.f32.mrb[0].mxu0
      %1175 = vmatprep.mubr.bf16.mxu0 0
      %1176 = vmatmul.mubr.bf16.gmra.mrb[0].mxu0 %v1092
      %v1177 = vpop.f32.mrb[0].mxu0
      %v1178 = vadd.f32 0.0, %v1177
      %v1179 = vpop.f32.mrb[0].mxu0
      %v1180 = vpop.f32.mrb[0].mxu0
      %v1181 = vadd.f32 0.0, %v1180
      %v1182 = vpop.f32.mrb[0].mxu0
      %1183 = vmatprep.mubr.bf16.mxu0 0
      %1184 = vmatmul.mubr.bf16.gmra.mrb[0].mxu0 %v1095
      %v1185 = vpop.f32.mrb[0].mxu0
      %v1186 = vadd.f32 0.0, %v1185
      %v1187 = vpop.f32.mrb[0].mxu0
      %v1188 = vpop.f32.mrb[0].mxu0
      %v1189 = vadd.f32 0.0, %v1188
      %v1190 = vpop.f32.mrb[0].mxu0
      %1191 = vmatprep.mubr.bf16.mxu0 0
      %1192 = vmatmul.mubr.bf16.gmra.mrb[0].mxu0 %v1098
      %v1193 = vpop.f32.mrb[0].mxu0
      %v1194 = vadd.f32 0.0, %v1193
      %v1195 = vpop.f32.mrb[0].mxu0
      %v1196 = vpop.f32.mrb[0].mxu0
      %v1197 = vadd.f32 0.0, %v1196
      %v1198 = vpop.f32.mrb[0].mxu0
      %1199 = vdwg.mxu0
      %v1200 = vadd.f32 %v1050, %v1138
      %v1201 = vadd.f32 %v1051, %v1141
      %v1202 = vadd.f32 %v1052, %v1146
      %v1203 = vadd.f32 %v1053, %v1149
      %v1204 = vadd.f32 %v1054, %v1154
      %v1205 = vadd.f32 %v1055, %v1157
      %v1206 = vadd.f32 %v1056, %v1162
      %v1207 = vadd.f32 %v1057, %v1165
      %v1208 = vadd.f32 %v1058, %v1170
      %v1209 = vadd.f32 %v1059, %v1173
      %v1210 = vadd.f32 %v1060, %v1178
      %v1211 = vadd.f32 %v1061, %v1181
      %v1212 = vadd.f32 %v1062, %v1186
      %v1213 = vadd.f32 %v1063, %v1189
      %v1214 = vadd.f32 %v1064, %v1194
      %v1215 = vadd.f32 %v1065, %v1197
      %1216 = vst.msk [vmem:[#allocation3] sm:$0xff] %vm407, %v1200
      %1217 = vst.msk [vmem:[#allocation3 + $0x8] sm:$0xff] %vm407, %v1201
      %1218 = vst.msk [vmem:[#allocation3 + $0x10] sm:$0xff] %vm407, %v1202
      %1219 = vst.msk [vmem:[#allocation3 + $0x18] sm:$0xff] %vm407, %v1203
      %1220 = vst.msk [vmem:[#allocation3 + $0x20] sm:$0xff] %vm407, %v1204
      %1221 = vst.msk [vmem:[#allocation3 + $0x28] sm:$0xff] %vm407, %v1205
      %1222 = vst.msk [vmem:[#allocation3 + $0x30] sm:$0xff] %vm407, %v1206
      %1223 = vst.msk [vmem:[#allocation3 + $0x38] sm:$0xff] %vm407, %v1207
      %1224 = vst.msk [vmem:[#allocation3 + $0x40] sm:$0xff] %vm407, %v1208
      %1225 = vst.msk [vmem:[#allocation3 + $0x48] sm:$0xff] %vm407, %v1209
      %1226 = vst.msk [vmem:[#allocation3 + $0x50] sm:$0xff] %vm407, %v1210
      %1227 = vst.msk [vmem:[#allocation3 + $0x58] sm:$0xff] %vm407, %v1211
      %1228 = vst.msk [vmem:[#allocation3 + $0x60] sm:$0xff] %vm407, %v1212
      %1229 = vst.msk [vmem:[#allocation3 + $0x68] sm:$0xff] %vm407, %v1213
      %1230 = vst.msk [vmem:[#allocation3 + $0x70] sm:$0xff] %vm407, %v1214
      %1231 = vst.msk [vmem:[#allocation3 + $0x78] sm:$0xff] %vm407, %v1215
      %v1232 = vld [vmem:[%s440 + $0x3] sm:$0xff]
      %v1233 = vld [vmem:[%s440 + $0xb] sm:$0xff]
      %v1234 = vld [vmem:[%s440 + $0x1b] sm:$0xff]
      %v1235 = vld [vmem:[%s440 + $0x23] sm:$0xff]
      %v1236 = vld [vmem:[%s440 + $0x33] sm:$0xff]
      %v1237 = vld [vmem:[%s440 + $0x3b] sm:$0xff]
      %v1238 = vld [vmem:[%s440 + $0x4b] sm:$0xff]
      %v1239 = vld [vmem:[%s440 + $0x53] sm:$0xff]
      %v1240 = vld [vmem:[%s440 + $0x63] sm:$0xff]
      %v1241 = vld [vmem:[%s440 + $0x6b] sm:$0xff]
      %v1242 = vld [vmem:[%s440 + $0x7b] sm:$0xff]
      %v1243 = vld [vmem:[%s440 + $0x83] sm:$0xff]
      %v1244 = vld [vmem:[%s440 + $0x93] sm:$0xff]
      %v1245 = vld [vmem:[%s440 + $0x9b] sm:$0xff]
      %v1246 = vld [vmem:[%s440 + $0xab] sm:$0xff]
      %v1247 = vld [vmem:[%s440 + $0xb3] sm:$0xff]
      %v1248 = vld [vmem:[#allocation2] sm:$0xff]
      %v1249 = vld [vmem:[#allocation2 + $0x8] sm:$0xff]
      %v1250 = vld [vmem:[#allocation2 + $0x10] sm:$0xff]
      %v1251 = vld [vmem:[#allocation2 + $0x18] sm:$0xff]
      %v1252 = vld [vmem:[#allocation2 + $0x20] sm:$0xff]
      %v1253 = vld [vmem:[#allocation2 + $0x28] sm:$0xff]
      %v1254 = vld [vmem:[#allocation2 + $0x30] sm:$0xff]
      %v1255 = vld [vmem:[#allocation2 + $0x38] sm:$0xff]
      %v1256 = vld [vmem:[#allocation2 + $0x40] sm:$0xff]
      %v1257 = vld [vmem:[#allocation2 + $0x48] sm:$0xff]
      %v1258 = vld [vmem:[#allocation2 + $0x50] sm:$0xff]
      %v1259 = vld [vmem:[#allocation2 + $0x58] sm:$0xff]
      %v1260 = vld [vmem:[#allocation2 + $0x60] sm:$0xff]
      %v1261 = vld [vmem:[#allocation2 + $0x68] sm:$0xff]
      %v1262 = vld [vmem:[#allocation2 + $0x70] sm:$0xff]
      %v1263 = vld [vmem:[#allocation2 + $0x78] sm:$0xff]
      %v1264 = vpack.c.bf16 %v1233, %v1232
      %v1265 = vpack.c.bf16 %v1235, %v1234
      %v1266 = vpack.c.bf16 %v1237, %v1236
      %v1267 = vpack.c.bf16 %v1239, %v1238
      %v1268 = vpack.c.bf16 %v1241, %v1240
      %v1269 = vpack.c.bf16 %v1243, %v1242
      %v1270 = vpack.c.bf16 %v1245, %v1244
      %v1271 = vpack.c.bf16 %v1247, %v1246
      %s1272 = scalar_lea.vmem %s1, 4
      %v1273 = vld [vmem:[%s1272] sm:$0x3]
      %v1275 = vsel %vm407, %v1264, 0
      %v1278 = vsel %vm407, %v1265, 0
      %v1281 = vsel %vm407, %v1266, 0
      %v1284 = vsel %vm407, %v1267, 0
      %v1287 = vsel %vm407, %v1268, 0
      %v1290 = vsel %vm407, %v1269, 0
      %v1293 = vsel %vm407, %v1270, 0
      %v1296 = vsel %vm407, %v1271, 0
      %v1299 = vsel %vm506, %v1273, 0
      %1301 = vmatprep.subr.bf16.mxu0 0
      %1302 = vmatpush1.bf16.msra.mxu0 %v1299
      %1303 = vmatprep.subr.bf16.mxu0 0
      %1304 = vmatpush1.bf16.msra.mxu0 0
      %1305 = vmatprep.subr.bf16.mxu0 0
      %1306 = vmatpush1.bf16.msra.mxu0 0
      %1307 = vmatprep.subr.bf16.mxu0 0
      %1308 = vmatpush1.bf16.msra.mxu0 0
      %1309 = vmatprep.subr.bf16.mxu0 0
      %1310 = vmatpush1.bf16.msra.mxu0 0
      %1311 = vmatprep.subr.bf16.mxu0 0
      %1312 = vmatpush1.bf16.msra.mxu0 0
      %1313 = vmatprep.subr.bf16.mxu0 0
      %1314 = vmatpush1.bf16.msra.mxu0 0
      %1315 = vmatprep.subr.bf16.mxu0 0
      %1316 = vmatpush1.bf16.msra.mxu0 0
      %1317 = vmatprep.subr.bf16.mxu0 0
      %1318 = vmatpush1.bf16.msra.mxu0 0
      %1319 = vmatprep.subr.bf16.mxu0 0
      %1320 = vmatpush1.bf16.msra.mxu0 0
      %1321 = vmatprep.subr.bf16.mxu0 0
      %1322 = vmatpush1.bf16.msra.mxu0 0
      %1323 = vmatprep.subr.bf16.mxu0 0
      %1324 = vmatpush1.bf16.msra.mxu0 0
      %1325 = vmatprep.subr.bf16.mxu0 0
      %1326 = vmatpush1.bf16.msra.mxu0 0
      %1327 = vmatprep.subr.bf16.mxu0 0
      %1328 = vmatpush1.bf16.msra.mxu0 0
      %1329 = vmatprep.subr.bf16.mxu0 0
      %1330 = vmatpush1.bf16.msra.mxu0 0
      %1331 = vmatprep.subr.bf16.mxu0 0
      %1332 = vmatpush1.bf16.msra.mxu0 0
      %1333 = vmatprep.mubr.bf16.mxu0 0
      %1334 = vmatmul.mubr.bf16.gmra.mrb[0].mxu0 %v1275
      %v1335 = vpop.f32.mrb[0].mxu0
      %v1336 = vadd.f32 0.0, %v1335
      %v1337 = vpop.f32.mrb[0].mxu0
      %v1338 = vpop.f32.mrb[0].mxu0
      %v1339 = vadd.f32 0.0, %v1338
      %v1340 = vpop.f32.mrb[0].mxu0
      %1341 = vmatprep.mubr.bf16.mxu0 0
      %1342 = vmatmul.mubr.bf16.gmra.mrb[0].mxu0 %v1278
      %v1343 = vpop.f32.mrb[0].mxu0
      %v1344 = vadd.f32 0.0, %v1343
      %v1345 = vpop.f32.mrb[0].mxu0
      %v1346 = vpop.f32.mrb[0].mxu0
      %v1347 = vadd.f32 0.0, %v1346
      %v1348 = vpop.f32.mrb[0].mxu0
      %1349 = vmatprep.mubr.bf16.mxu0 0
      %1350 = vmatmul.mubr.bf16.gmra.mrb[0].mxu0 %v1281
      %v1351 = vpop.f32.mrb[0].mxu0
      %v1352 = vadd.f32 0.0, %v1351
      %v1353 = vpop.f32.mrb[0].mxu0
      %v1354 = vpop.f32.mrb[0].mxu0
      %v1355 = vadd.f32 0.0, %v1354
      %v1356 = vpop.f32.mrb[0].mxu0
      %1357 = vmatprep.mubr.bf16.mxu0 0
      %1358 = vmatmul.mubr.bf16.gmra.mrb[0].mxu0 %v1284
      %v1359 = vpop.f32.mrb[0].mxu0
      %v1360 = vadd.f32 0.0, %v1359
      %v1361 = vpop.f32.mrb[0].mxu0
      %v1362 = vpop.f32.mrb[0].mxu0
      %v1363 = vadd.f32 0.0, %v1362
      %v1364 = vpop.f32.mrb[0].mxu0
      %1365 = vmatprep.mubr.bf16.mxu0 0
      %1366 = vmatmul.mubr.bf16.gmra.mrb[0].mxu0 %v1287
      %v1367 = vpop.f32.mrb[0].mxu0
      %v1368 = vadd.f32 0.0, %v1367
      %v1369 = vpop.f32.mrb[0].mxu0
      %v1370 = vpop.f32.mrb[0].mxu0
      %v1371 = vadd.f32 0.0, %v1370
      %v1372 = vpop.f32.mrb[0].mxu0
      %1373 = vmatprep.mubr.bf16.mxu0 0
      %1374 = vmatmul.mubr.bf16.gmra.mrb[0].mxu0 %v1290
      %v1375 = vpop.f32.mrb[0].mxu0
      %v1376 = vadd.f32 0.0, %v1375
      %v1377 = vpop.f32.mrb[0].mxu0
      %v1378 = vpop.f32.mrb[0].mxu0
      %v1379 = vadd.f32 0.0, %v1378
      %v1380 = vpop.f32.mrb[0].mxu0
      %1381 = vmatprep.mubr.bf16.mxu0 0
      %1382 = vmatmul.mubr.bf16.gmra.mrb[0].mxu0 %v1293
      %v1383 = vpop.f32.mrb[0].mxu0
      %v1384 = vadd.f32 0.0, %v1383
      %v1385 = vpop.f32.mrb[0].mxu0
      %v1386 = vpop.f32.mrb[0].mxu0
      %v1387 = vadd.f32 0.0, %v1386
      %v1388 = vpop.f32.mrb[0].mxu0
      %1389 = vmatprep.mubr.bf16.mxu0 0
      %1390 = vmatmul.mubr.bf16.gmra.mrb[0].mxu0 %v1296
      %v1391 = vpop.f32.mrb[0].mxu0
      %v1392 = vadd.f32 0.0, %v1391
      %v1393 = vpop.f32.mrb[0].mxu0
      %v1394 = vpop.f32.mrb[0].mxu0
      %v1395 = vadd.f32 0.0, %v1394
      %v1396 = vpop.f32.mrb[0].mxu0
      %1397 = vdwg.mxu0
      %v1398 = vadd.f32 %v1248, %v1336
      %v1399 = vadd.f32 %v1249, %v1339
      %v1400 = vadd.f32 %v1250, %v1344
      %v1401 = vadd.f32 %v1251, %v1347
      %v1402 = vadd.f32 %v1252, %v1352
      %v1403 = vadd.f32 %v1253, %v1355
      %v1404 = vadd.f32 %v1254, %v1360
      %v1405 = vadd.f32 %v1255, %v1363
      %v1406 = vadd.f32 %v1256, %v1368
      %v1407 = vadd.f32 %v1257, %v1371
      %v1408 = vadd.f32 %v1258, %v1376
      %v1409 = vadd.f32 %v1259, %v1379
      %v1410 = vadd.f32 %v1260, %v1384
      %v1411 = vadd.f32 %v1261, %v1387
      %v1412 = vadd.f32 %v1262, %v1392
      %v1413 = vadd.f32 %v1263, %v1395
      %1414 = vst.msk [vmem:[#allocation2] sm:$0xff] %vm407, %v1398
      %1415 = vst.msk [vmem:[#allocation2 + $0x8] sm:$0xff] %vm407, %v1399
      %1416 = vst.msk [vmem:[#allocation2 + $0x10] sm:$0xff] %vm407, %v1400
      %1417 = vst.msk [vmem:[#allocation2 + $0x18] sm:$0xff] %vm407, %v1401
      %1418 = vst.msk [vmem:[#allocation2 + $0x20] sm:$0xff] %vm407, %v1402
      %1419 = vst.msk [vmem:[#allocation2 + $0x28] sm:$0xff] %vm407, %v1403
      %1420 = vst.msk [vmem:[#allocation2 + $0x30] sm:$0xff] %vm407, %v1404
      %1421 = vst.msk [vmem:[#allocation2 + $0x38] sm:$0xff] %vm407, %v1405
      %1422 = vst.msk [vmem:[#allocation2 + $0x40] sm:$0xff] %vm407, %v1406
      %1423 = vst.msk [vmem:[#allocation2 + $0x48] sm:$0xff] %vm407, %v1407
      %1424 = vst.msk [vmem:[#allocation2 + $0x50] sm:$0xff] %vm407, %v1408
      %1425 = vst.msk [vmem:[#allocation2 + $0x58] sm:$0xff] %vm407, %v1409
      %1426 = vst.msk [vmem:[#allocation2 + $0x60] sm:$0xff] %vm407, %v1410
      %1427 = vst.msk [vmem:[#allocation2 + $0x68] sm:$0xff] %vm407, %v1411
      %1428 = vst.msk [vmem:[#allocation2 + $0x70] sm:$0xff] %vm407, %v1412
      %1429 = vst.msk [vmem:[#allocation2 + $0x78] sm:$0xff] %vm407, %v1413
      %v1430 = vld [vmem:[%s378 + $0x4] sm:$0xff]
      %v1431 = vld [vmem:[%s378 + $0xc] sm:$0xff]
      %v1432 = vld [vmem:[%s378 + $0x1c] sm:$0xff]
      %v1433 = vld [vmem:[%s378 + $0x24] sm:$0xff]
      %v1434 = vld [vmem:[%s378 + $0x34] sm:$0xff]
      %v1435 = vld [vmem:[%s378 + $0x3c] sm:$0xff]
      %v1436 = vld [vmem:[%s378 + $0x4c] sm:$0xff]
      %v1437 = vld [vmem:[%s378 + $0x54] sm:$0xff]
      %v1438 = vld [vmem:[%s378 + $0x64] sm:$0xff]
      %v1439 = vld [vmem:[%s378 + $0x6c] sm:$0xff]
      %v1440 = vld [vmem:[%s378 + $0x7c] sm:$0xff]
      %v1441 = vld [vmem:[%s378 + $0x84] sm:$0xff]
      %v1442 = vld [vmem:[%s378 + $0x94] sm:$0xff]
      %v1443 = vld [vmem:[%s378 + $0x9c] sm:$0xff]
      %v1444 = vld [vmem:[%s378 + $0xac] sm:$0xff]
      %v1445 = vld [vmem:[%s378 + $0xb4] sm:$0xff]
      %v1446 = vld [vmem:[#allocation3] sm:$0xff]
      %v1447 = vld [vmem:[#allocation3 + $0x8] sm:$0xff]
      %v1448 = vld [vmem:[#allocation3 + $0x10] sm:$0xff]
      %v1449 = vld [vmem:[#allocation3 + $0x18] sm:$0xff]
      %v1450 = vld [vmem:[#allocation3 + $0x20] sm:$0xff]
      %v1451 = vld [vmem:[#allocation3 + $0x28] sm:$0xff]
      %v1452 = vld [vmem:[#allocation3 + $0x30] sm:$0xff]
      %v1453 = vld [vmem:[#allocation3 + $0x38] sm:$0xff]
      %v1454 = vld [vmem:[#allocation3 + $0x40] sm:$0xff]
      %v1455 = vld [vmem:[#allocation3 + $0x48] sm:$0xff]
      %v1456 = vld [vmem:[#allocation3 + $0x50] sm:$0xff]
      %v1457 = vld [vmem:[#allocation3 + $0x58] sm:$0xff]
      %v1458 = vld [vmem:[#allocation3 + $0x60] sm:$0xff]
      %v1459 = vld [vmem:[#allocation3 + $0x68] sm:$0xff]
      %v1460 = vld [vmem:[#allocation3 + $0x70] sm:$0xff]
      %v1461 = vld [vmem:[#allocation3 + $0x78] sm:$0xff]
      %v1462 = vpack.c.bf16 %v1431, %v1430
      %v1463 = vpack.c.bf16 %v1433, %v1432
      %v1464 = vpack.c.bf16 %v1435, %v1434
      %v1465 = vpack.c.bf16 %v1437, %v1436
      %v1466 = vpack.c.bf16 %v1439, %v1438
      %v1467 = vpack.c.bf16 %v1441, %v1440
      %v1468 = vpack.c.bf16 %v1443, %v1442
      %v1469 = vpack.c.bf16 %v1445, %v1444
      %s1470 = scalar_lea.vmem %s2, 4
      %v1471 = vld [vmem:[%s1470] sm:$0x3]
      %v1473 = vsel %vm407, %v1462, 0
      %v1476 = vsel %vm407, %v1463, 0
      %v1479 = vsel %vm407, %v1464, 0
      %v1482 = vsel %vm407, %v1465, 0
      %v1485 = vsel %vm407, %v1466, 0
      %v1488 = vsel %vm407, %v1467, 0
      %v1491 = vsel %vm407, %v1468, 0
      %v1494 = vsel %vm407, %v1469, 0
      %v1497 = vsel %vm506, %v1471, 0
      %1499 = vmatprep.subr.bf16.mxu0 0
      %1500 = vmatpush1.bf16.msra.mxu0 %v1497
      %1501 = vmatprep.subr.bf16.mxu0 0
      %1502 = vmatpush1.bf16.msra.mxu0 0
      %1503 = vmatprep.subr.bf16.mxu0 0
      %1504 = vmatpush1.bf16.msra.mxu0 0
      %1505 = vmatprep.subr.bf16.mxu0 0
      %1506 = vmatpush1.bf16.msra.mxu0 0
      %1507 = vmatprep.subr.bf16.mxu0 0
      %1508 = vmatpush1.bf16.msra.mxu0 0
      %1509 = vmatprep.subr.bf16.mxu0 0
      %1510 = vmatpush1.bf16.msra.mxu0 0
      %1511 = vmatprep.subr.bf16.mxu0 0
      %1512 = vmatpush1.bf16.msra.mxu0 0
      %1513 = vmatprep.subr.bf16.mxu0 0
      %1514 = vmatpush1.bf16.msra.mxu0 0
      %1515 = vmatprep.subr.bf16.mxu0 0
      %1516 = vmatpush1.bf16.msra.mxu0 0
      %1517 = vmatprep.subr.bf16.mxu0 0
      %1518 = vmatpush1.bf16.msra.mxu0 0
      %1519 = vmatprep.subr.bf16.mxu0 0
      %1520 = vmatpush1.bf16.msra.mxu0 0
      %1521 = vmatprep.subr.bf16.mxu0 0
      %1522 = vmatpush1.bf16.msra.mxu0 0
      %1523 = vmatprep.subr.bf16.mxu0 0
      %1524 = vmatpush1.bf16.msra.mxu0 0
      %1525 = vmatprep.subr.bf16.mxu0 0
      %1526 = vmatpush1.bf16.msra.mxu0 0
      %1527 = vmatprep.subr.bf16.mxu0 0
      %1528 = vmatpush1.bf16.msra.mxu0 0
      %1529 = vmatprep.subr.bf16.mxu0 0
      %1530 = vmatpush1.bf16.msra.mxu0 0
      %1531 = vmatprep.mubr.bf16.mxu0 0
      %1532 = vmatmul.mubr.bf16.gmra.mrb[0].mxu0 %v1473
      %v1533 = vpop.f32.mrb[0].mxu0
      %v1534 = vadd.f32 0.0, %v1533
      %v1535 = vpop.f32.mrb[0].mxu0
      %v1536 = vpop.f32.mrb[0].mxu0
      %v1537 = vadd.f32 0.0, %v1536
      %v1538 = vpop.f32.mrb[0].mxu0
      %1539 = vmatprep.mubr.bf16.mxu0 0
      %1540 = vmatmul.mubr.bf16.gmra.mrb[0].mxu0 %v1476
      %v1541 = vpop.f32.mrb[0].mxu0
      %v1542 = vadd.f32 0.0, %v1541
      %v1543 = vpop.f32.mrb[0].mxu0
      %v1544 = vpop.f32.mrb[0].mxu0
      %v1545 = vadd.f32 0.0, %v1544
      %v1546 = vpop.f32.mrb[0].mxu0
      %1547 = vmatprep.mubr.bf16.mxu0 0
      %1548 = vmatmul.mubr.bf16.gmra.mrb[0].mxu0 %v1479
      %v1549 = vpop.f32.mrb[0].mxu0
      %v1550 = vadd.f32 0.0, %v1549
      %v1551 = vpop.f32.mrb[0].mxu0
      %v1552 = vpop.f32.mrb[0].mxu0
      %v1553 = vadd.f32 0.0, %v1552
      %v1554 = vpop.f32.mrb[0].mxu0
      %1555 = vmatprep.mubr.bf16.mxu0 0
      %1556 = vmatmul.mubr.bf16.gmra.mrb[0].mxu0 %v1482
      %v1557 = vpop.f32.mrb[0].mxu0
      %v1558 = vadd.f32 0.0, %v1557
      %v1559 = vpop.f32.mrb[0].mxu0
      %v1560 = vpop.f32.mrb[0].mxu0
      %v1561 = vadd.f32 0.0, %v1560
      %v1562 = vpop.f32.mrb[0].mxu0
      %1563 = vmatprep.mubr.bf16.mxu0 0
      %1564 = vmatmul.mubr.bf16.gmra.mrb[0].mxu0 %v1485
      %v1565 = vpop.f32.mrb[0].mxu0
      %v1566 = vadd.f32 0.0, %v1565
      %v1567 = vpop.f32.mrb[0].mxu0
      %v1568 = vpop.f32.mrb[0].mxu0
      %v1569 = vadd.f32 0.0, %v1568
      %v1570 = vpop.f32.mrb[0].mxu0
      %1571 = vmatprep.mubr.bf16.mxu0 0
      %1572 = vmatmul.mubr.bf16.gmra.mrb[0].mxu0 %v1488
      %v1573 = vpop.f32.mrb[0].mxu0
      %v1574 = vadd.f32 0.0, %v1573
      %v1575 = vpop.f32.mrb[0].mxu0
      %v1576 = vpop.f32.mrb[0].mxu0
      %v1577 = vadd.f32 0.0, %v1576
      %v1578 = vpop.f32.mrb[0].mxu0
      %1579 = vmatprep.mubr.bf16.mxu0 0
      %1580 = vmatmul.mubr.bf16.gmra.mrb[0].mxu0 %v1491
      %v1581 = vpop.f32.mrb[0].mxu0
      %v1582 = vadd.f32 0.0, %v1581
      %v1583 = vpop.f32.mrb[0].mxu0
      %v1584 = vpop.f32.mrb[0].mxu0
      %v1585 = vadd.f32 0.0, %v1584
      %v1586 = vpop.f32.mrb[0].mxu0
      %1587 = vmatprep.mubr.bf16.mxu0 0
      %1588 = vmatmul.mubr.bf16.gmra.mrb[0].mxu0 %v1494
      %v1589 = vpop.f32.mrb[0].mxu0
      %v1590 = vadd.f32 0.0, %v1589
      %v1591 = vpop.f32.mrb[0].mxu0
      %v1592 = vpop.f32.mrb[0].mxu0
      %v1593 = vadd.f32 0.0, %v1592
      %v1594 = vpop.f32.mrb[0].mxu0
      %1595 = vdwg.mxu0
      %v1596 = vadd.f32 %v1446, %v1534
      %v1597 = vadd.f32 %v1447, %v1537
      %v1598 = vadd.f32 %v1448, %v1542
      %v1599 = vadd.f32 %v1449, %v1545
      %v1600 = vadd.f32 %v1450, %v1550
      %v1601 = vadd.f32 %v1451, %v1553
      %v1602 = vadd.f32 %v1452, %v1558
      %v1603 = vadd.f32 %v1453, %v1561
      %v1604 = vadd.f32 %v1454, %v1566
      %v1605 = vadd.f32 %v1455, %v1569
      %v1606 = vadd.f32 %v1456, %v1574
      %v1607 = vadd.f32 %v1457, %v1577
      %v1608 = vadd.f32 %v1458, %v1582
      %v1609 = vadd.f32 %v1459, %v1585
      %v1610 = vadd.f32 %v1460, %v1590
      %v1611 = vadd.f32 %v1461, %v1593
      %1612 = vst.msk [vmem:[#allocation3] sm:$0xff] %vm407, %v1596
      %1613 = vst.msk [vmem:[#allocation3 + $0x8] sm:$0xff] %vm407, %v1597
      %1614 = vst.msk [vmem:[#allocation3 + $0x10] sm:$0xff] %vm407, %v1598
      %1615 = vst.msk [vmem:[#allocation3 + $0x18] sm:$0xff] %vm407, %v1599
      %1616 = vst.msk [vmem:[#allocation3 + $0x20] sm:$0xff] %vm407, %v1600
      %1617 = vst.msk [vmem:[#allocation3 + $0x28] sm:$0xff] %vm407, %v1601
      %1618 = vst.msk [vmem:[#allocation3 + $0x30] sm:$0xff] %vm407, %v1602
      %1619 = vst.msk [vmem:[#allocation3 + $0x38] sm:$0xff] %vm407, %v1603
      %1620 = vst.msk [vmem:[#allocation3 + $0x40] sm:$0xff] %vm407, %v1604
      %1621 = vst.msk [vmem:[#allocation3 + $0x48] sm:$0xff] %vm407, %v1605
      %1622 = vst.msk [vmem:[#allocation3 + $0x50] sm:$0xff] %vm407, %v1606
      %1623 = vst.msk [vmem:[#allocation3 + $0x58] sm:$0xff] %vm407, %v1607
      %1624 = vst.msk [vmem:[#allocation3 + $0x60] sm:$0xff] %vm407, %v1608
      %1625 = vst.msk [vmem:[#allocation3 + $0x68] sm:$0xff] %vm407, %v1609
      %1626 = vst.msk [vmem:[#allocation3 + $0x70] sm:$0xff] %vm407, %v1610
      %1627 = vst.msk [vmem:[#allocation3 + $0x78] sm:$0xff] %vm407, %v1611
      %s1628 = scalar_lea.vmem %s378, 48
      %v1629 = vld [vmem:[%s1628 + $0x1] sm:$0xff]
      %v1630 = vld [vmem:[%s1628 + $0x9] sm:$0xff]
      %v1631 = vld [vmem:[%s1628 + $0x19] sm:$0xff]
      %v1632 = vld [vmem:[%s1628 + $0x21] sm:$0xff]
      %v1633 = vld [vmem:[%s1628 + $0x31] sm:$0xff]
      %v1634 = vld [vmem:[%s1628 + $0x39] sm:$0xff]
      %v1635 = vld [vmem:[%s1628 + $0x49] sm:$0xff]
      %v1636 = vld [vmem:[%s1628 + $0x51] sm:$0xff]
      %v1637 = vld [vmem:[%s1628 + $0x61] sm:$0xff]
      %v1638 = vld [vmem:[%s1628 + $0x69] sm:$0xff]
      %v1639 = vld [vmem:[%s1628 + $0x79] sm:$0xff]
      %v1640 = vld [vmem:[%s1628 + $0x81] sm:$0xff]
      %v1641 = vld [vmem:[%s1628 + $0x91] sm:$0xff]
      %v1642 = vld [vmem:[%s1628 + $0x99] sm:$0xff]
      %v1643 = vld [vmem:[%s1628 + $0xa9] sm:$0xff]
      %v1644 = vld [vmem:[%s1628 + $0xb1] sm:$0xff]
      %v1645 = vld [vmem:[#allocation2] sm:$0xff]
      %v1646 = vld [vmem:[#allocation2 + $0x8] sm:$0xff]
      %v1647 = vld [vmem:[#allocation2 + $0x10] sm:$0xff]
      %v1648 = vld [vmem:[#allocation2 + $0x18] sm:$0xff]
      %v1649 = vld [vmem:[#allocation2 + $0x20] sm:$0xff]
      %v1650 = vld [vmem:[#allocation2 + $0x28] sm:$0xff]
      %v1651 = vld [vmem:[#allocation2 + $0x30] sm:$0xff]
      %v1652 = vld [vmem:[#allocation2 + $0x38] sm:$0xff]
      %v1653 = vld [vmem:[#allocation2 + $0x40] sm:$0xff]
      %v1654 = vld [vmem:[#allocation2 + $0x48] sm:$0xff]
      %v1655 = vld [vmem:[#allocation2 + $0x50] sm:$0xff]
      %v1656 = vld [vmem:[#allocation2 + $0x58] sm:$0xff]
      %v1657 = vld [vmem:[#allocation2 + $0x60] sm:$0xff]
      %v1658 = vld [vmem:[#allocation2 + $0x68] sm:$0xff]
      %v1659 = vld [vmem:[#allocation2 + $0x70] sm:$0xff]
      %v1660 = vld [vmem:[#allocation2 + $0x78] sm:$0xff]
      %v1661 = vpack.c.bf16 %v1630, %v1629
      %v1662 = vpack.c.bf16 %v1632, %v1631
      %v1663 = vpack.c.bf16 %v1634, %v1633
      %v1664 = vpack.c.bf16 %v1636, %v1635
      %v1665 = vpack.c.bf16 %v1638, %v1637
      %v1666 = vpack.c.bf16 %v1640, %v1639
      %v1667 = vpack.c.bf16 %v1642, %v1641
      %v1668 = vpack.c.bf16 %v1644, %v1643
      %s1669 = scalar_lea.vmem %s1, 6
      %v1670 = vld [vmem:[%s1669] sm:$0x3]
      %v1672 = vsel %vm407, %v1661, 0
      %v1675 = vsel %vm407, %v1662, 0
      %v1678 = vsel %vm407, %v1663, 0
      %v1681 = vsel %vm407, %v1664, 0
      %v1684 = vsel %vm407, %v1665, 0
      %v1687 = vsel %vm407, %v1666, 0
      %v1690 = vsel %vm407, %v1667, 0
      %v1693 = vsel %vm407, %v1668, 0
      %v1696 = vsel %vm506, %v1670, 0
      %1698 = vmatprep.subr.bf16.mxu0 0
      %1699 = vmatpush1.bf16.msra.mxu0 %v1696
      %1700 = vmatprep.subr.bf16.mxu0 0
      %1701 = vmatpush1.bf16.msra.mxu0 0
      %1702 = vmatprep.subr.bf16.mxu0 0
      %1703 = vmatpush1.bf16.msra.mxu0 0
      %1704 = vmatprep.subr.bf16.mxu0 0
      %1705 = vmatpush1.bf16.msra.mxu0 0
      %1706 = vmatprep.subr.bf16.mxu0 0
      %1707 = vmatpush1.bf16.msra.mxu0 0
      %1708 = vmatprep.subr.bf16.mxu0 0
      %1709 = vmatpush1.bf16.msra.mxu0 0
      %1710 = vmatprep.subr.bf16.mxu0 0
      %1711 = vmatpush1.bf16.msra.mxu0 0
      %1712 = vmatprep.subr.bf16.mxu0 0
      %1713 = vmatpush1.bf16.msra.mxu0 0
      %1714 = vmatprep.subr.bf16.mxu0 0
      %1715 = vmatpush1.bf16.msra.mxu0 0
      %1716 = vmatprep.subr.bf16.mxu0 0
      %1717 = vmatpush1.bf16.msra.mxu0 0
      %1718 = vmatprep.subr.bf16.mxu0 0
      %1719 = vmatpush1.bf16.msra.mxu0 0
      %1720 = vmatprep.subr.bf16.mxu0 0
      %1721 = vmatpush1.bf16.msra.mxu0 0
      %1722 = vmatprep.subr.bf16.mxu0 0
      %1723 = vmatpush1.bf16.msra.mxu0 0
      %1724 = vmatprep.subr.bf16.mxu0 0
      %1725 = vmatpush1.bf16.msra.mxu0 0
      %1726 = vmatprep.subr.bf16.mxu0 0
      %1727 = vmatpush1.bf16.msra.mxu0 0
      %1728 = vmatprep.subr.bf16.mxu0 0
      %1729 = vmatpush1.bf16.msra.mxu0 0
      %1730 = vmatprep.mubr.bf16.mxu0 0
      %1731 = vmatmul.mubr.bf16.gmra.mrb[0].mxu0 %v1672
      %v1732 = vpop.f32.mrb[0].mxu0
      %v1733 = vadd.f32 0.0, %v1732
      %v1734 = vpop.f32.mrb[0].mxu0
      %v1735 = vpop.f32.mrb[0].mxu0
      %v1736 = vadd.f32 0.0, %v1735
      %v1737 = vpop.f32.mrb[0].mxu0
      %1738 = vmatprep.mubr.bf16.mxu0 0
      %1739 = vmatmul.mubr.bf16.gmra.mrb[0].mxu0 %v1675
      %v1740 = vpop.f32.mrb[0].mxu0
      %v1741 = vadd.f32 0.0, %v1740
      %v1742 = vpop.f32.mrb[0].mxu0
      %v1743 = vpop.f32.mrb[0].mxu0
      %v1744 = vadd.f32 0.0, %v1743
      %v1745 = vpop.f32.mrb[0].mxu0
      %1746 = vmatprep.mubr.bf16.mxu0 0
      %1747 = vmatmul.mubr.bf16.gmra.mrb[0].mxu0 %v1678
      %v1748 = vpop.f32.mrb[0].mxu0
      %v1749 = vadd.f32 0.0, %v1748
      %v1750 = vpop.f32.mrb[0].mxu0
      %v1751 = vpop.f32.mrb[0].mxu0
      %v1752 = vadd.f32 0.0, %v1751
      %v1753 = vpop.f32.mrb[0].mxu0
      %1754 = vmatprep.mubr.bf16.mxu0 0
      %1755 = vmatmul.mubr.bf16.gmra.mrb[0].mxu0 %v1681
      %v1756 = vpop.f32.mrb[0].mxu0
      %v1757 = vadd.f32 0.0, %v1756
      %v1758 = vpop.f32.mrb[0].mxu0
      %v1759 = vpop.f32.mrb[0].mxu0
      %v1760 = vadd.f32 0.0, %v1759
      %v1761 = vpop.f32.mrb[0].mxu0
      %1762 = vmatprep.mubr.bf16.mxu0 0
      %1763 = vmatmul.mubr.bf16.gmra.mrb[0].mxu0 %v1684
      %v1764 = vpop.f32.mrb[0].mxu0
      %v1765 = vadd.f32 0.0, %v1764
      %v1766 = vpop.f32.mrb[0].mxu0
      %v1767 = vpop.f32.mrb[0].mxu0
      %v1768 = vadd.f32 0.0, %v1767
      %v1769 = vpop.f32.mrb[0].mxu0
      %1770 = vmatprep.mubr.bf16.mxu0 0
      %1771 = vmatmul.mubr.bf16.gmra.mrb[0].mxu0 %v1687
      %v1772 = vpop.f32.mrb[0].mxu0
      %v1773 = vadd.f32 0.0, %v1772
      %v1774 = vpop.f32.mrb[0].mxu0
      %v1775 = vpop.f32.mrb[0].mxu0
      %v1776 = vadd.f32 0.0, %v1775
      %v1777 = vpop.f32.mrb[0].mxu0
      %1778 = vmatprep.mubr.bf16.mxu0 0
      %1779 = vmatmul.mubr.bf16.gmra.mrb[0].mxu0 %v1690
      %v1780 = vpop.f32.mrb[0].mxu0
      %v1781 = vadd.f32 0.0, %v1780
      %v1782 = vpop.f32.mrb[0].mxu0
      %v1783 = vpop.f32.mrb[0].mxu0
      %v1784 = vadd.f32 0.0, %v1783
      %v1785 = vpop.f32.mrb[0].mxu0
      %1786 = vmatprep.mubr.bf16.mxu0 0
      %1787 = vmatmul.mubr.bf16.gmra.mrb[0].mxu0 %v1693
      %v1788 = vpop.f32.mrb[0].mxu0
      %v1789 = vadd.f32 0.0, %v1788
      %v1790 = vpop.f32.mrb[0].mxu0
      %v1791 = vpop.f32.mrb[0].mxu0
      %v1792 = vadd.f32 0.0, %v1791
      %v1793 = vpop.f32.mrb[0].mxu0
      %1794 = vdwg.mxu0
      %v1795 = vadd.f32 %v1645, %v1733
      %v1796 = vadd.f32 %v1646, %v1736
      %v1797 = vadd.f32 %v1647, %v1741
      %v1798 = vadd.f32 %v1648, %v1744
      %v1799 = vadd.f32 %v1649, %v1749
      %v1800 = vadd.f32 %v1650, %v1752
      %v1801 = vadd.f32 %v1651, %v1757
      %v1802 = vadd.f32 %v1652, %v1760
      %v1803 = vadd.f32 %v1653, %v1765
      %v1804 = vadd.f32 %v1654, %v1768
      %v1805 = vadd.f32 %v1655, %v1773
      %v1806 = vadd.f32 %v1656, %v1776
      %v1807 = vadd.f32 %v1657, %v1781
      %v1808 = vadd.f32 %v1658, %v1784
      %v1809 = vadd.f32 %v1659, %v1789
      %v1810 = vadd.f32 %v1660, %v1792
      %1811 = vst.msk [vmem:[#allocation2] sm:$0xff] %vm407, %v1795
      %1812 = vst.msk [vmem:[#allocation2 + $0x8] sm:$0xff] %vm407, %v1796
      %1813 = vst.msk [vmem:[#allocation2 + $0x10] sm:$0xff] %vm407, %v1797
      %1814 = vst.msk [vmem:[#allocation2 + $0x18] sm:$0xff] %vm407, %v1798
      %1815 = vst.msk [vmem:[#allocation2 + $0x20] sm:$0xff] %vm407, %v1799
      %1816 = vst.msk [vmem:[#allocation2 + $0x28] sm:$0xff] %vm407, %v1800
      %1817 = vst.msk [vmem:[#allocation2 + $0x30] sm:$0xff] %vm407, %v1801
      %1818 = vst.msk [vmem:[#allocation2 + $0x38] sm:$0xff] %vm407, %v1802
      %1819 = vst.msk [vmem:[#allocation2 + $0x40] sm:$0xff] %vm407, %v1803
      %1820 = vst.msk [vmem:[#allocation2 + $0x48] sm:$0xff] %vm407, %v1804
      %1821 = vst.msk [vmem:[#allocation2 + $0x50] sm:$0xff] %vm407, %v1805
      %1822 = vst.msk [vmem:[#allocation2 + $0x58] sm:$0xff] %vm407, %v1806
      %1823 = vst.msk [vmem:[#allocation2 + $0x60] sm:$0xff] %vm407, %v1807
      %1824 = vst.msk [vmem:[#allocation2 + $0x68] sm:$0xff] %vm407, %v1808
      %1825 = vst.msk [vmem:[#allocation2 + $0x70] sm:$0xff] %vm407, %v1809
      %1826 = vst.msk [vmem:[#allocation2 + $0x78] sm:$0xff] %vm407, %v1810
      %v1827 = vld [vmem:[%s1628] sm:$0xff]
      %v1828 = vld [vmem:[%s1628 + $0x8] sm:$0xff]
      %v1829 = vld [vmem:[%s1628 + $0x18] sm:$0xff]
      %v1830 = vld [vmem:[%s1628 + $0x20] sm:$0xff]
      %v1831 = vld [vmem:[%s1628 + $0x30] sm:$0xff]
      %v1832 = vld [vmem:[%s1628 + $0x38] sm:$0xff]
      %v1833 = vld [vmem:[%s1628 + $0x48] sm:$0xff]
      %v1834 = vld [vmem:[%s1628 + $0x50] sm:$0xff]
      %v1835 = vld [vmem:[%s1628 + $0x60] sm:$0xff]
      %v1836 = vld [vmem:[%s1628 + $0x68] sm:$0xff]
      %v1837 = vld [vmem:[%s1628 + $0x78] sm:$0xff]
      %v1838 = vld [vmem:[%s1628 + $0x80] sm:$0xff]
      %v1839 = vld [vmem:[%s1628 + $0x90] sm:$0xff]
      %v1840 = vld [vmem:[%s1628 + $0x98] sm:$0xff]
      %v1841 = vld [vmem:[%s1628 + $0xa8] sm:$0xff]
      %v1842 = vld [vmem:[%s1628 + $0xb0] sm:$0xff]
      %v1843 = vld [vmem:[#allocation3] sm:$0xff]
      %v1844 = vld [vmem:[#allocation3 + $0x8] sm:$0xff]
      %v1845 = vld [vmem:[#allocation3 + $0x10] sm:$0xff]
      %v1846 = vld [vmem:[#allocation3 + $0x18] sm:$0xff]
      %v1847 = vld [vmem:[#allocation3 + $0x20] sm:$0xff]
      %v1848 = vld [vmem:[#allocation3 + $0x28] sm:$0xff]
      %v1849 = vld [vmem:[#allocation3 + $0x30] sm:$0xff]
      %v1850 = vld [vmem:[#allocation3 + $0x38] sm:$0xff]
      %v1851 = vld [vmem:[#allocation3 + $0x40] sm:$0xff]
      %v1852 = vld [vmem:[#allocation3 + $0x48] sm:$0xff]
      %v1853 = vld [vmem:[#allocation3 + $0x50] sm:$0xff]
      %v1854 = vld [vmem:[#allocation3 + $0x58] sm:$0xff]
      %v1855 = vld [vmem:[#allocation3 + $0x60] sm:$0xff]
      %v1856 = vld [vmem:[#allocation3 + $0x68] sm:$0xff]
      %v1857 = vld [vmem:[#allocation3 + $0x70] sm:$0xff]
      %v1858 = vld [vmem:[#allocation3 + $0x78] sm:$0xff]
      %v1859 = vpack.c.bf16 %v1828, %v1827
      %v1860 = vpack.c.bf16 %v1830, %v1829
      %v1861 = vpack.c.bf16 %v1832, %v1831
      %v1862 = vpack.c.bf16 %v1834, %v1833
      %v1863 = vpack.c.bf16 %v1836, %v1835
      %v1864 = vpack.c.bf16 %v1838, %v1837
      %v1865 = vpack.c.bf16 %v1840, %v1839
      %v1866 = vpack.c.bf16 %v1842, %v1841
      %s1867 = scalar_lea.vmem %s2, 6
      %v1868 = vld [vmem:[%s1867] sm:$0x3]
      %v1870 = vsel %vm407, %v1859, 0
      %v1873 = vsel %vm407, %v1860, 0
      %v1876 = vsel %vm407, %v1861, 0
      %v1879 = vsel %vm407, %v1862, 0
      %v1882 = vsel %vm407, %v1863, 0
      %v1885 = vsel %vm407, %v1864, 0
      %v1888 = vsel %vm407, %v1865, 0
      %v1891 = vsel %vm407, %v1866, 0
      %v1894 = vsel %vm506, %v1868, 0
      %1896 = vmatprep.subr.bf16.mxu0 0
      %1897 = vmatpush1.bf16.msra.mxu0 %v1894
      %1898 = vmatprep.subr.bf16.mxu0 0
      %1899 = vmatpush1.bf16.msra.mxu0 0
      %1900 = vmatprep.subr.bf16.mxu0 0
      %1901 = vmatpush1.bf16.msra.mxu0 0
      %1902 = vmatprep.subr.bf16.mxu0 0
      %1903 = vmatpush1.bf16.msra.mxu0 0
      %1904 = vmatprep.subr.bf16.mxu0 0
      %1905 = vmatpush1.bf16.msra.mxu0 0
      %1906 = vmatprep.subr.bf16.mxu0 0
      %1907 = vmatpush1.bf16.msra.mxu0 0
      %1908 = vmatprep.subr.bf16.mxu0 0
      %1909 = vmatpush1.bf16.msra.mxu0 0
      %1910 = vmatprep.subr.bf16.mxu0 0
      %1911 = vmatpush1.bf16.msra.mxu0 0
      %1912 = vmatprep.subr.bf16.mxu0 0
      %1913 = vmatpush1.bf16.msra.mxu0 0
      %1914 = vmatprep.subr.bf16.mxu0 0
      %1915 = vmatpush1.bf16.msra.mxu0 0
      %1916 = vmatprep.subr.bf16.mxu0 0
      %1917 = vmatpush1.bf16.msra.mxu0 0
      %1918 = vmatprep.subr.bf16.mxu0 0
      %1919 = vmatpush1.bf16.msra.mxu0 0
      %1920 = vmatprep.subr.bf16.mxu0 0
      %1921 = vmatpush1.bf16.msra.mxu0 0
      %1922 = vmatprep.subr.bf16.mxu0 0
      %1923 = vmatpush1.bf16.msra.mxu0 0
      %1924 = vmatprep.subr.bf16.mxu0 0
      %1925 = vmatpush1.bf16.msra.mxu0 0
      %1926 = vmatprep.subr.bf16.mxu0 0
      %1927 = vmatpush1.bf16.msra.mxu0 0
      %1928 = vmatprep.mubr.bf16.mxu0 0
      %1929 = vmatmul.mubr.bf16.gmra.mrb[0].mxu0 %v1870
      %v1930 = vpop.f32.mrb[0].mxu0
      %v1931 = vadd.f32 0.0, %v1930
      %v1932 = vpop.f32.mrb[0].mxu0
      %v1933 = vpop.f32.mrb[0].mxu0
      %v1934 = vadd.f32 0.0, %v1933
      %v1935 = vpop.f32.mrb[0].mxu0
      %1936 = vmatprep.mubr.bf16.mxu0 0
      %1937 = vmatmul.mubr.bf16.gmra.mrb[0].mxu0 %v1873
      %v1938 = vpop.f32.mrb[0].mxu0
      %v1939 = vadd.f32 0.0, %v1938
      %v1940 = vpop.f32.mrb[0].mxu0
      %v1941 = vpop.f32.mrb[0].mxu0
      %v1942 = vadd.f32 0.0, %v1941
      %v1943 = vpop.f32.mrb[0].mxu0
      %1944 = vmatprep.mubr.bf16.mxu0 0
      %1945 = vmatmul.mubr.bf16.gmra.mrb[0].mxu0 %v1876
      %v1946 = vpop.f32.mrb[0].mxu0
      %v1947 = vadd.f32 0.0, %v1946
      %v1948 = vpop.f32.mrb[0].mxu0
      %v1949 = vpop.f32.mrb[0].mxu0
      %v1950 = vadd.f32 0.0, %v1949
      %v1951 = vpop.f32.mrb[0].mxu0
      %1952 = vmatprep.mubr.bf16.mxu0 0
      %1953 = vmatmul.mubr.bf16.gmra.mrb[0].mxu0 %v1879
      %v1954 = vpop.f32.mrb[0].mxu0
      %v1955 = vadd.f32 0.0, %v1954
      %v1956 = vpop.f32.mrb[0].mxu0
      %v1957 = vpop.f32.mrb[0].mxu0
      %v1958 = vadd.f32 0.0, %v1957
      %v1959 = vpop.f32.mrb[0].mxu0
      %1960 = vmatprep.mubr.bf16.mxu0 0
      %1961 = vmatmul.mubr.bf16.gmra.mrb[0].mxu0 %v1882
      %v1962 = vpop.f32.mrb[0].mxu0
      %v1963 = vadd.f32 0.0, %v1962
      %v1964 = vpop.f32.mrb[0].mxu0
      %v1965 = vpop.f32.mrb[0].mxu0
      %v1966 = vadd.f32 0.0, %v1965
      %v1967 = vpop.f32.mrb[0].mxu0
      %1968 = vmatprep.mubr.bf16.mxu0 0
      %1969 = vmatmul.mubr.bf16.gmra.mrb[0].mxu0 %v1885
      %v1970 = vpop.f32.mrb[0].mxu0
      %v1971 = vadd.f32 0.0, %v1970
      %v1972 = vpop.f32.mrb[0].mxu0
      %v1973 = vpop.f32.mrb[0].mxu0
      %v1974 = vadd.f32 0.0, %v1973
      %v1975 = vpop.f32.mrb[0].mxu0
      %1976 = vmatprep.mubr.bf16.mxu0 0
      %1977 = vmatmul.mubr.bf16.gmra.mrb[0].mxu0 %v1888
      %v1978 = vpop.f32.mrb[0].mxu0
      %v1979 = vadd.f32 0.0, %v1978
      %v1980 = vpop.f32.mrb[0].mxu0
      %v1981 = vpop.f32.mrb[0].mxu0
      %v1982 = vadd.f32 0.0, %v1981
      %v1983 = vpop.f32.mrb[0].mxu0
      %1984 = vmatprep.mubr.bf16.mxu0 0
      %1985 = vmatmul.mubr.bf16.gmra.mrb[0].mxu0 %v1891
      %v1986 = vpop.f32.mrb[0].mxu0
      %v1987 = vadd.f32 0.0, %v1986
      %v1988 = vpop.f32.mrb[0].mxu0
      %v1989 = vpop.f32.mrb[0].mxu0
      %v1990 = vadd.f32 0.0, %v1989
      %v1991 = vpop.f32.mrb[0].mxu0
      %1992 = vdwg.mxu0
      %v1993 = vadd.f32 %v1843, %v1931
      %v1994 = vadd.f32 %v1844, %v1934
      %v1995 = vadd.f32 %v1845, %v1939
      %v1996 = vadd.f32 %v1846, %v1942
      %v1997 = vadd.f32 %v1847, %v1947
      %v1998 = vadd.f32 %v1848, %v1950
      %v1999 = vadd.f32 %v1849, %v1955
      %v2000 = vadd.f32 %v1850, %v1958
      %v2001 = vadd.f32 %v1851, %v1963
      %v2002 = vadd.f32 %v1852, %v1966
      %v2003 = vadd.f32 %v1853, %v1971
      %v2004 = vadd.f32 %v1854, %v1974
      %v2005 = vadd.f32 %v1855, %v1979
      %v2006 = vadd.f32 %v1856, %v1982
      %v2007 = vadd.f32 %v1857, %v1987
      %v2008 = vadd.f32 %v1858, %v1990
      %2009 = vst.msk [vmem:[#allocation3] sm:$0xff] %vm407, %v1993
      %2010 = vst.msk [vmem:[#allocation3 + $0x8] sm:$0xff] %vm407, %v1994
      %2011 = vst.msk [vmem:[#allocation3 + $0x10] sm:$0xff] %vm407, %v1995
      %2012 = vst.msk [vmem:[#allocation3 + $0x18] sm:$0xff] %vm407, %v1996
      %2013 = vst.msk [vmem:[#allocation3 + $0x20] sm:$0xff] %vm407, %v1997
      %2014 = vst.msk [vmem:[#allocation3 + $0x28] sm:$0xff] %vm407, %v1998
      %2015 = vst.msk [vmem:[#allocation3 + $0x30] sm:$0xff] %vm407, %v1999
      %2016 = vst.msk [vmem:[#allocation3 + $0x38] sm:$0xff] %vm407, %v2000
      %2017 = vst.msk [vmem:[#allocation3 + $0x40] sm:$0xff] %vm407, %v2001
      %2018 = vst.msk [vmem:[#allocation3 + $0x48] sm:$0xff] %vm407, %v2002
      %2019 = vst.msk [vmem:[#allocation3 + $0x50] sm:$0xff] %vm407, %v2003
      %2020 = vst.msk [vmem:[#allocation3 + $0x58] sm:$0xff] %vm407, %v2004
      %2021 = vst.msk [vmem:[#allocation3 + $0x60] sm:$0xff] %vm407, %v2005
      %2022 = vst.msk [vmem:[#allocation3 + $0x68] sm:$0xff] %vm407, %v2006
      %2023 = vst.msk [vmem:[#allocation3 + $0x70] sm:$0xff] %vm407, %v2007
      %2024 = vst.msk [vmem:[#allocation3 + $0x78] sm:$0xff] %vm407, %v2008
      %v2025 = vld [vmem:[%s1628 + $0x2] sm:$0xff]
      %v2026 = vld [vmem:[%s1628 + $0xa] sm:$0xff]
      %v2027 = vld [vmem:[%s1628 + $0x1a] sm:$0xff]
      %v2028 = vld [vmem:[%s1628 + $0x22] sm:$0xff]
      %v2029 = vld [vmem:[%s1628 + $0x32] sm:$0xff]
      %v2030 = vld [vmem:[%s1628 + $0x3a] sm:$0xff]
      %v2031 = vld [vmem:[%s1628 + $0x4a] sm:$0xff]
      %v2032 = vld [vmem:[%s1628 + $0x52] sm:$0xff]
      %v2033 = vld [vmem:[%s1628 + $0x62] sm:$0xff]
      %v2034 = vld [vmem:[%s1628 + $0x6a] sm:$0xff]
      %v2035 = vld [vmem:[%s1628 + $0x7a] sm:$0xff]
      %v2036 = vld [vmem:[%s1628 + $0x82] sm:$0xff]
      %v2037 = vld [vmem:[%s1628 + $0x92] sm:$0xff]
      %v2038 = vld [vmem:[%s1628 + $0x9a] sm:$0xff]
      %v2039 = vld [vmem:[%s1628 + $0xaa] sm:$0xff]
      %v2040 = vld [vmem:[%s1628 + $0xb2] sm:$0xff]
      %v2041 = vld [vmem:[#allocation2] sm:$0xff]
      %v2042 = vld [vmem:[#allocation2 + $0x8] sm:$0xff]
      %v2043 = vld [vmem:[#allocation2 + $0x10] sm:$0xff]
      %v2044 = vld [vmem:[#allocation2 + $0x18] sm:$0xff]
      %v2045 = vld [vmem:[#allocation2 + $0x20] sm:$0xff]
      %v2046 = vld [vmem:[#allocation2 + $0x28] sm:$0xff]
      %v2047 = vld [vmem:[#allocation2 + $0x30] sm:$0xff]
      %v2048 = vld [vmem:[#allocation2 + $0x38] sm:$0xff]
      %v2049 = vld [vmem:[#allocation2 + $0x40] sm:$0xff]
      %v2050 = vld [vmem:[#allocation2 + $0x48] sm:$0xff]
      %v2051 = vld [vmem:[#allocation2 + $0x50] sm:$0xff]
      %v2052 = vld [vmem:[#allocation2 + $0x58] sm:$0xff]
      %v2053 = vld [vmem:[#allocation2 + $0x60] sm:$0xff]
      %v2054 = vld [vmem:[#allocation2 + $0x68] sm:$0xff]
      %v2055 = vld [vmem:[#allocation2 + $0x70] sm:$0xff]
      %v2056 = vld [vmem:[#allocation2 + $0x78] sm:$0xff]
      %v2057 = vpack.c.bf16 %v2026, %v2025
      %v2058 = vpack.c.bf16 %v2028, %v2027
      %v2059 = vpack.c.bf16 %v2030, %v2029
      %v2060 = vpack.c.bf16 %v2032, %v2031
      %v2061 = vpack.c.bf16 %v2034, %v2033
      %v2062 = vpack.c.bf16 %v2036, %v2035
      %v2063 = vpack.c.bf16 %v2038, %v2037
      %v2064 = vpack.c.bf16 %v2040, %v2039
      %s2065 = scalar_lea.vmem %s1, 8
      %v2066 = vld [vmem:[%s2065] sm:$0x3]
      %v2068 = vsel %vm407, %v2057, 0
      %v2071 = vsel %vm407, %v2058, 0
      %v2074 = vsel %vm407, %v2059, 0
      %v2077 = vsel %vm407, %v2060, 0
      %v2080 = vsel %vm407, %v2061, 0
      %v2083 = vsel %vm407, %v2062, 0
      %v2086 = vsel %vm407, %v2063, 0
      %v2089 = vsel %vm407, %v2064, 0
      %v2092 = vsel %vm506, %v2066, 0
      %2094 = vmatprep.subr.bf16.mxu0 0
      %2095 = vmatpush1.bf16.msra.mxu0 %v2092
      %2096 = vmatprep.subr.bf16.mxu0 0
      %2097 = vmatpush1.bf16.msra.mxu0 0
      %2098 = vmatprep.subr.bf16.mxu0 0
      %2099 = vmatpush1.bf16.msra.mxu0 0
      %2100 = vmatprep.subr.bf16.mxu0 0
      %2101 = vmatpush1.bf16.msra.mxu0 0
      %2102 = vmatprep.subr.bf16.mxu0 0
      %2103 = vmatpush1.bf16.msra.mxu0 0
      %2104 = vmatprep.subr.bf16.mxu0 0
      %2105 = vmatpush1.bf16.msra.mxu0 0
      %2106 = vmatprep.subr.bf16.mxu0 0
      %2107 = vmatpush1.bf16.msra.mxu0 0
      %2108 = vmatprep.subr.bf16.mxu0 0
      %2109 = vmatpush1.bf16.msra.mxu0 0
      %2110 = vmatprep.subr.bf16.mxu0 0
      %2111 = vmatpush1.bf16.msra.mxu0 0
      %2112 = vmatprep.subr.bf16.mxu0 0
      %2113 = vmatpush1.bf16.msra.mxu0 0
      %2114 = vmatprep.subr.bf16.mxu0 0
      %2115 = vmatpush1.bf16.msra.mxu0 0
      %2116 = vmatprep.subr.bf16.mxu0 0
      %2117 = vmatpush1.bf16.msra.mxu0 0
      %2118 = vmatprep.subr.bf16.mxu0 0
      %2119 = vmatpush1.bf16.msra.mxu0 0
      %2120 = vmatprep.subr.bf16.mxu0 0
      %2121 = vmatpush1.bf16.msra.mxu0 0
      %2122 = vmatprep.subr.bf16.mxu0 0
      %2123 = vmatpush1.bf16.msra.mxu0 0
      %2124 = vmatprep.subr.bf16.mxu0 0
      %2125 = vmatpush1.bf16.msra.mxu0 0
      %2126 = vmatprep.mubr.bf16.mxu0 0
      %2127 = vmatmul.mubr.bf16.gmra.mrb[0].mxu0 %v2068
      %v2128 = vpop.f32.mrb[0].mxu0
      %v2129 = vadd.f32 0.0, %v2128
      %v2130 = vpop.f32.mrb[0].mxu0
      %v2131 = vpop.f32.mrb[0].mxu0
      %v2132 = vadd.f32 0.0, %v2131
      %v2133 = vpop.f32.mrb[0].mxu0
      %2134 = vmatprep.mubr.bf16.mxu0 0
      %2135 = vmatmul.mubr.bf16.gmra.mrb[0].mxu0 %v2071
      %v2136 = vpop.f32.mrb[0].mxu0
      %v2137 = vadd.f32 0.0, %v2136
      %v2138 = vpop.f32.mrb[0].mxu0
      %v2139 = vpop.f32.mrb[0].mxu0
      %v2140 = vadd.f32 0.0, %v2139
      %v2141 = vpop.f32.mrb[0].mxu0
      %2142 = vmatprep.mubr.bf16.mxu0 0
      %2143 = vmatmul.mubr.bf16.gmra.mrb[0].mxu0 %v2074
      %v2144 = vpop.f32.mrb[0].mxu0
      %v2145 = vadd.f32 0.0, %v2144
      %v2146 = vpop.f32.mrb[0].mxu0
      %v2147 = vpop.f32.mrb[0].mxu0
      %v2148 = vadd.f32 0.0, %v2147
      %v2149 = vpop.f32.mrb[0].mxu0
      %2150 = vmatprep.mubr.bf16.mxu0 0
      %2151 = vmatmul.mubr.bf16.gmra.mrb[0].mxu0 %v2077
      %v2152 = vpop.f32.mrb[0].mxu0
      %v2153 = vadd.f32 0.0, %v2152
      %v2154 = vpop.f32.mrb[0].mxu0
      %v2155 = vpop.f32.mrb[0].mxu0
      %v2156 = vadd.f32 0.0, %v2155
      %v2157 = vpop.f32.mrb[0].mxu0
      %2158 = vmatprep.mubr.bf16.mxu0 0
      %2159 = vmatmul.mubr.bf16.gmra.mrb[0].mxu0 %v2080
      %v2160 = vpop.f32.mrb[0].mxu0
      %v2161 = vadd.f32 0.0, %v2160
      %v2162 = vpop.f32.mrb[0].mxu0
      %v2163 = vpop.f32.mrb[0].mxu0
      %v2164 = vadd.f32 0.0, %v2163
      %v2165 = vpop.f32.mrb[0].mxu0
      %2166 = vmatprep.mubr.bf16.mxu0 0
      %2167 = vmatmul.mubr.bf16.gmra.mrb[0].mxu0 %v2083
      %v2168 = vpop.f32.mrb[0].mxu0
      %v2169 = vadd.f32 0.0, %v2168
      %v2170 = vpop.f32.mrb[0].mxu0
      %v2171 = vpop.f32.mrb[0].mxu0
      %v2172 = vadd.f32 0.0, %v2171
      %v2173 = vpop.f32.mrb[0].mxu0
      %2174 = vmatprep.mubr.bf16.mxu0 0
      %2175 = vmatmul.mubr.bf16.gmra.mrb[0].mxu0 %v2086
      %v2176 = vpop.f32.mrb[0].mxu0
      %v2177 = vadd.f32 0.0, %v2176
      %v2178 = vpop.f32.mrb[0].mxu0
      %v2179 = vpop.f32.mrb[0].mxu0
      %v2180 = vadd.f32 0.0, %v2179
      %v2181 = vpop.f32.mrb[0].mxu0
      %2182 = vmatprep.mubr.bf16.mxu0 0
      %2183 = vmatmul.mubr.bf16.gmra.mrb[0].mxu0 %v2089
      %v2184 = vpop.f32.mrb[0].mxu0
      %v2185 = vadd.f32 0.0, %v2184
      %v2186 = vpop.f32.mrb[0].mxu0
      %v2187 = vpop.f32.mrb[0].mxu0
      %v2188 = vadd.f32 0.0, %v2187
      %v2189 = vpop.f32.mrb[0].mxu0
      %2190 = vdwg.mxu0
      %v2191 = vadd.f32 %v2041, %v2129
      %v2192 = vadd.f32 %v2042, %v2132
      %v2193 = vadd.f32 %v2043, %v2137
      %v2194 = vadd.f32 %v2044, %v2140
      %v2195 = vadd.f32 %v2045, %v2145
      %v2196 = vadd.f32 %v2046, %v2148
      %v2197 = vadd.f32 %v2047, %v2153
      %v2198 = vadd.f32 %v2048, %v2156
      %v2199 = vadd.f32 %v2049, %v2161
      %v2200 = vadd.f32 %v2050, %v2164
      %v2201 = vadd.f32 %v2051, %v2169
      %v2202 = vadd.f32 %v2052, %v2172
      %v2203 = vadd.f32 %v2053, %v2177
      %v2204 = vadd.f32 %v2054, %v2180
      %v2205 = vadd.f32 %v2055, %v2185
      %v2206 = vadd.f32 %v2056, %v2188
      %2207 = vst.msk [vmem:[#allocation2] sm:$0xff] %vm407, %v2191
      %2208 = vst.msk [vmem:[#allocation2 + $0x8] sm:$0xff] %vm407, %v2192
      %2209 = vst.msk [vmem:[#allocation2 + $0x10] sm:$0xff] %vm407, %v2193
      %2210 = vst.msk [vmem:[#allocation2 + $0x18] sm:$0xff] %vm407, %v2194
      %2211 = vst.msk [vmem:[#allocation2 + $0x20] sm:$0xff] %vm407, %v2195
      %2212 = vst.msk [vmem:[#allocation2 + $0x28] sm:$0xff] %vm407, %v2196
      %2213 = vst.msk [vmem:[#allocation2 + $0x30] sm:$0xff] %vm407, %v2197
      %2214 = vst.msk [vmem:[#allocation2 + $0x38] sm:$0xff] %vm407, %v2198
      %2215 = vst.msk [vmem:[#allocation2 + $0x40] sm:$0xff] %vm407, %v2199
      %2216 = vst.msk [vmem:[#allocation2 + $0x48] sm:$0xff] %vm407, %v2200
      %2217 = vst.msk [vmem:[#allocation2 + $0x50] sm:$0xff] %vm407, %v2201
      %2218 = vst.msk [vmem:[#allocation2 + $0x58] sm:$0xff] %vm407, %v2202
      %2219 = vst.msk [vmem:[#allocation2 + $0x60] sm:$0xff] %vm407, %v2203
      %2220 = vst.msk [vmem:[#allocation2 + $0x68] sm:$0xff] %vm407, %v2204
      %2221 = vst.msk [vmem:[#allocation2 + $0x70] sm:$0xff] %vm407, %v2205
      %2222 = vst.msk [vmem:[#allocation2 + $0x78] sm:$0xff] %vm407, %v2206
      %v2223 = vld [vmem:[%s1628 + $0x2] sm:$0xff]
      %v2224 = vld [vmem:[%s1628 + $0xa] sm:$0xff]
      %v2225 = vld [vmem:[%s1628 + $0x1a] sm:$0xff]
      %v2226 = vld [vmem:[%s1628 + $0x22] sm:$0xff]
      %v2227 = vld [vmem:[%s1628 + $0x32] sm:$0xff]
      %v2228 = vld [vmem:[%s1628 + $0x3a] sm:$0xff]
      %v2229 = vld [vmem:[%s1628 + $0x4a] sm:$0xff]
      %v2230 = vld [vmem:[%s1628 + $0x52] sm:$0xff]
      %v2231 = vld [vmem:[%s1628 + $0x62] sm:$0xff]
      %v2232 = vld [vmem:[%s1628 + $0x6a] sm:$0xff]
      %v2233 = vld [vmem:[%s1628 + $0x7a] sm:$0xff]
      %v2234 = vld [vmem:[%s1628 + $0x82] sm:$0xff]
      %v2235 = vld [vmem:[%s1628 + $0x92] sm:$0xff]
      %v2236 = vld [vmem:[%s1628 + $0x9a] sm:$0xff]
      %v2237 = vld [vmem:[%s1628 + $0xaa] sm:$0xff]
      %v2238 = vld [vmem:[%s1628 + $0xb2] sm:$0xff]
      %v2239 = vld [vmem:[#allocation3] sm:$0xff]
      %v2240 = vld [vmem:[#allocation3 + $0x8] sm:$0xff]
      %v2241 = vld [vmem:[#allocation3 + $0x10] sm:$0xff]
      %v2242 = vld [vmem:[#allocation3 + $0x18] sm:$0xff]
      %v2243 = vld [vmem:[#allocation3 + $0x20] sm:$0xff]
      %v2244 = vld [vmem:[#allocation3 + $0x28] sm:$0xff]
      %v2245 = vld [vmem:[#allocation3 + $0x30] sm:$0xff]
      %v2246 = vld [vmem:[#allocation3 + $0x38] sm:$0xff]
      %v2247 = vld [vmem:[#allocation3 + $0x40] sm:$0xff]
      %v2248 = vld [vmem:[#allocation3 + $0x48] sm:$0xff]
      %v2249 = vld [vmem:[#allocation3 + $0x50] sm:$0xff]
      %v2250 = vld [vmem:[#allocation3 + $0x58] sm:$0xff]
      %v2251 = vld [vmem:[#allocation3 + $0x60] sm:$0xff]
      %v2252 = vld [vmem:[#allocation3 + $0x68] sm:$0xff]
      %v2253 = vld [vmem:[#allocation3 + $0x70] sm:$0xff]
      %v2254 = vld [vmem:[#allocation3 + $0x78] sm:$0xff]
      %v2255 = vpack.c.bf16 %v2224, %v2223
      %v2256 = vpack.c.bf16 %v2226, %v2225
      %v2257 = vpack.c.bf16 %v2228, %v2227
      %v2258 = vpack.c.bf16 %v2230, %v2229
      %v2259 = vpack.c.bf16 %v2232, %v2231
      %v2260 = vpack.c.bf16 %v2234, %v2233
      %v2261 = vpack.c.bf16 %v2236, %v2235
      %v2262 = vpack.c.bf16 %v2238, %v2237
      %s2263 = scalar_lea.vmem %s2, 8
      %v2264 = vld [vmem:[%s2263] sm:$0x3]
      %v2266 = vsel %vm407, %v2255, 0
      %v2269 = vsel %vm407, %v2256, 0
      %v2272 = vsel %vm407, %v2257, 0
      %v2275 = vsel %vm407, %v2258, 0
      %v2278 = vsel %vm407, %v2259, 0
      %v2281 = vsel %vm407, %v2260, 0
      %v2284 = vsel %vm407, %v2261, 0
      %v2287 = vsel %vm407, %v2262, 0
      %v2290 = vsel %vm506, %v2264, 0
      %2292 = vmatprep.subr.bf16.mxu0 0
      %2293 = vmatpush1.bf16.msra.mxu0 %v2290
      %2294 = vmatprep.subr.bf16.mxu0 0
      %2295 = vmatpush1.bf16.msra.mxu0 0
      %2296 = vmatprep.subr.bf16.mxu0 0
      %2297 = vmatpush1.bf16.msra.mxu0 0
      %2298 = vmatprep.subr.bf16.mxu0 0
      %2299 = vmatpush1.bf16.msra.mxu0 0
      %2300 = vmatprep.subr.bf16.mxu0 0
      %2301 = vmatpush1.bf16.msra.mxu0 0
      %2302 = vmatprep.subr.bf16.mxu0 0
      %2303 = vmatpush1.bf16.msra.mxu0 0
      %2304 = vmatprep.subr.bf16.mxu0 0
      %2305 = vmatpush1.bf16.msra.mxu0 0
      %2306 = vmatprep.subr.bf16.mxu0 0
      %2307 = vmatpush1.bf16.msra.mxu0 0
      %2308 = vmatprep.subr.bf16.mxu0 0
      %2309 = vmatpush1.bf16.msra.mxu0 0
      %2310 = vmatprep.subr.bf16.mxu0 0
      %2311 = vmatpush1.bf16.msra.mxu0 0
      %2312 = vmatprep.subr.bf16.mxu0 0
      %2313 = vmatpush1.bf16.msra.mxu0 0
      %2314 = vmatprep.subr.bf16.mxu0 0
      %2315 = vmatpush1.bf16.msra.mxu0 0
      %2316 = vmatprep.subr.bf16.mxu0 0
      %2317 = vmatpush1.bf16.msra.mxu0 0
      %2318 = vmatprep.subr.bf16.mxu0 0
      %2319 = vmatpush1.bf16.msra.mxu0 0
      %2320 = vmatprep.subr.bf16.mxu0 0
      %2321 = vmatpush1.bf16.msra.mxu0 0
      %2322 = vmatprep.subr.bf16.mxu0 0
      %2323 = vmatpush1.bf16.msra.mxu0 0
      %2324 = vmatprep.mubr.bf16.mxu0 0
      %2325 = vmatmul.mubr.bf16.gmra.mrb[0].mxu0 %v2266
      %v2326 = vpop.f32.mrb[0].mxu0
      %v2327 = vadd.f32 0.0, %v2326
      %v2328 = vpop.f32.mrb[0].mxu0
      %v2329 = vpop.f32.mrb[0].mxu0
      %v2330 = vadd.f32 0.0, %v2329
      %v2331 = vpop.f32.mrb[0].mxu0
      %2332 = vmatprep.mubr.bf16.mxu0 0
      %2333 = vmatmul.mubr.bf16.gmra.mrb[0].mxu0 %v2269
      %v2334 = vpop.f32.mrb[0].mxu0
      %v2335 = vadd.f32 0.0, %v2334
      %v2336 = vpop.f32.mrb[0].mxu0
      %v2337 = vpop.f32.mrb[0].mxu0
      %v2338 = vadd.f32 0.0, %v2337
      %v2339 = vpop.f32.mrb[0].mxu0
      %2340 = vmatprep.mubr.bf16.mxu0 0
      %2341 = vmatmul.mubr.bf16.gmra.mrb[0].mxu0 %v2272
      %v2342 = vpop.f32.mrb[0].mxu0
      %v2343 = vadd.f32 0.0, %v2342
      %v2344 = vpop.f32.mrb[0].mxu0
      %v2345 = vpop.f32.mrb[0].mxu0
      %v2346 = vadd.f32 0.0, %v2345
      %v2347 = vpop.f32.mrb[0].mxu0
      %2348 = vmatprep.mubr.bf16.mxu0 0
      %2349 = vmatmul.mubr.bf16.gmra.mrb[0].mxu0 %v2275
      %v2350 = vpop.f32.mrb[0].mxu0
      %v2351 = vadd.f32 0.0, %v2350
      %v2352 = vpop.f32.mrb[0].mxu0
      %v2353 = vpop.f32.mrb[0].mxu0
      %v2354 = vadd.f32 0.0, %v2353
      %v2355 = vpop.f32.mrb[0].mxu0
      %2356 = vmatprep.mubr.bf16.mxu0 0
      %2357 = vmatmul.mubr.bf16.gmra.mrb[0].mxu0 %v2278
      %v2358 = vpop.f32.mrb[0].mxu0
      %v2359 = vadd.f32 0.0, %v2358
      %v2360 = vpop.f32.mrb[0].mxu0
      %v2361 = vpop.f32.mrb[0].mxu0
      %v2362 = vadd.f32 0.0, %v2361
      %v2363 = vpop.f32.mrb[0].mxu0
      %2364 = vmatprep.mubr.bf16.mxu0 0
      %2365 = vmatmul.mubr.bf16.gmra.mrb[0].mxu0 %v2281
      %v2366 = vpop.f32.mrb[0].mxu0
      %v2367 = vadd.f32 0.0, %v2366
      %v2368 = vpop.f32.mrb[0].mxu0
      %v2369 = vpop.f32.mrb[0].mxu0
      %v2370 = vadd.f32 0.0, %v2369
      %v2371 = vpop.f32.mrb[0].mxu0
      %2372 = vmatprep.mubr.bf16.mxu0 0
      %2373 = vmatmul.mubr.bf16.gmra.mrb[0].mxu0 %v2284
      %v2374 = vpop.f32.mrb[0].mxu0
      %v2375 = vadd.f32 0.0, %v2374
      %v2376 = vpop.f32.mrb[0].mxu0
      %v2377 = vpop.f32.mrb[0].mxu0
      %v2378 = vadd.f32 0.0, %v2377
      %v2379 = vpop.f32.mrb[0].mxu0
      %2380 = vmatprep.mubr.bf16.mxu0 0
      %2381 = vmatmul.mubr.bf16.gmra.mrb[0].mxu0 %v2287
      %v2382 = vpop.f32.mrb[0].mxu0
      %v2383 = vadd.f32 0.0, %v2382
      %v2384 = vpop.f32.mrb[0].mxu0
      %v2385 = vpop.f32.mrb[0].mxu0
      %v2386 = vadd.f32 0.0, %v2385
      %v2387 = vpop.f32.mrb[0].mxu0
      %2388 = vdwg.mxu0
      %v2389 = vadd.f32 %v2239, %v2327
      %v2390 = vadd.f32 %v2240, %v2330
      %v2391 = vadd.f32 %v2241, %v2335
      %v2392 = vadd.f32 %v2242, %v2338
      %v2393 = vadd.f32 %v2243, %v2343
      %v2394 = vadd.f32 %v2244, %v2346
      %v2395 = vadd.f32 %v2245, %v2351
      %v2396 = vadd.f32 %v2246, %v2354
      %v2397 = vadd.f32 %v2247, %v2359
      %v2398 = vadd.f32 %v2248, %v2362
      %v2399 = vadd.f32 %v2249, %v2367
      %v2400 = vadd.f32 %v2250, %v2370
      %v2401 = vadd.f32 %v2251, %v2375
      %v2402 = vadd.f32 %v2252, %v2378
      %v2403 = vadd.f32 %v2253, %v2383
      %v2404 = vadd.f32 %v2254, %v2386
      %2405 = vst.msk [vmem:[#allocation3] sm:$0xff] %vm407, %v2389
      %2406 = vst.msk [vmem:[#allocation3 + $0x8] sm:$0xff] %vm407, %v2390
      %2407 = vst.msk [vmem:[#allocation3 + $0x10] sm:$0xff] %vm407, %v2391
      %2408 = vst.msk [vmem:[#allocation3 + $0x18] sm:$0xff] %vm407, %v2392
      %2409 = vst.msk [vmem:[#allocation3 + $0x20] sm:$0xff] %vm407, %v2393
      %2410 = vst.msk [vmem:[#allocation3 + $0x28] sm:$0xff] %vm407, %v2394
      %2411 = vst.msk [vmem:[#allocation3 + $0x30] sm:$0xff] %vm407, %v2395
      %2412 = vst.msk [vmem:[#allocation3 + $0x38] sm:$0xff] %vm407, %v2396
      %2413 = vst.msk [vmem:[#allocation3 + $0x40] sm:$0xff] %vm407, %v2397
      %2414 = vst.msk [vmem:[#allocation3 + $0x48] sm:$0xff] %vm407, %v2398
      %2415 = vst.msk [vmem:[#allocation3 + $0x50] sm:$0xff] %vm407, %v2399
      %2416 = vst.msk [vmem:[#allocation3 + $0x58] sm:$0xff] %vm407, %v2400
      %2417 = vst.msk [vmem:[#allocation3 + $0x60] sm:$0xff] %vm407, %v2401
      %2418 = vst.msk [vmem:[#allocation3 + $0x68] sm:$0xff] %vm407, %v2402
      %2419 = vst.msk [vmem:[#allocation3 + $0x70] sm:$0xff] %vm407, %v2403
      %2420 = vst.msk [vmem:[#allocation3 + $0x78] sm:$0xff] %vm407, %v2404
      %v2421 = vld [vmem:[%s1628 + $0x3] sm:$0xff]
      %v2422 = vld [vmem:[%s1628 + $0xb] sm:$0xff]
      %v2423 = vld [vmem:[%s1628 + $0x1b] sm:$0xff]
      %v2424 = vld [vmem:[%s1628 + $0x23] sm:$0xff]
      %v2425 = vld [vmem:[%s1628 + $0x33] sm:$0xff]
      %v2426 = vld [vmem:[%s1628 + $0x3b] sm:$0xff]
      %v2427 = vld [vmem:[%s1628 + $0x4b] sm:$0xff]
      %v2428 = vld [vmem:[%s1628 + $0x53] sm:$0xff]
      %v2429 = vld [vmem:[%s1628 + $0x63] sm:$0xff]
      %v2430 = vld [vmem:[%s1628 + $0x6b] sm:$0xff]
      %v2431 = vld [vmem:[%s1628 + $0x7b] sm:$0xff]
      %v2432 = vld [vmem:[%s1628 + $0x83] sm:$0xff]
      %v2433 = vld [vmem:[%s1628 + $0x93] sm:$0xff]
      %v2434 = vld [vmem:[%s1628 + $0x9b] sm:$0xff]
      %v2435 = vld [vmem:[%s1628 + $0xab] sm:$0xff]
      %v2436 = vld [vmem:[%s1628 + $0xb3] sm:$0xff]
      %v2437 = vld [vmem:[#allocation2] sm:$0xff]
      %v2438 = vld [vmem:[#allocation2 + $0x8] sm:$0xff]
      %v2439 = vld [vmem:[#allocation2 + $0x10] sm:$0xff]
      %v2440 = vld [vmem:[#allocation2 + $0x18] sm:$0xff]
      %v2441 = vld [vmem:[#allocation2 + $0x20] sm:$0xff]
      %v2442 = vld [vmem:[#allocation2 + $0x28] sm:$0xff]
      %v2443 = vld [vmem:[#allocation2 + $0x30] sm:$0xff]
      %v2444 = vld [vmem:[#allocation2 + $0x38] sm:$0xff]
      %v2445 = vld [vmem:[#allocation2 + $0x40] sm:$0xff]
      %v2446 = vld [vmem:[#allocation2 + $0x48] sm:$0xff]
      %v2447 = vld [vmem:[#allocation2 + $0x50] sm:$0xff]
      %v2448 = vld [vmem:[#allocation2 + $0x58] sm:$0xff]
      %v2449 = vld [vmem:[#allocation2 + $0x60] sm:$0xff]
      %v2450 = vld [vmem:[#allocation2 + $0x68] sm:$0xff]
      %v2451 = vld [vmem:[#allocation2 + $0x70] sm:$0xff]
      %v2452 = vld [vmem:[#allocation2 + $0x78] sm:$0xff]
      %v2453 = vpack.c.bf16 %v2422, %v2421
      %v2454 = vpack.c.bf16 %v2424, %v2423
      %v2455 = vpack.c.bf16 %v2426, %v2425
      %v2456 = vpack.c.bf16 %v2428, %v2427
      %v2457 = vpack.c.bf16 %v2430, %v2429
      %v2458 = vpack.c.bf16 %v2432, %v2431
      %v2459 = vpack.c.bf16 %v2434, %v2433
      %v2460 = vpack.c.bf16 %v2436, %v2435
      %s2461 = scalar_lea.vmem %s1, 10
      %v2462 = vld [vmem:[%s2461] sm:$0x3]
      %v2464 = vsel %vm407, %v2453, 0
      %v2467 = vsel %vm407, %v2454, 0
      %v2470 = vsel %vm407, %v2455, 0
      %v2473 = vsel %vm407, %v2456, 0
      %v2476 = vsel %vm407, %v2457, 0
      %v2479 = vsel %vm407, %v2458, 0
      %v2482 = vsel %vm407, %v2459, 0
      %v2485 = vsel %vm407, %v2460, 0
      %v2488 = vsel %vm506, %v2462, 0
      %2490 = vmatprep.subr.bf16.mxu0 0
      %2491 = vmatpush1.bf16.msra.mxu0 %v2488
      %2492 = vmatprep.subr.bf16.mxu0 0
      %2493 = vmatpush1.bf16.msra.mxu0 0
      %2494 = vmatprep.subr.bf16.mxu0 0
      %2495 = vmatpush1.bf16.msra.mxu0 0
      %2496 = vmatprep.subr.bf16.mxu0 0
      %2497 = vmatpush1.bf16.msra.mxu0 0
      %2498 = vmatprep.subr.bf16.mxu0 0
      %2499 = vmatpush1.bf16.msra.mxu0 0
      %2500 = vmatprep.subr.bf16.mxu0 0
      %2501 = vmatpush1.bf16.msra.mxu0 0
      %2502 = vmatprep.subr.bf16.mxu0 0
      %2503 = vmatpush1.bf16.msra.mxu0 0
      %2504 = vmatprep.subr.bf16.mxu0 0
      %2505 = vmatpush1.bf16.msra.mxu0 0
      %2506 = vmatprep.subr.bf16.mxu0 0
      %2507 = vmatpush1.bf16.msra.mxu0 0
      %2508 = vmatprep.subr.bf16.mxu0 0
      %2509 = vmatpush1.bf16.msra.mxu0 0
      %2510 = vmatprep.subr.bf16.mxu0 0
      %2511 = vmatpush1.bf16.msra.mxu0 0
      %2512 = vmatprep.subr.bf16.mxu0 0
      %2513 = vmatpush1.bf16.msra.mxu0 0
      %2514 = vmatprep.subr.bf16.mxu0 0
      %2515 = vmatpush1.bf16.msra.mxu0 0
      %2516 = vmatprep.subr.bf16.mxu0 0
      %2517 = vmatpush1.bf16.msra.mxu0 0
      %2518 = vmatprep.subr.bf16.mxu0 0
      %2519 = vmatpush1.bf16.msra.mxu0 0
      %2520 = vmatprep.subr.bf16.mxu0 0
      %2521 = vmatpush1.bf16.msra.mxu0 0
      %2522 = vmatprep.mubr.bf16.mxu0 0
      %2523 = vmatmul.mubr.bf16.gmra.mrb[0].mxu0 %v2464
      %v2524 = vpop.f32.mrb[0].mxu0
      %v2525 = vadd.f32 0.0, %v2524
      %v2526 = vpop.f32.mrb[0].mxu0
      %v2527 = vpop.f32.mrb[0].mxu0
      %v2528 = vadd.f32 0.0, %v2527
      %v2529 = vpop.f32.mrb[0].mxu0
      %2530 = vmatprep.mubr.bf16.mxu0 0
      %2531 = vmatmul.mubr.bf16.gmra.mrb[0].mxu0 %v2467
      %v2532 = vpop.f32.mrb[0].mxu0
      %v2533 = vadd.f32 0.0, %v2532
      %v2534 = vpop.f32.mrb[0].mxu0
      %v2535 = vpop.f32.mrb[0].mxu0
      %v2536 = vadd.f32 0.0, %v2535
      %v2537 = vpop.f32.mrb[0].mxu0
      %2538 = vmatprep.mubr.bf16.mxu0 0
      %2539 = vmatmul.mubr.bf16.gmra.mrb[0].mxu0 %v2470
      %v2540 = vpop.f32.mrb[0].mxu0
      %v2541 = vadd.f32 0.0, %v2540
      %v2542 = vpop.f32.mrb[0].mxu0
      %v2543 = vpop.f32.mrb[0].mxu0
      %v2544 = vadd.f32 0.0, %v2543
      %v2545 = vpop.f32.mrb[0].mxu0
      %2546 = vmatprep.mubr.bf16.mxu0 0
      %2547 = vmatmul.mubr.bf16.gmra.mrb[0].mxu0 %v2473
      %v2548 = vpop.f32.mrb[0].mxu0
      %v2549 = vadd.f32 0.0, %v2548
      %v2550 = vpop.f32.mrb[0].mxu0
      %v2551 = vpop.f32.mrb[0].mxu0
      %v2552 = vadd.f32 0.0, %v2551
      %v2553 = vpop.f32.mrb[0].mxu0
      %2554 = vmatprep.mubr.bf16.mxu0 0
      %2555 = vmatmul.mubr.bf16.gmra.mrb[0].mxu0 %v2476
      %v2556 = vpop.f32.mrb[0].mxu0
      %v2557 = vadd.f32 0.0, %v2556
      %v2558 = vpop.f32.mrb[0].mxu0
      %v2559 = vpop.f32.mrb[0].mxu0
      %v2560 = vadd.f32 0.0, %v2559
      %v2561 = vpop.f32.mrb[0].mxu0
      %2562 = vmatprep.mubr.bf16.mxu0 0
      %2563 = vmatmul.mubr.bf16.gmra.mrb[0].mxu0 %v2479
      %v2564 = vpop.f32.mrb[0].mxu0
      %v2565 = vadd.f32 0.0, %v2564
      %v2566 = vpop.f32.mrb[0].mxu0
      %v2567 = vpop.f32.mrb[0].mxu0
      %v2568 = vadd.f32 0.0, %v2567
      %v2569 = vpop.f32.mrb[0].mxu0
      %2570 = vmatprep.mubr.bf16.mxu0 0
      %2571 = vmatmul.mubr.bf16.gmra.mrb[0].mxu0 %v2482
      %v2572 = vpop.f32.mrb[0].mxu0
      %v2573 = vadd.f32 0.0, %v2572
      %v2574 = vpop.f32.mrb[0].mxu0
      %v2575 = vpop.f32.mrb[0].mxu0
      %v2576 = vadd.f32 0.0, %v2575
      %v2577 = vpop.f32.mrb[0].mxu0
      %2578 = vmatprep.mubr.bf16.mxu0 0
      %2579 = vmatmul.mubr.bf16.gmra.mrb[0].mxu0 %v2485
      %v2580 = vpop.f32.mrb[0].mxu0
      %v2581 = vadd.f32 0.0, %v2580
      %v2582 = vpop.f32.mrb[0].mxu0
      %v2583 = vpop.f32.mrb[0].mxu0
      %v2584 = vadd.f32 0.0, %v2583
      %v2585 = vpop.f32.mrb[0].mxu0
      %2586 = vdwg.mxu0
      %v2587 = vadd.f32 %v2437, %v2525
      %v2588 = vadd.f32 %v2438, %v2528
      %v2589 = vadd.f32 %v2439, %v2533
      %v2590 = vadd.f32 %v2440, %v2536
      %v2591 = vadd.f32 %v2441, %v2541
      %v2592 = vadd.f32 %v2442, %v2544
      %v2593 = vadd.f32 %v2443, %v2549
      %v2594 = vadd.f32 %v2444, %v2552
      %v2595 = vadd.f32 %v2445, %v2557
      %v2596 = vadd.f32 %v2446, %v2560
      %v2597 = vadd.f32 %v2447, %v2565
      %v2598 = vadd.f32 %v2448, %v2568
      %v2599 = vadd.f32 %v2449, %v2573
      %v2600 = vadd.f32 %v2450, %v2576
      %v2601 = vadd.f32 %v2451, %v2581
      %v2602 = vadd.f32 %v2452, %v2584
      %2603 = vst.msk [vmem:[#allocation2] sm:$0xff] %vm407, %v2587
      %2604 = vst.msk [vmem:[#allocation2 + $0x8] sm:$0xff] %vm407, %v2588
      %2605 = vst.msk [vmem:[#allocation2 + $0x10] sm:$0xff] %vm407, %v2589
      %2606 = vst.msk [vmem:[#allocation2 + $0x18] sm:$0xff] %vm407, %v2590
      %2607 = vst.msk [vmem:[#allocation2 + $0x20] sm:$0xff] %vm407, %v2591
      %2608 = vst.msk [vmem:[#allocation2 + $0x28] sm:$0xff] %vm407, %v2592
      %2609 = vst.msk [vmem:[#allocation2 + $0x30] sm:$0xff] %vm407, %v2593
      %2610 = vst.msk [vmem:[#allocation2 + $0x38] sm:$0xff] %vm407, %v2594
      %2611 = vst.msk [vmem:[#allocation2 + $0x40] sm:$0xff] %vm407, %v2595
      %2612 = vst.msk [vmem:[#allocation2 + $0x48] sm:$0xff] %vm407, %v2596
      %2613 = vst.msk [vmem:[#allocation2 + $0x50] sm:$0xff] %vm407, %v2597
      %2614 = vst.msk [vmem:[#allocation2 + $0x58] sm:$0xff] %vm407, %v2598
      %2615 = vst.msk [vmem:[#allocation2 + $0x60] sm:$0xff] %vm407, %v2599
      %2616 = vst.msk [vmem:[#allocation2 + $0x68] sm:$0xff] %vm407, %v2600
      %2617 = vst.msk [vmem:[#allocation2 + $0x70] sm:$0xff] %vm407, %v2601
      %2618 = vst.msk [vmem:[#allocation2 + $0x78] sm:$0xff] %vm407, %v2602
      %v2619 = vld [vmem:[%s1628 + $0x4] sm:$0xff]
      %v2620 = vld [vmem:[%s1628 + $0xc] sm:$0xff]
      %v2621 = vld [vmem:[%s1628 + $0x1c] sm:$0xff]
      %v2622 = vld [vmem:[%s1628 + $0x24] sm:$0xff]
      %v2623 = vld [vmem:[%s1628 + $0x34] sm:$0xff]
      %v2624 = vld [vmem:[%s1628 + $0x3c] sm:$0xff]
      %v2625 = vld [vmem:[%s1628 + $0x4c] sm:$0xff]
      %v2626 = vld [vmem:[%s1628 + $0x54] sm:$0xff]
      %v2627 = vld [vmem:[%s1628 + $0x64] sm:$0xff]
      %v2628 = vld [vmem:[%s1628 + $0x6c] sm:$0xff]
      %v2629 = vld [vmem:[%s1628 + $0x7c] sm:$0xff]
      %v2630 = vld [vmem:[%s1628 + $0x84] sm:$0xff]
      %v2631 = vld [vmem:[%s1628 + $0x94] sm:$0xff]
      %v2632 = vld [vmem:[%s1628 + $0x9c] sm:$0xff]
      %v2633 = vld [vmem:[%s1628 + $0xac] sm:$0xff]
      %v2634 = vld [vmem:[%s1628 + $0xb4] sm:$0xff]
      %v2635 = vld [vmem:[#allocation3] sm:$0xff]
      %v2636 = vld [vmem:[#allocation3 + $0x8] sm:$0xff]
      %v2637 = vld [vmem:[#allocation3 + $0x10] sm:$0xff]
      %v2638 = vld [vmem:[#allocation3 + $0x18] sm:$0xff]
      %v2639 = vld [vmem:[#allocation3 + $0x20] sm:$0xff]
      %v2640 = vld [vmem:[#allocation3 + $0x28] sm:$0xff]
      %v2641 = vld [vmem:[#allocation3 + $0x30] sm:$0xff]
      %v2642 = vld [vmem:[#allocation3 + $0x38] sm:$0xff]
      %v2643 = vld [vmem:[#allocation3 + $0x40] sm:$0xff]
      %v2644 = vld [vmem:[#allocation3 + $0x48] sm:$0xff]
      %v2645 = vld [vmem:[#allocation3 + $0x50] sm:$0xff]
      %v2646 = vld [vmem:[#allocation3 + $0x58] sm:$0xff]
      %v2647 = vld [vmem:[#allocation3 + $0x60] sm:$0xff]
      %v2648 = vld [vmem:[#allocation3 + $0x68] sm:$0xff]
      %v2649 = vld [vmem:[#allocation3 + $0x70] sm:$0xff]
      %v2650 = vld [vmem:[#allocation3 + $0x78] sm:$0xff]
      %v2651 = vpack.c.bf16 %v2620, %v2619
      %v2652 = vpack.c.bf16 %v2622, %v2621
      %v2653 = vpack.c.bf16 %v2624, %v2623
      %v2654 = vpack.c.bf16 %v2626, %v2625
      %v2655 = vpack.c.bf16 %v2628, %v2627
      %v2656 = vpack.c.bf16 %v2630, %v2629
      %v2657 = vpack.c.bf16 %v2632, %v2631
      %v2658 = vpack.c.bf16 %v2634, %v2633
      %s2659 = scalar_lea.vmem %s2, 10
      %v2660 = vld [vmem:[%s2659] sm:$0x3]
      %v2662 = vsel %vm407, %v2651, 0
      %v2665 = vsel %vm407, %v2652, 0
      %v2668 = vsel %vm407, %v2653, 0
      %v2671 = vsel %vm407, %v2654, 0
      %v2674 = vsel %vm407, %v2655, 0
      %v2677 = vsel %vm407, %v2656, 0
      %v2680 = vsel %vm407, %v2657, 0
      %v2683 = vsel %vm407, %v2658, 0
      %v2686 = vsel %vm506, %v2660, 0
      %2688 = vmatprep.subr.bf16.mxu0 0
      %2689 = vmatpush1.bf16.msra.mxu0 %v2686
      %2690 = vmatprep.subr.bf16.mxu0 0
      %2691 = vmatpush1.bf16.msra.mxu0 0
      %2692 = vmatprep.subr.bf16.mxu0 0
      %2693 = vmatpush1.bf16.msra.mxu0 0
      %2694 = vmatprep.subr.bf16.mxu0 0
      %2695 = vmatpush1.bf16.msra.mxu0 0
      %2696 = vmatprep.subr.bf16.mxu0 0
      %2697 = vmatpush1.bf16.msra.mxu0 0
      %2698 = vmatprep.subr.bf16.mxu0 0
      %2699 = vmatpush1.bf16.msra.mxu0 0
      %2700 = vmatprep.subr.bf16.mxu0 0
      %2701 = vmatpush1.bf16.msra.mxu0 0
      %2702 = vmatprep.subr.bf16.mxu0 0
      %2703 = vmatpush1.bf16.msra.mxu0 0
      %2704 = vmatprep.subr.bf16.mxu0 0
      %2705 = vmatpush1.bf16.msra.mxu0 0
      %2706 = vmatprep.subr.bf16.mxu0 0
      %2707 = vmatpush1.bf16.msra.mxu0 0
      %2708 = vmatprep.subr.bf16.mxu0 0
      %2709 = vmatpush1.bf16.msra.mxu0 0
      %2710 = vmatprep.subr.bf16.mxu0 0
      %2711 = vmatpush1.bf16.msra.mxu0 0
      %2712 = vmatprep.subr.bf16.mxu0 0
      %2713 = vmatpush1.bf16.msra.mxu0 0
      %2714 = vmatprep.subr.bf16.mxu0 0
      %2715 = vmatpush1.bf16.msra.mxu0 0
      %2716 = vmatprep.subr.bf16.mxu0 0
      %2717 = vmatpush1.bf16.msra.mxu0 0
      %2718 = vmatprep.subr.bf16.mxu0 0
      %2719 = vmatpush1.bf16.msra.mxu0 0
      %2720 = vmatprep.mubr.bf16.mxu0 0
      %2721 = vmatmul.mubr.bf16.gmra.mrb[0].mxu0 %v2662
      %v2722 = vpop.f32.mrb[0].mxu0
      %v2723 = vadd.f32 0.0, %v2722
      %v2724 = vpop.f32.mrb[0].mxu0
      %v2725 = vpop.f32.mrb[0].mxu0
      %v2726 = vadd.f32 0.0, %v2725
      %v2727 = vpop.f32.mrb[0].mxu0
      %2728 = vmatprep.mubr.bf16.mxu0 0
      %2729 = vmatmul.mubr.bf16.gmra.mrb[0].mxu0 %v2665
      %v2730 = vpop.f32.mrb[0].mxu0
      %v2731 = vadd.f32 0.0, %v2730
      %v2732 = vpop.f32.mrb[0].mxu0
      %v2733 = vpop.f32.mrb[0].mxu0
      %v2734 = vadd.f32 0.0, %v2733
      %v2735 = vpop.f32.mrb[0].mxu0
      %2736 = vmatprep.mubr.bf16.mxu0 0
      %2737 = vmatmul.mubr.bf16.gmra.mrb[0].mxu0 %v2668
      %v2738 = vpop.f32.mrb[0].mxu0
      %v2739 = vadd.f32 0.0, %v2738
      %v2740 = vpop.f32.mrb[0].mxu0
      %v2741 = vpop.f32.mrb[0].mxu0
      %v2742 = vadd.f32 0.0, %v2741
      %v2743 = vpop.f32.mrb[0].mxu0
      %2744 = vmatprep.mubr.bf16.mxu0 0
      %2745 = vmatmul.mubr.bf16.gmra.mrb[0].mxu0 %v2671
      %v2746 = vpop.f32.mrb[0].mxu0
      %v2747 = vadd.f32 0.0, %v2746
      %v2748 = vpop.f32.mrb[0].mxu0
      %v2749 = vpop.f32.mrb[0].mxu0
      %v2750 = vadd.f32 0.0, %v2749
      %v2751 = vpop.f32.mrb[0].mxu0
      %2752 = vmatprep.mubr.bf16.mxu0 0
      %2753 = vmatmul.mubr.bf16.gmra.mrb[0].mxu0 %v2674
      %v2754 = vpop.f32.mrb[0].mxu0
      %v2755 = vadd.f32 0.0, %v2754
      %v2756 = vpop.f32.mrb[0].mxu0
      %v2757 = vpop.f32.mrb[0].mxu0
      %v2758 = vadd.f32 0.0, %v2757
      %v2759 = vpop.f32.mrb[0].mxu0
      %2760 = vmatprep.mubr.bf16.mxu0 0
      %2761 = vmatmul.mubr.bf16.gmra.mrb[0].mxu0 %v2677
      %v2762 = vpop.f32.mrb[0].mxu0
      %v2763 = vadd.f32 0.0, %v2762
      %v2764 = vpop.f32.mrb[0].mxu0
      %v2765 = vpop.f32.mrb[0].mxu0
      %v2766 = vadd.f32 0.0, %v2765
      %v2767 = vpop.f32.mrb[0].mxu0
      %2768 = vmatprep.mubr.bf16.mxu0 0
      %2769 = vmatmul.mubr.bf16.gmra.mrb[0].mxu0 %v2680
      %v2770 = vpop.f32.mrb[0].mxu0
      %v2771 = vadd.f32 0.0, %v2770
      %v2772 = vpop.f32.mrb[0].mxu0
      %v2773 = vpop.f32.mrb[0].mxu0
      %v2774 = vadd.f32 0.0, %v2773
      %v2775 = vpop.f32.mrb[0].mxu0
      %2776 = vmatprep.mubr.bf16.mxu0 0
      %2777 = vmatmul.mubr.bf16.gmra.mrb[0].mxu0 %v2683
      %v2778 = vpop.f32.mrb[0].mxu0
      %v2779 = vadd.f32 0.0, %v2778
      %v2780 = vpop.f32.mrb[0].mxu0
      %v2781 = vpop.f32.mrb[0].mxu0
      %v2782 = vadd.f32 0.0, %v2781
      %v2783 = vpop.f32.mrb[0].mxu0
      %2784 = vdwg.mxu0
      %v2785 = vadd.f32 %v2635, %v2723
      %v2786 = vadd.f32 %v2636, %v2726
      %v2787 = vadd.f32 %v2637, %v2731
      %v2788 = vadd.f32 %v2638, %v2734
      %v2789 = vadd.f32 %v2639, %v2739
      %v2790 = vadd.f32 %v2640, %v2742
      %v2791 = vadd.f32 %v2641, %v2747
      %v2792 = vadd.f32 %v2642, %v2750
      %v2793 = vadd.f32 %v2643, %v2755
      %v2794 = vadd.f32 %v2644, %v2758
      %v2795 = vadd.f32 %v2645, %v2763
      %v2796 = vadd.f32 %v2646, %v2766
      %v2797 = vadd.f32 %v2647, %v2771
      %v2798 = vadd.f32 %v2648, %v2774
      %v2799 = vadd.f32 %v2649, %v2779
      %v2800 = vadd.f32 %v2650, %v2782
      %2801 = vst.msk [vmem:[#allocation3] sm:$0xff] %vm407, %v2785
      %2802 = vst.msk [vmem:[#allocation3 + $0x8] sm:$0xff] %vm407, %v2786
      %2803 = vst.msk [vmem:[#allocation3 + $0x10] sm:$0xff] %vm407, %v2787
      %2804 = vst.msk [vmem:[#allocation3 + $0x18] sm:$0xff] %vm407, %v2788
      %2805 = vst.msk [vmem:[#allocation3 + $0x20] sm:$0xff] %vm407, %v2789
      %2806 = vst.msk [vmem:[#allocation3 + $0x28] sm:$0xff] %vm407, %v2790
      %2807 = vst.msk [vmem:[#allocation3 + $0x30] sm:$0xff] %vm407, %v2791
      %2808 = vst.msk [vmem:[#allocation3 + $0x38] sm:$0xff] %vm407, %v2792
      %2809 = vst.msk [vmem:[#allocation3 + $0x40] sm:$0xff] %vm407, %v2793
      %2810 = vst.msk [vmem:[#allocation3 + $0x48] sm:$0xff] %vm407, %v2794
      %2811 = vst.msk [vmem:[#allocation3 + $0x50] sm:$0xff] %vm407, %v2795
      %2812 = vst.msk [vmem:[#allocation3 + $0x58] sm:$0xff] %vm407, %v2796
      %2813 = vst.msk [vmem:[#allocation3 + $0x60] sm:$0xff] %vm407, %v2797
      %2814 = vst.msk [vmem:[#allocation3 + $0x68] sm:$0xff] %vm407, %v2798
      %2815 = vst.msk [vmem:[#allocation3 + $0x70] sm:$0xff] %vm407, %v2799
      %2816 = vst.msk [vmem:[#allocation3 + $0x78] sm:$0xff] %vm407, %v2800
      %s2817 = scalar_lea.vmem %s378, 72
      %v2818 = vld [vmem:[%s2817 + $0x1] sm:$0xff]
      %v2819 = vld [vmem:[%s2817 + $0x9] sm:$0xff]
      %v2820 = vld [vmem:[%s2817 + $0x19] sm:$0xff]
      %v2821 = vld [vmem:[%s2817 + $0x21] sm:$0xff]
      %v2822 = vld [vmem:[%s2817 + $0x31] sm:$0xff]
      %v2823 = vld [vmem:[%s2817 + $0x39] sm:$0xff]
      %v2824 = vld [vmem:[%s2817 + $0x49] sm:$0xff]
      %v2825 = vld [vmem:[%s2817 + $0x51] sm:$0xff]
      %v2826 = vld [vmem:[%s2817 + $0x61] sm:$0xff]
      %v2827 = vld [vmem:[%s2817 + $0x69] sm:$0xff]
      %v2828 = vld [vmem:[%s2817 + $0x79] sm:$0xff]
      %v2829 = vld [vmem:[%s2817 + $0x81] sm:$0xff]
      %v2830 = vld [vmem:[%s2817 + $0x91] sm:$0xff]
      %v2831 = vld [vmem:[%s2817 + $0x99] sm:$0xff]
      %v2832 = vld [vmem:[%s2817 + $0xa9] sm:$0xff]
      %v2833 = vld [vmem:[%s2817 + $0xb1] sm:$0xff]
      %v2834 = vld [vmem:[#allocation2] sm:$0xff]
      %v2835 = vld [vmem:[#allocation2 + $0x8] sm:$0xff]
      %v2836 = vld [vmem:[#allocation2 + $0x10] sm:$0xff]
      %v2837 = vld [vmem:[#allocation2 + $0x18] sm:$0xff]
      %v2838 = vld [vmem:[#allocation2 + $0x20] sm:$0xff]
      %v2839 = vld [vmem:[#allocation2 + $0x28] sm:$0xff]
      %v2840 = vld [vmem:[#allocation2 + $0x30] sm:$0xff]
      %v2841 = vld [vmem:[#allocation2 + $0x38] sm:$0xff]
      %v2842 = vld [vmem:[#allocation2 + $0x40] sm:$0xff]
      %v2843 = vld [vmem:[#allocation2 + $0x48] sm:$0xff]
      %v2844 = vld [vmem:[#allocation2 + $0x50] sm:$0xff]
      %v2845 = vld [vmem:[#allocation2 + $0x58] sm:$0xff]
      %v2846 = vld [vmem:[#allocation2 + $0x60] sm:$0xff]
      %v2847 = vld [vmem:[#allocation2 + $0x68] sm:$0xff]
      %v2848 = vld [vmem:[#allocation2 + $0x70] sm:$0xff]
      %v2849 = vld [vmem:[#allocation2 + $0x78] sm:$0xff]
      %v2850 = vpack.c.bf16 %v2819, %v2818
      %v2851 = vpack.c.bf16 %v2821, %v2820
      %v2852 = vpack.c.bf16 %v2823, %v2822
      %v2853 = vpack.c.bf16 %v2825, %v2824
      %v2854 = vpack.c.bf16 %v2827, %v2826
      %v2855 = vpack.c.bf16 %v2829, %v2828
      %v2856 = vpack.c.bf16 %v2831, %v2830
      %v2857 = vpack.c.bf16 %v2833, %v2832
      %s2858 = scalar_lea.vmem %s1, 12
      %v2859 = vld [vmem:[%s2858] sm:$0x3]
      %v2861 = vsel %vm407, %v2850, 0
      %v2864 = vsel %vm407, %v2851, 0
      %v2867 = vsel %vm407, %v2852, 0
      %v2870 = vsel %vm407, %v2853, 0
      %v2873 = vsel %vm407, %v2854, 0
      %v2876 = vsel %vm407, %v2855, 0
      %v2879 = vsel %vm407, %v2856, 0
      %v2882 = vsel %vm407, %v2857, 0
      %v2885 = vsel %vm506, %v2859, 0
      %2887 = vmatprep.subr.bf16.mxu0 0
      %2888 = vmatpush1.bf16.msra.mxu0 %v2885
      %2889 = vmatprep.subr.bf16.mxu0 0
      %2890 = vmatpush1.bf16.msra.mxu0 0
      %2891 = vmatprep.subr.bf16.mxu0 0
      %2892 = vmatpush1.bf16.msra.mxu0 0
      %2893 = vmatprep.subr.bf16.mxu0 0
      %2894 = vmatpush1.bf16.msra.mxu0 0
      %2895 = vmatprep.subr.bf16.mxu0 0
      %2896 = vmatpush1.bf16.msra.mxu0 0
      %2897 = vmatprep.subr.bf16.mxu0 0
      %2898 = vmatpush1.bf16.msra.mxu0 0
      %2899 = vmatprep.subr.bf16.mxu0 0
      %2900 = vmatpush1.bf16.msra.mxu0 0
      %2901 = vmatprep.subr.bf16.mxu0 0
      %2902 = vmatpush1.bf16.msra.mxu0 0
      %2903 = vmatprep.subr.bf16.mxu0 0
      %2904 = vmatpush1.bf16.msra.mxu0 0
      %2905 = vmatprep.subr.bf16.mxu0 0
      %2906 = vmatpush1.bf16.msra.mxu0 0
      %2907 = vmatprep.subr.bf16.mxu0 0
      %2908 = vmatpush1.bf16.msra.mxu0 0
      %2909 = vmatprep.subr.bf16.mxu0 0
      %2910 = vmatpush1.bf16.msra.mxu0 0
      %2911 = vmatprep.subr.bf16.mxu0 0
      %2912 = vmatpush1.bf16.msra.mxu0 0
      %2913 = vmatprep.subr.bf16.mxu0 0
      %2914 = vmatpush1.bf16.msra.mxu0 0
      %2915 = vmatprep.subr.bf16.mxu0 0
      %2916 = vmatpush1.bf16.msra.mxu0 0
      %2917 = vmatprep.subr.bf16.mxu0 0
      %2918 = vmatpush1.bf16.msra.mxu0 0
      %2919 = vmatprep.mubr.bf16.mxu0 0
      %2920 = vmatmul.mubr.bf16.gmra.mrb[0].mxu0 %v2861
      %v2921 = vpop.f32.mrb[0].mxu0
      %v2922 = vadd.f32 0.0, %v2921
      %v2923 = vpop.f32.mrb[0].mxu0
      %v2924 = vpop.f32.mrb[0].mxu0
      %v2925 = vadd.f32 0.0, %v2924
      %v2926 = vpop.f32.mrb[0].mxu0
      %2927 = vmatprep.mubr.bf16.mxu0 0
      %2928 = vmatmul.mubr.bf16.gmra.mrb[0].mxu0 %v2864
      %v2929 = vpop.f32.mrb[0].mxu0
      %v2930 = vadd.f32 0.0, %v2929
      %v2931 = vpop.f32.mrb[0].mxu0
      %v2932 = vpop.f32.mrb[0].mxu0
      %v2933 = vadd.f32 0.0, %v2932
      %v2934 = vpop.f32.mrb[0].mxu0
      %2935 = vmatprep.mubr.bf16.mxu0 0
      %2936 = vmatmul.mubr.bf16.gmra.mrb[0].mxu0 %v2867
      %v2937 = vpop.f32.mrb[0].mxu0
      %v2938 = vadd.f32 0.0, %v2937
      %v2939 = vpop.f32.mrb[0].mxu0
      %v2940 = vpop.f32.mrb[0].mxu0
      %v2941 = vadd.f32 0.0, %v2940
      %v2942 = vpop.f32.mrb[0].mxu0
      %2943 = vmatprep.mubr.bf16.mxu0 0
      %2944 = vmatmul.mubr.bf16.gmra.mrb[0].mxu0 %v2870
      %v2945 = vpop.f32.mrb[0].mxu0
      %v2946 = vadd.f32 0.0, %v2945
      %v2947 = vpop.f32.mrb[0].mxu0
      %v2948 = vpop.f32.mrb[0].mxu0
      %v2949 = vadd.f32 0.0, %v2948
      %v2950 = vpop.f32.mrb[0].mxu0
      %2951 = vmatprep.mubr.bf16.mxu0 0
      %2952 = vmatmul.mubr.bf16.gmra.mrb[0].mxu0 %v2873
      %v2953 = vpop.f32.mrb[0].mxu0
      %v2954 = vadd.f32 0.0, %v2953
      %v2955 = vpop.f32.mrb[0].mxu0
      %v2956 = vpop.f32.mrb[0].mxu0
      %v2957 = vadd.f32 0.0, %v2956
      %v2958 = vpop.f32.mrb[0].mxu0
      %2959 = vmatprep.mubr.bf16.mxu0 0
      %2960 = vmatmul.mubr.bf16.gmra.mrb[0].mxu0 %v2876
      %v2961 = vpop.f32.mrb[0].mxu0
      %v2962 = vadd.f32 0.0, %v2961
      %v2963 = vpop.f32.mrb[0].mxu0
      %v2964 = vpop.f32.mrb[0].mxu0
      %v2965 = vadd.f32 0.0, %v2964
      %v2966 = vpop.f32.mrb[0].mxu0
      %2967 = vmatprep.mubr.bf16.mxu0 0
      %2968 = vmatmul.mubr.bf16.gmra.mrb[0].mxu0 %v2879
      %v2969 = vpop.f32.mrb[0].mxu0
      %v2970 = vadd.f32 0.0, %v2969
      %v2971 = vpop.f32.mrb[0].mxu0
      %v2972 = vpop.f32.mrb[0].mxu0
      %v2973 = vadd.f32 0.0, %v2972
      %v2974 = vpop.f32.mrb[0].mxu0
      %2975 = vmatprep.mubr.bf16.mxu0 0
      %2976 = vmatmul.mubr.bf16.gmra.mrb[0].mxu0 %v2882
      %v2977 = vpop.f32.mrb[0].mxu0
      %v2978 = vadd.f32 0.0, %v2977
      %v2979 = vpop.f32.mrb[0].mxu0
      %v2980 = vpop.f32.mrb[0].mxu0
      %v2981 = vadd.f32 0.0, %v2980
      %v2982 = vpop.f32.mrb[0].mxu0
      %2983 = vdwg.mxu0
      %v2984 = vadd.f32 %v2834, %v2922
      %v2985 = vadd.f32 %v2835, %v2925
      %v2986 = vadd.f32 %v2836, %v2930
      %v2987 = vadd.f32 %v2837, %v2933
      %v2988 = vadd.f32 %v2838, %v2938
      %v2989 = vadd.f32 %v2839, %v2941
      %v2990 = vadd.f32 %v2840, %v2946
      %v2991 = vadd.f32 %v2841, %v2949
      %v2992 = vadd.f32 %v2842, %v2954
      %v2993 = vadd.f32 %v2843, %v2957
      %v2994 = vadd.f32 %v2844, %v2962
      %v2995 = vadd.f32 %v2845, %v2965
      %v2996 = vadd.f32 %v2846, %v2970
      %v2997 = vadd.f32 %v2847, %v2973
      %v2998 = vadd.f32 %v2848, %v2978
      %v2999 = vadd.f32 %v2849, %v2981
      %3000 = vst.msk [vmem:[#allocation2] sm:$0xff] %vm407, %v2984
      %3001 = vst.msk [vmem:[#allocation2 + $0x8] sm:$0xff] %vm407, %v2985
      %3002 = vst.msk [vmem:[#allocation2 + $0x10] sm:$0xff] %vm407, %v2986
      %3003 = vst.msk [vmem:[#allocation2 + $0x18] sm:$0xff] %vm407, %v2987
      %3004 = vst.msk [vmem:[#allocation2 + $0x20] sm:$0xff] %vm407, %v2988
      %3005 = vst.msk [vmem:[#allocation2 + $0x28] sm:$0xff] %vm407, %v2989
      %3006 = vst.msk [vmem:[#allocation2 + $0x30] sm:$0xff] %vm407, %v2990
      %3007 = vst.msk [vmem:[#allocation2 + $0x38] sm:$0xff] %vm407, %v2991
      %3008 = vst.msk [vmem:[#allocation2 + $0x40] sm:$0xff] %vm407, %v2992
      %3009 = vst.msk [vmem:[#allocation2 + $0x48] sm:$0xff] %vm407, %v2993
      %3010 = vst.msk [vmem:[#allocation2 + $0x50] sm:$0xff] %vm407, %v2994
      %3011 = vst.msk [vmem:[#allocation2 + $0x58] sm:$0xff] %vm407, %v2995
      %3012 = vst.msk [vmem:[#allocation2 + $0x60] sm:$0xff] %vm407, %v2996
      %3013 = vst.msk [vmem:[#allocation2 + $0x68] sm:$0xff] %vm407, %v2997
      %3014 = vst.msk [vmem:[#allocation2 + $0x70] sm:$0xff] %vm407, %v2998
      %3015 = vst.msk [vmem:[#allocation2 + $0x78] sm:$0xff] %vm407, %v2999
      %s3016 = scalar_lea.vmem %s378, 96
      %v3017 = vld [vmem:[%s3016] sm:$0xff]
      %v3018 = vld [vmem:[%s3016 + $0x8] sm:$0xff]
      %v3019 = vld [vmem:[%s3016 + $0x18] sm:$0xff]
      %v3020 = vld [vmem:[%s3016 + $0x20] sm:$0xff]
      %v3021 = vld [vmem:[%s3016 + $0x30] sm:$0xff]
      %v3022 = vld [vmem:[%s3016 + $0x38] sm:$0xff]
      %v3023 = vld [vmem:[%s3016 + $0x48] sm:$0xff]
      %v3024 = vld [vmem:[%s3016 + $0x50] sm:$0xff]
      %v3025 = vld [vmem:[%s3016 + $0x60] sm:$0xff]
      %v3026 = vld [vmem:[%s3016 + $0x68] sm:$0xff]
      %v3027 = vld [vmem:[%s3016 + $0x78] sm:$0xff]
      %v3028 = vld [vmem:[%s3016 + $0x80] sm:$0xff]
      %v3029 = vld [vmem:[%s3016 + $0x90] sm:$0xff]
      %v3030 = vld [vmem:[%s3016 + $0x98] sm:$0xff]
      %v3031 = vld [vmem:[%s3016 + $0xa8] sm:$0xff]
      %v3032 = vld [vmem:[%s3016 + $0xb0] sm:$0xff]
      %v3033 = vld [vmem:[#allocation3] sm:$0xff]
      %v3034 = vld [vmem:[#allocation3 + $0x8] sm:$0xff]
      %v3035 = vld [vmem:[#allocation3 + $0x10] sm:$0xff]
      %v3036 = vld [vmem:[#allocation3 + $0x18] sm:$0xff]
      %v3037 = vld [vmem:[#allocation3 + $0x20] sm:$0xff]
      %v3038 = vld [vmem:[#allocation3 + $0x28] sm:$0xff]
      %v3039 = vld [vmem:[#allocation3 + $0x30] sm:$0xff]
      %v3040 = vld [vmem:[#allocation3 + $0x38] sm:$0xff]
      %v3041 = vld [vmem:[#allocation3 + $0x40] sm:$0xff]
      %v3042 = vld [vmem:[#allocation3 + $0x48] sm:$0xff]
      %v3043 = vld [vmem:[#allocation3 + $0x50] sm:$0xff]
      %v3044 = vld [vmem:[#allocation3 + $0x58] sm:$0xff]
      %v3045 = vld [vmem:[#allocation3 + $0x60] sm:$0xff]
      %v3046 = vld [vmem:[#allocation3 + $0x68] sm:$0xff]
      %v3047 = vld [vmem:[#allocation3 + $0x70] sm:$0xff]
      %v3048 = vld [vmem:[#allocation3 + $0x78] sm:$0xff]
      %v3049 = vpack.c.bf16 %v3018, %v3017
      %v3050 = vpack.c.bf16 %v3020, %v3019
      %v3051 = vpack.c.bf16 %v3022, %v3021
      %v3052 = vpack.c.bf16 %v3024, %v3023
      %v3053 = vpack.c.bf16 %v3026, %v3025
      %v3054 = vpack.c.bf16 %v3028, %v3027
      %v3055 = vpack.c.bf16 %v3030, %v3029
      %v3056 = vpack.c.bf16 %v3032, %v3031
      %s3057 = scalar_lea.vmem %s2, 12
      %v3058 = vld [vmem:[%s3057] sm:$0x3]
      %v3060 = vsel %vm407, %v3049, 0
      %v3063 = vsel %vm407, %v3050, 0
      %v3066 = vsel %vm407, %v3051, 0
      %v3069 = vsel %vm407, %v3052, 0
      %v3072 = vsel %vm407, %v3053, 0
      %v3075 = vsel %vm407, %v3054, 0
      %v3078 = vsel %vm407, %v3055, 0
      %v3081 = vsel %vm407, %v3056, 0
      %v3084 = vsel %vm506, %v3058, 0
      %3086 = vmatprep.subr.bf16.mxu0 0
      %3087 = vmatpush1.bf16.msra.mxu0 %v3084
      %3088 = vmatprep.subr.bf16.mxu0 0
      %3089 = vmatpush1.bf16.msra.mxu0 0
      %3090 = vmatprep.subr.bf16.mxu0 0
      %3091 = vmatpush1.bf16.msra.mxu0 0
      %3092 = vmatprep.subr.bf16.mxu0 0
      %3093 = vmatpush1.bf16.msra.mxu0 0
      %3094 = vmatprep.subr.bf16.mxu0 0
      %3095 = vmatpush1.bf16.msra.mxu0 0
      %3096 = vmatprep.subr.bf16.mxu0 0
      %3097 = vmatpush1.bf16.msra.mxu0 0
      %3098 = vmatprep.subr.bf16.mxu0 0
      %3099 = vmatpush1.bf16.msra.mxu0 0
      %3100 = vmatprep.subr.bf16.mxu0 0
      %3101 = vmatpush1.bf16.msra.mxu0 0
      %3102 = vmatprep.subr.bf16.mxu0 0
      %3103 = vmatpush1.bf16.msra.mxu0 0
      %3104 = vmatprep.subr.bf16.mxu0 0
      %3105 = vmatpush1.bf16.msra.mxu0 0
      %3106 = vmatprep.subr.bf16.mxu0 0
      %3107 = vmatpush1.bf16.msra.mxu0 0
      %3108 = vmatprep.subr.bf16.mxu0 0
      %3109 = vmatpush1.bf16.msra.mxu0 0
      %3110 = vmatprep.subr.bf16.mxu0 0
      %3111 = vmatpush1.bf16.msra.mxu0 0
      %3112 = vmatprep.subr.bf16.mxu0 0
      %3113 = vmatpush1.bf16.msra.mxu0 0
      %3114 = vmatprep.subr.bf16.mxu0 0
      %3115 = vmatpush1.bf16.msra.mxu0 0
      %3116 = vmatprep.subr.bf16.mxu0 0
      %3117 = vmatpush1.bf16.msra.mxu0 0
      %3118 = vmatprep.mubr.bf16.mxu0 0
      %3119 = vmatmul.mubr.bf16.gmra.mrb[0].mxu0 %v3060
      %v3120 = vpop.f32.mrb[0].mxu0
      %v3121 = vadd.f32 0.0, %v3120
      %v3122 = vpop.f32.mrb[0].mxu0
      %v3123 = vpop.f32.mrb[0].mxu0
      %v3124 = vadd.f32 0.0, %v3123
      %v3125 = vpop.f32.mrb[0].mxu0
      %3126 = vmatprep.mubr.bf16.mxu0 0
      %3127 = vmatmul.mubr.bf16.gmra.mrb[0].mxu0 %v3063
      %v3128 = vpop.f32.mrb[0].mxu0
      %v3129 = vadd.f32 0.0, %v3128
      %v3130 = vpop.f32.mrb[0].mxu0
      %v3131 = vpop.f32.mrb[0].mxu0
      %v3132 = vadd.f32 0.0, %v3131
      %v3133 = vpop.f32.mrb[0].mxu0
      %3134 = vmatprep.mubr.bf16.mxu0 0
      %3135 = vmatmul.mubr.bf16.gmra.mrb[0].mxu0 %v3066
      %v3136 = vpop.f32.mrb[0].mxu0
      %v3137 = vadd.f32 0.0, %v3136
      %v3138 = vpop.f32.mrb[0].mxu0
      %v3139 = vpop.f32.mrb[0].mxu0
      %v3140 = vadd.f32 0.0, %v3139
      %v3141 = vpop.f32.mrb[0].mxu0
      %3142 = vmatprep.mubr.bf16.mxu0 0
      %3143 = vmatmul.mubr.bf16.gmra.mrb[0].mxu0 %v3069
      %v3144 = vpop.f32.mrb[0].mxu0
      %v3145 = vadd.f32 0.0, %v3144
      %v3146 = vpop.f32.mrb[0].mxu0
      %v3147 = vpop.f32.mrb[0].mxu0
      %v3148 = vadd.f32 0.0, %v3147
      %v3149 = vpop.f32.mrb[0].mxu0
      %3150 = vmatprep.mubr.bf16.mxu0 0
      %3151 = vmatmul.mubr.bf16.gmra.mrb[0].mxu0 %v3072
      %v3152 = vpop.f32.mrb[0].mxu0
      %v3153 = vadd.f32 0.0, %v3152
      %v3154 = vpop.f32.mrb[0].mxu0
      %v3155 = vpop.f32.mrb[0].mxu0
      %v3156 = vadd.f32 0.0, %v3155
      %v3157 = vpop.f32.mrb[0].mxu0
      %3158 = vmatprep.mubr.bf16.mxu0 0
      %3159 = vmatmul.mubr.bf16.gmra.mrb[0].mxu0 %v3075
      %v3160 = vpop.f32.mrb[0].mxu0
      %v3161 = vadd.f32 0.0, %v3160
      %v3162 = vpop.f32.mrb[0].mxu0
      %v3163 = vpop.f32.mrb[0].mxu0
      %v3164 = vadd.f32 0.0, %v3163
      %v3165 = vpop.f32.mrb[0].mxu0
      %3166 = vmatprep.mubr.bf16.mxu0 0
      %3167 = vmatmul.mubr.bf16.gmra.mrb[0].mxu0 %v3078
      %v3168 = vpop.f32.mrb[0].mxu0
      %v3169 = vadd.f32 0.0, %v3168
      %v3170 = vpop.f32.mrb[0].mxu0
      %v3171 = vpop.f32.mrb[0].mxu0
      %v3172 = vadd.f32 0.0, %v3171
      %v3173 = vpop.f32.mrb[0].mxu0
      %3174 = vmatprep.mubr.bf16.mxu0 0
      %3175 = vmatmul.mubr.bf16.gmra.mrb[0].mxu0 %v3081
      %v3176 = vpop.f32.mrb[0].mxu0
      %v3177 = vadd.f32 0.0, %v3176
      %v3178 = vpop.f32.mrb[0].mxu0
      %v3179 = vpop.f32.mrb[0].mxu0
      %v3180 = vadd.f32 0.0, %v3179
      %v3181 = vpop.f32.mrb[0].mxu0
      %3182 = vdwg.mxu0
      %v3183 = vadd.f32 %v3033, %v3121
      %v3184 = vadd.f32 %v3034, %v3124
      %v3185 = vadd.f32 %v3035, %v3129
      %v3186 = vadd.f32 %v3036, %v3132
      %v3187 = vadd.f32 %v3037, %v3137
      %v3188 = vadd.f32 %v3038, %v3140
      %v3189 = vadd.f32 %v3039, %v3145
      %v3190 = vadd.f32 %v3040, %v3148
      %v3191 = vadd.f32 %v3041, %v3153
      %v3192 = vadd.f32 %v3042, %v3156
      %v3193 = vadd.f32 %v3043, %v3161
      %v3194 = vadd.f32 %v3044, %v3164
      %v3195 = vadd.f32 %v3045, %v3169
      %v3196 = vadd.f32 %v3046, %v3172
      %v3197 = vadd.f32 %v3047, %v3177
      %v3198 = vadd.f32 %v3048, %v3180
      %3199 = vst.msk [vmem:[#allocation3] sm:$0xff] %vm407, %v3183
      %3200 = vst.msk [vmem:[#allocation3 + $0x8] sm:$0xff] %vm407, %v3184
      %3201 = vst.msk [vmem:[#allocation3 + $0x10] sm:$0xff] %vm407, %v3185
      %3202 = vst.msk [vmem:[#allocation3 + $0x18] sm:$0xff] %vm407, %v3186
      %3203 = vst.msk [vmem:[#allocation3 + $0x20] sm:$0xff] %vm407, %v3187
      %3204 = vst.msk [vmem:[#allocation3 + $0x28] sm:$0xff] %vm407, %v3188
      %3205 = vst.msk [vmem:[#allocation3 + $0x30] sm:$0xff] %vm407, %v3189
      %3206 = vst.msk [vmem:[#allocation3 + $0x38] sm:$0xff] %vm407, %v3190
      %3207 = vst.msk [vmem:[#allocation3 + $0x40] sm:$0xff] %vm407, %v3191
      %3208 = vst.msk [vmem:[#allocation3 + $0x48] sm:$0xff] %vm407, %v3192
      %3209 = vst.msk [vmem:[#allocation3 + $0x50] sm:$0xff] %vm407, %v3193
      %3210 = vst.msk [vmem:[#allocation3 + $0x58] sm:$0xff] %vm407, %v3194
      %3211 = vst.msk [vmem:[#allocation3 + $0x60] sm:$0xff] %vm407, %v3195
      %3212 = vst.msk [vmem:[#allocation3 + $0x68] sm:$0xff] %vm407, %v3196
      %3213 = vst.msk [vmem:[#allocation3 + $0x70] sm:$0xff] %vm407, %v3197
      %3214 = vst.msk [vmem:[#allocation3 + $0x78] sm:$0xff] %vm407, %v3198
      %v3215 = vld [vmem:[%s2817 + $0x2] sm:$0xff]
      %v3216 = vld [vmem:[%s2817 + $0xa] sm:$0xff]
      %v3217 = vld [vmem:[%s2817 + $0x1a] sm:$0xff]
      %v3218 = vld [vmem:[%s2817 + $0x22] sm:$0xff]
      %v3219 = vld [vmem:[%s2817 + $0x32] sm:$0xff]
      %v3220 = vld [vmem:[%s2817 + $0x3a] sm:$0xff]
      %v3221 = vld [vmem:[%s2817 + $0x4a] sm:$0xff]
      %v3222 = vld [vmem:[%s2817 + $0x52] sm:$0xff]
      %v3223 = vld [vmem:[%s2817 + $0x62] sm:$0xff]
      %v3224 = vld [vmem:[%s2817 + $0x6a] sm:$0xff]
      %v3225 = vld [vmem:[%s2817 + $0x7a] sm:$0xff]
      %v3226 = vld [vmem:[%s2817 + $0x82] sm:$0xff]
      %v3227 = vld [vmem:[%s2817 + $0x92] sm:$0xff]
      %v3228 = vld [vmem:[%s2817 + $0x9a] sm:$0xff]
      %v3229 = vld [vmem:[%s2817 + $0xaa] sm:$0xff]
      %v3230 = vld [vmem:[%s2817 + $0xb2] sm:$0xff]
      %v3231 = vld [vmem:[#allocation2] sm:$0xff]
      %v3232 = vld [vmem:[#allocation2 + $0x8] sm:$0xff]
      %v3233 = vld [vmem:[#allocation2 + $0x10] sm:$0xff]
      %v3234 = vld [vmem:[#allocation2 + $0x18] sm:$0xff]
      %v3235 = vld [vmem:[#allocation2 + $0x20] sm:$0xff]
      %v3236 = vld [vmem:[#allocation2 + $0x28] sm:$0xff]
      %v3237 = vld [vmem:[#allocation2 + $0x30] sm:$0xff]
      %v3238 = vld [vmem:[#allocation2 + $0x38] sm:$0xff]
      %v3239 = vld [vmem:[#allocation2 + $0x40] sm:$0xff]
      %v3240 = vld [vmem:[#allocation2 + $0x48] sm:$0xff]
      %v3241 = vld [vmem:[#allocation2 + $0x50] sm:$0xff]
      %v3242 = vld [vmem:[#allocation2 + $0x58] sm:$0xff]
      %v3243 = vld [vmem:[#allocation2 + $0x60] sm:$0xff]
      %v3244 = vld [vmem:[#allocation2 + $0x68] sm:$0xff]
      %v3245 = vld [vmem:[#allocation2 + $0x70] sm:$0xff]
      %v3246 = vld [vmem:[#allocation2 + $0x78] sm:$0xff]
      %v3247 = vpack.c.bf16 %v3216, %v3215
      %v3248 = vpack.c.bf16 %v3218, %v3217
      %v3249 = vpack.c.bf16 %v3220, %v3219
      %v3250 = vpack.c.bf16 %v3222, %v3221
      %v3251 = vpack.c.bf16 %v3224, %v3223
      %v3252 = vpack.c.bf16 %v3226, %v3225
      %v3253 = vpack.c.bf16 %v3228, %v3227
      %v3254 = vpack.c.bf16 %v3230, %v3229
      %s3255 = scalar_lea.vmem %s1, 14
      %v3256 = vld [vmem:[%s3255] sm:$0x3]
      %v3258 = vsel %vm407, %v3247, 0
      %v3261 = vsel %vm407, %v3248, 0
      %v3264 = vsel %vm407, %v3249, 0
      %v3267 = vsel %vm407, %v3250, 0
      %v3270 = vsel %vm407, %v3251, 0
      %v3273 = vsel %vm407, %v3252, 0
      %v3276 = vsel %vm407, %v3253, 0
      %v3279 = vsel %vm407, %v3254, 0
      %v3282 = vsel %vm506, %v3256, 0
      %3284 = vmatprep.subr.bf16.mxu0 0
      %3285 = vmatpush1.bf16.msra.mxu0 %v3282
      %3286 = vmatprep.subr.bf16.mxu0 0
      %3287 = vmatpush1.bf16.msra.mxu0 0
      %3288 = vmatprep.subr.bf16.mxu0 0
      %3289 = vmatpush1.bf16.msra.mxu0 0
      %3290 = vmatprep.subr.bf16.mxu0 0
      %3291 = vmatpush1.bf16.msra.mxu0 0
      %3292 = vmatprep.subr.bf16.mxu0 0
      %3293 = vmatpush1.bf16.msra.mxu0 0
      %3294 = vmatprep.subr.bf16.mxu0 0
      %3295 = vmatpush1.bf16.msra.mxu0 0
      %3296 = vmatprep.subr.bf16.mxu0 0
      %3297 = vmatpush1.bf16.msra.mxu0 0
      %3298 = vmatprep.subr.bf16.mxu0 0
      %3299 = vmatpush1.bf16.msra.mxu0 0
      %3300 = vmatprep.subr.bf16.mxu0 0
      %3301 = vmatpush1.bf16.msra.mxu0 0
      %3302 = vmatprep.subr.bf16.mxu0 0
      %3303 = vmatpush1.bf16.msra.mxu0 0
      %3304 = vmatprep.subr.bf16.mxu0 0
      %3305 = vmatpush1.bf16.msra.mxu0 0
      %3306 = vmatprep.subr.bf16.mxu0 0
      %3307 = vmatpush1.bf16.msra.mxu0 0
      %3308 = vmatprep.subr.bf16.mxu0 0
      %3309 = vmatpush1.bf16.msra.mxu0 0
      %3310 = vmatprep.subr.bf16.mxu0 0
      %3311 = vmatpush1.bf16.msra.mxu0 0
      %3312 = vmatprep.subr.bf16.mxu0 0
      %3313 = vmatpush1.bf16.msra.mxu0 0
      %3314 = vmatprep.subr.bf16.mxu0 0
      %3315 = vmatpush1.bf16.msra.mxu0 0
      %3316 = vmatprep.mubr.bf16.mxu0 0
      %3317 = vmatmul.mubr.bf16.gmra.mrb[0].mxu0 %v3258
      %v3318 = vpop.f32.mrb[0].mxu0
      %v3319 = vadd.f32 0.0, %v3318
      %v3320 = vpop.f32.mrb[0].mxu0
      %v3321 = vpop.f32.mrb[0].mxu0
      %v3322 = vadd.f32 0.0, %v3321
      %v3323 = vpop.f32.mrb[0].mxu0
      %3324 = vmatprep.mubr.bf16.mxu0 0
      %3325 = vmatmul.mubr.bf16.gmra.mrb[0].mxu0 %v3261
      %v3326 = vpop.f32.mrb[0].mxu0
      %v3327 = vadd.f32 0.0, %v3326
      %v3328 = vpop.f32.mrb[0].mxu0
      %v3329 = vpop.f32.mrb[0].mxu0
      %v3330 = vadd.f32 0.0, %v3329
      %v3331 = vpop.f32.mrb[0].mxu0
      %3332 = vmatprep.mubr.bf16.mxu0 0
      %3333 = vmatmul.mubr.bf16.gmra.mrb[0].mxu0 %v3264
      %v3334 = vpop.f32.mrb[0].mxu0
      %v3335 = vadd.f32 0.0, %v3334
      %v3336 = vpop.f32.mrb[0].mxu0
      %v3337 = vpop.f32.mrb[0].mxu0
      %v3338 = vadd.f32 0.0, %v3337
      %v3339 = vpop.f32.mrb[0].mxu0
      %3340 = vmatprep.mubr.bf16.mxu0 0
      %3341 = vmatmul.mubr.bf16.gmra.mrb[0].mxu0 %v3267
      %v3342 = vpop.f32.mrb[0].mxu0
      %v3343 = vadd.f32 0.0, %v3342
      %v3344 = vpop.f32.mrb[0].mxu0
      %v3345 = vpop.f32.mrb[0].mxu0
      %v3346 = vadd.f32 0.0, %v3345
      %v3347 = vpop.f32.mrb[0].mxu0
      %3348 = vmatprep.mubr.bf16.mxu0 0
      %3349 = vmatmul.mubr.bf16.gmra.mrb[0].mxu0 %v3270
      %v3350 = vpop.f32.mrb[0].mxu0
      %v3351 = vadd.f32 0.0, %v3350
      %v3352 = vpop.f32.mrb[0].mxu0
      %v3353 = vpop.f32.mrb[0].mxu0
      %v3354 = vadd.f32 0.0, %v3353
      %v3355 = vpop.f32.mrb[0].mxu0
      %3356 = vmatprep.mubr.bf16.mxu0 0
      %3357 = vmatmul.mubr.bf16.gmra.mrb[0].mxu0 %v3273
      %v3358 = vpop.f32.mrb[0].mxu0
      %v3359 = vadd.f32 0.0, %v3358
      %v3360 = vpop.f32.mrb[0].mxu0
      %v3361 = vpop.f32.mrb[0].mxu0
      %v3362 = vadd.f32 0.0, %v3361
      %v3363 = vpop.f32.mrb[0].mxu0
      %3364 = vmatprep.mubr.bf16.mxu0 0
      %3365 = vmatmul.mubr.bf16.gmra.mrb[0].mxu0 %v3276
      %v3366 = vpop.f32.mrb[0].mxu0
      %v3367 = vadd.f32 0.0, %v3366
      %v3368 = vpop.f32.mrb[0].mxu0
      %v3369 = vpop.f32.mrb[0].mxu0
      %v3370 = vadd.f32 0.0, %v3369
      %v3371 = vpop.f32.mrb[0].mxu0
      %3372 = vmatprep.mubr.bf16.mxu0 0
      %3373 = vmatmul.mubr.bf16.gmra.mrb[0].mxu0 %v3279
      %v3374 = vpop.f32.mrb[0].mxu0
      %v3375 = vadd.f32 0.0, %v3374
      %v3376 = vpop.f32.mrb[0].mxu0
      %v3377 = vpop.f32.mrb[0].mxu0
      %v3378 = vadd.f32 0.0, %v3377
      %v3379 = vpop.f32.mrb[0].mxu0
      %3380 = vdwg.mxu0
      %v3381 = vadd.f32 %v3231, %v3319
      %v3382 = vadd.f32 %v3232, %v3322
      %v3383 = vadd.f32 %v3233, %v3327
      %v3384 = vadd.f32 %v3234, %v3330
      %v3385 = vadd.f32 %v3235, %v3335
      %v3386 = vadd.f32 %v3236, %v3338
      %v3387 = vadd.f32 %v3237, %v3343
      %v3388 = vadd.f32 %v3238, %v3346
      %v3389 = vadd.f32 %v3239, %v3351
      %v3390 = vadd.f32 %v3240, %v3354
      %v3391 = vadd.f32 %v3241, %v3359
      %v3392 = vadd.f32 %v3242, %v3362
      %v3393 = vadd.f32 %v3243, %v3367
      %v3394 = vadd.f32 %v3244, %v3370
      %v3395 = vadd.f32 %v3245, %v3375
      %v3396 = vadd.f32 %v3246, %v3378
      %3397 = vst.msk [vmem:[#allocation2] sm:$0xff] %vm407, %v3381
      %3398 = vst.msk [vmem:[#allocation2 + $0x8] sm:$0xff] %vm407, %v3382
      %3399 = vst.msk [vmem:[#allocation2 + $0x10] sm:$0xff] %vm407, %v3383
      %3400 = vst.msk [vmem:[#allocation2 + $0x18] sm:$0xff] %vm407, %v3384
      %3401 = vst.msk [vmem:[#allocation2 + $0x20] sm:$0xff] %vm407, %v3385
      %3402 = vst.msk [vmem:[#allocation2 + $0x28] sm:$0xff] %vm407, %v3386
      %3403 = vst.msk [vmem:[#allocation2 + $0x30] sm:$0xff] %vm407, %v3387
      %3404 = vst.msk [vmem:[#allocation2 + $0x38] sm:$0xff] %vm407, %v3388
      %3405 = vst.msk [vmem:[#allocation2 + $0x40] sm:$0xff] %vm407, %v3389
      %3406 = vst.msk [vmem:[#allocation2 + $0x48] sm:$0xff] %vm407, %v3390
      %3407 = vst.msk [vmem:[#allocation2 + $0x50] sm:$0xff] %vm407, %v3391
      %3408 = vst.msk [vmem:[#allocation2 + $0x58] sm:$0xff] %vm407, %v3392
      %3409 = vst.msk [vmem:[#allocation2 + $0x60] sm:$0xff] %vm407, %v3393
      %3410 = vst.msk [vmem:[#allocation2 + $0x68] sm:$0xff] %vm407, %v3394
      %3411 = vst.msk [vmem:[#allocation2 + $0x70] sm:$0xff] %vm407, %v3395
      %3412 = vst.msk [vmem:[#allocation2 + $0x78] sm:$0xff] %vm407, %v3396
      %v3413 = vld [vmem:[%s3016 + $0x2] sm:$0xff]
      %v3414 = vld [vmem:[%s3016 + $0xa] sm:$0xff]
      %v3415 = vld [vmem:[%s3016 + $0x1a] sm:$0xff]
      %v3416 = vld [vmem:[%s3016 + $0x22] sm:$0xff]
      %v3417 = vld [vmem:[%s3016 + $0x32] sm:$0xff]
      %v3418 = vld [vmem:[%s3016 + $0x3a] sm:$0xff]
      %v3419 = vld [vmem:[%s3016 + $0x4a] sm:$0xff]
      %v3420 = vld [vmem:[%s3016 + $0x52] sm:$0xff]
      %v3421 = vld [vmem:[%s3016 + $0x62] sm:$0xff]
      %v3422 = vld [vmem:[%s3016 + $0x6a] sm:$0xff]
      %v3423 = vld [vmem:[%s3016 + $0x7a] sm:$0xff]
      %v3424 = vld [vmem:[%s3016 + $0x82] sm:$0xff]
      %v3425 = vld [vmem:[%s3016 + $0x92] sm:$0xff]
      %v3426 = vld [vmem:[%s3016 + $0x9a] sm:$0xff]
      %v3427 = vld [vmem:[%s3016 + $0xaa] sm:$0xff]
      %v3428 = vld [vmem:[%s3016 + $0xb2] sm:$0xff]
      %v3429 = vld [vmem:[#allocation3] sm:$0xff]
      %v3430 = vld [vmem:[#allocation3 + $0x8] sm:$0xff]
      %v3431 = vld [vmem:[#allocation3 + $0x10] sm:$0xff]
      %v3432 = vld [vmem:[#allocation3 + $0x18] sm:$0xff]
      %v3433 = vld [vmem:[#allocation3 + $0x20] sm:$0xff]
      %v3434 = vld [vmem:[#allocation3 + $0x28] sm:$0xff]
      %v3435 = vld [vmem:[#allocation3 + $0x30] sm:$0xff]
      %v3436 = vld [vmem:[#allocation3 + $0x38] sm:$0xff]
      %v3437 = vld [vmem:[#allocation3 + $0x40] sm:$0xff]
      %v3438 = vld [vmem:[#allocation3 + $0x48] sm:$0xff]
      %v3439 = vld [vmem:[#allocation3 + $0x50] sm:$0xff]
      %v3440 = vld [vmem:[#allocation3 + $0x58] sm:$0xff]
      %v3441 = vld [vmem:[#allocation3 + $0x60] sm:$0xff]
      %v3442 = vld [vmem:[#allocation3 + $0x68] sm:$0xff]
      %v3443 = vld [vmem:[#allocation3 + $0x70] sm:$0xff]
      %v3444 = vld [vmem:[#allocation3 + $0x78] sm:$0xff]
      %v3445 = vpack.c.bf16 %v3414, %v3413
      %v3446 = vpack.c.bf16 %v3416, %v3415
      %v3447 = vpack.c.bf16 %v3418, %v3417
      %v3448 = vpack.c.bf16 %v3420, %v3419
      %v3449 = vpack.c.bf16 %v3422, %v3421
      %v3450 = vpack.c.bf16 %v3424, %v3423
      %v3451 = vpack.c.bf16 %v3426, %v3425
      %v3452 = vpack.c.bf16 %v3428, %v3427
      %s3453 = scalar_lea.vmem %s2, 14
      %v3454 = vld [vmem:[%s3453] sm:$0x3]
      %v3456 = vsel %vm407, %v3445, 0
      %v3459 = vsel %vm407, %v3446, 0
      %v3462 = vsel %vm407, %v3447, 0
      %v3465 = vsel %vm407, %v3448, 0
      %v3468 = vsel %vm407, %v3449, 0
      %v3471 = vsel %vm407, %v3450, 0
      %v3474 = vsel %vm407, %v3451, 0
      %v3477 = vsel %vm407, %v3452, 0
      %v3480 = vsel %vm506, %v3454, 0
      %3482 = vmatprep.subr.bf16.mxu0 0
      %3483 = vmatpush1.bf16.msra.mxu0 %v3480
      %3484 = vmatprep.subr.bf16.mxu0 0
      %3485 = vmatpush1.bf16.msra.mxu0 0
      %3486 = vmatprep.subr.bf16.mxu0 0
      %3487 = vmatpush1.bf16.msra.mxu0 0
      %3488 = vmatprep.subr.bf16.mxu0 0
      %3489 = vmatpush1.bf16.msra.mxu0 0
      %3490 = vmatprep.subr.bf16.mxu0 0
      %3491 = vmatpush1.bf16.msra.mxu0 0
      %3492 = vmatprep.subr.bf16.mxu0 0
      %3493 = vmatpush1.bf16.msra.mxu0 0
      %3494 = vmatprep.subr.bf16.mxu0 0
      %3495 = vmatpush1.bf16.msra.mxu0 0
      %3496 = vmatprep.subr.bf16.mxu0 0
      %3497 = vmatpush1.bf16.msra.mxu0 0
      %3498 = vmatprep.subr.bf16.mxu0 0
      %3499 = vmatpush1.bf16.msra.mxu0 0
      %3500 = vmatprep.subr.bf16.mxu0 0
      %3501 = vmatpush1.bf16.msra.mxu0 0
      %3502 = vmatprep.subr.bf16.mxu0 0
      %3503 = vmatpush1.bf16.msra.mxu0 0
      %3504 = vmatprep.subr.bf16.mxu0 0
      %3505 = vmatpush1.bf16.msra.mxu0 0
      %3506 = vmatprep.subr.bf16.mxu0 0
      %3507 = vmatpush1.bf16.msra.mxu0 0
      %3508 = vmatprep.subr.bf16.mxu0 0
      %3509 = vmatpush1.bf16.msra.mxu0 0
      %3510 = vmatprep.subr.bf16.mxu0 0
      %3511 = vmatpush1.bf16.msra.mxu0 0
      %3512 = vmatprep.subr.bf16.mxu0 0
      %3513 = vmatpush1.bf16.msra.mxu0 0
      %3514 = vmatprep.mubr.bf16.mxu0 0
      %3515 = vmatmul.mubr.bf16.gmra.mrb[0].mxu0 %v3456
      %v3516 = vpop.f32.mrb[0].mxu0
      %v3517 = vadd.f32 0.0, %v3516
      %v3518 = vpop.f32.mrb[0].mxu0
      %v3519 = vpop.f32.mrb[0].mxu0
      %v3520 = vadd.f32 0.0, %v3519
      %v3521 = vpop.f32.mrb[0].mxu0
      %3522 = vmatprep.mubr.bf16.mxu0 0
      %3523 = vmatmul.mubr.bf16.gmra.mrb[0].mxu0 %v3459
      %v3524 = vpop.f32.mrb[0].mxu0
      %v3525 = vadd.f32 0.0, %v3524
      %v3526 = vpop.f32.mrb[0].mxu0
      %v3527 = vpop.f32.mrb[0].mxu0
      %v3528 = vadd.f32 0.0, %v3527
      %v3529 = vpop.f32.mrb[0].mxu0
      %3530 = vmatprep.mubr.bf16.mxu0 0
      %3531 = vmatmul.mubr.bf16.gmra.mrb[0].mxu0 %v3462
      %v3532 = vpop.f32.mrb[0].mxu0
      %v3533 = vadd.f32 0.0, %v3532
      %v3534 = vpop.f32.mrb[0].mxu0
      %v3535 = vpop.f32.mrb[0].mxu0
      %v3536 = vadd.f32 0.0, %v3535
      %v3537 = vpop.f32.mrb[0].mxu0
      %3538 = vmatprep.mubr.bf16.mxu0 0
      %3539 = vmatmul.mubr.bf16.gmra.mrb[0].mxu0 %v3465
      %v3540 = vpop.f32.mrb[0].mxu0
      %v3541 = vadd.f32 0.0, %v3540
      %v3542 = vpop.f32.mrb[0].mxu0
      %v3543 = vpop.f32.mrb[0].mxu0
      %v3544 = vadd.f32 0.0, %v3543
      %v3545 = vpop.f32.mrb[0].mxu0
      %3546 = vmatprep.mubr.bf16.mxu0 0
      %3547 = vmatmul.mubr.bf16.gmra.mrb[0].mxu0 %v3468
      %v3548 = vpop.f32.mrb[0].mxu0
      %v3549 = vadd.f32 0.0, %v3548
      %v3550 = vpop.f32.mrb[0].mxu0
      %v3551 = vpop.f32.mrb[0].mxu0
      %v3552 = vadd.f32 0.0, %v3551
      %v3553 = vpop.f32.mrb[0].mxu0
      %3554 = vmatprep.mubr.bf16.mxu0 0
      %3555 = vmatmul.mubr.bf16.gmra.mrb[0].mxu0 %v3471
      %v3556 = vpop.f32.mrb[0].mxu0
      %v3557 = vadd.f32 0.0, %v3556
      %v3558 = vpop.f32.mrb[0].mxu0
      %v3559 = vpop.f32.mrb[0].mxu0
      %v3560 = vadd.f32 0.0, %v3559
      %v3561 = vpop.f32.mrb[0].mxu0
      %3562 = vmatprep.mubr.bf16.mxu0 0
      %3563 = vmatmul.mubr.bf16.gmra.mrb[0].mxu0 %v3474
      %v3564 = vpop.f32.mrb[0].mxu0
      %v3565 = vadd.f32 0.0, %v3564
      %v3566 = vpop.f32.mrb[0].mxu0
      %v3567 = vpop.f32.mrb[0].mxu0
      %v3568 = vadd.f32 0.0, %v3567
      %v3569 = vpop.f32.mrb[0].mxu0
      %3570 = vmatprep.mubr.bf16.mxu0 0
      %3571 = vmatmul.mubr.bf16.gmra.mrb[0].mxu0 %v3477
      %v3572 = vpop.f32.mrb[0].mxu0
      %v3573 = vadd.f32 0.0, %v3572
      %v3574 = vpop.f32.mrb[0].mxu0
      %v3575 = vpop.f32.mrb[0].mxu0
      %v3576 = vadd.f32 0.0, %v3575
      %v3577 = vpop.f32.mrb[0].mxu0
      %3578 = vdwg.mxu0
      %v3579 = vadd.f32 %v3429, %v3517
      %v3580 = vadd.f32 %v3430, %v3520
      %v3581 = vadd.f32 %v3431, %v3525
      %v3582 = vadd.f32 %v3432, %v3528
      %v3583 = vadd.f32 %v3433, %v3533
      %v3584 = vadd.f32 %v3434, %v3536
      %v3585 = vadd.f32 %v3435, %v3541
      %v3586 = vadd.f32 %v3436, %v3544
      %v3587 = vadd.f32 %v3437, %v3549
      %v3588 = vadd.f32 %v3438, %v3552
      %v3589 = vadd.f32 %v3439, %v3557
      %v3590 = vadd.f32 %v3440, %v3560
      %v3591 = vadd.f32 %v3441, %v3565
      %v3592 = vadd.f32 %v3442, %v3568
      %v3593 = vadd.f32 %v3443, %v3573
      %v3594 = vadd.f32 %v3444, %v3576
      %3595 = vst.msk [vmem:[#allocation3] sm:$0xff] %vm407, %v3579
      %3596 = vst.msk [vmem:[#allocation3 + $0x8] sm:$0xff] %vm407, %v3580
      %3597 = vst.msk [vmem:[#allocation3 + $0x10] sm:$0xff] %vm407, %v3581
      %3598 = vst.msk [vmem:[#allocation3 + $0x18] sm:$0xff] %vm407, %v3582
      %3599 = vst.msk [vmem:[#allocation3 + $0x20] sm:$0xff] %vm407, %v3583
      %3600 = vst.msk [vmem:[#allocation3 + $0x28] sm:$0xff] %vm407, %v3584
      %3601 = vst.msk [vmem:[#allocation3 + $0x30] sm:$0xff] %vm407, %v3585
      %3602 = vst.msk [vmem:[#allocation3 + $0x38] sm:$0xff] %vm407, %v3586
      %3603 = vst.msk [vmem:[#allocation3 + $0x40] sm:$0xff] %vm407, %v3587
      %3604 = vst.msk [vmem:[#allocation3 + $0x48] sm:$0xff] %vm407, %v3588
      %3605 = vst.msk [vmem:[#allocation3 + $0x50] sm:$0xff] %vm407, %v3589
      %3606 = vst.msk [vmem:[#allocation3 + $0x58] sm:$0xff] %vm407, %v3590
      %3607 = vst.msk [vmem:[#allocation3 + $0x60] sm:$0xff] %vm407, %v3591
      %3608 = vst.msk [vmem:[#allocation3 + $0x68] sm:$0xff] %vm407, %v3592
      %3609 = vst.msk [vmem:[#allocation3 + $0x70] sm:$0xff] %vm407, %v3593
      %3610 = vst.msk [vmem:[#allocation3 + $0x78] sm:$0xff] %vm407, %v3594
      %v3611 = vld [vmem:[%s2817 + $0x3] sm:$0xff]
      %v3612 = vld [vmem:[%s2817 + $0xb] sm:$0xff]
      %v3613 = vld [vmem:[%s2817 + $0x1b] sm:$0xff]
      %v3614 = vld [vmem:[%s2817 + $0x23] sm:$0xff]
      %v3615 = vld [vmem:[%s2817 + $0x33] sm:$0xff]
      %v3616 = vld [vmem:[%s2817 + $0x3b] sm:$0xff]
      %v3617 = vld [vmem:[%s2817 + $0x4b] sm:$0xff]
      %v3618 = vld [vmem:[%s2817 + $0x53] sm:$0xff]
      %v3619 = vld [vmem:[%s2817 + $0x63] sm:$0xff]
      %v3620 = vld [vmem:[%s2817 + $0x6b] sm:$0xff]
      %v3621 = vld [vmem:[%s2817 + $0x7b] sm:$0xff]
      %v3622 = vld [vmem:[%s2817 + $0x83] sm:$0xff]
      %v3623 = vld [vmem:[%s2817 + $0x93] sm:$0xff]
      %v3624 = vld [vmem:[%s2817 + $0x9b] sm:$0xff]
      %v3625 = vld [vmem:[%s2817 + $0xab] sm:$0xff]
      %v3626 = vld [vmem:[%s2817 + $0xb3] sm:$0xff]
      %v3627 = vld [vmem:[#allocation2] sm:$0xff]
      %v3628 = vld [vmem:[#allocation2 + $0x8] sm:$0xff]
      %v3629 = vld [vmem:[#allocation2 + $0x10] sm:$0xff]
      %v3630 = vld [vmem:[#allocation2 + $0x18] sm:$0xff]
      %v3631 = vld [vmem:[#allocation2 + $0x20] sm:$0xff]
      %v3632 = vld [vmem:[#allocation2 + $0x28] sm:$0xff]
      %v3633 = vld [vmem:[#allocation2 + $0x30] sm:$0xff]
      %v3634 = vld [vmem:[#allocation2 + $0x38] sm:$0xff]
      %v3635 = vld [vmem:[#allocation2 + $0x40] sm:$0xff]
      %v3636 = vld [vmem:[#allocation2 + $0x48] sm:$0xff]
      %v3637 = vld [vmem:[#allocation2 + $0x50] sm:$0xff]
      %v3638 = vld [vmem:[#allocation2 + $0x58] sm:$0xff]
      %v3639 = vld [vmem:[#allocation2 + $0x60] sm:$0xff]
      %v3640 = vld [vmem:[#allocation2 + $0x68] sm:$0xff]
      %v3641 = vld [vmem:[#allocation2 + $0x70] sm:$0xff]
      %v3642 = vld [vmem:[#allocation2 + $0x78] sm:$0xff]
      %v3643 = vpack.c.bf16 %v3612, %v3611
      %v3644 = vpack.c.bf16 %v3614, %v3613
      %v3645 = vpack.c.bf16 %v3616, %v3615
      %v3646 = vpack.c.bf16 %v3618, %v3617
      %v3647 = vpack.c.bf16 %v3620, %v3619
      %v3648 = vpack.c.bf16 %v3622, %v3621
      %v3649 = vpack.c.bf16 %v3624, %v3623
      %v3650 = vpack.c.bf16 %v3626, %v3625
      %s3651 = scalar_lea.vmem %s1, 16
      %v3652 = vld [vmem:[%s3651] sm:$0x3]
      %v3654 = vsel %vm407, %v3643, 0
      %v3657 = vsel %vm407, %v3644, 0
      %v3660 = vsel %vm407, %v3645, 0
      %v3663 = vsel %vm407, %v3646, 0
      %v3666 = vsel %vm407, %v3647, 0
      %v3669 = vsel %vm407, %v3648, 0
      %v3672 = vsel %vm407, %v3649, 0
      %v3675 = vsel %vm407, %v3650, 0
      %v3678 = vsel %vm506, %v3652, 0
      %3680 = vmatprep.subr.bf16.mxu0 0
      %3681 = vmatpush1.bf16.msra.mxu0 %v3678
      %3682 = vmatprep.subr.bf16.mxu0 0
      %3683 = vmatpush1.bf16.msra.mxu0 0
      %3684 = vmatprep.subr.bf16.mxu0 0
      %3685 = vmatpush1.bf16.msra.mxu0 0
      %3686 = vmatprep.subr.bf16.mxu0 0
      %3687 = vmatpush1.bf16.msra.mxu0 0
      %3688 = vmatprep.subr.bf16.mxu0 0
      %3689 = vmatpush1.bf16.msra.mxu0 0
      %3690 = vmatprep.subr.bf16.mxu0 0
      %3691 = vmatpush1.bf16.msra.mxu0 0
      %3692 = vmatprep.subr.bf16.mxu0 0
      %3693 = vmatpush1.bf16.msra.mxu0 0
      %3694 = vmatprep.subr.bf16.mxu0 0
      %3695 = vmatpush1.bf16.msra.mxu0 0
      %3696 = vmatprep.subr.bf16.mxu0 0
      %3697 = vmatpush1.bf16.msra.mxu0 0
      %3698 = vmatprep.subr.bf16.mxu0 0
      %3699 = vmatpush1.bf16.msra.mxu0 0
      %3700 = vmatprep.subr.bf16.mxu0 0
      %3701 = vmatpush1.bf16.msra.mxu0 0
      %3702 = vmatprep.subr.bf16.mxu0 0
      %3703 = vmatpush1.bf16.msra.mxu0 0
      %3704 = vmatprep.subr.bf16.mxu0 0
      %3705 = vmatpush1.bf16.msra.mxu0 0
      %3706 = vmatprep.subr.bf16.mxu0 0
      %3707 = vmatpush1.bf16.msra.mxu0 0
      %3708 = vmatprep.subr.bf16.mxu0 0
      %3709 = vmatpush1.bf16.msra.mxu0 0
      %3710 = vmatprep.subr.bf16.mxu0 0
      %3711 = vmatpush1.bf16.msra.mxu0 0
      %3712 = vmatprep.mubr.bf16.mxu0 0
      %3713 = vmatmul.mubr.bf16.gmra.mrb[0].mxu0 %v3654
      %v3714 = vpop.f32.mrb[0].mxu0
      %v3715 = vadd.f32 0.0, %v3714
      %v3716 = vpop.f32.mrb[0].mxu0
      %v3717 = vpop.f32.mrb[0].mxu0
      %v3718 = vadd.f32 0.0, %v3717
      %v3719 = vpop.f32.mrb[0].mxu0
      %3720 = vmatprep.mubr.bf16.mxu0 0
      %3721 = vmatmul.mubr.bf16.gmra.mrb[0].mxu0 %v3657
      %v3722 = vpop.f32.mrb[0].mxu0
      %v3723 = vadd.f32 0.0, %v3722
      %v3724 = vpop.f32.mrb[0].mxu0
      %v3725 = vpop.f32.mrb[0].mxu0
      %v3726 = vadd.f32 0.0, %v3725
      %v3727 = vpop.f32.mrb[0].mxu0
      %3728 = vmatprep.mubr.bf16.mxu0 0
      %3729 = vmatmul.mubr.bf16.gmra.mrb[0].mxu0 %v3660
      %v3730 = vpop.f32.mrb[0].mxu0
      %v3731 = vadd.f32 0.0, %v3730
      %v3732 = vpop.f32.mrb[0].mxu0
      %v3733 = vpop.f32.mrb[0].mxu0
      %v3734 = vadd.f32 0.0, %v3733
      %v3735 = vpop.f32.mrb[0].mxu0
      %3736 = vmatprep.mubr.bf16.mxu0 0
      %3737 = vmatmul.mubr.bf16.gmra.mrb[0].mxu0 %v3663
      %v3738 = vpop.f32.mrb[0].mxu0
      %v3739 = vadd.f32 0.0, %v3738
      %v3740 = vpop.f32.mrb[0].mxu0
      %v3741 = vpop.f32.mrb[0].mxu0
      %v3742 = vadd.f32 0.0, %v3741
      %v3743 = vpop.f32.mrb[0].mxu0
      %3744 = vmatprep.mubr.bf16.mxu0 0
      %3745 = vmatmul.mubr.bf16.gmra.mrb[0].mxu0 %v3666
      %v3746 = vpop.f32.mrb[0].mxu0
      %v3747 = vadd.f32 0.0, %v3746
      %v3748 = vpop.f32.mrb[0].mxu0
      %v3749 = vpop.f32.mrb[0].mxu0
      %v3750 = vadd.f32 0.0, %v3749
      %v3751 = vpop.f32.mrb[0].mxu0
      %3752 = vmatprep.mubr.bf16.mxu0 0
      %3753 = vmatmul.mubr.bf16.gmra.mrb[0].mxu0 %v3669
      %v3754 = vpop.f32.mrb[0].mxu0
      %v3755 = vadd.f32 0.0, %v3754
      %v3756 = vpop.f32.mrb[0].mxu0
      %v3757 = vpop.f32.mrb[0].mxu0
      %v3758 = vadd.f32 0.0, %v3757
      %v3759 = vpop.f32.mrb[0].mxu0
      %3760 = vmatprep.mubr.bf16.mxu0 0
      %3761 = vmatmul.mubr.bf16.gmra.mrb[0].mxu0 %v3672
      %v3762 = vpop.f32.mrb[0].mxu0
      %v3763 = vadd.f32 0.0, %v3762
      %v3764 = vpop.f32.mrb[0].mxu0
      %v3765 = vpop.f32.mrb[0].mxu0
      %v3766 = vadd.f32 0.0, %v3765
      %v3767 = vpop.f32.mrb[0].mxu0
      %3768 = vmatprep.mubr.bf16.mxu0 0
      %3769 = vmatmul.mubr.bf16.gmra.mrb[0].mxu0 %v3675
      %v3770 = vpop.f32.mrb[0].mxu0
      %v3771 = vadd.f32 0.0, %v3770
      %v3772 = vpop.f32.mrb[0].mxu0
      %v3773 = vpop.f32.mrb[0].mxu0
      %v3774 = vadd.f32 0.0, %v3773
      %v3775 = vpop.f32.mrb[0].mxu0
      %3776 = vdwg.mxu0
      %v3777 = vadd.f32 %v3627, %v3715
      %v3778 = vadd.f32 %v3628, %v3718
      %v3779 = vadd.f32 %v3629, %v3723
      %v3780 = vadd.f32 %v3630, %v3726
      %v3781 = vadd.f32 %v3631, %v3731
      %v3782 = vadd.f32 %v3632, %v3734
      %v3783 = vadd.f32 %v3633, %v3739
      %v3784 = vadd.f32 %v3634, %v3742
      %v3785 = vadd.f32 %v3635, %v3747
      %v3786 = vadd.f32 %v3636, %v3750
      %v3787 = vadd.f32 %v3637, %v3755
      %v3788 = vadd.f32 %v3638, %v3758
      %v3789 = vadd.f32 %v3639, %v3763
      %v3790 = vadd.f32 %v3640, %v3766
      %v3791 = vadd.f32 %v3641, %v3771
      %v3792 = vadd.f32 %v3642, %v3774
      %3793 = vst.msk [vmem:[#allocation2] sm:$0xff] %vm407, %v3777
      %3794 = vst.msk [vmem:[#allocation2 + $0x8] sm:$0xff] %vm407, %v3778
      %3795 = vst.msk [vmem:[#allocation2 + $0x10] sm:$0xff] %vm407, %v3779
      %3796 = vst.msk [vmem:[#allocation2 + $0x18] sm:$0xff] %vm407, %v3780
      %3797 = vst.msk [vmem:[#allocation2 + $0x20] sm:$0xff] %vm407, %v3781
      %3798 = vst.msk [vmem:[#allocation2 + $0x28] sm:$0xff] %vm407, %v3782
      %3799 = vst.msk [vmem:[#allocation2 + $0x30] sm:$0xff] %vm407, %v3783
      %3800 = vst.msk [vmem:[#allocation2 + $0x38] sm:$0xff] %vm407, %v3784
      %3801 = vst.msk [vmem:[#allocation2 + $0x40] sm:$0xff] %vm407, %v3785
      %3802 = vst.msk [vmem:[#allocation2 + $0x48] sm:$0xff] %vm407, %v3786
      %3803 = vst.msk [vmem:[#allocation2 + $0x50] sm:$0xff] %vm407, %v3787
      %3804 = vst.msk [vmem:[#allocation2 + $0x58] sm:$0xff] %vm407, %v3788
      %3805 = vst.msk [vmem:[#allocation2 + $0x60] sm:$0xff] %vm407, %v3789
      %3806 = vst.msk [vmem:[#allocation2 + $0x68] sm:$0xff] %vm407, %v3790
      %3807 = vst.msk [vmem:[#allocation2 + $0x70] sm:$0xff] %vm407, %v3791
      %3808 = vst.msk [vmem:[#allocation2 + $0x78] sm:$0xff] %vm407, %v3792
      %v3809 = vld [vmem:[%s3016 + $0x4] sm:$0xff]
      %v3810 = vld [vmem:[%s3016 + $0xc] sm:$0xff]
      %v3811 = vld [vmem:[%s3016 + $0x1c] sm:$0xff]
      %v3812 = vld [vmem:[%s3016 + $0x24] sm:$0xff]
      %v3813 = vld [vmem:[%s3016 + $0x34] sm:$0xff]
      %v3814 = vld [vmem:[%s3016 + $0x3c] sm:$0xff]
      %v3815 = vld [vmem:[%s3016 + $0x4c] sm:$0xff]
      %v3816 = vld [vmem:[%s3016 + $0x54] sm:$0xff]
      %v3817 = vld [vmem:[%s3016 + $0x64] sm:$0xff]
      %v3818 = vld [vmem:[%s3016 + $0x6c] sm:$0xff]
      %v3819 = vld [vmem:[%s3016 + $0x7c] sm:$0xff]
      %v3820 = vld [vmem:[%s3016 + $0x84] sm:$0xff]
      %v3821 = vld [vmem:[%s3016 + $0x94] sm:$0xff]
      %v3822 = vld [vmem:[%s3016 + $0x9c] sm:$0xff]
      %v3823 = vld [vmem:[%s3016 + $0xac] sm:$0xff]
      %v3824 = vld [vmem:[%s3016 + $0xb4] sm:$0xff]
      %v3825 = vld [vmem:[#allocation3] sm:$0xff]
      %v3826 = vld [vmem:[#allocation3 + $0x8] sm:$0xff]
      %v3827 = vld [vmem:[#allocation3 + $0x10] sm:$0xff]
      %v3828 = vld [vmem:[#allocation3 + $0x18] sm:$0xff]
      %v3829 = vld [vmem:[#allocation3 + $0x20] sm:$0xff]
      %v3830 = vld [vmem:[#allocation3 + $0x28] sm:$0xff]
      %v3831 = vld [vmem:[#allocation3 + $0x30] sm:$0xff]
      %v3832 = vld [vmem:[#allocation3 + $0x38] sm:$0xff]
      %v3833 = vld [vmem:[#allocation3 + $0x40] sm:$0xff]
      %v3834 = vld [vmem:[#allocation3 + $0x48] sm:$0xff]
      %v3835 = vld [vmem:[#allocation3 + $0x50] sm:$0xff]
      %v3836 = vld [vmem:[#allocation3 + $0x58] sm:$0xff]
      %v3837 = vld [vmem:[#allocation3 + $0x60] sm:$0xff]
      %v3838 = vld [vmem:[#allocation3 + $0x68] sm:$0xff]
      %v3839 = vld [vmem:[#allocation3 + $0x70] sm:$0xff]
      %v3840 = vld [vmem:[#allocation3 + $0x78] sm:$0xff]
      %v3841 = vpack.c.bf16 %v3810, %v3809
      %v3842 = vpack.c.bf16 %v3812, %v3811
      %v3843 = vpack.c.bf16 %v3814, %v3813
      %v3844 = vpack.c.bf16 %v3816, %v3815
      %v3845 = vpack.c.bf16 %v3818, %v3817
      %v3846 = vpack.c.bf16 %v3820, %v3819
      %v3847 = vpack.c.bf16 %v3822, %v3821
      %v3848 = vpack.c.bf16 %v3824, %v3823
      %s3849 = scalar_lea.vmem %s2, 16
      %v3850 = vld [vmem:[%s3849] sm:$0x3]
      %v3852 = vsel %vm407, %v3841, 0
      %v3855 = vsel %vm407, %v3842, 0
      %v3858 = vsel %vm407, %v3843, 0
      %v3861 = vsel %vm407, %v3844, 0
      %v3864 = vsel %vm407, %v3845, 0
      %v3867 = vsel %vm407, %v3846, 0
      %v3870 = vsel %vm407, %v3847, 0
      %v3873 = vsel %vm407, %v3848, 0
      %v3876 = vsel %vm506, %v3850, 0
      %3878 = vmatprep.subr.bf16.mxu0 0
      %3879 = vmatpush1.bf16.msra.mxu0 %v3876
      %3880 = vmatprep.subr.bf16.mxu0 0
      %3881 = vmatpush1.bf16.msra.mxu0 0
      %3882 = vmatprep.subr.bf16.mxu0 0
      %3883 = vmatpush1.bf16.msra.mxu0 0
      %3884 = vmatprep.subr.bf16.mxu0 0
      %3885 = vmatpush1.bf16.msra.mxu0 0
      %3886 = vmatprep.subr.bf16.mxu0 0
      %3887 = vmatpush1.bf16.msra.mxu0 0
      %3888 = vmatprep.subr.bf16.mxu0 0
      %3889 = vmatpush1.bf16.msra.mxu0 0
      %3890 = vmatprep.subr.bf16.mxu0 0
      %3891 = vmatpush1.bf16.msra.mxu0 0
      %3892 = vmatprep.subr.bf16.mxu0 0
      %3893 = vmatpush1.bf16.msra.mxu0 0
      %3894 = vmatprep.subr.bf16.mxu0 0
      %3895 = vmatpush1.bf16.msra.mxu0 0
      %3896 = vmatprep.subr.bf16.mxu0 0
      %3897 = vmatpush1.bf16.msra.mxu0 0
      %3898 = vmatprep.subr.bf16.mxu0 0
      %3899 = vmatpush1.bf16.msra.mxu0 0
      %3900 = vmatprep.subr.bf16.mxu0 0
      %3901 = vmatpush1.bf16.msra.mxu0 0
      %3902 = vmatprep.subr.bf16.mxu0 0
      %3903 = vmatpush1.bf16.msra.mxu0 0
      %3904 = vmatprep.subr.bf16.mxu0 0
      %3905 = vmatpush1.bf16.msra.mxu0 0
      %3906 = vmatprep.subr.bf16.mxu0 0
      %3907 = vmatpush1.bf16.msra.mxu0 0
      %3908 = vmatprep.subr.bf16.mxu0 0
      %3909 = vmatpush1.bf16.msra.mxu0 0
      %3910 = vmatprep.mubr.bf16.mxu0 0
      %3911 = vmatmul.mubr.bf16.gmra.mrb[0].mxu0 %v3852
      %v3912 = vpop.f32.mrb[0].mxu0
      %v3913 = vadd.f32 0.0, %v3912
      %v3914 = vpop.f32.mrb[0].mxu0
      %v3915 = vpop.f32.mrb[0].mxu0
      %v3916 = vadd.f32 0.0, %v3915
      %v3917 = vpop.f32.mrb[0].mxu0
      %3918 = vmatprep.mubr.bf16.mxu0 0
      %3919 = vmatmul.mubr.bf16.gmra.mrb[0].mxu0 %v3855
      %v3920 = vpop.f32.mrb[0].mxu0
      %v3921 = vadd.f32 0.0, %v3920
      %v3922 = vpop.f32.mrb[0].mxu0
      %v3923 = vpop.f32.mrb[0].mxu0
      %v3924 = vadd.f32 0.0, %v3923
      %v3925 = vpop.f32.mrb[0].mxu0
      %3926 = vmatprep.mubr.bf16.mxu0 0
      %3927 = vmatmul.mubr.bf16.gmra.mrb[0].mxu0 %v3858
      %v3928 = vpop.f32.mrb[0].mxu0
      %v3929 = vadd.f32 0.0, %v3928
      %v3930 = vpop.f32.mrb[0].mxu0
      %v3931 = vpop.f32.mrb[0].mxu0
      %v3932 = vadd.f32 0.0, %v3931
      %v3933 = vpop.f32.mrb[0].mxu0
      %3934 = vmatprep.mubr.bf16.mxu0 0
      %3935 = vmatmul.mubr.bf16.gmra.mrb[0].mxu0 %v3861
      %v3936 = vpop.f32.mrb[0].mxu0
      %v3937 = vadd.f32 0.0, %v3936
      %v3938 = vpop.f32.mrb[0].mxu0
      %v3939 = vpop.f32.mrb[0].mxu0
      %v3940 = vadd.f32 0.0, %v3939
      %v3941 = vpop.f32.mrb[0].mxu0
      %3942 = vmatprep.mubr.bf16.mxu0 0
      %3943 = vmatmul.mubr.bf16.gmra.mrb[0].mxu0 %v3864
      %v3944 = vpop.f32.mrb[0].mxu0
      %v3945 = vadd.f32 0.0, %v3944
      %v3946 = vpop.f32.mrb[0].mxu0
      %v3947 = vpop.f32.mrb[0].mxu0
      %v3948 = vadd.f32 0.0, %v3947
      %v3949 = vpop.f32.mrb[0].mxu0
      %3950 = vmatprep.mubr.bf16.mxu0 0
      %3951 = vmatmul.mubr.bf16.gmra.mrb[0].mxu0 %v3867
      %v3952 = vpop.f32.mrb[0].mxu0
      %v3953 = vadd.f32 0.0, %v3952
      %v3954 = vpop.f32.mrb[0].mxu0
      %v3955 = vpop.f32.mrb[0].mxu0
      %v3956 = vadd.f32 0.0, %v3955
      %v3957 = vpop.f32.mrb[0].mxu0
      %3958 = vmatprep.mubr.bf16.mxu0 0
      %3959 = vmatmul.mubr.bf16.gmra.mrb[0].mxu0 %v3870
      %v3960 = vpop.f32.mrb[0].mxu0
      %v3961 = vadd.f32 0.0, %v3960
      %v3962 = vpop.f32.mrb[0].mxu0
      %v3963 = vpop.f32.mrb[0].mxu0
      %v3964 = vadd.f32 0.0, %v3963
      %v3965 = vpop.f32.mrb[0].mxu0
      %3966 = vmatprep.mubr.bf16.mxu0 0
      %3967 = vmatmul.mubr.bf16.gmra.mrb[0].mxu0 %v3873
      %v3968 = vpop.f32.mrb[0].mxu0
      %v3969 = vadd.f32 0.0, %v3968
      %v3970 = vpop.f32.mrb[0].mxu0
      %v3971 = vpop.f32.mrb[0].mxu0
      %v3972 = vadd.f32 0.0, %v3971
      %v3973 = vpop.f32.mrb[0].mxu0
      %3974 = vdwg.mxu0
      %v3975 = vadd.f32 %v3825, %v3913
      %v3976 = vadd.f32 %v3826, %v3916
      %v3977 = vadd.f32 %v3827, %v3921
      %v3978 = vadd.f32 %v3828, %v3924
      %v3979 = vadd.f32 %v3829, %v3929
      %v3980 = vadd.f32 %v3830, %v3932
      %v3981 = vadd.f32 %v3831, %v3937
      %v3982 = vadd.f32 %v3832, %v3940
      %v3983 = vadd.f32 %v3833, %v3945
      %v3984 = vadd.f32 %v3834, %v3948
      %v3985 = vadd.f32 %v3835, %v3953
      %v3986 = vadd.f32 %v3836, %v3956
      %v3987 = vadd.f32 %v3837, %v3961
      %v3988 = vadd.f32 %v3838, %v3964
      %v3989 = vadd.f32 %v3839, %v3969
      %v3990 = vadd.f32 %v3840, %v3972
      %3991 = vst.msk [vmem:[#allocation3] sm:$0xff] %vm407, %v3975
      %3992 = vst.msk [vmem:[#allocation3 + $0x8] sm:$0xff] %vm407, %v3976
      %3993 = vst.msk [vmem:[#allocation3 + $0x10] sm:$0xff] %vm407, %v3977
      %3994 = vst.msk [vmem:[#allocation3 + $0x18] sm:$0xff] %vm407, %v3978
      %3995 = vst.msk [vmem:[#allocation3 + $0x20] sm:$0xff] %vm407, %v3979
      %3996 = vst.msk [vmem:[#allocation3 + $0x28] sm:$0xff] %vm407, %v3980
      %3997 = vst.msk [vmem:[#allocation3 + $0x30] sm:$0xff] %vm407, %v3981
      %3998 = vst.msk [vmem:[#allocation3 + $0x38] sm:$0xff] %vm407, %v3982
      %3999 = vst.msk [vmem:[#allocation3 + $0x40] sm:$0xff] %vm407, %v3983
      %4000 = vst.msk [vmem:[#allocation3 + $0x48] sm:$0xff] %vm407, %v3984
      %4001 = vst.msk [vmem:[#allocation3 + $0x50] sm:$0xff] %vm407, %v3985
      %4002 = vst.msk [vmem:[#allocation3 + $0x58] sm:$0xff] %vm407, %v3986
      %4003 = vst.msk [vmem:[#allocation3 + $0x60] sm:$0xff] %vm407, %v3987
      %4004 = vst.msk [vmem:[#allocation3 + $0x68] sm:$0xff] %vm407, %v3988
      %4005 = vst.msk [vmem:[#allocation3 + $0x70] sm:$0xff] %vm407, %v3989
      %4006 = vst.msk [vmem:[#allocation3 + $0x78] sm:$0xff] %vm407, %v3990
      %v4007 = vld [vmem:[#allocation2] sm:$0xff]
      %v4008 = vld [vmem:[#allocation2 + $0x8] sm:$0xff]
      %v4009 = vld [vmem:[#allocation2 + $0x10] sm:$0xff]
      %v4010 = vld [vmem:[#allocation2 + $0x18] sm:$0xff]
      %v4011 = vld [vmem:[#allocation2 + $0x20] sm:$0xff]
      %v4012 = vld [vmem:[#allocation2 + $0x28] sm:$0xff]
      %v4013 = vld [vmem:[#allocation2 + $0x30] sm:$0xff]
      %v4014 = vld [vmem:[#allocation2 + $0x38] sm:$0xff]
      %v4015 = vld [vmem:[#allocation2 + $0x40] sm:$0xff]
      %v4016 = vld [vmem:[#allocation2 + $0x48] sm:$0xff]
      %v4017 = vld [vmem:[#allocation2 + $0x50] sm:$0xff]
      %v4018 = vld [vmem:[#allocation2 + $0x58] sm:$0xff]
      %v4019 = vld [vmem:[#allocation2 + $0x60] sm:$0xff]
      %v4020 = vld [vmem:[#allocation2 + $0x68] sm:$0xff]
      %v4021 = vld [vmem:[#allocation2 + $0x70] sm:$0xff]
      %v4022 = vld [vmem:[#allocation2 + $0x78] sm:$0xff]
      %v4023 = vld [vmem:[%s3] sm:$0x1]
      %v4025 = vlaneseq
      %v4026 = vshrl.u32 %v4025, 7
      %v4027 = vsub.s32 0, %v4026
      %v4028 = vrot.slane %v4023, %v4027
      %v4030 = vmul.f32 %v4007, %v4028
      %v4031 = vmul.f32 %v4008, %v4028
      %v4032 = vmul.f32 %v4009, %v4028
      %v4033 = vmul.f32 %v4010, %v4028
      %v4034 = vmul.f32 %v4011, %v4028
      %v4035 = vmul.f32 %v4012, %v4028
      %v4036 = vmul.f32 %v4013, %v4028
      %v4037 = vmul.f32 %v4014, %v4028
      %v4038 = vmul.f32 %v4015, %v4028
      %v4039 = vmul.f32 %v4016, %v4028
      %v4040 = vmul.f32 %v4017, %v4028
      %v4041 = vmul.f32 %v4018, %v4028
      %v4042 = vmul.f32 %v4019, %v4028
      %v4043 = vmul.f32 %v4020, %v4028
      %v4044 = vmul.f32 %v4021, %v4028
      %v4045 = vmul.f32 %v4022, %v4028
      %v4046 = vld [vmem:[%s4] sm:$0x1]
      %v4048 = vlaneseq
      %v4049 = vshrl.u32 %v4048, 7
      %v4050 = vsub.s32 0, %v4049
      %v4051 = vrot.slane %v4046, %v4050
      %v4053 = vadd.f32 %v4030, %v4051
      %v4054 = vadd.f32 %v4031, %v4051
      %v4055 = vadd.f32 %v4032, %v4051
      %v4056 = vadd.f32 %v4033, %v4051
      %v4057 = vadd.f32 %v4034, %v4051
      %v4058 = vadd.f32 %v4035, %v4051
      %v4059 = vadd.f32 %v4036, %v4051
      %v4060 = vadd.f32 %v4037, %v4051
      %v4061 = vadd.f32 %v4038, %v4051
      %v4062 = vadd.f32 %v4039, %v4051
      %v4063 = vadd.f32 %v4040, %v4051
      %v4064 = vadd.f32 %v4041, %v4051
      %v4065 = vadd.f32 %v4042, %v4051
      %v4066 = vadd.f32 %v4043, %v4051
      %v4067 = vadd.f32 %v4044, %v4051
      %v4068 = vadd.f32 %v4045, %v4051
      %v4069 = vmax.f32 %v4053, 0.0
      %v4070 = vmax.f32 %v4054, 0.0
      %v4071 = vmax.f32 %v4055, 0.0
      %v4072 = vmax.f32 %v4056, 0.0
      %v4073 = vmax.f32 %v4057, 0.0
      %v4074 = vmax.f32 %v4058, 0.0
      %v4075 = vmax.f32 %v4059, 0.0
      %v4076 = vmax.f32 %v4060, 0.0
      %v4077 = vmax.f32 %v4061, 0.0
      %v4078 = vmax.f32 %v4062, 0.0
      %v4079 = vmax.f32 %v4063, 0.0
      %v4080 = vmax.f32 %v4064, 0.0
      %v4081 = vmax.f32 %v4065, 0.0
      %v4082 = vmax.f32 %v4066, 0.0
      %v4083 = vmax.f32 %v4067, 0.0
      %v4084 = vmax.f32 %v4068, 0.0
      %v4085 = vld [vmem:[#allocation3] sm:$0xff]
      %v4086 = vld [vmem:[#allocation3 + $0x8] sm:$0xff]
      %v4087 = vld [vmem:[#allocation3 + $0x10] sm:$0xff]
      %v4088 = vld [vmem:[#allocation3 + $0x18] sm:$0xff]
      %v4089 = vld [vmem:[#allocation3 + $0x20] sm:$0xff]
      %v4090 = vld [vmem:[#allocation3 + $0x28] sm:$0xff]
      %v4091 = vld [vmem:[#allocation3 + $0x30] sm:$0xff]
      %v4092 = vld [vmem:[#allocation3 + $0x38] sm:$0xff]
      %v4093 = vld [vmem:[#allocation3 + $0x40] sm:$0xff]
      %v4094 = vld [vmem:[#allocation3 + $0x48] sm:$0xff]
      %v4095 = vld [vmem:[#allocation3 + $0x50] sm:$0xff]
      %v4096 = vld [vmem:[#allocation3 + $0x58] sm:$0xff]
      %v4097 = vld [vmem:[#allocation3 + $0x60] sm:$0xff]
      %v4098 = vld [vmem:[#allocation3 + $0x68] sm:$0xff]
      %v4099 = vld [vmem:[#allocation3 + $0x70] sm:$0xff]
      %v4100 = vld [vmem:[#allocation3 + $0x78] sm:$0xff]
      %v4101 = vld [vmem:[%s5] sm:$0x1]
      %v4103 = vlaneseq
      %v4104 = vshrl.u32 %v4103, 7
      %v4105 = vsub.s32 0, %v4104
      %v4106 = vrot.slane %v4101, %v4105
      %v4108 = vmul.f32 %v4085, %v4106
      %v4109 = vmul.f32 %v4086, %v4106
      %v4110 = vmul.f32 %v4087, %v4106
      %v4111 = vmul.f32 %v4088, %v4106
      %v4112 = vmul.f32 %v4089, %v4106
      %v4113 = vmul.f32 %v4090, %v4106
      %v4114 = vmul.f32 %v4091, %v4106
      %v4115 = vmul.f32 %v4092, %v4106
      %v4116 = vmul.f32 %v4093, %v4106
      %v4117 = vmul.f32 %v4094, %v4106
      %v4118 = vmul.f32 %v4095, %v4106
      %v4119 = vmul.f32 %v4096, %v4106
      %v4120 = vmul.f32 %v4097, %v4106
      %v4121 = vmul.f32 %v4098, %v4106
      %v4122 = vmul.f32 %v4099, %v4106
      %v4123 = vmul.f32 %v4100, %v4106
      %v4124 = vld [vmem:[%s6] sm:$0x1]
      %v4126 = vlaneseq
      %v4127 = vshrl.u32 %v4126, 7
      %v4128 = vsub.s32 0, %v4127
      %v4129 = vrot.slane %v4124, %v4128
      %v4131 = vadd.f32 %v4108, %v4129
      %v4132 = vadd.f32 %v4109, %v4129
      %v4133 = vadd.f32 %v4110, %v4129
      %v4134 = vadd.f32 %v4111, %v4129
      %v4135 = vadd.f32 %v4112, %v4129
      %v4136 = vadd.f32 %v4113, %v4129
      %v4137 = vadd.f32 %v4114, %v4129
      %v4138 = vadd.f32 %v4115, %v4129
      %v4139 = vadd.f32 %v4116, %v4129
      %v4140 = vadd.f32 %v4117, %v4129
      %v4141 = vadd.f32 %v4118, %v4129
      %v4142 = vadd.f32 %v4119, %v4129
      %v4143 = vadd.f32 %v4120, %v4129
      %v4144 = vadd.f32 %v4121, %v4129
      %v4145 = vadd.f32 %v4122, %v4129
      %v4146 = vadd.f32 %v4123, %v4129
      %v4147 = vmax.f32 %v4131, 0.0
      %v4148 = vmax.f32 %v4132, 0.0
      %v4149 = vmax.f32 %v4133, 0.0
      %v4150 = vmax.f32 %v4134, 0.0
      %v4151 = vmax.f32 %v4135, 0.0
      %v4152 = vmax.f32 %v4136, 0.0
      %v4153 = vmax.f32 %v4137, 0.0
      %v4154 = vmax.f32 %v4138, 0.0
      %v4155 = vmax.f32 %v4139, 0.0
      %v4156 = vmax.f32 %v4140, 0.0
      %v4157 = vmax.f32 %v4141, 0.0
      %v4158 = vmax.f32 %v4142, 0.0
      %v4159 = vmax.f32 %v4143, 0.0
      %v4160 = vmax.f32 %v4144, 0.0
      %v4161 = vmax.f32 %v4145, 0.0
      %v4162 = vmax.f32 %v4146, 0.0
      %v4163 = vpack.c.bf16 %v4070, %v4069
      %v4164 = vpack.c.bf16 %v4072, %v4071
      %v4165 = vpack.c.bf16 %v4074, %v4073
      %v4166 = vpack.c.bf16 %v4076, %v4075
      %v4167 = vpack.c.bf16 %v4078, %v4077
      %v4168 = vpack.c.bf16 %v4080, %v4079
      %v4169 = vpack.c.bf16 %v4082, %v4081
      %v4170 = vpack.c.bf16 %v4084, %v4083
      %v4179 = vunpack.c.l.b16 %v4163
      %v4180 = vunpack.c.h.b16 %v4163
      %v4181 = vunpack.c.l.b16 %v4164
      %v4182 = vunpack.c.h.b16 %v4164
      %v4183 = vunpack.c.l.b16 %v4165
      %v4184 = vunpack.c.h.b16 %v4165
      %v4185 = vunpack.c.l.b16 %v4166
      %v4186 = vunpack.c.h.b16 %v4166
      %v4187 = vunpack.c.l.b16 %v4167
      %v4188 = vunpack.c.h.b16 %v4167
      %v4189 = vunpack.c.l.b16 %v4168
      %v4190 = vunpack.c.h.b16 %v4168
      %v4191 = vunpack.c.l.b16 %v4169
      %v4192 = vunpack.c.h.b16 %v4169
      %v4193 = vunpack.c.l.b16 %v4170
      %v4194 = vunpack.c.h.b16 %v4170
      %v4195 = vpack.c.b16 %v4179, %v4179
      %v4196 = vpack.c.b16 %v4180, %v4180
      %v4197 = vpack.c.b16 %v4181, %v4181
      %v4198 = vpack.c.b16 %v4182, %v4182
      %v4199 = vpack.c.b16 %v4183, %v4183
      %v4200 = vpack.c.b16 %v4184, %v4184
      %v4201 = vpack.c.b16 %v4185, %v4185
      %v4202 = vpack.c.b16 %v4186, %v4186
      %v4203 = vpack.c.b16 %v4187, %v4187
      %v4204 = vpack.c.b16 %v4188, %v4188
      %v4205 = vpack.c.b16 %v4189, %v4189
      %v4206 = vpack.c.b16 %v4190, %v4190
      %v4207 = vpack.c.b16 %v4191, %v4191
      %v4208 = vpack.c.b16 %v4192, %v4192
      %v4209 = vpack.c.b16 %v4193, %v4193
      %v4210 = vpack.c.b16 %v4194, %v4194
      %vm4227 = vcmask 27648
      %4228 = vst.msk [vmem:[%s390] sm:$0xf] %vm4227, %v4195
      %4229 = vst.msk [vmem:[%s390 + $0x4] sm:$0xf] %vm4227, %v4196
      %4230 = vst.msk [vmem:[%s390 + $0x8] sm:$0xf] %vm4227, %v4197
      %4231 = vst.msk [vmem:[%s390 + $0xc] sm:$0xf] %vm4227, %v4198
      %4232 = vst.msk [vmem:[%s390 + $0x10] sm:$0xf] %vm4227, %v4199
      %4233 = vst.msk [vmem:[%s390 + $0x14] sm:$0xf] %vm4227, %v4200
      %4234 = vst.msk [vmem:[%s390 + $0x18] sm:$0xf] %vm4227, %v4201
      %4235 = vst.msk [vmem:[%s390 + $0x1c] sm:$0xf] %vm4227, %v4202
      %4236 = vst.msk [vmem:[%s390 + $0x20] sm:$0xf] %vm4227, %v4203
      %4237 = vst.msk [vmem:[%s390 + $0x24] sm:$0xf] %vm4227, %v4204
      %4238 = vst.msk [vmem:[%s390 + $0x28] sm:$0xf] %vm4227, %v4205
      %4239 = vst.msk [vmem:[%s390 + $0x2c] sm:$0xf] %vm4227, %v4206
      %4240 = vst.msk [vmem:[%s390 + $0x30] sm:$0xf] %vm4227, %v4207
      %4241 = vst.msk [vmem:[%s390 + $0x34] sm:$0xf] %vm4227, %v4208
      %4242 = vst.msk [vmem:[%s390 + $0x38] sm:$0xf] %vm4227, %v4209
      %4243 = vst.msk [vmem:[%s390 + $0x3c] sm:$0xf] %vm4227, %v4210
      %v4244 = vpack.c.bf16 %v4148, %v4147
      %v4245 = vpack.c.bf16 %v4150, %v4149
      %v4246 = vpack.c.bf16 %v4152, %v4151
      %v4247 = vpack.c.bf16 %v4154, %v4153
      %v4248 = vpack.c.bf16 %v4156, %v4155
      %v4249 = vpack.c.bf16 %v4158, %v4157
      %v4250 = vpack.c.bf16 %v4160, %v4159
      %v4251 = vpack.c.bf16 %v4162, %v4161
      %v4260 = vunpack.c.l.b16 %v4244
      %v4261 = vunpack.c.h.b16 %v4244
      %v4262 = vunpack.c.l.b16 %v4245
      %v4263 = vunpack.c.h.b16 %v4245
      %v4264 = vunpack.c.l.b16 %v4246
      %v4265 = vunpack.c.h.b16 %v4246
      %v4266 = vunpack.c.l.b16 %v4247
      %v4267 = vunpack.c.h.b16 %v4247
      %v4268 = vunpack.c.l.b16 %v4248
      %v4269 = vunpack.c.h.b16 %v4248
      %v4270 = vunpack.c.l.b16 %v4249
      %v4271 = vunpack.c.h.b16 %v4249
      %v4272 = vunpack.c.l.b16 %v4250
      %v4273 = vunpack.c.h.b16 %v4250
      %v4274 = vunpack.c.l.b16 %v4251
      %v4275 = vunpack.c.h.b16 %v4251
      %v4276 = vpack.c.b16 %v4260, %v4260
      %v4277 = vpack.c.b16 %v4261, %v4261
      %v4278 = vpack.c.b16 %v4262, %v4262
      %v4279 = vpack.c.b16 %v4263, %v4263
      %v4280 = vpack.c.b16 %v4264, %v4264
      %v4281 = vpack.c.b16 %v4265, %v4265
      %v4282 = vpack.c.b16 %v4266, %v4266
      %v4283 = vpack.c.b16 %v4267, %v4267
      %v4284 = vpack.c.b16 %v4268, %v4268
      %v4285 = vpack.c.b16 %v4269, %v4269
      %v4286 = vpack.c.b16 %v4270, %v4270
      %v4287 = vpack.c.b16 %v4271, %v4271
      %v4288 = vpack.c.b16 %v4272, %v4272
      %v4289 = vpack.c.b16 %v4273, %v4273
      %v4290 = vpack.c.b16 %v4274, %v4274
      %v4291 = vpack.c.b16 %v4275, %v4275
      %4308 = vst.msk [vmem:[%s401] sm:$0xf] %vm4227, %v4276
      %4309 = vst.msk [vmem:[%s401 + $0x4] sm:$0xf] %vm4227, %v4277
      %4310 = vst.msk [vmem:[%s401 + $0x8] sm:$0xf] %vm4227, %v4278
      %4311 = vst.msk [vmem:[%s401 + $0xc] sm:$0xf] %vm4227, %v4279
      %4312 = vst.msk [vmem:[%s401 + $0x10] sm:$0xf] %vm4227, %v4280
      %4313 = vst.msk [vmem:[%s401 + $0x14] sm:$0xf] %vm4227, %v4281
      %4314 = vst.msk [vmem:[%s401 + $0x18] sm:$0xf] %vm4227, %v4282
      %4315 = vst.msk [vmem:[%s401 + $0x1c] sm:$0xf] %vm4227, %v4283
      %4316 = vst.msk [vmem:[%s401 + $0x20] sm:$0xf] %vm4227, %v4284
      %4317 = vst.msk [vmem:[%s401 + $0x24] sm:$0xf] %vm4227, %v4285
      %4318 = vst.msk [vmem:[%s401 + $0x28] sm:$0xf] %vm4227, %v4286
      %4319 = vst.msk [vmem:[%s401 + $0x2c] sm:$0xf] %vm4227, %v4287
      %4320 = vst.msk [vmem:[%s401 + $0x30] sm:$0xf] %vm4227, %v4288
      %4321 = vst.msk [vmem:[%s401 + $0x34] sm:$0xf] %vm4227, %v4289
      %4322 = vst.msk [vmem:[%s401 + $0x38] sm:$0xf] %vm4227, %v4290
      %4323 = vst.msk [vmem:[%s401 + $0x3c] sm:$0xf] %vm4227, %v4291
      %p4324 = scmp.eq.s32.totalorder %s26, 0
      // Predicated region
      $region49: #{sk_bottleneck_forward.5} parent=47 // pred_check
        %p4325 = pneg %p4324
      $region50: #{sk_bottleneck_forward.5} parent=47 // pred_check_branch
        %4327 = sbr.rel (%p4325) target = $region52
      $region51: #{sk_bottleneck_forward.5} parent=47 // pred_region
        %vm4328 = vcmask 24576
        %4329 = vst.msk [vmem:[%s405] sm:$0x1] %vm4328, 0.0
      $region52: #{sk_bottleneck_forward.5} parent=47 // pred_fallthru
        _
      %v4330 = vld [vmem:[%s405] sm:$0x1]
      %v4331 = vadd.f32 %v4069, %v4147
      %v4332 = vadd.f32 %v4070, %v4148
      %v4333 = vadd.f32 %v4071, %v4149
      %v4334 = vadd.f32 %v4072, %v4150
      %v4335 = vadd.f32 %v4073, %v4151
      %v4336 = vadd.f32 %v4074, %v4152
      %v4337 = vadd.f32 %v4075, %v4153
      %v4338 = vadd.f32 %v4076, %v4154
      %v4339 = vadd.f32 %v4077, %v4155
      %v4340 = vadd.f32 %v4078, %v4156
      %v4341 = vadd.f32 %v4079, %v4157
      %v4342 = vadd.f32 %v4080, %v4158
      %v4343 = vadd.f32 %v4081, %v4159
      %v4344 = vadd.f32 %v4082, %v4160
      %v4345 = vadd.f32 %v4083, %v4161
      %v4346 = vadd.f32 %v4084, %v4162
      %v4347 = vsel %vm407, %v4331, 0.0
      %v4348 = vsel %vm407, %v4332, 0.0
      %v4349 = vadd.f32 %v4347, %v4348
      %v4350 = vsel %vm407, %v4333, 0.0
      %v4351 = vadd.f32 %v4349, %v4350
      %v4352 = vsel %vm407, %v4334, 0.0
      %v4353 = vadd.f32 %v4351, %v4352
      %v4354 = vsel %vm407, %v4335, 0.0
      %v4355 = vadd.f32 %v4353, %v4354
      %v4356 = vsel %vm407, %v4336, 0.0
      %v4357 = vadd.f32 %v4355, %v4356
      %v4358 = vsel %vm407, %v4337, 0.0
      %v4359 = vadd.f32 %v4357, %v4358
      %v4360 = vsel %vm407, %v4338, 0.0
      %v4361 = vadd.f32 %v4359, %v4360
      %v4362 = vsel %vm407, %v4339, 0.0
      %v4363 = vadd.f32 %v4361, %v4362
      %v4364 = vsel %vm407, %v4340, 0.0
      %v4365 = vadd.f32 %v4363, %v4364
      %v4366 = vsel %vm407, %v4341, 0.0
      %v4367 = vadd.f32 %v4365, %v4366
      %v4368 = vsel %vm407, %v4342, 0.0
      %v4369 = vadd.f32 %v4367, %v4368
      %v4370 = vsel %vm407, %v4343, 0.0
      %v4371 = vadd.f32 %v4369, %v4370
      %v4372 = vsel %vm407, %v4344, 0.0
      %v4373 = vadd.f32 %v4371, %v4372
      %v4374 = vsel %vm407, %v4345, 0.0
      %v4375 = vadd.f32 %v4373, %v4374
      %v4376 = vsel %vm407, %v4346, 0.0
      %v4377 = vadd.f32 %v4375, %v4376
      %v4378 = vrot.slane %v4377, 4
      %v4379 = vadd.f32 %v4377, %v4378
      %v4380 = vrot.slane %v4379, 2
      %v4381 = vadd.f32 %v4379, %v4380
      %v4382 = vrot.slane %v4381, 1
      %v4383 = vadd.f32 %v4381, %v4382
      %v4384 = vadd.f32 %v4330, %v4383
      %vm4385 = vcmask 24576
      %4386 = vst.msk [vmem:[%s405] sm:$0x1] %vm4385, %v4384
      %s4387 = smul.u32 8, %s26
      %p4388 = scmp.lt.s32.totalorder %s25, 1
      %s4389 = scalar_select %p4388, %s25, 1
      %p4390 = scmp.lt.s32.totalorder %s4387, 15
      %s4391 = scalar_select %p4390, %s4387, 15
      %s4392 = smul.addr %s4391, 2
      %s4393 = smul.addr %s4389, 32
      %s4394 = sadd.s32 %s4392, %s4393
      %s4395 = smul.addr %s4394, 4
      %s4396 = scalar_lea.vmem %s7, %s4395
      %s4397 = smul.u32 8, %s26
      %p4398 = scmp.lt.s32.totalorder %s25, 1
      %s4399 = scalar_select %p4398, %s25, 1
      %p4400 = scmp.lt.s32.totalorder %s4397, 15
      %s4401 = scalar_select %p4400, %s4397, 15
      %s4402 = smul.addr %s4401, 2
      %s4403 = smul.addr %s4399, 32
      %s4404 = sadd.s32 %s4402, %s4403
      %s4405 = smul.addr %s4404, 4
      %s4406 = scalar_lea.vmem %s8, %s4405
      %p4407 = scmp.lt.s32.totalorder %s25, 1
      %s4408 = scalar_select %p4407, %s25, 1
      %s4409 = scalar_lea.vmem %s9, %s4408
      // Predicated region
      $region53: #{sk_bottleneck_forward.5} parent=47 // pred_check
        %p4410 = pneg %p209
      $region54: #{sk_bottleneck_forward.5} parent=47 // pred_check_branch
        %4412 = sbr.rel (%p4410) target = $region56
      $region55: #{sk_bottleneck_forward.5} parent=47 // pred_region
        %s4413 = smul.u32 8, %s26
      $region56: #{sk_bottleneck_forward.5} parent=47 // pred_fallthru
        _
      // Predicated region
      $region57: #{sk_bottleneck_forward.5} parent=47 // pred_check
        %p4414 = pneg %p237
      $region58: #{sk_bottleneck_forward.5} parent=47 // pred_check_branch
        %4416 = sbr.rel (%p4414) target = $region60
      $region59: #{sk_bottleneck_forward.5} parent=47 // pred_region
        %s4417 = smul.u32 8, %s26
      $region60: #{sk_bottleneck_forward.5} parent=47 // pred_fallthru
        _
      // Predicated region
      $region61: #{sk_bottleneck_forward.5} parent=47 // pred_check
        %p4418 = pneg %p263
      $region62: #{sk_bottleneck_forward.5} parent=47 // pred_check_branch
        %4420 = sbr.rel (%p4418) target = $region64
      $region63: #{sk_bottleneck_forward.5} parent=47 // pred_region
        _
      $region64: #{sk_bottleneck_forward.5} parent=47 // pred_fallthru
        _
    $region48: #{sk_bottleneck_forward.5} parent=5 // pred_fallthru
      _
    %p4421 = scmp.le.s32.totalorder 2, %s16
    // Predicated region
    $region65: #{sk_bottleneck_forward.5} parent=5 // pred_check
      %p4422 = pneg %p4421
    $region66: #{sk_bottleneck_forward.5} parent=5 // pred_check_branch
      %4424 = sbr.rel (%p4422) target = $region68
    $region67: #{sk_bottleneck_forward.5} parent=5 // pred_region
      %s4425 = ssub.s32 %s16, 2
      // Predicated region
      $region69: #{sk_bottleneck_forward.5} parent=67 // pred_check
        %p4426 = pneg %p215
      $region70: #{sk_bottleneck_forward.5} parent=67 // pred_check_branch
        %4428 = sbr.rel (%p4426) target = $region72
      $region71: #{sk_bottleneck_forward.5} parent=67 // pred_region
        %s4429 = smul.u32 8, %s28
        %p4430 = scmp.lt.s32.totalorder %s27, 1
        %s4431 = scalar_select %p4430, %s27, 1
        %p4432 = scmp.lt.s32.totalorder %s4429, 15
        %s4433 = scalar_select %p4432, %s4429, 15
        %s4434 = smul.addr %s4433, 2
        %s4435 = smul.addr %s4431, 32
        %s4436 = sadd.s32 %s4434, %s4435
        %s4437 = smul.addr %s4436, 4
        %s4438 = scalar_lea.vmem %s7, %s4437
      $region72: #{sk_bottleneck_forward.5} parent=67 // pred_fallthru
        _
      // Predicated region
      $region73: #{sk_bottleneck_forward.5} parent=67 // pred_check
        %p4439 = pneg %p243
      $region74: #{sk_bottleneck_forward.5} parent=67 // pred_check_branch
        %4441 = sbr.rel (%p4439) target = $region76
      $region75: #{sk_bottleneck_forward.5} parent=67 // pred_region
        %s4442 = smul.u32 8, %s28
        %p4443 = scmp.lt.s32.totalorder %s27, 1
        %s4444 = scalar_select %p4443, %s27, 1
        %p4445 = scmp.lt.s32.totalorder %s4442, 15
        %s4446 = scalar_select %p4445, %s4442, 15
        %s4447 = smul.addr %s4446, 2
        %s4448 = smul.addr %s4444, 32
        %s4449 = sadd.s32 %s4447, %s4448
        %s4450 = smul.addr %s4449, 4
        %s4451 = scalar_lea.vmem %s8, %s4450
      $region76: #{sk_bottleneck_forward.5} parent=67 // pred_fallthru
        _
      // Predicated region
      $region77: #{sk_bottleneck_forward.5} parent=67 // pred_check
        %p4452 = pneg %p269
      $region78: #{sk_bottleneck_forward.5} parent=67 // pred_check_branch
        %4454 = sbr.rel (%p4452) target = $region80
      $region79: #{sk_bottleneck_forward.5} parent=67 // pred_region
        %p4455 = scmp.lt.s32.totalorder %s27, 1
        %s4456 = scalar_select %p4455, %s27, 1
        %s4457 = scalar_lea.vmem %s9, %s4456
      $region80: #{sk_bottleneck_forward.5} parent=67 // pred_fallthru
        _
    $region68: #{sk_bottleneck_forward.5} parent=5 // pred_fallthru
      _
  $region6: #{sk_bottleneck_forward.5} parent=0 // loop_footer
    %s20 = sadd.s32 1, %s16
  $region7: #{sk_bottleneck_forward.5} parent=0 // loop_footer_branch
    %15 = sbr.rel target = $region3
  $region8: #{sk_bottleneck_forward.5} parent=0 // loop_exit
    _

</llo_original>
